<compile_context>
chip_gen: v7x
topology: tpu7x:2x2x1
jax: 0.10.0
libtpu: 0.0.40
codegen_flags: <defaults>
</compile_context>

<pallas_src>
import math

import jax
import jax.numpy as jnp
from jax.experimental import pallas as pl
from jax.experimental.pallas import tpu as pltpu  # noqa: F401  (TPU backend)

# ----------------------------- small config ---------------------------------
B = 2            # batch
FEAT = 6         # per-person motion features (PyTorch FEATURES=262, scaled down)
FRAMES = 8       # max_frames
D = 32           # latent_dim (PyTorch 1024)
CLIP_DIM = 16    # clip_dim (PyTorch 512)
FF = 64          # ff_size (PyTorch 2048)
NUM_LAYERS = 2   # num_layers (PyTorch 8)
ACTOR_HEADS = 2  # reference actor model nhead (PyTorch 4)
INJECT_HEADS = 4 # inject model num_heads (PyTorch 8)
PE_MAX_LEN = 64
LN_EPS = 1e-5


# ----------------------- in-kernel building blocks ---------------------------
def _layernorm(x, g, b):
    mu = jnp.mean(x, axis=-1, keepdims=True)
    xc = x - mu
    var = jnp.mean(xc * xc, axis=-1, keepdims=True)
    return xc * jax.lax.rsqrt(var + LN_EPS) * g + b


def _mha(xq, extra_kv, bias, lp, nhead):
    """Multi-head self-attention with optional extra K/V sources.

    xq:       [M, D] query (and first K/V) source.
    extra_kv: list of [M, D] extra K/V sources (inject layers: actor embedding).
    bias:     [M, M] additive logits bias (batch block-diag + key padding),
              shared by every K/V block (matches einops-doubled padding mask).
    """
    Dm = xq.shape[-1]
    hd = Dm // nhead
    scale = 1.0 / math.sqrt(hd)

    # packed QKV projection: one [M, D] x [D, 3D] GEMM.
    qkv = jnp.dot(xq, lp["wqkv"], preferred_element_type=jnp.float32) + lp["bqkv"]
    q = qkv[:, 0:Dm] * scale
    k_blocks = [qkv[:, Dm:2 * Dm]]
    v_blocks = [qkv[:, 2 * Dm:3 * Dm]]
    for kv in extra_kv:
        kvp = (jnp.dot(kv, lp["wqkv"][:, Dm:], preferred_element_type=jnp.float32)
               + lp["bqkv"][:, Dm:])
        k_blocks.append(kvp[:, 0:Dm])
        v_blocks.append(kvp[:, Dm:2 * Dm])

    out = jnp.zeros((xq.shape[0], Dm), jnp.float32)
    for h in range(nhead):                       # static head loop, lane slices
        sl = slice(h * hd, (h + 1) * hd)
        qh = q[:, sl]
        s_blocks = [jax.lax.dot_general(qh, kb[:, sl], (((1,), (1,)), ((), ())),
                                        preferred_element_type=jnp.float32) + bias
                    for kb in k_blocks]
        m = s_blocks[0].max(axis=-1, keepdims=True)
        for s in s_blocks[1:]:
            m = jnp.maximum(m, s.max(axis=-1, keepdims=True))
        p_blocks = [jnp.exp(s - m) for s in s_blocks]
        denom = p_blocks[0].sum(axis=-1, keepdims=True)
        for pb in p_blocks[1:]:
            denom = denom + pb.sum(axis=-1, keepdims=True)
        inv = pl.reciprocal(denom, approx=True)
        oh = jnp.dot(p_blocks[0], v_blocks[0][:, sl], preferred_element_type=jnp.float32)
        for pb, vb in zip(p_blocks[1:], v_blocks[1:]):
            oh = oh + jnp.dot(pb, vb[:, sl], preferred_element_type=jnp.float32)
        oh = oh * inv
        # merge heads by accumulating the per-head slice of the output proj.
        out = out + jnp.dot(oh, lp["wo"][sl, :], preferred_element_type=jnp.float32)
    return out + lp["bo"]


def _encoder_layer(x, extra_kv, bias, lp, nhead):
    """Post-norm TransformerEncoderLayer (PyTorch default, gelu activation)."""
    attn = _mha(x, extra_kv, bias, lp, nhead)
    h = _layernorm(x + attn, lp["ln1_g"], lp["ln1_b"])
    # TODO(synk): PyTorch default F.gelu is exact-erf; tanh approximation used
    # here for robust Mosaic lowering (differs by ~1e-3).
    ff = jax.nn.gelu(jnp.dot(h, lp["w1"], preferred_element_type=jnp.float32) + lp["b1"],
                     approximate=True)
    ff = jnp.dot(ff, lp["w2"], preferred_element_type=jnp.float32) + lp["b2"]
    return _layernorm(h + ff, lp["ln2_g"], lp["ln2_b"])


# ----------------------------- forward ---------------------------------------
@jax.jit
def mdm_any_forward(params, x, timesteps, y_mask, text_emb):
    """
    x:        [B, 2*FEAT, 1, FRAMES]   (x_t, two persons stacked on joint axis)
    timesteps:[B] int32
    y_mask:   [B, 1, 1, FRAMES] bool   (True = valid frame)
    text_emb: [B, CLIP_DIM]            (precomputed CLIP text features)
    returns:  [B, 2*FEAT, 1, FRAMES]
    """
    pe = params["pe"]
    Bn = x.shape[0]
    F = x.shape[-1]
    feat = x.shape[1] // 2
    T = F + 1
    TB = T * Bn

    # --- layout prep outside the kernel (tiny XLA ops, no Pallas launches) ----
    t_pe = pe[timesteps]                                              # [B, D]

    def flat_motion(x_half):
        # [B, FEAT, 1, F] -> [F, B, FEAT] -> [F*B, FEAT]  (token-major rows)
        return jnp.transpose(x_half, (3, 0, 1, 2)).reshape(F * Bn, feat)

    x1 = flat_motion(x[:, :feat])
    x2 = flat_motion(x[:, feat:])

    pe_rows = jnp.repeat(pe[:T], Bn, axis=0)                          # [TB, D]

    # additive attention bias: batch block-diagonal + key padding (-1e9)
    pad = jnp.logical_not(y_mask[:, 0, 0, :])                         # [B, F]
    key_pad = jnp.concatenate([jnp.zeros((Bn, 1), dtype=bool), pad], axis=1)  # [B, T]
    row = jnp.arange(TB)
    tok = row // Bn
    bat = row % Bn
    key_ignore = key_pad[bat, tok]                                    # [TB]
    allowed = (bat[:, None] == bat[None, :]) & jnp.logical_not(key_ignore)[None, :]
    bias1 = jnp.where(allowed, 0.0, -1e9).astype(jnp.float32)         # [TB, TB]

    # placement matrices: seq row r = emb[r] for r < B else frame_proj[r - B]
    p_emb = (row[:, None] == jnp.arange(Bn)[None, :]).astype(jnp.float32)          # [TB, B]
    p_x = ((row[:, None] - Bn) == jnp.arange(F * Bn)[None, :]).astype(jnp.float32)  # [TB, F*B]

    # stack per-layer params along a leading layer axis -> fewer kernel operands
    def stack_layers(layers):
        return jax.tree_util.tree_map(lambda *xs: jnp.stack(xs, axis=0), *layers)

    kparams = {k: params[k] for k in ("time_w1", "time_b1", "time_w2", "time_b2",
                                      "text_w", "text_b", "in_w", "in_b",
                                      "out_w", "out_b")}
    kparams["actor"] = stack_layers(params["actor_layers"])
    kparams["inject"] = stack_layers(params["inject_layers"])

    inputs = dict(t_pe=t_pe, text=text_emb, x1=x1, x2=x2, pe_rows=pe_rows,
                  bias1=bias1, p_emb=p_emb, p_x=p_x, params=kparams)
    flat, treedef = jax.tree_util.tree_flatten(inputs)
    n_in = len(flat)

    # --- single fused kernel: everything stays VMEM-resident -----------------
    def kernel(*refs):
        v = jax.tree_util.tree_unflatten(treedef, [r[...] for r in refs[:n_in]])
        o1_ref, o2_ref = refs[n_in], refs[n_in + 1]
        p = v["params"]

        # TimestepEmbedder: pe[t] -> Linear -> SiLU -> Linear
        t = jnp.dot(v["t_pe"], p["time_w1"], preferred_element_type=jnp.float32) + p["time_b1"]
        t = t * jax.nn.sigmoid(t)
        t = jnp.dot(t, p["time_w2"], preferred_element_type=jnp.float32) + p["time_b2"]
        # embed_text(mask_cond(enc_text)): eval mode => mask_cond is identity.
        # TODO(synk): clip_model.encode_text has no Pallas equivalent; `text`
        # is assumed to already be the CLIP feature vector.
        txt = jnp.dot(v["text"], p["text_w"], preferred_element_type=jnp.float32) + p["text_b"]
        emb = t + txt                                                 # [B, D]

        def build_seq(x_flat):
            xin = jnp.dot(x_flat, p["in_w"], preferred_element_type=jnp.float32) + p["in_b"]
            seq = (jnp.dot(v["p_emb"], emb, preferred_element_type=jnp.float32)
                   + jnp.dot(v["p_x"], xin, preferred_element_type=jnp.float32))
            return seq + v["pe_rows"]                                 # dropout: eval no-op

        xseq1 = build_seq(v["x1"])
        xseq2 = build_seq(v["x2"])
        bias = v["bias1"]

        def layer_params(stack, i):                 # static layer index
            return {k: a[i] for k, a in stack.items()}

        # actor model: store per-layer input embeddings (torch.no_grad in ref).
        # TODO(synk): AttentionStoreEmbeddingsTransformerEncoder source not
        # available; stored "embeddings" assumed to be per-layer input seqs.
        h = xseq1
        embeddings = []
        for i in range(NUM_LAYERS):
            embeddings.append(h)
            h = _encoder_layer(h, [], bias, layer_params(p["actor"], i), ACTOR_HEADS)
        out1 = h

        # inject model: self-attention K/V = concat(own seq, actor embedding),
        # realized as a two-block online softmax (both blocks share `bias`,
        # matching the einops-doubled key-padding mask).
        g = xseq2
        for i in range(NUM_LAYERS):
            g = _encoder_layer(g, [embeddings[i]], bias,
                               layer_params(p["inject"], i), INJECT_HEADS)
        out2 = g

        # OutputProcess (shared weights); conditioning-token rows dropped
        # outside the kernel.
        o1_ref[...] = jnp.dot(out1, p["out_w"], preferred_element_type=jnp.float32) + p["out_b"]
        o2_ref[...] = jnp.dot(out2, p["out_w"], preferred_element_type=jnp.float32) + p["out_b"]

    o1_full, o2_full = pl.pallas_call(
        kernel,
        out_shape=(jax.ShapeDtypeStruct((TB, feat), jnp.float32),
                   jax.ShapeDtypeStruct((TB, feat), jnp.float32)),
    )(*flat)

    def to_output(o_full):
        o = o_full[Bn:].reshape(F, Bn, feat, 1)                       # drop cond token rows
        return jnp.transpose(o, (1, 2, 3, 0))                         # [B, FEAT, 1, F]

    return jnp.concatenate([to_output(o1_full), to_output(o2_full)], axis=1)


# ----------------------------- parameter init --------------------------------
def make_positional_encoding(max_len, d):
    pos = jnp.arange(max_len, dtype=jnp.float32)[:, None]
    div = jnp.exp(jnp.arange(0, d, 2, dtype=jnp.float32) * (-math.log(10000.0) / d))
    pe = jnp.zeros((max_len, d), jnp.float32)
    pe = pe.at[:, 0::2].set(jnp.sin(pos * div))
    pe = pe.at[:, 1::2].set(jnp.cos(pos * div))
    return pe


def init_linear(key, fan_in, fan_out):
    k1, k2 = jax.random.split(key)
    w = jax.random.normal(k1, (fan_in, fan_out), jnp.float32) * 0.02
    b = jax.random.normal(k2, (1, fan_out), jnp.float32) * 0.02
    return w, b


def init_layer(key, d, ff):
    keys = jax.random.split(key, 4)
    wqkv, bqkv = init_linear(keys[0], d, 3 * d)      # packed Q/K/V projection
    wo, bo = init_linear(keys[1], d, d)
    w1, b1 = init_linear(keys[2], d, ff)
    w2, b2 = init_linear(keys[3], ff, d)
    return dict(wqkv=wqkv, bqkv=bqkv, wo=wo, bo=bo, w1=w1, b1=b1, w2=w2, b2=b2,
                ln1_g=jnp.ones((1, d), jnp.float32), ln1_b=jnp.zeros((1, d), jnp.float32),
                ln2_g=jnp.ones((1, d), jnp.float32), ln2_b=jnp.zeros((1, d), jnp.float32))


def init_params(key):
    # TODO(synk): torch.load(REFERENCE_CHECKPOINT) replaced by deterministic init.
    keys = jax.random.split(key, 5 + 2 * NUM_LAYERS)
    time_w1, time_b1 = init_linear(keys[0], D, D)
    time_w2, time_b2 = init_linear(keys[1], D, D)
    text_w, text_b = init_linear(keys[2], CLIP_DIM, D)
    in_w, in_b = init_linear(keys[3], FEAT, D)
    out_w, out_b = init_linear(keys[4], D, FEAT)
    actor_layers = [init_layer(keys[5 + i], D, FF) for i in range(NUM_LAYERS)]
    inject_layers = [init_layer(keys[5 + NUM_LAYERS + i], D, FF) for i in range(NUM_LAYERS)]
    return dict(pe=make_positional_encoding(PE_MAX_LEN, D),
                time_w1=time_w1, time_b1=time_b1, time_w2=time_w2, time_b2=time_b2,
                text_w=text_w, text_b=text_b,
                in_w=in_w, in_b=in_b, out_w=out_w, out_b=out_b,
                actor_layers=actor_layers, inject_layers=inject_layers)


# ----------------------------- main -------------------------------------------
if __name__ == "__main__":
    key = jax.random.PRNGKey(0)
    k_param, k_x, k_text = jax.random.split(key, 3)

    params = init_params(k_param)

    x = jax.random.normal(k_x, (B, 2 * FEAT, 1, FRAMES), jnp.float32)
    timesteps = jnp.array([5, 17], dtype=jnp.int32)
    y_mask = jnp.ones((B, 1, 1, FRAMES), dtype=bool)
    y_mask = y_mask.at[1, :, :, -2:].set(False)          # pad last 2 frames of item 1
    text_emb = jax.random.normal(k_text, (B, CLIP_DIM), jnp.float32)

    out = mdm_any_forward(params, x, timesteps, y_mask, text_emb)
    out = jax.block_until_ready(out)

    assert out.shape == (B, 2 * FEAT, 1, FRAMES), out.shape
    assert bool(jnp.all(jnp.isfinite(out)))
    print("KERNEL_OK")
</pallas_src>

<mosaic_0001>
module attributes {stable_mosaic.version = 11 : i64} {
  func.func @kernel(%arg0: memref<18x18xf32, #tpu.memory_space<vmem>>, %arg1: memref<18x2xf32, #tpu.memory_space<vmem>>, %arg2: memref<18x16xf32, #tpu.memory_space<vmem>>, %arg3: memref<2x1x64xf32, #tpu.memory_space<vmem>>, %arg4: memref<2x1x32xf32, #tpu.memory_space<vmem>>, %arg5: memref<2x1x32xf32, #tpu.memory_space<vmem>>, %arg6: memref<2x1x96xf32, #tpu.memory_space<vmem>>, %arg7: memref<2x1x32xf32, #tpu.memory_space<vmem>>, %arg8: memref<2x1x32xf32, #tpu.memory_space<vmem>>, %arg9: memref<2x1x32xf32, #tpu.memory_space<vmem>>, %arg10: memref<2x1x32xf32, #tpu.memory_space<vmem>>, %arg11: memref<2x32x64xf32, #tpu.memory_space<vmem>>, %arg12: memref<2x64x32xf32, #tpu.memory_space<vmem>>, %arg13: memref<2x32x32xf32, #tpu.memory_space<vmem>>, %arg14: memref<2x32x96xf32, #tpu.memory_space<vmem>>, %arg15: memref<1x32xf32, #tpu.memory_space<vmem>>, %arg16: memref<6x32xf32, #tpu.memory_space<vmem>>, %arg17: memref<2x1x64xf32, #tpu.memory_space<vmem>>, %arg18: memref<2x1x32xf32, #tpu.memory_space<vmem>>, %arg19: memref<2x1x32xf32, #tpu.memory_space<vmem>>, %arg20: memref<2x1x96xf32, #tpu.memory_space<vmem>>, %arg21: memref<2x1x32xf32, #tpu.memory_space<vmem>>, %arg22: memref<2x1x32xf32, #tpu.memory_space<vmem>>, %arg23: memref<2x1x32xf32, #tpu.memory_space<vmem>>, %arg24: memref<2x1x32xf32, #tpu.memory_space<vmem>>, %arg25: memref<2x32x64xf32, #tpu.memory_space<vmem>>, %arg26: memref<2x64x32xf32, #tpu.memory_space<vmem>>, %arg27: memref<2x32x32xf32, #tpu.memory_space<vmem>>, %arg28: memref<2x32x96xf32, #tpu.memory_space<vmem>>, %arg29: memref<1x6xf32, #tpu.memory_space<vmem>>, %arg30: memref<32x6xf32, #tpu.memory_space<vmem>>, %arg31: memref<1x32xf32, #tpu.memory_space<vmem>>, %arg32: memref<16x32xf32, #tpu.memory_space<vmem>>, %arg33: memref<1x32xf32, #tpu.memory_space<vmem>>, %arg34: memref<1x32xf32, #tpu.memory_space<vmem>>, %arg35: memref<32x32xf32, #tpu.memory_space<vmem>>, %arg36: memref<32x32xf32, #tpu.memory_space<vmem>>, %arg37: memref<18x32xf32, #tpu.memory_space<vmem>>, %arg38: memref<2x32xf32, #tpu.memory_space<vmem>>, %arg39: memref<2x16xf32, #tpu.memory_space<vmem>>, %arg40: memref<16x6xf32, #tpu.memory_space<vmem>>, %arg41: memref<16x6xf32, #tpu.memory_space<vmem>>, %arg42: memref<18x6xf32, #tpu.memory_space<vmem>>, %arg43: memref<18x6xf32, #tpu.memory_space<vmem>>) attributes {dimension_semantics = [], scalar_prefetch = 0 : i64, scratch_operands = 0 : i64, tpu.core_type = #tpu.core_type<tc>} {
    %c0 = arith.constant 0 : index
    %c0_0 = arith.constant 0 : index
    %0 = vector.load %arg0[%c0, %c0_0] : memref<18x18xf32, #tpu.memory_space<vmem>>, vector<18x18xf32>
    %c0_1 = arith.constant 0 : index
    %c0_2 = arith.constant 0 : index
    %1 = vector.load %arg1[%c0_1, %c0_2] : memref<18x2xf32, #tpu.memory_space<vmem>>, vector<18x2xf32>
    %c0_3 = arith.constant 0 : index
    %c0_4 = arith.constant 0 : index
    %2 = vector.load %arg2[%c0_3, %c0_4] : memref<18x16xf32, #tpu.memory_space<vmem>>, vector<18x16xf32>
    %c0_5 = arith.constant 0 : index
    %c0_6 = arith.constant 0 : index
    %c0_7 = arith.constant 0 : index
    %3 = vector.load %arg3[%c0_5, %c0_6, %c0_7] : memref<2x1x64xf32, #tpu.memory_space<vmem>>, vector<2x1x64xf32>
    %c0_8 = arith.constant 0 : index
    %c0_9 = arith.constant 0 : index
    %c0_10 = arith.constant 0 : index
    %4 = vector.load %arg4[%c0_8, %c0_9, %c0_10] : memref<2x1x32xf32, #tpu.memory_space<vmem>>, vector<2x1x32xf32>
    %c0_11 = arith.constant 0 : index
    %c0_12 = arith.constant 0 : index
    %c0_13 = arith.constant 0 : index
    %5 = vector.load %arg5[%c0_11, %c0_12, %c0_13] : memref<2x1x32xf32, #tpu.memory_space<vmem>>, vector<2x1x32xf32>
    %c0_14 = arith.constant 0 : index
    %c0_15 = arith.constant 0 : index
    %c0_16 = arith.constant 0 : index
    %6 = vector.load %arg6[%c0_14, %c0_15, %c0_16] : memref<2x1x96xf32, #tpu.memory_space<vmem>>, vector<2x1x96xf32>
    %c0_17 = arith.constant 0 : index
    %c0_18 = arith.constant 0 : index
    %c0_19 = arith.constant 0 : index
    %7 = vector.load %arg7[%c0_17, %c0_18, %c0_19] : memref<2x1x32xf32, #tpu.memory_space<vmem>>, vector<2x1x32xf32>
    %c0_20 = arith.constant 0 : index
    %c0_21 = arith.constant 0 : index
    %c0_22 = arith.constant 0 : index
    %8 = vector.load %arg8[%c0_20, %c0_21, %c0_22] : memref<2x1x32xf32, #tpu.memory_space<vmem>>, vector<2x1x32xf32>
    %c0_23 = arith.constant 0 : index
    %c0_24 = arith.constant 0 : index
    %c0_25 = arith.constant 0 : index
    %9 = vector.load %arg9[%c0_23, %c0_24, %c0_25] : memref<2x1x32xf32, #tpu.memory_space<vmem>>, vector<2x1x32xf32>
    %c0_26 = arith.constant 0 : index
    %c0_27 = arith.constant 0 : index
    %c0_28 = arith.constant 0 : index
    %10 = vector.load %arg10[%c0_26, %c0_27, %c0_28] : memref<2x1x32xf32, #tpu.memory_space<vmem>>, vector<2x1x32xf32>
    %c0_29 = arith.constant 0 : index
    %c0_30 = arith.constant 0 : index
    %c0_31 = arith.constant 0 : index
    %11 = vector.load %arg11[%c0_29, %c0_30, %c0_31] : memref<2x32x64xf32, #tpu.memory_space<vmem>>, vector<2x32x64xf32>
    %c0_32 = arith.constant 0 : index
    %c0_33 = arith.constant 0 : index
    %c0_34 = arith.constant 0 : index
    %12 = vector.load %arg12[%c0_32, %c0_33, %c0_34] : memref<2x64x32xf32, #tpu.memory_space<vmem>>, vector<2x64x32xf32>
    %c0_35 = arith.constant 0 : index
    %c0_36 = arith.constant 0 : index
    %c0_37 = arith.constant 0 : index
    %13 = vector.load %arg13[%c0_35, %c0_36, %c0_37] : memref<2x32x32xf32, #tpu.memory_space<vmem>>, vector<2x32x32xf32>
    %c0_38 = arith.constant 0 : index
    %c0_39 = arith.constant 0 : index
    %c0_40 = arith.constant 0 : index
    %14 = vector.load %arg14[%c0_38, %c0_39, %c0_40] : memref<2x32x96xf32, #tpu.memory_space<vmem>>, vector<2x32x96xf32>
    %c0_41 = arith.constant 0 : index
    %c0_42 = arith.constant 0 : index
    %15 = vector.load %arg15[%c0_41, %c0_42] : memref<1x32xf32, #tpu.memory_space<vmem>>, vector<1x32xf32>
    %c0_43 = arith.constant 0 : index
    %c0_44 = arith.constant 0 : index
    %16 = vector.load %arg16[%c0_43, %c0_44] : memref<6x32xf32, #tpu.memory_space<vmem>>, vector<6x32xf32>
    %c0_45 = arith.constant 0 : index
    %c0_46 = arith.constant 0 : index
    %c0_47 = arith.constant 0 : index
    %17 = vector.load %arg17[%c0_45, %c0_46, %c0_47] : memref<2x1x64xf32, #tpu.memory_space<vmem>>, vector<2x1x64xf32>
    %c0_48 = arith.constant 0 : index
    %c0_49 = arith.constant 0 : index
    %c0_50 = arith.constant 0 : index
    %18 = vector.load %arg18[%c0_48, %c0_49, %c0_50] : memref<2x1x32xf32, #tpu.memory_space<vmem>>, vector<2x1x32xf32>
    %c0_51 = arith.constant 0 : index
    %c0_52 = arith.constant 0 : index
    %c0_53 = arith.constant 0 : index
    %19 = vector.load %arg19[%c0_51, %c0_52, %c0_53] : memref<2x1x32xf32, #tpu.memory_space<vmem>>, vector<2x1x32xf32>
    %c0_54 = arith.constant 0 : index
    %c0_55 = arith.constant 0 : index
    %c0_56 = arith.constant 0 : index
    %20 = vector.load %arg20[%c0_54, %c0_55, %c0_56] : memref<2x1x96xf32, #tpu.memory_space<vmem>>, vector<2x1x96xf32>
    %c0_57 = arith.constant 0 : index
    %c0_58 = arith.constant 0 : index
    %c0_59 = arith.constant 0 : index
    %21 = vector.load %arg21[%c0_57, %c0_58, %c0_59] : memref<2x1x32xf32, #tpu.memory_space<vmem>>, vector<2x1x32xf32>
    %c0_60 = arith.constant 0 : index
    %c0_61 = arith.constant 0 : index
    %c0_62 = arith.constant 0 : index
    %22 = vector.load %arg22[%c0_60, %c0_61, %c0_62] : memref<2x1x32xf32, #tpu.memory_space<vmem>>, vector<2x1x32xf32>
    %c0_63 = arith.constant 0 : index
    %c0_64 = arith.constant 0 : index
    %c0_65 = arith.constant 0 : index
    %23 = vector.load %arg23[%c0_63, %c0_64, %c0_65] : memref<2x1x32xf32, #tpu.memory_space<vmem>>, vector<2x1x32xf32>
    %c0_66 = arith.constant 0 : index
    %c0_67 = arith.constant 0 : index
    %c0_68 = arith.constant 0 : index
    %24 = vector.load %arg24[%c0_66, %c0_67, %c0_68] : memref<2x1x32xf32, #tpu.memory_space<vmem>>, vector<2x1x32xf32>
    %c0_69 = arith.constant 0 : index
    %c0_70 = arith.constant 0 : index
    %c0_71 = arith.constant 0 : index
    %25 = vector.load %arg25[%c0_69, %c0_70, %c0_71] : memref<2x32x64xf32, #tpu.memory_space<vmem>>, vector<2x32x64xf32>
    %c0_72 = arith.constant 0 : index
    %c0_73 = arith.constant 0 : index
    %c0_74 = arith.constant 0 : index
    %26 = vector.load %arg26[%c0_72, %c0_73, %c0_74] : memref<2x64x32xf32, #tpu.memory_space<vmem>>, vector<2x64x32xf32>
    %c0_75 = arith.constant 0 : index
    %c0_76 = arith.constant 0 : index
    %c0_77 = arith.constant 0 : index
    %27 = vector.load %arg27[%c0_75, %c0_76, %c0_77] : memref<2x32x32xf32, #tpu.memory_space<vmem>>, vector<2x32x32xf32>
    %c0_78 = arith.constant 0 : index
    %c0_79 = arith.constant 0 : index
    %c0_80 = arith.constant 0 : index
    %28 = vector.load %arg28[%c0_78, %c0_79, %c0_80] : memref<2x32x96xf32, #tpu.memory_space<vmem>>, vector<2x32x96xf32>
    %c0_81 = arith.constant 0 : index
    %c0_82 = arith.constant 0 : index
    %29 = vector.load %arg29[%c0_81, %c0_82] : memref<1x6xf32, #tpu.memory_space<vmem>>, vector<1x6xf32>
    %c0_83 = arith.constant 0 : index
    %c0_84 = arith.constant 0 : index
    %30 = vector.load %arg30[%c0_83, %c0_84] : memref<32x6xf32, #tpu.memory_space<vmem>>, vector<32x6xf32>
    %c0_85 = arith.constant 0 : index
    %c0_86 = arith.constant 0 : index
    %31 = vector.load %arg31[%c0_85, %c0_86] : memref<1x32xf32, #tpu.memory_space<vmem>>, vector<1x32xf32>
    %c0_87 = arith.constant 0 : index
    %c0_88 = arith.constant 0 : index
    %32 = vector.load %arg32[%c0_87, %c0_88] : memref<16x32xf32, #tpu.memory_space<vmem>>, vector<16x32xf32>
    %c0_89 = arith.constant 0 : index
    %c0_90 = arith.constant 0 : index
    %33 = vector.load %arg33[%c0_89, %c0_90] : memref<1x32xf32, #tpu.memory_space<vmem>>, vector<1x32xf32>
    %c0_91 = arith.constant 0 : index
    %c0_92 = arith.constant 0 : index
    %34 = vector.load %arg34[%c0_91, %c0_92] : memref<1x32xf32, #tpu.memory_space<vmem>>, vector<1x32xf32>
    %c0_93 = arith.constant 0 : index
    %c0_94 = arith.constant 0 : index
    %35 = vector.load %arg35[%c0_93, %c0_94] : memref<32x32xf32, #tpu.memory_space<vmem>>, vector<32x32xf32>
    %c0_95 = arith.constant 0 : index
    %c0_96 = arith.constant 0 : index
    %36 = vector.load %arg36[%c0_95, %c0_96] : memref<32x32xf32, #tpu.memory_space<vmem>>, vector<32x32xf32>
    %c0_97 = arith.constant 0 : index
    %c0_98 = arith.constant 0 : index
    %37 = vector.load %arg37[%c0_97, %c0_98] : memref<18x32xf32, #tpu.memory_space<vmem>>, vector<18x32xf32>
    %c0_99 = arith.constant 0 : index
    %c0_100 = arith.constant 0 : index
    %38 = vector.load %arg38[%c0_99, %c0_100] : memref<2x32xf32, #tpu.memory_space<vmem>>, vector<2x32xf32>
    %c0_101 = arith.constant 0 : index
    %c0_102 = arith.constant 0 : index
    %39 = vector.load %arg39[%c0_101, %c0_102] : memref<2x16xf32, #tpu.memory_space<vmem>>, vector<2x16xf32>
    %c0_103 = arith.constant 0 : index
    %c0_104 = arith.constant 0 : index
    %40 = vector.load %arg40[%c0_103, %c0_104] : memref<16x6xf32, #tpu.memory_space<vmem>>, vector<16x6xf32>
    %c0_105 = arith.constant 0 : index
    %c0_106 = arith.constant 0 : index
    %41 = vector.load %arg41[%c0_105, %c0_106] : memref<16x6xf32, #tpu.memory_space<vmem>>, vector<16x6xf32>
    %cst = arith.constant dense<0.000000e+00> : vector<2x32xf32>
    %42 = tpu.matmul %38, %35, %cst {dimension_numbers = #tpu.dot_dimension_numbers<[1], [0], [0], [1], [0, 0, 1, 1], [], []>} : vector<2x32xf32>, vector<32x32xf32>, vector<2x32xf32> -> vector<2x32xf32>
    %43 = vector.broadcast %33 : vector<1x32xf32> to vector<2x32xf32>
    %44 = arith.addf %42, %43 : vector<2x32xf32>
    %45 = arith.negf %44 : vector<2x32xf32>
    %46 = math.exp %45 : vector<2x32xf32>
    %cst_107 = arith.constant 1.000000e+00 : f32
    %47 = vector.broadcast %cst_107 : f32 to vector<2x32xf32>
    %48 = arith.addf %47, %46 : vector<2x32xf32>
    %49 = arith.divf %47, %48 : vector<2x32xf32>
    %50 = arith.mulf %44, %49 : vector<2x32xf32>
    %cst_108 = arith.constant dense<0.000000e+00> : vector<2x32xf32>
    %51 = tpu.matmul %50, %36, %cst_108 {dimension_numbers = #tpu.dot_dimension_numbers<[1], [0], [0], [1], [0, 0, 1, 1], [], []>} : vector<2x32xf32>, vector<32x32xf32>, vector<2x32xf32> -> vector<2x32xf32>
    %52 = vector.broadcast %34 : vector<1x32xf32> to vector<2x32xf32>
    %53 = arith.addf %51, %52 : vector<2x32xf32>
    %cst_109 = arith.constant dense<0.000000e+00> : vector<2x32xf32>
    %54 = tpu.matmul %39, %32, %cst_109 {dimension_numbers = #tpu.dot_dimension_numbers<[1], [0], [0], [1], [0, 0, 1, 1], [], []>} : vector<2x16xf32>, vector<16x32xf32>, vector<2x32xf32> -> vector<2x32xf32>
    %55 = vector.broadcast %31 : vector<1x32xf32> to vector<2x32xf32>
    %56 = arith.addf %54, %55 : vector<2x32xf32>
    %57 = arith.addf %53, %56 : vector<2x32xf32>
    %cst_110 = arith.constant dense<0.000000e+00> : vector<16x32xf32>
    %58 = tpu.matmul %40, %16, %cst_110 {dimension_numbers = #tpu.dot_dimension_numbers<[1], [0], [0], [1], [0, 0, 1, 1], [], []>} : vector<16x6xf32>, vector<6x32xf32>, vector<16x32xf32> -> vector<16x32xf32>
    %59 = vector.broadcast %15 : vector<1x32xf32> to vector<16x32xf32>
    %60 = arith.addf %58, %59 : vector<16x32xf32>
    %cst_111 = arith.constant dense<0.000000e+00> : vector<18x32xf32>
    %61 = tpu.matmul %1, %57, %cst_111 {dimension_numbers = #tpu.dot_dimension_numbers<[1], [0], [0], [1], [0, 0, 1, 1], [], []>} : vector<18x2xf32>, vector<2x32xf32>, vector<18x32xf32> -> vector<18x32xf32>
    %cst_112 = arith.constant dense<0.000000e+00> : vector<18x32xf32>
    %62 = tpu.matmul %2, %60, %cst_112 {dimension_numbers = #tpu.dot_dimension_numbers<[1], [0], [0], [1], [0, 0, 1, 1], [], []>} : vector<18x16xf32>, vector<16x32xf32>, vector<18x32xf32> -> vector<18x32xf32>
    %63 = arith.addf %61, %62 : vector<18x32xf32>
    %64 = arith.addf %63, %37 : vector<18x32xf32>
    %cst_113 = arith.constant dense<0.000000e+00> : vector<16x32xf32>
    %65 = tpu.matmul %41, %16, %cst_113 {dimension_numbers = #tpu.dot_dimension_numbers<[1], [0], [0], [1], [0, 0, 1, 1], [], []>} : vector<16x6xf32>, vector<6x32xf32>, vector<16x32xf32> -> vector<16x32xf32>
    %66 = vector.broadcast %15 : vector<1x32xf32> to vector<16x32xf32>
    %67 = arith.addf %65, %66 : vector<16x32xf32>
    %cst_114 = arith.constant dense<0.000000e+00> : vector<18x32xf32>
    %68 = tpu.matmul %1, %57, %cst_114 {dimension_numbers = #tpu.dot_dimension_numbers<[1], [0], [0], [1], [0, 0, 1, 1], [], []>} : vector<18x2xf32>, vector<2x32xf32>, vector<18x32xf32> -> vector<18x32xf32>
    %cst_115 = arith.constant dense<0.000000e+00> : vector<18x32xf32>
    %69 = tpu.matmul %2, %67, %cst_115 {dimension_numbers = #tpu.dot_dimension_numbers<[1], [0], [0], [1], [0, 0, 1, 1], [], []>} : vector<18x16xf32>, vector<16x32xf32>, vector<18x32xf32> -> vector<18x32xf32>
    %70 = arith.addf %68, %69 : vector<18x32xf32>
    %71 = arith.addf %70, %37 : vector<18x32xf32>
    %72 = vector.extract_strided_slice %3 {offsets = [0, 0, 0], sizes = [1, 1, 64], strides = [1, 1, 1]} : vector<2x1x64xf32> to vector<1x1x64xf32>
    %73 = vector.shape_cast %72 : vector<1x1x64xf32> to vector<1x64xf32>
    %74 = vector.extract_strided_slice %4 {offsets = [0, 0, 0], sizes = [1, 1, 32], strides = [1, 1, 1]} : vector<2x1x32xf32> to vector<1x1x32xf32>
    %75 = vector.shape_cast %74 : vector<1x1x32xf32> to vector<1x32xf32>
    %76 = vector.extract_strided_slice %5 {offsets = [0, 0, 0], sizes = [1, 1, 32], strides = [1, 1, 1]} : vector<2x1x32xf32> to vector<1x1x32xf32>
    %77 = vector.shape_cast %76 : vector<1x1x32xf32> to vector<1x32xf32>
    %78 = vector.extract_strided_slice %6 {offsets = [0, 0, 0], sizes = [1, 1, 96], strides = [1, 1, 1]} : vector<2x1x96xf32> to vector<1x1x96xf32>
    %79 = vector.shape_cast %78 : vector<1x1x96xf32> to vector<1x96xf32>
    %80 = vector.extract_strided_slice %7 {offsets = [0, 0, 0], sizes = [1, 1, 32], strides = [1, 1, 1]} : vector<2x1x32xf32> to vector<1x1x32xf32>
    %81 = vector.shape_cast %80 : vector<1x1x32xf32> to vector<1x32xf32>
    %82 = vector.extract_strided_slice %8 {offsets = [0, 0, 0], sizes = [1, 1, 32], strides = [1, 1, 1]} : vector<2x1x32xf32> to vector<1x1x32xf32>
    %83 = vector.shape_cast %82 : vector<1x1x32xf32> to vector<1x32xf32>
    %84 = vector.extract_strided_slice %9 {offsets = [0, 0, 0], sizes = [1, 1, 32], strides = [1, 1, 1]} : vector<2x1x32xf32> to vector<1x1x32xf32>
    %85 = vector.shape_cast %84 : vector<1x1x32xf32> to vector<1x32xf32>
    %86 = vector.extract_strided_slice %10 {offsets = [0, 0, 0], sizes = [1, 1, 32], strides = [1, 1, 1]} : vector<2x1x32xf32> to vector<1x1x32xf32>
    %87 = vector.shape_cast %86 : vector<1x1x32xf32> to vector<1x32xf32>
    %88 = vector.extract_strided_slice %11 {offsets = [0, 0, 0], sizes = [1, 32, 64], strides = [1, 1, 1]} : vector<2x32x64xf32> to vector<1x32x64xf32>
    %89 = vector.shape_cast %88 : vector<1x32x64xf32> to vector<32x64xf32>
    %90 = vector.extract_strided_slice %12 {offsets = [0, 0, 0], sizes = [1, 64, 32], strides = [1, 1, 1]} : vector<2x64x32xf32> to vector<1x64x32xf32>
    %91 = vector.shape_cast %90 : vector<1x64x32xf32> to vector<64x32xf32>
    %92 = vector.extract_strided_slice %13 {offsets = [0, 0, 0], sizes = [1, 32, 32], strides = [1, 1, 1]} : vector<2x32x32xf32> to vector<1x32x32xf32>
    %93 = vector.shape_cast %92 : vector<1x32x32xf32> to vector<32x32xf32>
    %94 = vector.extract_strided_slice %14 {offsets = [0, 0, 0], sizes = [1, 32, 96], strides = [1, 1, 1]} : vector<2x32x96xf32> to vector<1x32x96xf32>
    %95 = vector.shape_cast %94 : vector<1x32x96xf32> to vector<32x96xf32>
    %cst_116 = arith.constant dense<0.000000e+00> : vector<18x96xf32>
    %96 = tpu.matmul %64, %95, %cst_116 {dimension_numbers = #tpu.dot_dimension_numbers<[1], [0], [0], [1], [0, 0, 1, 1], [], []>} : vector<18x32xf32>, vector<32x96xf32>, vector<18x96xf32> -> vector<18x96xf32>
    %97 = vector.broadcast %79 : vector<1x96xf32> to vector<18x96xf32>
    %98 = arith.addf %96, %97 : vector<18x96xf32>
    %99 = vector.extract_strided_slice %98 {offsets = [0, 0], sizes = [18, 32], strides = [1, 1]} : vector<18x96xf32> to vector<18x32xf32>
    %cst_117 = arith.constant 2.500000e-01 : f32
    %100 = vector.broadcast %cst_117 : f32 to vector<18x32xf32>
    %101 = arith.mulf %99, %100 : vector<18x32xf32>
    %102 = vector.extract_strided_slice %98 {offsets = [0, 32], sizes = [18, 32], strides = [1, 1]} : vector<18x96xf32> to vector<18x32xf32>
    %103 = vector.extract_strided_slice %98 {offsets = [0, 64], sizes = [18, 32], strides = [1, 1]} : vector<18x96xf32> to vector<18x32xf32>
    %cst_118 = arith.constant 0.000000e+00 : f32
    %104 = vector.broadcast %cst_118 : f32 to vector<18x32xf32>
    %105 = vector.extract_strided_slice %101 {offsets = [0, 0], sizes = [18, 16], strides = [1, 1]} : vector<18x32xf32> to vector<18x16xf32>
    %106 = vector.extract_strided_slice %102 {offsets = [0, 0], sizes = [18, 16], strides = [1, 1]} : vector<18x32xf32> to vector<18x16xf32>
    %cst_119 = arith.constant dense<0.000000e+00> : vector<18x18xf32>
    %107 = tpu.matmul %105, %106, %cst_119 {dimension_numbers = #tpu.dot_dimension_numbers<[1], [1], [0], [0], [0, 0, 1, 0], [], []>} : vector<18x16xf32>, vector<18x16xf32>, vector<18x18xf32> -> vector<18x18xf32>
    %108 = arith.addf %107, %0 : vector<18x18xf32>
    %cst_120 = arith.constant dense<0xFF800000> : vector<18xf32>
    %109 = vector.multi_reduction <maximumf>, %108, %cst_120 [1] : vector<18x18xf32> to vector<18xf32>
    %110 = vector.shape_cast %109 : vector<18xf32> to vector<18x1xf32>
    %111 = vector.broadcast %110 : vector<18x1xf32> to vector<18x18xf32>
    %112 = arith.subf %108, %111 : vector<18x18xf32>
    %113 = math.exp %112 : vector<18x18xf32>
    %cst_121 = arith.constant dense<0.000000e+00> : vector<18xf32>
    %114 = vector.multi_reduction <add>, %113, %cst_121 [1] : vector<18x18xf32> to vector<18xf32>
    %115 = vector.shape_cast %114 : vector<18xf32> to vector<18x1xf32>
    %116 = tpu.reciprocal %115 {approx = true} : vector<18x1xf32> -> vector<18x1xf32>
    %117 = vector.extract_strided_slice %103 {offsets = [0, 0], sizes = [18, 16], strides = [1, 1]} : vector<18x32xf32> to vector<18x16xf32>
    %cst_122 = arith.constant dense<0.000000e+00> : vector<18x16xf32>
    %118 = tpu.matmul %113, %117, %cst_122 {dimension_numbers = #tpu.dot_dimension_numbers<[1], [0], [0], [1], [0, 0, 1, 1], [], []>} : vector<18x18xf32>, vector<18x16xf32>, vector<18x16xf32> -> vector<18x16xf32>
    %119 = vector.broadcast %116 : vector<18x1xf32> to vector<18x16xf32>
    %120 = arith.mulf %118, %119 : vector<18x16xf32>
    %121 = vector.extract_strided_slice %93 {offsets = [0, 0], sizes = [16, 32], strides = [1, 1]} : vector<32x32xf32> to vector<16x32xf32>
    %cst_123 = arith.constant dense<0.000000e+00> : vector<18x32xf32>
    %122 = tpu.matmul %120, %121, %cst_123 {dimension_numbers = #tpu.dot_dimension_numbers<[1], [0], [0], [1], [0, 0, 1, 1], [], []>} : vector<18x16xf32>, vector<16x32xf32>, vector<18x32xf32> -> vector<18x32xf32>
    %123 = arith.addf %104, %122 : vector<18x32xf32>
    %124 = vector.extract_strided_slice %101 {offsets = [0, 16], sizes = [18, 16], strides = [1, 1]} : vector<18x32xf32> to vector<18x16xf32>
    %125 = vector.extract_strided_slice %102 {offsets = [0, 16], sizes = [18, 16], strides = [1, 1]} : vector<18x32xf32> to vector<18x16xf32>
    %cst_124 = arith.constant dense<0.000000e+00> : vector<18x18xf32>
    %126 = tpu.matmul %124, %125, %cst_124 {dimension_numbers = #tpu.dot_dimension_numbers<[1], [1], [0], [0], [0, 0, 1, 0], [], []>} : vector<18x16xf32>, vector<18x16xf32>, vector<18x18xf32> -> vector<18x18xf32>
    %127 = arith.addf %126, %0 : vector<18x18xf32>
    %cst_125 = arith.constant dense<0xFF800000> : vector<18xf32>
    %128 = vector.multi_reduction <maximumf>, %127, %cst_125 [1] : vector<18x18xf32> to vector<18xf32>
    %129 = vector.shape_cast %128 : vector<18xf32> to vector<18x1xf32>
    %130 = vector.broadcast %129 : vector<18x1xf32> to vector<18x18xf32>
    %131 = arith.subf %127, %130 : vector<18x18xf32>
    %132 = math.exp %131 : vector<18x18xf32>
    %cst_126 = arith.constant dense<0.000000e+00> : vector<18xf32>
    %133 = vector.multi_reduction <add>, %132, %cst_126 [1] : vector<18x18xf32> to vector<18xf32>
    %134 = vector.shape_cast %133 : vector<18xf32> to vector<18x1xf32>
    %135 = tpu.reciprocal %134 {approx = true} : vector<18x1xf32> -> vector<18x1xf32>
    %136 = vector.extract_strided_slice %103 {offsets = [0, 16], sizes = [18, 16], strides = [1, 1]} : vector<18x32xf32> to vector<18x16xf32>
    %cst_127 = arith.constant dense<0.000000e+00> : vector<18x16xf32>
    %137 = tpu.matmul %132, %136, %cst_127 {dimension_numbers = #tpu.dot_dimension_numbers<[1], [0], [0], [1], [0, 0, 1, 1], [], []>} : vector<18x18xf32>, vector<18x16xf32>, vector<18x16xf32> -> vector<18x16xf32>
    %138 = vector.broadcast %135 : vector<18x1xf32> to vector<18x16xf32>
    %139 = arith.mulf %137, %138 : vector<18x16xf32>
    %140 = vector.extract_strided_slice %93 {offsets = [16, 0], sizes = [16, 32], strides = [1, 1]} : vector<32x32xf32> to vector<16x32xf32>
    %cst_128 = arith.constant dense<0.000000e+00> : vector<18x32xf32>
    %141 = tpu.matmul %139, %140, %cst_128 {dimension_numbers = #tpu.dot_dimension_numbers<[1], [0], [0], [1], [0, 0, 1, 1], [], []>} : vector<18x16xf32>, vector<16x32xf32>, vector<18x32xf32> -> vector<18x32xf32>
    %142 = arith.addf %123, %141 : vector<18x32xf32>
    %143 = vector.broadcast %77 : vector<1x32xf32> to vector<18x32xf32>
    %144 = arith.addf %142, %143 : vector<18x32xf32>
    %145 = arith.addf %64, %144 : vector<18x32xf32>
    %cst_129 = arith.constant dense<0.000000e+00> : vector<18xf32>
    %146 = vector.multi_reduction <add>, %145, %cst_129 [1] : vector<18x32xf32> to vector<18xf32>
    %147 = vector.shape_cast %146 : vector<18xf32> to vector<18x1xf32>
    %cst_130 = arith.constant 3.200000e+01 : f32
    %148 = vector.broadcast %cst_130 : f32 to vector<18x1xf32>
    %149 = arith.divf %147, %148 : vector<18x1xf32>
    %150 = vector.broadcast %149 : vector<18x1xf32> to vector<18x32xf32>
    %151 = arith.subf %145, %150 : vector<18x32xf32>
    %152 = arith.mulf %151, %151 : vector<18x32xf32>
    %cst_131 = arith.constant dense<0.000000e+00> : vector<18xf32>
    %153 = vector.multi_reduction <add>, %152, %cst_131 [1] : vector<18x32xf32> to vector<18xf32>
    %154 = vector.shape_cast %153 : vector<18xf32> to vector<18x1xf32>
    %cst_132 = arith.constant 3.200000e+01 : f32
    %155 = vector.broadcast %cst_132 : f32 to vector<18x1xf32>
    %156 = arith.divf %154, %155 : vector<18x1xf32>
    %cst_133 = arith.constant 9.99999974E-6 : f32
    %157 = vector.broadcast %cst_133 : f32 to vector<18x1xf32>
    %158 = arith.addf %156, %157 : vector<18x1xf32>
    %159 = math.rsqrt %158 : vector<18x1xf32>
    %160 = vector.broadcast %159 : vector<18x1xf32> to vector<18x32xf32>
    %161 = arith.mulf %151, %160 : vector<18x32xf32>
    %162 = vector.broadcast %83 : vector<1x32xf32> to vector<18x32xf32>
    %163 = arith.mulf %161, %162 : vector<18x32xf32>
    %164 = vector.broadcast %81 : vector<1x32xf32> to vector<18x32xf32>
    %165 = arith.addf %163, %164 : vector<18x32xf32>
    %cst_134 = arith.constant dense<0.000000e+00> : vector<18x64xf32>
    %166 = tpu.matmul %165, %89, %cst_134 {dimension_numbers = #tpu.dot_dimension_numbers<[1], [0], [0], [1], [0, 0, 1, 1], [], []>} : vector<18x32xf32>, vector<32x64xf32>, vector<18x64xf32> -> vector<18x64xf32>
    %167 = vector.broadcast %73 : vector<1x64xf32> to vector<18x64xf32>
    %168 = arith.addf %166, %167 : vector<18x64xf32>
    %169 = arith.mulf %168, %168 : vector<18x64xf32>
    %170 = arith.mulf %168, %169 : vector<18x64xf32>
    %cst_135 = arith.constant 4.471500e-02 : f32
    %171 = vector.broadcast %cst_135 : f32 to vector<18x64xf32>
    %172 = arith.mulf %171, %170 : vector<18x64xf32>
    %173 = arith.addf %168, %172 : vector<18x64xf32>
    %cst_136 = arith.constant 0.797884583 : f32
    %174 = vector.broadcast %cst_136 : f32 to vector<18x64xf32>
    %175 = arith.mulf %174, %173 : vector<18x64xf32>
    %176 = math.tanh %175 : vector<18x64xf32>
    %cst_137 = arith.constant 1.000000e+00 : f32
    %177 = vector.broadcast %cst_137 : f32 to vector<18x64xf32>
    %178 = arith.addf %177, %176 : vector<18x64xf32>
    %cst_138 = arith.constant 5.000000e-01 : f32
    %179 = vector.broadcast %cst_138 : f32 to vector<18x64xf32>
    %180 = arith.mulf %179, %178 : vector<18x64xf32>
    %181 = arith.mulf %168, %180 : vector<18x64xf32>
    %cst_139 = arith.constant dense<0.000000e+00> : vector<18x32xf32>
    %182 = tpu.matmul %181, %91, %cst_139 {dimension_numbers = #tpu.dot_dimension_numbers<[1], [0], [0], [1], [0, 0, 1, 1], [], []>} : vector<18x64xf32>, vector<64x32xf32>, vector<18x32xf32> -> vector<18x32xf32>
    %183 = vector.broadcast %75 : vector<1x32xf32> to vector<18x32xf32>
    %184 = arith.addf %182, %183 : vector<18x32xf32>
    %185 = arith.addf %165, %184 : vector<18x32xf32>
    %cst_140 = arith.constant dense<0.000000e+00> : vector<18xf32>
    %186 = vector.multi_reduction <add>, %185, %cst_140 [1] : vector<18x32xf32> to vector<18xf32>
    %187 = vector.shape_cast %186 : vector<18xf32> to vector<18x1xf32>
    %cst_141 = arith.constant 3.200000e+01 : f32
    %188 = vector.broadcast %cst_141 : f32 to vector<18x1xf32>
    %189 = arith.divf %187, %188 : vector<18x1xf32>
    %190 = vector.broadcast %189 : vector<18x1xf32> to vector<18x32xf32>
    %191 = arith.subf %185, %190 : vector<18x32xf32>
    %192 = arith.mulf %191, %191 : vector<18x32xf32>
    %cst_142 = arith.constant dense<0.000000e+00> : vector<18xf32>
    %193 = vector.multi_reduction <add>, %192, %cst_142 [1] : vector<18x32xf32> to vector<18xf32>
    %194 = vector.shape_cast %193 : vector<18xf32> to vector<18x1xf32>
    %cst_143 = arith.constant 3.200000e+01 : f32
    %195 = vector.broadcast %cst_143 : f32 to vector<18x1xf32>
    %196 = arith.divf %194, %195 : vector<18x1xf32>
    %cst_144 = arith.constant 9.99999974E-6 : f32
    %197 = vector.broadcast %cst_144 : f32 to vector<18x1xf32>
    %198 = arith.addf %196, %197 : vector<18x1xf32>
    %199 = math.rsqrt %198 : vector<18x1xf32>
    %200 = vector.broadcast %199 : vector<18x1xf32> to vector<18x32xf32>
    %201 = arith.mulf %191, %200 : vector<18x32xf32>
    %202 = vector.broadcast %87 : vector<1x32xf32> to vector<18x32xf32>
    %203 = arith.mulf %201, %202 : vector<18x32xf32>
    %204 = vector.broadcast %85 : vector<1x32xf32> to vector<18x32xf32>
    %205 = arith.addf %203, %204 : vector<18x32xf32>
    %206 = vector.extract_strided_slice %3 {offsets = [1, 0, 0], sizes = [1, 1, 64], strides = [1, 1, 1]} : vector<2x1x64xf32> to vector<1x1x64xf32>
    %207 = vector.shape_cast %206 : vector<1x1x64xf32> to vector<1x64xf32>
    %208 = vector.extract_strided_slice %4 {offsets = [1, 0, 0], sizes = [1, 1, 32], strides = [1, 1, 1]} : vector<2x1x32xf32> to vector<1x1x32xf32>
    %209 = vector.shape_cast %208 : vector<1x1x32xf32> to vector<1x32xf32>
    %210 = vector.extract_strided_slice %5 {offsets = [1, 0, 0], sizes = [1, 1, 32], strides = [1, 1, 1]} : vector<2x1x32xf32> to vector<1x1x32xf32>
    %211 = vector.shape_cast %210 : vector<1x1x32xf32> to vector<1x32xf32>
    %212 = vector.extract_strided_slice %6 {offsets = [1, 0, 0], sizes = [1, 1, 96], strides = [1, 1, 1]} : vector<2x1x96xf32> to vector<1x1x96xf32>
    %213 = vector.shape_cast %212 : vector<1x1x96xf32> to vector<1x96xf32>
    %214 = vector.extract_strided_slice %7 {offsets = [1, 0, 0], sizes = [1, 1, 32], strides = [1, 1, 1]} : vector<2x1x32xf32> to vector<1x1x32xf32>
    %215 = vector.shape_cast %214 : vector<1x1x32xf32> to vector<1x32xf32>
    %216 = vector.extract_strided_slice %8 {offsets = [1, 0, 0], sizes = [1, 1, 32], strides = [1, 1, 1]} : vector<2x1x32xf32> to vector<1x1x32xf32>
    %217 = vector.shape_cast %216 : vector<1x1x32xf32> to vector<1x32xf32>
    %218 = vector.extract_strided_slice %9 {offsets = [1, 0, 0], sizes = [1, 1, 32], strides = [1, 1, 1]} : vector<2x1x32xf32> to vector<1x1x32xf32>
    %219 = vector.shape_cast %218 : vector<1x1x32xf32> to vector<1x32xf32>
    %220 = vector.extract_strided_slice %10 {offsets = [1, 0, 0], sizes = [1, 1, 32], strides = [1, 1, 1]} : vector<2x1x32xf32> to vector<1x1x32xf32>
    %221 = vector.shape_cast %220 : vector<1x1x32xf32> to vector<1x32xf32>
    %222 = vector.extract_strided_slice %11 {offsets = [1, 0, 0], sizes = [1, 32, 64], strides = [1, 1, 1]} : vector<2x32x64xf32> to vector<1x32x64xf32>
    %223 = vector.shape_cast %222 : vector<1x32x64xf32> to vector<32x64xf32>
    %224 = vector.extract_strided_slice %12 {offsets = [1, 0, 0], sizes = [1, 64, 32], strides = [1, 1, 1]} : vector<2x64x32xf32> to vector<1x64x32xf32>
    %225 = vector.shape_cast %224 : vector<1x64x32xf32> to vector<64x32xf32>
    %226 = vector.extract_strided_slice %13 {offsets = [1, 0, 0], sizes = [1, 32, 32], strides = [1, 1, 1]} : vector<2x32x32xf32> to vector<1x32x32xf32>
    %227 = vector.shape_cast %226 : vector<1x32x32xf32> to vector<32x32xf32>
    %228 = vector.extract_strided_slice %14 {offsets = [1, 0, 0], sizes = [1, 32, 96], strides = [1, 1, 1]} : vector<2x32x96xf32> to vector<1x32x96xf32>
    %229 = vector.shape_cast %228 : vector<1x32x96xf32> to vector<32x96xf32>
    %cst_145 = arith.constant dense<0.000000e+00> : vector<18x96xf32>
    %230 = tpu.matmul %205, %229, %cst_145 {dimension_numbers = #tpu.dot_dimension_numbers<[1], [0], [0], [1], [0, 0, 1, 1], [], []>} : vector<18x32xf32>, vector<32x96xf32>, vector<18x96xf32> -> vector<18x96xf32>
    %231 = vector.broadcast %213 : vector<1x96xf32> to vector<18x96xf32>
    %232 = arith.addf %230, %231 : vector<18x96xf32>
    %233 = vector.extract_strided_slice %232 {offsets = [0, 0], sizes = [18, 32], strides = [1, 1]} : vector<18x96xf32> to vector<18x32xf32>
    %cst_146 = arith.constant 2.500000e-01 : f32
    %234 = vector.broadcast %cst_146 : f32 to vector<18x32xf32>
    %235 = arith.mulf %233, %234 : vector<18x32xf32>
    %236 = vector.extract_strided_slice %232 {offsets = [0, 32], sizes = [18, 32], strides = [1, 1]} : vector<18x96xf32> to vector<18x32xf32>
    %237 = vector.extract_strided_slice %232 {offsets = [0, 64], sizes = [18, 32], strides = [1, 1]} : vector<18x96xf32> to vector<18x32xf32>
    %cst_147 = arith.constant 0.000000e+00 : f32
    %238 = vector.broadcast %cst_147 : f32 to vector<18x32xf32>
    %239 = vector.extract_strided_slice %235 {offsets = [0, 0], sizes = [18, 16], strides = [1, 1]} : vector<18x32xf32> to vector<18x16xf32>
    %240 = vector.extract_strided_slice %236 {offsets = [0, 0], sizes = [18, 16], strides = [1, 1]} : vector<18x32xf32> to vector<18x16xf32>
    %cst_148 = arith.constant dense<0.000000e+00> : vector<18x18xf32>
    %241 = tpu.matmul %239, %240, %cst_148 {dimension_numbers = #tpu.dot_dimension_numbers<[1], [1], [0], [0], [0, 0, 1, 0], [], []>} : vector<18x16xf32>, vector<18x16xf32>, vector<18x18xf32> -> vector<18x18xf32>
    %242 = arith.addf %241, %0 : vector<18x18xf32>
    %cst_149 = arith.constant dense<0xFF800000> : vector<18xf32>
    %243 = vector.multi_reduction <maximumf>, %242, %cst_149 [1] : vector<18x18xf32> to vector<18xf32>
    %244 = vector.shape_cast %243 : vector<18xf32> to vector<18x1xf32>
    %245 = vector.broadcast %244 : vector<18x1xf32> to vector<18x18xf32>
    %246 = arith.subf %242, %245 : vector<18x18xf32>
    %247 = math.exp %246 : vector<18x18xf32>
    %cst_150 = arith.constant dense<0.000000e+00> : vector<18xf32>
    %248 = vector.multi_reduction <add>, %247, %cst_150 [1] : vector<18x18xf32> to vector<18xf32>
    %249 = vector.shape_cast %248 : vector<18xf32> to vector<18x1xf32>
    %250 = tpu.reciprocal %249 {approx = true} : vector<18x1xf32> -> vector<18x1xf32>
    %251 = vector.extract_strided_slice %237 {offsets = [0, 0], sizes = [18, 16], strides = [1, 1]} : vector<18x32xf32> to vector<18x16xf32>
    %cst_151 = arith.constant dense<0.000000e+00> : vector<18x16xf32>
    %252 = tpu.matmul %247, %251, %cst_151 {dimension_numbers = #tpu.dot_dimension_numbers<[1], [0], [0], [1], [0, 0, 1, 1], [], []>} : vector<18x18xf32>, vector<18x16xf32>, vector<18x16xf32> -> vector<18x16xf32>
    %253 = vector.broadcast %250 : vector<18x1xf32> to vector<18x16xf32>
    %254 = arith.mulf %252, %253 : vector<18x16xf32>
    %255 = vector.extract_strided_slice %227 {offsets = [0, 0], sizes = [16, 32], strides = [1, 1]} : vector<32x32xf32> to vector<16x32xf32>
    %cst_152 = arith.constant dense<0.000000e+00> : vector<18x32xf32>
    %256 = tpu.matmul %254, %255, %cst_152 {dimension_numbers = #tpu.dot_dimension_numbers<[1], [0], [0], [1], [0, 0, 1, 1], [], []>} : vector<18x16xf32>, vector<16x32xf32>, vector<18x32xf32> -> vector<18x32xf32>
    %257 = arith.addf %238, %256 : vector<18x32xf32>
    %258 = vector.extract_strided_slice %235 {offsets = [0, 16], sizes = [18, 16], strides = [1, 1]} : vector<18x32xf32> to vector<18x16xf32>
    %259 = vector.extract_strided_slice %236 {offsets = [0, 16], sizes = [18, 16], strides = [1, 1]} : vector<18x32xf32> to vector<18x16xf32>
    %cst_153 = arith.constant dense<0.000000e+00> : vector<18x18xf32>
    %260 = tpu.matmul %258, %259, %cst_153 {dimension_numbers = #tpu.dot_dimension_numbers<[1], [1], [0], [0], [0, 0, 1, 0], [], []>} : vector<18x16xf32>, vector<18x16xf32>, vector<18x18xf32> -> vector<18x18xf32>
    %261 = arith.addf %260, %0 : vector<18x18xf32>
    %cst_154 = arith.constant dense<0xFF800000> : vector<18xf32>
    %262 = vector.multi_reduction <maximumf>, %261, %cst_154 [1] : vector<18x18xf32> to vector<18xf32>
    %263 = vector.shape_cast %262 : vector<18xf32> to vector<18x1xf32>
    %264 = vector.broadcast %263 : vector<18x1xf32> to vector<18x18xf32>
    %265 = arith.subf %261, %264 : vector<18x18xf32>
    %266 = math.exp %265 : vector<18x18xf32>
    %cst_155 = arith.constant dense<0.000000e+00> : vector<18xf32>
    %267 = vector.multi_reduction <add>, %266, %cst_155 [1] : vector<18x18xf32> to vector<18xf32>
    %268 = vector.shape_cast %267 : vector<18xf32> to vector<18x1xf32>
    %269 = tpu.reciprocal %268 {approx = true} : vector<18x1xf32> -> vector<18x1xf32>
    %270 = vector.extract_strided_slice %237 {offsets = [0, 16], sizes = [18, 16], strides = [1, 1]} : vector<18x32xf32> to vector<18x16xf32>
    %cst_156 = arith.constant dense<0.000000e+00> : vector<18x16xf32>
    %271 = tpu.matmul %266, %270, %cst_156 {dimension_numbers = #tpu.dot_dimension_numbers<[1], [0], [0], [1], [0, 0, 1, 1], [], []>} : vector<18x18xf32>, vector<18x16xf32>, vector<18x16xf32> -> vector<18x16xf32>
    %272 = vector.broadcast %269 : vector<18x1xf32> to vector<18x16xf32>
    %273 = arith.mulf %271, %272 : vector<18x16xf32>
    %274 = vector.extract_strided_slice %227 {offsets = [16, 0], sizes = [16, 32], strides = [1, 1]} : vector<32x32xf32> to vector<16x32xf32>
    %cst_157 = arith.constant dense<0.000000e+00> : vector<18x32xf32>
    %275 = tpu.matmul %273, %274, %cst_157 {dimension_numbers = #tpu.dot_dimension_numbers<[1], [0], [0], [1], [0, 0, 1, 1], [], []>} : vector<18x16xf32>, vector<16x32xf32>, vector<18x32xf32> -> vector<18x32xf32>
    %276 = arith.addf %257, %275 : vector<18x32xf32>
    %277 = vector.broadcast %211 : vector<1x32xf32> to vector<18x32xf32>
    %278 = arith.addf %276, %277 : vector<18x32xf32>
    %279 = arith.addf %205, %278 : vector<18x32xf32>
    %cst_158 = arith.constant dense<0.000000e+00> : vector<18xf32>
    %280 = vector.multi_reduction <add>, %279, %cst_158 [1] : vector<18x32xf32> to vector<18xf32>
    %281 = vector.shape_cast %280 : vector<18xf32> to vector<18x1xf32>
    %cst_159 = arith.constant 3.200000e+01 : f32
    %282 = vector.broadcast %cst_159 : f32 to vector<18x1xf32>
    %283 = arith.divf %281, %282 : vector<18x1xf32>
    %284 = vector.broadcast %283 : vector<18x1xf32> to vector<18x32xf32>
    %285 = arith.subf %279, %284 : vector<18x32xf32>
    %286 = arith.mulf %285, %285 : vector<18x32xf32>
    %cst_160 = arith.constant dense<0.000000e+00> : vector<18xf32>
    %287 = vector.multi_reduction <add>, %286, %cst_160 [1] : vector<18x32xf32> to vector<18xf32>
    %288 = vector.shape_cast %287 : vector<18xf32> to vector<18x1xf32>
    %cst_161 = arith.constant 3.200000e+01 : f32
    %289 = vector.broadcast %cst_161 : f32 to vector<18x1xf32>
    %290 = arith.divf %288, %289 : vector<18x1xf32>
    %cst_162 = arith.constant 9.99999974E-6 : f32
    %291 = vector.broadcast %cst_162 : f32 to vector<18x1xf32>
    %292 = arith.addf %290, %291 : vector<18x1xf32>
    %293 = math.rsqrt %292 : vector<18x1xf32>
    %294 = vector.broadcast %293 : vector<18x1xf32> to vector<18x32xf32>
    %295 = arith.mulf %285, %294 : vector<18x32xf32>
    %296 = vector.broadcast %217 : vector<1x32xf32> to vector<18x32xf32>
    %297 = arith.mulf %295, %296 : vector<18x32xf32>
    %298 = vector.broadcast %215 : vector<1x32xf32> to vector<18x32xf32>
    %299 = arith.addf %297, %298 : vector<18x32xf32>
    %cst_163 = arith.constant dense<0.000000e+00> : vector<18x64xf32>
    %300 = tpu.matmul %299, %223, %cst_163 {dimension_numbers = #tpu.dot_dimension_numbers<[1], [0], [0], [1], [0, 0, 1, 1], [], []>} : vector<18x32xf32>, vector<32x64xf32>, vector<18x64xf32> -> vector<18x64xf32>
    %301 = vector.broadcast %207 : vector<1x64xf32> to vector<18x64xf32>
    %302 = arith.addf %300, %301 : vector<18x64xf32>
    %303 = arith.mulf %302, %302 : vector<18x64xf32>
    %304 = arith.mulf %302, %303 : vector<18x64xf32>
    %cst_164 = arith.constant 4.471500e-02 : f32
    %305 = vector.broadcast %cst_164 : f32 to vector<18x64xf32>
    %306 = arith.mulf %305, %304 : vector<18x64xf32>
    %307 = arith.addf %302, %306 : vector<18x64xf32>
    %cst_165 = arith.constant 0.797884583 : f32
    %308 = vector.broadcast %cst_165 : f32 to vector<18x64xf32>
    %309 = arith.mulf %308, %307 : vector<18x64xf32>
    %310 = math.tanh %309 : vector<18x64xf32>
    %cst_166 = arith.constant 1.000000e+00 : f32
    %311 = vector.broadcast %cst_166 : f32 to vector<18x64xf32>
    %312 = arith.addf %311, %310 : vector<18x64xf32>
    %cst_167 = arith.constant 5.000000e-01 : f32
    %313 = vector.broadcast %cst_167 : f32 to vector<18x64xf32>
    %314 = arith.mulf %313, %312 : vector<18x64xf32>
    %315 = arith.mulf %302, %314 : vector<18x64xf32>
    %cst_168 = arith.constant dense<0.000000e+00> : vector<18x32xf32>
    %316 = tpu.matmul %315, %225, %cst_168 {dimension_numbers = #tpu.dot_dimension_numbers<[1], [0], [0], [1], [0, 0, 1, 1], [], []>} : vector<18x64xf32>, vector<64x32xf32>, vector<18x32xf32> -> vector<18x32xf32>
    %317 = vector.broadcast %209 : vector<1x32xf32> to vector<18x32xf32>
    %318 = arith.addf %316, %317 : vector<18x32xf32>
    %319 = arith.addf %299, %318 : vector<18x32xf32>
    %cst_169 = arith.constant dense<0.000000e+00> : vector<18xf32>
    %320 = vector.multi_reduction <add>, %319, %cst_169 [1] : vector<18x32xf32> to vector<18xf32>
    %321 = vector.shape_cast %320 : vector<18xf32> to vector<18x1xf32>
    %cst_170 = arith.constant 3.200000e+01 : f32
    %322 = vector.broadcast %cst_170 : f32 to vector<18x1xf32>
    %323 = arith.divf %321, %322 : vector<18x1xf32>
    %324 = vector.broadcast %323 : vector<18x1xf32> to vector<18x32xf32>
    %325 = arith.subf %319, %324 : vector<18x32xf32>
    %326 = arith.mulf %325, %325 : vector<18x32xf32>
    %cst_171 = arith.constant dense<0.000000e+00> : vector<18xf32>
    %327 = vector.multi_reduction <add>, %326, %cst_171 [1] : vector<18x32xf32> to vector<18xf32>
    %328 = vector.shape_cast %327 : vector<18xf32> to vector<18x1xf32>
    %cst_172 = arith.constant 3.200000e+01 : f32
    %329 = vector.broadcast %cst_172 : f32 to vector<18x1xf32>
    %330 = arith.divf %328, %329 : vector<18x1xf32>
    %cst_173 = arith.constant 9.99999974E-6 : f32
    %331 = vector.broadcast %cst_173 : f32 to vector<18x1xf32>
    %332 = arith.addf %330, %331 : vector<18x1xf32>
    %333 = math.rsqrt %332 : vector<18x1xf32>
    %334 = vector.broadcast %333 : vector<18x1xf32> to vector<18x32xf32>
    %335 = arith.mulf %325, %334 : vector<18x32xf32>
    %336 = vector.broadcast %221 : vector<1x32xf32> to vector<18x32xf32>
    %337 = arith.mulf %335, %336 : vector<18x32xf32>
    %338 = vector.broadcast %219 : vector<1x32xf32> to vector<18x32xf32>
    %339 = arith.addf %337, %338 : vector<18x32xf32>
    %340 = vector.extract_strided_slice %17 {offsets = [0, 0, 0], sizes = [1, 1, 64], strides = [1, 1, 1]} : vector<2x1x64xf32> to vector<1x1x64xf32>
    %341 = vector.shape_cast %340 : vector<1x1x64xf32> to vector<1x64xf32>
    %342 = vector.extract_strided_slice %18 {offsets = [0, 0, 0], sizes = [1, 1, 32], strides = [1, 1, 1]} : vector<2x1x32xf32> to vector<1x1x32xf32>
    %343 = vector.shape_cast %342 : vector<1x1x32xf32> to vector<1x32xf32>
    %344 = vector.extract_strided_slice %19 {offsets = [0, 0, 0], sizes = [1, 1, 32], strides = [1, 1, 1]} : vector<2x1x32xf32> to vector<1x1x32xf32>
    %345 = vector.shape_cast %344 : vector<1x1x32xf32> to vector<1x32xf32>
    %346 = vector.extract_strided_slice %20 {offsets = [0, 0, 0], sizes = [1, 1, 96], strides = [1, 1, 1]} : vector<2x1x96xf32> to vector<1x1x96xf32>
    %347 = vector.shape_cast %346 : vector<1x1x96xf32> to vector<1x96xf32>
    %348 = vector.extract_strided_slice %21 {offsets = [0, 0, 0], sizes = [1, 1, 32], strides = [1, 1, 1]} : vector<2x1x32xf32> to vector<1x1x32xf32>
    %349 = vector.shape_cast %348 : vector<1x1x32xf32> to vector<1x32xf32>
    %350 = vector.extract_strided_slice %22 {offsets = [0, 0, 0], sizes = [1, 1, 32], strides = [1, 1, 1]} : vector<2x1x32xf32> to vector<1x1x32xf32>
    %351 = vector.shape_cast %350 : vector<1x1x32xf32> to vector<1x32xf32>
    %352 = vector.extract_strided_slice %23 {offsets = [0, 0, 0], sizes = [1, 1, 32], strides = [1, 1, 1]} : vector<2x1x32xf32> to vector<1x1x32xf32>
    %353 = vector.shape_cast %352 : vector<1x1x32xf32> to vector<1x32xf32>
    %354 = vector.extract_strided_slice %24 {offsets = [0, 0, 0], sizes = [1, 1, 32], strides = [1, 1, 1]} : vector<2x1x32xf32> to vector<1x1x32xf32>
    %355 = vector.shape_cast %354 : vector<1x1x32xf32> to vector<1x32xf32>
    %356 = vector.extract_strided_slice %25 {offsets = [0, 0, 0], sizes = [1, 32, 64], strides = [1, 1, 1]} : vector<2x32x64xf32> to vector<1x32x64xf32>
    %357 = vector.shape_cast %356 : vector<1x32x64xf32> to vector<32x64xf32>
    %358 = vector.extract_strided_slice %26 {offsets = [0, 0, 0], sizes = [1, 64, 32], strides = [1, 1, 1]} : vector<2x64x32xf32> to vector<1x64x32xf32>
    %359 = vector.shape_cast %358 : vector<1x64x32xf32> to vector<64x32xf32>
    %360 = vector.extract_strided_slice %27 {offsets = [0, 0, 0], sizes = [1, 32, 32], strides = [1, 1, 1]} : vector<2x32x32xf32> to vector<1x32x32xf32>
    %361 = vector.shape_cast %360 : vector<1x32x32xf32> to vector<32x32xf32>
    %362 = vector.extract_strided_slice %28 {offsets = [0, 0, 0], sizes = [1, 32, 96], strides = [1, 1, 1]} : vector<2x32x96xf32> to vector<1x32x96xf32>
    %363 = vector.shape_cast %362 : vector<1x32x96xf32> to vector<32x96xf32>
    %cst_174 = arith.constant dense<0.000000e+00> : vector<18x96xf32>
    %364 = tpu.matmul %71, %363, %cst_174 {dimension_numbers = #tpu.dot_dimension_numbers<[1], [0], [0], [1], [0, 0, 1, 1], [], []>} : vector<18x32xf32>, vector<32x96xf32>, vector<18x96xf32> -> vector<18x96xf32>
    %365 = vector.broadcast %347 : vector<1x96xf32> to vector<18x96xf32>
    %366 = arith.addf %364, %365 : vector<18x96xf32>
    %367 = vector.extract_strided_slice %366 {offsets = [0, 0], sizes = [18, 32], strides = [1, 1]} : vector<18x96xf32> to vector<18x32xf32>
    %cst_175 = arith.constant 0.353553385 : f32
    %368 = vector.broadcast %cst_175 : f32 to vector<18x32xf32>
    %369 = arith.mulf %367, %368 : vector<18x32xf32>
    %370 = vector.extract_strided_slice %366 {offsets = [0, 32], sizes = [18, 32], strides = [1, 1]} : vector<18x96xf32> to vector<18x32xf32>
    %371 = vector.extract_strided_slice %366 {offsets = [0, 64], sizes = [18, 32], strides = [1, 1]} : vector<18x96xf32> to vector<18x32xf32>
    %372 = vector.extract_strided_slice %363 {offsets = [0, 32], sizes = [32, 64], strides = [1, 1]} : vector<32x96xf32> to vector<32x64xf32>
    %cst_176 = arith.constant dense<0.000000e+00> : vector<18x64xf32>
    %373 = tpu.matmul %64, %372, %cst_176 {dimension_numbers = #tpu.dot_dimension_numbers<[1], [0], [0], [1], [0, 0, 1, 1], [], []>} : vector<18x32xf32>, vector<32x64xf32>, vector<18x64xf32> -> vector<18x64xf32>
    %374 = vector.extract_strided_slice %347 {offsets = [0, 32], sizes = [1, 64], strides = [1, 1]} : vector<1x96xf32> to vector<1x64xf32>
    %375 = vector.broadcast %374 : vector<1x64xf32> to vector<18x64xf32>
    %376 = arith.addf %373, %375 : vector<18x64xf32>
    %377 = vector.extract_strided_slice %376 {offsets = [0, 0], sizes = [18, 32], strides = [1, 1]} : vector<18x64xf32> to vector<18x32xf32>
    %378 = vector.extract_strided_slice %376 {offsets = [0, 32], sizes = [18, 32], strides = [1, 1]} : vector<18x64xf32> to vector<18x32xf32>
    %cst_177 = arith.constant 0.000000e+00 : f32
    %379 = vector.broadcast %cst_177 : f32 to vector<18x32xf32>
    %380 = vector.extract_strided_slice %369 {offsets = [0, 0], sizes = [18, 8], strides = [1, 1]} : vector<18x32xf32> to vector<18x8xf32>
    %381 = vector.extract_strided_slice %370 {offsets = [0, 0], sizes = [18, 8], strides = [1, 1]} : vector<18x32xf32> to vector<18x8xf32>
    %cst_178 = arith.constant dense<0.000000e+00> : vector<18x18xf32>
    %382 = tpu.matmul %380, %381, %cst_178 {dimension_numbers = #tpu.dot_dimension_numbers<[1], [1], [0], [0], [0, 0, 1, 0], [], []>} : vector<18x8xf32>, vector<18x8xf32>, vector<18x18xf32> -> vector<18x18xf32>
    %383 = arith.addf %382, %0 : vector<18x18xf32>
    %384 = vector.extract_strided_slice %377 {offsets = [0, 0], sizes = [18, 8], strides = [1, 1]} : vector<18x32xf32> to vector<18x8xf32>
    %cst_179 = arith.constant dense<0.000000e+00> : vector<18x18xf32>
    %385 = tpu.matmul %380, %384, %cst_179 {dimension_numbers = #tpu.dot_dimension_numbers<[1], [1], [0], [0], [0, 0, 1, 0], [], []>} : vector<18x8xf32>, vector<18x8xf32>, vector<18x18xf32> -> vector<18x18xf32>
    %386 = arith.addf %385, %0 : vector<18x18xf32>
    %cst_180 = arith.constant dense<0xFF800000> : vector<18xf32>
    %387 = vector.multi_reduction <maximumf>, %383, %cst_180 [1] : vector<18x18xf32> to vector<18xf32>
    %388 = vector.shape_cast %387 : vector<18xf32> to vector<18x1xf32>
    %cst_181 = arith.constant dense<0xFF800000> : vector<18xf32>
    %389 = vector.multi_reduction <maximumf>, %386, %cst_181 [1] : vector<18x18xf32> to vector<18xf32>
    %390 = vector.shape_cast %389 : vector<18xf32> to vector<18x1xf32>
    %391 = arith.maximumf %388, %390 : vector<18x1xf32>
    %392 = vector.broadcast %391 : vector<18x1xf32> to vector<18x18xf32>
    %393 = arith.subf %383, %392 : vector<18x18xf32>
    %394 = math.exp %393 : vector<18x18xf32>
    %395 = vector.broadcast %391 : vector<18x1xf32> to vector<18x18xf32>
    %396 = arith.subf %386, %395 : vector<18x18xf32>
    %397 = math.exp %396 : vector<18x18xf32>
    %cst_182 = arith.constant dense<0.000000e+00> : vector<18xf32>
    %398 = vector.multi_reduction <add>, %394, %cst_182 [1] : vector<18x18xf32> to vector<18xf32>
    %399 = vector.shape_cast %398 : vector<18xf32> to vector<18x1xf32>
    %cst_183 = arith.constant dense<0.000000e+00> : vector<18xf32>
    %400 = vector.multi_reduction <add>, %397, %cst_183 [1] : vector<18x18xf32> to vector<18xf32>
    %401 = vector.shape_cast %400 : vector<18xf32> to vector<18x1xf32>
    %402 = arith.addf %399, %401 : vector<18x1xf32>
    %403 = tpu.reciprocal %402 {approx = true} : vector<18x1xf32> -> vector<18x1xf32>
    %404 = vector.extract_strided_slice %371 {offsets = [0, 0], sizes = [18, 8], strides = [1, 1]} : vector<18x32xf32> to vector<18x8xf32>
    %cst_184 = arith.constant dense<0.000000e+00> : vector<18x8xf32>
    %405 = tpu.matmul %394, %404, %cst_184 {dimension_numbers = #tpu.dot_dimension_numbers<[1], [0], [0], [1], [0, 0, 1, 1], [], []>} : vector<18x18xf32>, vector<18x8xf32>, vector<18x8xf32> -> vector<18x8xf32>
    %406 = vector.extract_strided_slice %378 {offsets = [0, 0], sizes = [18, 8], strides = [1, 1]} : vector<18x32xf32> to vector<18x8xf32>
    %cst_185 = arith.constant dense<0.000000e+00> : vector<18x8xf32>
    %407 = tpu.matmul %397, %406, %cst_185 {dimension_numbers = #tpu.dot_dimension_numbers<[1], [0], [0], [1], [0, 0, 1, 1], [], []>} : vector<18x18xf32>, vector<18x8xf32>, vector<18x8xf32> -> vector<18x8xf32>
    %408 = arith.addf %405, %407 : vector<18x8xf32>
    %409 = vector.broadcast %403 : vector<18x1xf32> to vector<18x8xf32>
    %410 = arith.mulf %408, %409 : vector<18x8xf32>
    %411 = vector.extract_strided_slice %361 {offsets = [0, 0], sizes = [8, 32], strides = [1, 1]} : vector<32x32xf32> to vector<8x32xf32>
    %cst_186 = arith.constant dense<0.000000e+00> : vector<18x32xf32>
    %412 = tpu.matmul %410, %411, %cst_186 {dimension_numbers = #tpu.dot_dimension_numbers<[1], [0], [0], [1], [0, 0, 1, 1], [], []>} : vector<18x8xf32>, vector<8x32xf32>, vector<18x32xf32> -> vector<18x32xf32>
    %413 = arith.addf %379, %412 : vector<18x32xf32>
    %414 = vector.extract_strided_slice %369 {offsets = [0, 8], sizes = [18, 8], strides = [1, 1]} : vector<18x32xf32> to vector<18x8xf32>
    %415 = vector.extract_strided_slice %370 {offsets = [0, 8], sizes = [18, 8], strides = [1, 1]} : vector<18x32xf32> to vector<18x8xf32>
    %cst_187 = arith.constant dense<0.000000e+00> : vector<18x18xf32>
    %416 = tpu.matmul %414, %415, %cst_187 {dimension_numbers = #tpu.dot_dimension_numbers<[1], [1], [0], [0], [0, 0, 1, 0], [], []>} : vector<18x8xf32>, vector<18x8xf32>, vector<18x18xf32> -> vector<18x18xf32>
    %417 = arith.addf %416, %0 : vector<18x18xf32>
    %418 = vector.extract_strided_slice %377 {offsets = [0, 8], sizes = [18, 8], strides = [1, 1]} : vector<18x32xf32> to vector<18x8xf32>
    %cst_188 = arith.constant dense<0.000000e+00> : vector<18x18xf32>
    %419 = tpu.matmul %414, %418, %cst_188 {dimension_numbers = #tpu.dot_dimension_numbers<[1], [1], [0], [0], [0, 0, 1, 0], [], []>} : vector<18x8xf32>, vector<18x8xf32>, vector<18x18xf32> -> vector<18x18xf32>
    %420 = arith.addf %419, %0 : vector<18x18xf32>
    %cst_189 = arith.constant dense<0xFF800000> : vector<18xf32>
    %421 = vector.multi_reduction <maximumf>, %417, %cst_189 [1] : vector<18x18xf32> to vector<18xf32>
    %422 = vector.shape_cast %421 : vector<18xf32> to vector<18x1xf32>
    %cst_190 = arith.constant dense<0xFF800000> : vector<18xf32>
    %423 = vector.multi_reduction <maximumf>, %420, %cst_190 [1] : vector<18x18xf32> to vector<18xf32>
    %424 = vector.shape_cast %423 : vector<18xf32> to vector<18x1xf32>
    %425 = arith.maximumf %422, %424 : vector<18x1xf32>
    %426 = vector.broadcast %425 : vector<18x1xf32> to vector<18x18xf32>
    %427 = arith.subf %417, %426 : vector<18x18xf32>
    %428 = math.exp %427 : vector<18x18xf32>
    %429 = vector.broadcast %425 : vector<18x1xf32> to vector<18x18xf32>
    %430 = arith.subf %420, %429 : vector<18x18xf32>
    %431 = math.exp %430 : vector<18x18xf32>
    %cst_191 = arith.constant dense<0.000000e+00> : vector<18xf32>
    %432 = vector.multi_reduction <add>, %428, %cst_191 [1] : vector<18x18xf32> to vector<18xf32>
    %433 = vector.shape_cast %432 : vector<18xf32> to vector<18x1xf32>
    %cst_192 = arith.constant dense<0.000000e+00> : vector<18xf32>
    %434 = vector.multi_reduction <add>, %431, %cst_192 [1] : vector<18x18xf32> to vector<18xf32>
    %435 = vector.shape_cast %434 : vector<18xf32> to vector<18x1xf32>
    %436 = arith.addf %433, %435 : vector<18x1xf32>
    %437 = tpu.reciprocal %436 {approx = true} : vector<18x1xf32> -> vector<18x1xf32>
    %438 = vector.extract_strided_slice %371 {offsets = [0, 8], sizes = [18, 8], strides = [1, 1]} : vector<18x32xf32> to vector<18x8xf32>
    %cst_193 = arith.constant dense<0.000000e+00> : vector<18x8xf32>
    %439 = tpu.matmul %428, %438, %cst_193 {dimension_numbers = #tpu.dot_dimension_numbers<[1], [0], [0], [1], [0, 0, 1, 1], [], []>} : vector<18x18xf32>, vector<18x8xf32>, vector<18x8xf32> -> vector<18x8xf32>
    %440 = vector.extract_strided_slice %378 {offsets = [0, 8], sizes = [18, 8], strides = [1, 1]} : vector<18x32xf32> to vector<18x8xf32>
    %cst_194 = arith.constant dense<0.000000e+00> : vector<18x8xf32>
    %441 = tpu.matmul %431, %440, %cst_194 {dimension_numbers = #tpu.dot_dimension_numbers<[1], [0], [0], [1], [0, 0, 1, 1], [], []>} : vector<18x18xf32>, vector<18x8xf32>, vector<18x8xf32> -> vector<18x8xf32>
    %442 = arith.addf %439, %441 : vector<18x8xf32>
    %443 = vector.broadcast %437 : vector<18x1xf32> to vector<18x8xf32>
    %444 = arith.mulf %442, %443 : vector<18x8xf32>
    %445 = vector.extract_strided_slice %361 {offsets = [8, 0], sizes = [8, 32], strides = [1, 1]} : vector<32x32xf32> to vector<8x32xf32>
    %cst_195 = arith.constant dense<0.000000e+00> : vector<18x32xf32>
    %446 = tpu.matmul %444, %445, %cst_195 {dimension_numbers = #tpu.dot_dimension_numbers<[1], [0], [0], [1], [0, 0, 1, 1], [], []>} : vector<18x8xf32>, vector<8x32xf32>, vector<18x32xf32> -> vector<18x32xf32>
    %447 = arith.addf %413, %446 : vector<18x32xf32>
    %448 = vector.extract_strided_slice %369 {offsets = [0, 16], sizes = [18, 8], strides = [1, 1]} : vector<18x32xf32> to vector<18x8xf32>
    %449 = vector.extract_strided_slice %370 {offsets = [0, 16], sizes = [18, 8], strides = [1, 1]} : vector<18x32xf32> to vector<18x8xf32>
    %cst_196 = arith.constant dense<0.000000e+00> : vector<18x18xf32>
    %450 = tpu.matmul %448, %449, %cst_196 {dimension_numbers = #tpu.dot_dimension_numbers<[1], [1], [0], [0], [0, 0, 1, 0], [], []>} : vector<18x8xf32>, vector<18x8xf32>, vector<18x18xf32> -> vector<18x18xf32>
    %451 = arith.addf %450, %0 : vector<18x18xf32>
    %452 = vector.extract_strided_slice %377 {offsets = [0, 16], sizes = [18, 8], strides = [1, 1]} : vector<18x32xf32> to vector<18x8xf32>
    %cst_197 = arith.constant dense<0.000000e+00> : vector<18x18xf32>
    %453 = tpu.matmul %448, %452, %cst_197 {dimension_numbers = #tpu.dot_dimension_numbers<[1], [1], [0], [0], [0, 0, 1, 0], [], []>} : vector<18x8xf32>, vector<18x8xf32>, vector<18x18xf32> -> vector<18x18xf32>
    %454 = arith.addf %453, %0 : vector<18x18xf32>
    %cst_198 = arith.constant dense<0xFF800000> : vector<18xf32>
    %455 = vector.multi_reduction <maximumf>, %451, %cst_198 [1] : vector<18x18xf32> to vector<18xf32>
    %456 = vector.shape_cast %455 : vector<18xf32> to vector<18x1xf32>
    %cst_199 = arith.constant dense<0xFF800000> : vector<18xf32>
    %457 = vector.multi_reduction <maximumf>, %454, %cst_199 [1] : vector<18x18xf32> to vector<18xf32>
    %458 = vector.shape_cast %457 : vector<18xf32> to vector<18x1xf32>
    %459 = arith.maximumf %456, %458 : vector<18x1xf32>
    %460 = vector.broadcast %459 : vector<18x1xf32> to vector<18x18xf32>
    %461 = arith.subf %451, %460 : vector<18x18xf32>
    %462 = math.exp %461 : vector<18x18xf32>
    %463 = vector.broadcast %459 : vector<18x1xf32> to vector<18x18xf32>
    %464 = arith.subf %454, %463 : vector<18x18xf32>
    %465 = math.exp %464 : vector<18x18xf32>
    %cst_200 = arith.constant dense<0.000000e+00> : vector<18xf32>
    %466 = vector.multi_reduction <add>, %462, %cst_200 [1] : vector<18x18xf32> to vector<18xf32>
    %467 = vector.shape_cast %466 : vector<18xf32> to vector<18x1xf32>
    %cst_201 = arith.constant dense<0.000000e+00> : vector<18xf32>
    %468 = vector.multi_reduction <add>, %465, %cst_201 [1] : vector<18x18xf32> to vector<18xf32>
    %469 = vector.shape_cast %468 : vector<18xf32> to vector<18x1xf32>
    %470 = arith.addf %467, %469 : vector<18x1xf32>
    %471 = tpu.reciprocal %470 {approx = true} : vector<18x1xf32> -> vector<18x1xf32>
    %472 = vector.extract_strided_slice %371 {offsets = [0, 16], sizes = [18, 8], strides = [1, 1]} : vector<18x32xf32> to vector<18x8xf32>
    %cst_202 = arith.constant dense<0.000000e+00> : vector<18x8xf32>
    %473 = tpu.matmul %462, %472, %cst_202 {dimension_numbers = #tpu.dot_dimension_numbers<[1], [0], [0], [1], [0, 0, 1, 1], [], []>} : vector<18x18xf32>, vector<18x8xf32>, vector<18x8xf32> -> vector<18x8xf32>
    %474 = vector.extract_strided_slice %378 {offsets = [0, 16], sizes = [18, 8], strides = [1, 1]} : vector<18x32xf32> to vector<18x8xf32>
    %cst_203 = arith.constant dense<0.000000e+00> : vector<18x8xf32>
    %475 = tpu.matmul %465, %474, %cst_203 {dimension_numbers = #tpu.dot_dimension_numbers<[1], [0], [0], [1], [0, 0, 1, 1], [], []>} : vector<18x18xf32>, vector<18x8xf32>, vector<18x8xf32> -> vector<18x8xf32>
    %476 = arith.addf %473, %475 : vector<18x8xf32>
    %477 = vector.broadcast %471 : vector<18x1xf32> to vector<18x8xf32>
    %478 = arith.mulf %476, %477 : vector<18x8xf32>
    %479 = vector.extract_strided_slice %361 {offsets = [16, 0], sizes = [8, 32], strides = [1, 1]} : vector<32x32xf32> to vector<8x32xf32>
    %cst_204 = arith.constant dense<0.000000e+00> : vector<18x32xf32>
    %480 = tpu.matmul %478, %479, %cst_204 {dimension_numbers = #tpu.dot_dimension_numbers<[1], [0], [0], [1], [0, 0, 1, 1], [], []>} : vector<18x8xf32>, vector<8x32xf32>, vector<18x32xf32> -> vector<18x32xf32>
    %481 = arith.addf %447, %480 : vector<18x32xf32>
    %482 = vector.extract_strided_slice %369 {offsets = [0, 24], sizes = [18, 8], strides = [1, 1]} : vector<18x32xf32> to vector<18x8xf32>
    %483 = vector.extract_strided_slice %370 {offsets = [0, 24], sizes = [18, 8], strides = [1, 1]} : vector<18x32xf32> to vector<18x8xf32>
    %cst_205 = arith.constant dense<0.000000e+00> : vector<18x18xf32>
    %484 = tpu.matmul %482, %483, %cst_205 {dimension_numbers = #tpu.dot_dimension_numbers<[1], [1], [0], [0], [0, 0, 1, 0], [], []>} : vector<18x8xf32>, vector<18x8xf32>, vector<18x18xf32> -> vector<18x18xf32>
    %485 = arith.addf %484, %0 : vector<18x18xf32>
    %486 = vector.extract_strided_slice %377 {offsets = [0, 24], sizes = [18, 8], strides = [1, 1]} : vector<18x32xf32> to vector<18x8xf32>
    %cst_206 = arith.constant dense<0.000000e+00> : vector<18x18xf32>
    %487 = tpu.matmul %482, %486, %cst_206 {dimension_numbers = #tpu.dot_dimension_numbers<[1], [1], [0], [0], [0, 0, 1, 0], [], []>} : vector<18x8xf32>, vector<18x8xf32>, vector<18x18xf32> -> vector<18x18xf32>
    %488 = arith.addf %487, %0 : vector<18x18xf32>
    %cst_207 = arith.constant dense<0xFF800000> : vector<18xf32>
    %489 = vector.multi_reduction <maximumf>, %485, %cst_207 [1] : vector<18x18xf32> to vector<18xf32>
    %490 = vector.shape_cast %489 : vector<18xf32> to vector<18x1xf32>
    %cst_208 = arith.constant dense<0xFF800000> : vector<18xf32>
    %491 = vector.multi_reduction <maximumf>, %488, %cst_208 [1] : vector<18x18xf32> to vector<18xf32>
    %492 = vector.shape_cast %491 : vector<18xf32> to vector<18x1xf32>
    %493 = arith.maximumf %490, %492 : vector<18x1xf32>
    %494 = vector.broadcast %493 : vector<18x1xf32> to vector<18x18xf32>
    %495 = arith.subf %485, %494 : vector<18x18xf32>
    %496 = math.exp %495 : vector<18x18xf32>
    %497 = vector.broadcast %493 : vector<18x1xf32> to vector<18x18xf32>
    %498 = arith.subf %488, %497 : vector<18x18xf32>
    %499 = math.exp %498 : vector<18x18xf32>
    %cst_209 = arith.constant dense<0.000000e+00> : vector<18xf32>
    %500 = vector.multi_reduction <add>, %496, %cst_209 [1] : vector<18x18xf32> to vector<18xf32>
    %501 = vector.shape_cast %500 : vector<18xf32> to vector<18x1xf32>
    %cst_210 = arith.constant dense<0.000000e+00> : vector<18xf32>
    %502 = vector.multi_reduction <add>, %499, %cst_210 [1] : vector<18x18xf32> to vector<18xf32>
    %503 = vector.shape_cast %502 : vector<18xf32> to vector<18x1xf32>
    %504 = arith.addf %501, %503 : vector<18x1xf32>
    %505 = tpu.reciprocal %504 {approx = true} : vector<18x1xf32> -> vector<18x1xf32>
    %506 = vector.extract_strided_slice %371 {offsets = [0, 24], sizes = [18, 8], strides = [1, 1]} : vector<18x32xf32> to vector<18x8xf32>
    %cst_211 = arith.constant dense<0.000000e+00> : vector<18x8xf32>
    %507 = tpu.matmul %496, %506, %cst_211 {dimension_numbers = #tpu.dot_dimension_numbers<[1], [0], [0], [1], [0, 0, 1, 1], [], []>} : vector<18x18xf32>, vector<18x8xf32>, vector<18x8xf32> -> vector<18x8xf32>
    %508 = vector.extract_strided_slice %378 {offsets = [0, 24], sizes = [18, 8], strides = [1, 1]} : vector<18x32xf32> to vector<18x8xf32>
    %cst_212 = arith.constant dense<0.000000e+00> : vector<18x8xf32>
    %509 = tpu.matmul %499, %508, %cst_212 {dimension_numbers = #tpu.dot_dimension_numbers<[1], [0], [0], [1], [0, 0, 1, 1], [], []>} : vector<18x18xf32>, vector<18x8xf32>, vector<18x8xf32> -> vector<18x8xf32>
    %510 = arith.addf %507, %509 : vector<18x8xf32>
    %511 = vector.broadcast %505 : vector<18x1xf32> to vector<18x8xf32>
    %512 = arith.mulf %510, %511 : vector<18x8xf32>
    %513 = vector.extract_strided_slice %361 {offsets = [24, 0], sizes = [8, 32], strides = [1, 1]} : vector<32x32xf32> to vector<8x32xf32>
    %cst_213 = arith.constant dense<0.000000e+00> : vector<18x32xf32>
    %514 = tpu.matmul %512, %513, %cst_213 {dimension_numbers = #tpu.dot_dimension_numbers<[1], [0], [0], [1], [0, 0, 1, 1], [], []>} : vector<18x8xf32>, vector<8x32xf32>, vector<18x32xf32> -> vector<18x32xf32>
    %515 = arith.addf %481, %514 : vector<18x32xf32>
    %516 = vector.broadcast %345 : vector<1x32xf32> to vector<18x32xf32>
    %517 = arith.addf %515, %516 : vector<18x32xf32>
    %518 = arith.addf %71, %517 : vector<18x32xf32>
    %cst_214 = arith.constant dense<0.000000e+00> : vector<18xf32>
    %519 = vector.multi_reduction <add>, %518, %cst_214 [1] : vector<18x32xf32> to vector<18xf32>
    %520 = vector.shape_cast %519 : vector<18xf32> to vector<18x1xf32>
    %cst_215 = arith.constant 3.200000e+01 : f32
    %521 = vector.broadcast %cst_215 : f32 to vector<18x1xf32>
    %522 = arith.divf %520, %521 : vector<18x1xf32>
    %523 = vector.broadcast %522 : vector<18x1xf32> to vector<18x32xf32>
    %524 = arith.subf %518, %523 : vector<18x32xf32>
    %525 = arith.mulf %524, %524 : vector<18x32xf32>
    %cst_216 = arith.constant dense<0.000000e+00> : vector<18xf32>
    %526 = vector.multi_reduction <add>, %525, %cst_216 [1] : vector<18x32xf32> to vector<18xf32>
    %527 = vector.shape_cast %526 : vector<18xf32> to vector<18x1xf32>
    %cst_217 = arith.constant 3.200000e+01 : f32
    %528 = vector.broadcast %cst_217 : f32 to vector<18x1xf32>
    %529 = arith.divf %527, %528 : vector<18x1xf32>
    %cst_218 = arith.constant 9.99999974E-6 : f32
    %530 = vector.broadcast %cst_218 : f32 to vector<18x1xf32>
    %531 = arith.addf %529, %530 : vector<18x1xf32>
    %532 = math.rsqrt %531 : vector<18x1xf32>
    %533 = vector.broadcast %532 : vector<18x1xf32> to vector<18x32xf32>
    %534 = arith.mulf %524, %533 : vector<18x32xf32>
    %535 = vector.broadcast %351 : vector<1x32xf32> to vector<18x32xf32>
    %536 = arith.mulf %534, %535 : vector<18x32xf32>
    %537 = vector.broadcast %349 : vector<1x32xf32> to vector<18x32xf32>
    %538 = arith.addf %536, %537 : vector<18x32xf32>
    %cst_219 = arith.constant dense<0.000000e+00> : vector<18x64xf32>
    %539 = tpu.matmul %538, %357, %cst_219 {dimension_numbers = #tpu.dot_dimension_numbers<[1], [0], [0], [1], [0, 0, 1, 1], [], []>} : vector<18x32xf32>, vector<32x64xf32>, vector<18x64xf32> -> vector<18x64xf32>
    %540 = vector.broadcast %341 : vector<1x64xf32> to vector<18x64xf32>
    %541 = arith.addf %539, %540 : vector<18x64xf32>
    %542 = arith.mulf %541, %541 : vector<18x64xf32>
    %543 = arith.mulf %541, %542 : vector<18x64xf32>
    %cst_220 = arith.constant 4.471500e-02 : f32
    %544 = vector.broadcast %cst_220 : f32 to vector<18x64xf32>
    %545 = arith.mulf %544, %543 : vector<18x64xf32>
    %546 = arith.addf %541, %545 : vector<18x64xf32>
    %cst_221 = arith.constant 0.797884583 : f32
    %547 = vector.broadcast %cst_221 : f32 to vector<18x64xf32>
    %548 = arith.mulf %547, %546 : vector<18x64xf32>
    %549 = math.tanh %548 : vector<18x64xf32>
    %cst_222 = arith.constant 1.000000e+00 : f32
    %550 = vector.broadcast %cst_222 : f32 to vector<18x64xf32>
    %551 = arith.addf %550, %549 : vector<18x64xf32>
    %cst_223 = arith.constant 5.000000e-01 : f32
    %552 = vector.broadcast %cst_223 : f32 to vector<18x64xf32>
    %553 = arith.mulf %552, %551 : vector<18x64xf32>
    %554 = arith.mulf %541, %553 : vector<18x64xf32>
    %cst_224 = arith.constant dense<0.000000e+00> : vector<18x32xf32>
    %555 = tpu.matmul %554, %359, %cst_224 {dimension_numbers = #tpu.dot_dimension_numbers<[1], [0], [0], [1], [0, 0, 1, 1], [], []>} : vector<18x64xf32>, vector<64x32xf32>, vector<18x32xf32> -> vector<18x32xf32>
    %556 = vector.broadcast %343 : vector<1x32xf32> to vector<18x32xf32>
    %557 = arith.addf %555, %556 : vector<18x32xf32>
    %558 = arith.addf %538, %557 : vector<18x32xf32>
    %cst_225 = arith.constant dense<0.000000e+00> : vector<18xf32>
    %559 = vector.multi_reduction <add>, %558, %cst_225 [1] : vector<18x32xf32> to vector<18xf32>
    %560 = vector.shape_cast %559 : vector<18xf32> to vector<18x1xf32>
    %cst_226 = arith.constant 3.200000e+01 : f32
    %561 = vector.broadcast %cst_226 : f32 to vector<18x1xf32>
    %562 = arith.divf %560, %561 : vector<18x1xf32>
    %563 = vector.broadcast %562 : vector<18x1xf32> to vector<18x32xf32>
    %564 = arith.subf %558, %563 : vector<18x32xf32>
    %565 = arith.mulf %564, %564 : vector<18x32xf32>
    %cst_227 = arith.constant dense<0.000000e+00> : vector<18xf32>
    %566 = vector.multi_reduction <add>, %565, %cst_227 [1] : vector<18x32xf32> to vector<18xf32>
    %567 = vector.shape_cast %566 : vector<18xf32> to vector<18x1xf32>
    %cst_228 = arith.constant 3.200000e+01 : f32
    %568 = vector.broadcast %cst_228 : f32 to vector<18x1xf32>
    %569 = arith.divf %567, %568 : vector<18x1xf32>
    %cst_229 = arith.constant 9.99999974E-6 : f32
    %570 = vector.broadcast %cst_229 : f32 to vector<18x1xf32>
    %571 = arith.addf %569, %570 : vector<18x1xf32>
    %572 = math.rsqrt %571 : vector<18x1xf32>
    %573 = vector.broadcast %572 : vector<18x1xf32> to vector<18x32xf32>
    %574 = arith.mulf %564, %573 : vector<18x32xf32>
    %575 = vector.broadcast %355 : vector<1x32xf32> to vector<18x32xf32>
    %576 = arith.mulf %574, %575 : vector<18x32xf32>
    %577 = vector.broadcast %353 : vector<1x32xf32> to vector<18x32xf32>
    %578 = arith.addf %576, %577 : vector<18x32xf32>
    %579 = vector.extract_strided_slice %17 {offsets = [1, 0, 0], sizes = [1, 1, 64], strides = [1, 1, 1]} : vector<2x1x64xf32> to vector<1x1x64xf32>
    %580 = vector.shape_cast %579 : vector<1x1x64xf32> to vector<1x64xf32>
    %581 = vector.extract_strided_slice %18 {offsets = [1, 0, 0], sizes = [1, 1, 32], strides = [1, 1, 1]} : vector<2x1x32xf32> to vector<1x1x32xf32>
    %582 = vector.shape_cast %581 : vector<1x1x32xf32> to vector<1x32xf32>
    %583 = vector.extract_strided_slice %19 {offsets = [1, 0, 0], sizes = [1, 1, 32], strides = [1, 1, 1]} : vector<2x1x32xf32> to vector<1x1x32xf32>
    %584 = vector.shape_cast %583 : vector<1x1x32xf32> to vector<1x32xf32>
    %585 = vector.extract_strided_slice %20 {offsets = [1, 0, 0], sizes = [1, 1, 96], strides = [1, 1, 1]} : vector<2x1x96xf32> to vector<1x1x96xf32>
    %586 = vector.shape_cast %585 : vector<1x1x96xf32> to vector<1x96xf32>
    %587 = vector.extract_strided_slice %21 {offsets = [1, 0, 0], sizes = [1, 1, 32], strides = [1, 1, 1]} : vector<2x1x32xf32> to vector<1x1x32xf32>
    %588 = vector.shape_cast %587 : vector<1x1x32xf32> to vector<1x32xf32>
    %589 = vector.extract_strided_slice %22 {offsets = [1, 0, 0], sizes = [1, 1, 32], strides = [1, 1, 1]} : vector<2x1x32xf32> to vector<1x1x32xf32>
    %590 = vector.shape_cast %589 : vector<1x1x32xf32> to vector<1x32xf32>
    %591 = vector.extract_strided_slice %23 {offsets = [1, 0, 0], sizes = [1, 1, 32], strides = [1, 1, 1]} : vector<2x1x32xf32> to vector<1x1x32xf32>
    %592 = vector.shape_cast %591 : vector<1x1x32xf32> to vector<1x32xf32>
    %593 = vector.extract_strided_slice %24 {offsets = [1, 0, 0], sizes = [1, 1, 32], strides = [1, 1, 1]} : vector<2x1x32xf32> to vector<1x1x32xf32>
    %594 = vector.shape_cast %593 : vector<1x1x32xf32> to vector<1x32xf32>
    %595 = vector.extract_strided_slice %25 {offsets = [1, 0, 0], sizes = [1, 32, 64], strides = [1, 1, 1]} : vector<2x32x64xf32> to vector<1x32x64xf32>
    %596 = vector.shape_cast %595 : vector<1x32x64xf32> to vector<32x64xf32>
    %597 = vector.extract_strided_slice %26 {offsets = [1, 0, 0], sizes = [1, 64, 32], strides = [1, 1, 1]} : vector<2x64x32xf32> to vector<1x64x32xf32>
    %598 = vector.shape_cast %597 : vector<1x64x32xf32> to vector<64x32xf32>
    %599 = vector.extract_strided_slice %27 {offsets = [1, 0, 0], sizes = [1, 32, 32], strides = [1, 1, 1]} : vector<2x32x32xf32> to vector<1x32x32xf32>
    %600 = vector.shape_cast %599 : vector<1x32x32xf32> to vector<32x32xf32>
    %601 = vector.extract_strided_slice %28 {offsets = [1, 0, 0], sizes = [1, 32, 96], strides = [1, 1, 1]} : vector<2x32x96xf32> to vector<1x32x96xf32>
    %602 = vector.shape_cast %601 : vector<1x32x96xf32> to vector<32x96xf32>
    %cst_230 = arith.constant dense<0.000000e+00> : vector<18x96xf32>
    %603 = tpu.matmul %578, %602, %cst_230 {dimension_numbers = #tpu.dot_dimension_numbers<[1], [0], [0], [1], [0, 0, 1, 1], [], []>} : vector<18x32xf32>, vector<32x96xf32>, vector<18x96xf32> -> vector<18x96xf32>
    %604 = vector.broadcast %586 : vector<1x96xf32> to vector<18x96xf32>
    %605 = arith.addf %603, %604 : vector<18x96xf32>
    %606 = vector.extract_strided_slice %605 {offsets = [0, 0], sizes = [18, 32], strides = [1, 1]} : vector<18x96xf32> to vector<18x32xf32>
    %cst_231 = arith.constant 0.353553385 : f32
    %607 = vector.broadcast %cst_231 : f32 to vector<18x32xf32>
    %608 = arith.mulf %606, %607 : vector<18x32xf32>
    %609 = vector.extract_strided_slice %605 {offsets = [0, 32], sizes = [18, 32], strides = [1, 1]} : vector<18x96xf32> to vector<18x32xf32>
    %610 = vector.extract_strided_slice %605 {offsets = [0, 64], sizes = [18, 32], strides = [1, 1]} : vector<18x96xf32> to vector<18x32xf32>
    %611 = vector.extract_strided_slice %602 {offsets = [0, 32], sizes = [32, 64], strides = [1, 1]} : vector<32x96xf32> to vector<32x64xf32>
    %cst_232 = arith.constant dense<0.000000e+00> : vector<18x64xf32>
    %612 = tpu.matmul %205, %611, %cst_232 {dimension_numbers = #tpu.dot_dimension_numbers<[1], [0], [0], [1], [0, 0, 1, 1], [], []>} : vector<18x32xf32>, vector<32x64xf32>, vector<18x64xf32> -> vector<18x64xf32>
    %613 = vector.extract_strided_slice %586 {offsets = [0, 32], sizes = [1, 64], strides = [1, 1]} : vector<1x96xf32> to vector<1x64xf32>
    %614 = vector.broadcast %613 : vector<1x64xf32> to vector<18x64xf32>
    %615 = arith.addf %612, %614 : vector<18x64xf32>
    %616 = vector.extract_strided_slice %615 {offsets = [0, 0], sizes = [18, 32], strides = [1, 1]} : vector<18x64xf32> to vector<18x32xf32>
    %617 = vector.extract_strided_slice %615 {offsets = [0, 32], sizes = [18, 32], strides = [1, 1]} : vector<18x64xf32> to vector<18x32xf32>
    %cst_233 = arith.constant 0.000000e+00 : f32
    %618 = vector.broadcast %cst_233 : f32 to vector<18x32xf32>
    %619 = vector.extract_strided_slice %608 {offsets = [0, 0], sizes = [18, 8], strides = [1, 1]} : vector<18x32xf32> to vector<18x8xf32>
    %620 = vector.extract_strided_slice %609 {offsets = [0, 0], sizes = [18, 8], strides = [1, 1]} : vector<18x32xf32> to vector<18x8xf32>
    %cst_234 = arith.constant dense<0.000000e+00> : vector<18x18xf32>
    %621 = tpu.matmul %619, %620, %cst_234 {dimension_numbers = #tpu.dot_dimension_numbers<[1], [1], [0], [0], [0, 0, 1, 0], [], []>} : vector<18x8xf32>, vector<18x8xf32>, vector<18x18xf32> -> vector<18x18xf32>
    %622 = arith.addf %621, %0 : vector<18x18xf32>
    %623 = vector.extract_strided_slice %616 {offsets = [0, 0], sizes = [18, 8], strides = [1, 1]} : vector<18x32xf32> to vector<18x8xf32>
    %cst_235 = arith.constant dense<0.000000e+00> : vector<18x18xf32>
    %624 = tpu.matmul %619, %623, %cst_235 {dimension_numbers = #tpu.dot_dimension_numbers<[1], [1], [0], [0], [0, 0, 1, 0], [], []>} : vector<18x8xf32>, vector<18x8xf32>, vector<18x18xf32> -> vector<18x18xf32>
    %625 = arith.addf %624, %0 : vector<18x18xf32>
    %cst_236 = arith.constant dense<0xFF800000> : vector<18xf32>
    %626 = vector.multi_reduction <maximumf>, %622, %cst_236 [1] : vector<18x18xf32> to vector<18xf32>
    %627 = vector.shape_cast %626 : vector<18xf32> to vector<18x1xf32>
    %cst_237 = arith.constant dense<0xFF800000> : vector<18xf32>
    %628 = vector.multi_reduction <maximumf>, %625, %cst_237 [1] : vector<18x18xf32> to vector<18xf32>
    %629 = vector.shape_cast %628 : vector<18xf32> to vector<18x1xf32>
    %630 = arith.maximumf %627, %629 : vector<18x1xf32>
    %631 = vector.broadcast %630 : vector<18x1xf32> to vector<18x18xf32>
    %632 = arith.subf %622, %631 : vector<18x18xf32>
    %633 = math.exp %632 : vector<18x18xf32>
    %634 = vector.broadcast %630 : vector<18x1xf32> to vector<18x18xf32>
    %635 = arith.subf %625, %634 : vector<18x18xf32>
    %636 = math.exp %635 : vector<18x18xf32>
    %cst_238 = arith.constant dense<0.000000e+00> : vector<18xf32>
    %637 = vector.multi_reduction <add>, %633, %cst_238 [1] : vector<18x18xf32> to vector<18xf32>
    %638 = vector.shape_cast %637 : vector<18xf32> to vector<18x1xf32>
    %cst_239 = arith.constant dense<0.000000e+00> : vector<18xf32>
    %639 = vector.multi_reduction <add>, %636, %cst_239 [1] : vector<18x18xf32> to vector<18xf32>
    %640 = vector.shape_cast %639 : vector<18xf32> to vector<18x1xf32>
    %641 = arith.addf %638, %640 : vector<18x1xf32>
    %642 = tpu.reciprocal %641 {approx = true} : vector<18x1xf32> -> vector<18x1xf32>
    %643 = vector.extract_strided_slice %610 {offsets = [0, 0], sizes = [18, 8], strides = [1, 1]} : vector<18x32xf32> to vector<18x8xf32>
    %cst_240 = arith.constant dense<0.000000e+00> : vector<18x8xf32>
    %644 = tpu.matmul %633, %643, %cst_240 {dimension_numbers = #tpu.dot_dimension_numbers<[1], [0], [0], [1], [0, 0, 1, 1], [], []>} : vector<18x18xf32>, vector<18x8xf32>, vector<18x8xf32> -> vector<18x8xf32>
    %645 = vector.extract_strided_slice %617 {offsets = [0, 0], sizes = [18, 8], strides = [1, 1]} : vector<18x32xf32> to vector<18x8xf32>
    %cst_241 = arith.constant dense<0.000000e+00> : vector<18x8xf32>
    %646 = tpu.matmul %636, %645, %cst_241 {dimension_numbers = #tpu.dot_dimension_numbers<[1], [0], [0], [1], [0, 0, 1, 1], [], []>} : vector<18x18xf32>, vector<18x8xf32>, vector<18x8xf32> -> vector<18x8xf32>
    %647 = arith.addf %644, %646 : vector<18x8xf32>
    %648 = vector.broadcast %642 : vector<18x1xf32> to vector<18x8xf32>
    %649 = arith.mulf %647, %648 : vector<18x8xf32>
    %650 = vector.extract_strided_slice %600 {offsets = [0, 0], sizes = [8, 32], strides = [1, 1]} : vector<32x32xf32> to vector<8x32xf32>
    %cst_242 = arith.constant dense<0.000000e+00> : vector<18x32xf32>
    %651 = tpu.matmul %649, %650, %cst_242 {dimension_numbers = #tpu.dot_dimension_numbers<[1], [0], [0], [1], [0, 0, 1, 1], [], []>} : vector<18x8xf32>, vector<8x32xf32>, vector<18x32xf32> -> vector<18x32xf32>
    %652 = arith.addf %618, %651 : vector<18x32xf32>
    %653 = vector.extract_strided_slice %608 {offsets = [0, 8], sizes = [18, 8], strides = [1, 1]} : vector<18x32xf32> to vector<18x8xf32>
    %654 = vector.extract_strided_slice %609 {offsets = [0, 8], sizes = [18, 8], strides = [1, 1]} : vector<18x32xf32> to vector<18x8xf32>
    %cst_243 = arith.constant dense<0.000000e+00> : vector<18x18xf32>
    %655 = tpu.matmul %653, %654, %cst_243 {dimension_numbers = #tpu.dot_dimension_numbers<[1], [1], [0], [0], [0, 0, 1, 0], [], []>} : vector<18x8xf32>, vector<18x8xf32>, vector<18x18xf32> -> vector<18x18xf32>
    %656 = arith.addf %655, %0 : vector<18x18xf32>
    %657 = vector.extract_strided_slice %616 {offsets = [0, 8], sizes = [18, 8], strides = [1, 1]} : vector<18x32xf32> to vector<18x8xf32>
    %cst_244 = arith.constant dense<0.000000e+00> : vector<18x18xf32>
    %658 = tpu.matmul %653, %657, %cst_244 {dimension_numbers = #tpu.dot_dimension_numbers<[1], [1], [0], [0], [0, 0, 1, 0], [], []>} : vector<18x8xf32>, vector<18x8xf32>, vector<18x18xf32> -> vector<18x18xf32>
    %659 = arith.addf %658, %0 : vector<18x18xf32>
    %cst_245 = arith.constant dense<0xFF800000> : vector<18xf32>
    %660 = vector.multi_reduction <maximumf>, %656, %cst_245 [1] : vector<18x18xf32> to vector<18xf32>
    %661 = vector.shape_cast %660 : vector<18xf32> to vector<18x1xf32>
    %cst_246 = arith.constant dense<0xFF800000> : vector<18xf32>
    %662 = vector.multi_reduction <maximumf>, %659, %cst_246 [1] : vector<18x18xf32> to vector<18xf32>
    %663 = vector.shape_cast %662 : vector<18xf32> to vector<18x1xf32>
    %664 = arith.maximumf %661, %663 : vector<18x1xf32>
    %665 = vector.broadcast %664 : vector<18x1xf32> to vector<18x18xf32>
    %666 = arith.subf %656, %665 : vector<18x18xf32>
    %667 = math.exp %666 : vector<18x18xf32>
    %668 = vector.broadcast %664 : vector<18x1xf32> to vector<18x18xf32>
    %669 = arith.subf %659, %668 : vector<18x18xf32>
    %670 = math.exp %669 : vector<18x18xf32>
    %cst_247 = arith.constant dense<0.000000e+00> : vector<18xf32>
    %671 = vector.multi_reduction <add>, %667, %cst_247 [1] : vector<18x18xf32> to vector<18xf32>
    %672 = vector.shape_cast %671 : vector<18xf32> to vector<18x1xf32>
    %cst_248 = arith.constant dense<0.000000e+00> : vector<18xf32>
    %673 = vector.multi_reduction <add>, %670, %cst_248 [1] : vector<18x18xf32> to vector<18xf32>
    %674 = vector.shape_cast %673 : vector<18xf32> to vector<18x1xf32>
    %675 = arith.addf %672, %674 : vector<18x1xf32>
    %676 = tpu.reciprocal %675 {approx = true} : vector<18x1xf32> -> vector<18x1xf32>
    %677 = vector.extract_strided_slice %610 {offsets = [0, 8], sizes = [18, 8], strides = [1, 1]} : vector<18x32xf32> to vector<18x8xf32>
    %cst_249 = arith.constant dense<0.000000e+00> : vector<18x8xf32>
    %678 = tpu.matmul %667, %677, %cst_249 {dimension_numbers = #tpu.dot_dimension_numbers<[1], [0], [0], [1], [0, 0, 1, 1], [], []>} : vector<18x18xf32>, vector<18x8xf32>, vector<18x8xf32> -> vector<18x8xf32>
    %679 = vector.extract_strided_slice %617 {offsets = [0, 8], sizes = [18, 8], strides = [1, 1]} : vector<18x32xf32> to vector<18x8xf32>
    %cst_250 = arith.constant dense<0.000000e+00> : vector<18x8xf32>
    %680 = tpu.matmul %670, %679, %cst_250 {dimension_numbers = #tpu.dot_dimension_numbers<[1], [0], [0], [1], [0, 0, 1, 1], [], []>} : vector<18x18xf32>, vector<18x8xf32>, vector<18x8xf32> -> vector<18x8xf32>
    %681 = arith.addf %678, %680 : vector<18x8xf32>
    %682 = vector.broadcast %676 : vector<18x1xf32> to vector<18x8xf32>
    %683 = arith.mulf %681, %682 : vector<18x8xf32>
    %684 = vector.extract_strided_slice %600 {offsets = [8, 0], sizes = [8, 32], strides = [1, 1]} : vector<32x32xf32> to vector<8x32xf32>
    %cst_251 = arith.constant dense<0.000000e+00> : vector<18x32xf32>
    %685 = tpu.matmul %683, %684, %cst_251 {dimension_numbers = #tpu.dot_dimension_numbers<[1], [0], [0], [1], [0, 0, 1, 1], [], []>} : vector<18x8xf32>, vector<8x32xf32>, vector<18x32xf32> -> vector<18x32xf32>
    %686 = arith.addf %652, %685 : vector<18x32xf32>
    %687 = vector.extract_strided_slice %608 {offsets = [0, 16], sizes = [18, 8], strides = [1, 1]} : vector<18x32xf32> to vector<18x8xf32>
    %688 = vector.extract_strided_slice %609 {offsets = [0, 16], sizes = [18, 8], strides = [1, 1]} : vector<18x32xf32> to vector<18x8xf32>
    %cst_252 = arith.constant dense<0.000000e+00> : vector<18x18xf32>
    %689 = tpu.matmul %687, %688, %cst_252 {dimension_numbers = #tpu.dot_dimension_numbers<[1], [1], [0], [0], [0, 0, 1, 0], [], []>} : vector<18x8xf32>, vector<18x8xf32>, vector<18x18xf32> -> vector<18x18xf32>
    %690 = arith.addf %689, %0 : vector<18x18xf32>
    %691 = vector.extract_strided_slice %616 {offsets = [0, 16], sizes = [18, 8], strides = [1, 1]} : vector<18x32xf32> to vector<18x8xf32>
    %cst_253 = arith.constant dense<0.000000e+00> : vector<18x18xf32>
    %692 = tpu.matmul %687, %691, %cst_253 {dimension_numbers = #tpu.dot_dimension_numbers<[1], [1], [0], [0], [0, 0, 1, 0], [], []>} : vector<18x8xf32>, vector<18x8xf32>, vector<18x18xf32> -> vector<18x18xf32>
    %693 = arith.addf %692, %0 : vector<18x18xf32>
    %cst_254 = arith.constant dense<0xFF800000> : vector<18xf32>
    %694 = vector.multi_reduction <maximumf>, %690, %cst_254 [1] : vector<18x18xf32> to vector<18xf32>
    %695 = vector.shape_cast %694 : vector<18xf32> to vector<18x1xf32>
    %cst_255 = arith.constant dense<0xFF800000> : vector<18xf32>
    %696 = vector.multi_reduction <maximumf>, %693, %cst_255 [1] : vector<18x18xf32> to vector<18xf32>
    %697 = vector.shape_cast %696 : vector<18xf32> to vector<18x1xf32>
    %698 = arith.maximumf %695, %697 : vector<18x1xf32>
    %699 = vector.broadcast %698 : vector<18x1xf32> to vector<18x18xf32>
    %700 = arith.subf %690, %699 : vector<18x18xf32>
    %701 = math.exp %700 : vector<18x18xf32>
    %702 = vector.broadcast %698 : vector<18x1xf32> to vector<18x18xf32>
    %703 = arith.subf %693, %702 : vector<18x18xf32>
    %704 = math.exp %703 : vector<18x18xf32>
    %cst_256 = arith.constant dense<0.000000e+00> : vector<18xf32>
    %705 = vector.multi_reduction <add>, %701, %cst_256 [1] : vector<18x18xf32> to vector<18xf32>
    %706 = vector.shape_cast %705 : vector<18xf32> to vector<18x1xf32>
    %cst_257 = arith.constant dense<0.000000e+00> : vector<18xf32>
    %707 = vector.multi_reduction <add>, %704, %cst_257 [1] : vector<18x18xf32> to vector<18xf32>
    %708 = vector.shape_cast %707 : vector<18xf32> to vector<18x1xf32>
    %709 = arith.addf %706, %708 : vector<18x1xf32>
    %710 = tpu.reciprocal %709 {approx = true} : vector<18x1xf32> -> vector<18x1xf32>
    %711 = vector.extract_strided_slice %610 {offsets = [0, 16], sizes = [18, 8], strides = [1, 1]} : vector<18x32xf32> to vector<18x8xf32>
    %cst_258 = arith.constant dense<0.000000e+00> : vector<18x8xf32>
    %712 = tpu.matmul %701, %711, %cst_258 {dimension_numbers = #tpu.dot_dimension_numbers<[1], [0], [0], [1], [0, 0, 1, 1], [], []>} : vector<18x18xf32>, vector<18x8xf32>, vector<18x8xf32> -> vector<18x8xf32>
    %713 = vector.extract_strided_slice %617 {offsets = [0, 16], sizes = [18, 8], strides = [1, 1]} : vector<18x32xf32> to vector<18x8xf32>
    %cst_259 = arith.constant dense<0.000000e+00> : vector<18x8xf32>
    %714 = tpu.matmul %704, %713, %cst_259 {dimension_numbers = #tpu.dot_dimension_numbers<[1], [0], [0], [1], [0, 0, 1, 1], [], []>} : vector<18x18xf32>, vector<18x8xf32>, vector<18x8xf32> -> vector<18x8xf32>
    %715 = arith.addf %712, %714 : vector<18x8xf32>
    %716 = vector.broadcast %710 : vector<18x1xf32> to vector<18x8xf32>
    %717 = arith.mulf %715, %716 : vector<18x8xf32>
    %718 = vector.extract_strided_slice %600 {offsets = [16, 0], sizes = [8, 32], strides = [1, 1]} : vector<32x32xf32> to vector<8x32xf32>
    %cst_260 = arith.constant dense<0.000000e+00> : vector<18x32xf32>
    %719 = tpu.matmul %717, %718, %cst_260 {dimension_numbers = #tpu.dot_dimension_numbers<[1], [0], [0], [1], [0, 0, 1, 1], [], []>} : vector<18x8xf32>, vector<8x32xf32>, vector<18x32xf32> -> vector<18x32xf32>
    %720 = arith.addf %686, %719 : vector<18x32xf32>
    %721 = vector.extract_strided_slice %608 {offsets = [0, 24], sizes = [18, 8], strides = [1, 1]} : vector<18x32xf32> to vector<18x8xf32>
    %722 = vector.extract_strided_slice %609 {offsets = [0, 24], sizes = [18, 8], strides = [1, 1]} : vector<18x32xf32> to vector<18x8xf32>
    %cst_261 = arith.constant dense<0.000000e+00> : vector<18x18xf32>
    %723 = tpu.matmul %721, %722, %cst_261 {dimension_numbers = #tpu.dot_dimension_numbers<[1], [1], [0], [0], [0, 0, 1, 0], [], []>} : vector<18x8xf32>, vector<18x8xf32>, vector<18x18xf32> -> vector<18x18xf32>
    %724 = arith.addf %723, %0 : vector<18x18xf32>
    %725 = vector.extract_strided_slice %616 {offsets = [0, 24], sizes = [18, 8], strides = [1, 1]} : vector<18x32xf32> to vector<18x8xf32>
    %cst_262 = arith.constant dense<0.000000e+00> : vector<18x18xf32>
    %726 = tpu.matmul %721, %725, %cst_262 {dimension_numbers = #tpu.dot_dimension_numbers<[1], [1], [0], [0], [0, 0, 1, 0], [], []>} : vector<18x8xf32>, vector<18x8xf32>, vector<18x18xf32> -> vector<18x18xf32>
    %727 = arith.addf %726, %0 : vector<18x18xf32>
    %cst_263 = arith.constant dense<0xFF800000> : vector<18xf32>
    %728 = vector.multi_reduction <maximumf>, %724, %cst_263 [1] : vector<18x18xf32> to vector<18xf32>
    %729 = vector.shape_cast %728 : vector<18xf32> to vector<18x1xf32>
    %cst_264 = arith.constant dense<0xFF800000> : vector<18xf32>
    %730 = vector.multi_reduction <maximumf>, %727, %cst_264 [1] : vector<18x18xf32> to vector<18xf32>
    %731 = vector.shape_cast %730 : vector<18xf32> to vector<18x1xf32>
    %732 = arith.maximumf %729, %731 : vector<18x1xf32>
    %733 = vector.broadcast %732 : vector<18x1xf32> to vector<18x18xf32>
    %734 = arith.subf %724, %733 : vector<18x18xf32>
    %735 = math.exp %734 : vector<18x18xf32>
    %736 = vector.broadcast %732 : vector<18x1xf32> to vector<18x18xf32>
    %737 = arith.subf %727, %736 : vector<18x18xf32>
    %738 = math.exp %737 : vector<18x18xf32>
    %cst_265 = arith.constant dense<0.000000e+00> : vector<18xf32>
    %739 = vector.multi_reduction <add>, %735, %cst_265 [1] : vector<18x18xf32> to vector<18xf32>
    %740 = vector.shape_cast %739 : vector<18xf32> to vector<18x1xf32>
    %cst_266 = arith.constant dense<0.000000e+00> : vector<18xf32>
    %741 = vector.multi_reduction <add>, %738, %cst_266 [1] : vector<18x18xf32> to vector<18xf32>
    %742 = vector.shape_cast %741 : vector<18xf32> to vector<18x1xf32>
    %743 = arith.addf %740, %742 : vector<18x1xf32>
    %744 = tpu.reciprocal %743 {approx = true} : vector<18x1xf32> -> vector<18x1xf32>
    %745 = vector.extract_strided_slice %610 {offsets = [0, 24], sizes = [18, 8], strides = [1, 1]} : vector<18x32xf32> to vector<18x8xf32>
    %cst_267 = arith.constant dense<0.000000e+00> : vector<18x8xf32>
    %746 = tpu.matmul %735, %745, %cst_267 {dimension_numbers = #tpu.dot_dimension_numbers<[1], [0], [0], [1], [0, 0, 1, 1], [], []>} : vector<18x18xf32>, vector<18x8xf32>, vector<18x8xf32> -> vector<18x8xf32>
    %747 = vector.extract_strided_slice %617 {offsets = [0, 24], sizes = [18, 8], strides = [1, 1]} : vector<18x32xf32> to vector<18x8xf32>
    %cst_268 = arith.constant dense<0.000000e+00> : vector<18x8xf32>
    %748 = tpu.matmul %738, %747, %cst_268 {dimension_numbers = #tpu.dot_dimension_numbers<[1], [0], [0], [1], [0, 0, 1, 1], [], []>} : vector<18x18xf32>, vector<18x8xf32>, vector<18x8xf32> -> vector<18x8xf32>
    %749 = arith.addf %746, %748 : vector<18x8xf32>
    %750 = vector.broadcast %744 : vector<18x1xf32> to vector<18x8xf32>
    %751 = arith.mulf %749, %750 : vector<18x8xf32>
    %752 = vector.extract_strided_slice %600 {offsets = [24, 0], sizes = [8, 32], strides = [1, 1]} : vector<32x32xf32> to vector<8x32xf32>
    %cst_269 = arith.constant dense<0.000000e+00> : vector<18x32xf32>
    %753 = tpu.matmul %751, %752, %cst_269 {dimension_numbers = #tpu.dot_dimension_numbers<[1], [0], [0], [1], [0, 0, 1, 1], [], []>} : vector<18x8xf32>, vector<8x32xf32>, vector<18x32xf32> -> vector<18x32xf32>
    %754 = arith.addf %720, %753 : vector<18x32xf32>
    %755 = vector.broadcast %584 : vector<1x32xf32> to vector<18x32xf32>
    %756 = arith.addf %754, %755 : vector<18x32xf32>
    %757 = arith.addf %578, %756 : vector<18x32xf32>
    %cst_270 = arith.constant dense<0.000000e+00> : vector<18xf32>
    %758 = vector.multi_reduction <add>, %757, %cst_270 [1] : vector<18x32xf32> to vector<18xf32>
    %759 = vector.shape_cast %758 : vector<18xf32> to vector<18x1xf32>
    %cst_271 = arith.constant 3.200000e+01 : f32
    %760 = vector.broadcast %cst_271 : f32 to vector<18x1xf32>
    %761 = arith.divf %759, %760 : vector<18x1xf32>
    %762 = vector.broadcast %761 : vector<18x1xf32> to vector<18x32xf32>
    %763 = arith.subf %757, %762 : vector<18x32xf32>
    %764 = arith.mulf %763, %763 : vector<18x32xf32>
    %cst_272 = arith.constant dense<0.000000e+00> : vector<18xf32>
    %765 = vector.multi_reduction <add>, %764, %cst_272 [1] : vector<18x32xf32> to vector<18xf32>
    %766 = vector.shape_cast %765 : vector<18xf32> to vector<18x1xf32>
    %cst_273 = arith.constant 3.200000e+01 : f32
    %767 = vector.broadcast %cst_273 : f32 to vector<18x1xf32>
    %768 = arith.divf %766, %767 : vector<18x1xf32>
    %cst_274 = arith.constant 9.99999974E-6 : f32
    %769 = vector.broadcast %cst_274 : f32 to vector<18x1xf32>
    %770 = arith.addf %768, %769 : vector<18x1xf32>
    %771 = math.rsqrt %770 : vector<18x1xf32>
    %772 = vector.broadcast %771 : vector<18x1xf32> to vector<18x32xf32>
    %773 = arith.mulf %763, %772 : vector<18x32xf32>
    %774 = vector.broadcast %590 : vector<1x32xf32> to vector<18x32xf32>
    %775 = arith.mulf %773, %774 : vector<18x32xf32>
    %776 = vector.broadcast %588 : vector<1x32xf32> to vector<18x32xf32>
    %777 = arith.addf %775, %776 : vector<18x32xf32>
    %cst_275 = arith.constant dense<0.000000e+00> : vector<18x64xf32>
    %778 = tpu.matmul %777, %596, %cst_275 {dimension_numbers = #tpu.dot_dimension_numbers<[1], [0], [0], [1], [0, 0, 1, 1], [], []>} : vector<18x32xf32>, vector<32x64xf32>, vector<18x64xf32> -> vector<18x64xf32>
    %779 = vector.broadcast %580 : vector<1x64xf32> to vector<18x64xf32>
    %780 = arith.addf %778, %779 : vector<18x64xf32>
    %781 = arith.mulf %780, %780 : vector<18x64xf32>
    %782 = arith.mulf %780, %781 : vector<18x64xf32>
    %cst_276 = arith.constant 4.471500e-02 : f32
    %783 = vector.broadcast %cst_276 : f32 to vector<18x64xf32>
    %784 = arith.mulf %783, %782 : vector<18x64xf32>
    %785 = arith.addf %780, %784 : vector<18x64xf32>
    %cst_277 = arith.constant 0.797884583 : f32
    %786 = vector.broadcast %cst_277 : f32 to vector<18x64xf32>
    %787 = arith.mulf %786, %785 : vector<18x64xf32>
    %788 = math.tanh %787 : vector<18x64xf32>
    %cst_278 = arith.constant 1.000000e+00 : f32
    %789 = vector.broadcast %cst_278 : f32 to vector<18x64xf32>
    %790 = arith.addf %789, %788 : vector<18x64xf32>
    %cst_279 = arith.constant 5.000000e-01 : f32
    %791 = vector.broadcast %cst_279 : f32 to vector<18x64xf32>
    %792 = arith.mulf %791, %790 : vector<18x64xf32>
    %793 = arith.mulf %780, %792 : vector<18x64xf32>
    %cst_280 = arith.constant dense<0.000000e+00> : vector<18x32xf32>
    %794 = tpu.matmul %793, %598, %cst_280 {dimension_numbers = #tpu.dot_dimension_numbers<[1], [0], [0], [1], [0, 0, 1, 1], [], []>} : vector<18x64xf32>, vector<64x32xf32>, vector<18x32xf32> -> vector<18x32xf32>
    %795 = vector.broadcast %582 : vector<1x32xf32> to vector<18x32xf32>
    %796 = arith.addf %794, %795 : vector<18x32xf32>
    %797 = arith.addf %777, %796 : vector<18x32xf32>
    %cst_281 = arith.constant dense<0.000000e+00> : vector<18xf32>
    %798 = vector.multi_reduction <add>, %797, %cst_281 [1] : vector<18x32xf32> to vector<18xf32>
    %799 = vector.shape_cast %798 : vector<18xf32> to vector<18x1xf32>
    %cst_282 = arith.constant 3.200000e+01 : f32
    %800 = vector.broadcast %cst_282 : f32 to vector<18x1xf32>
    %801 = arith.divf %799, %800 : vector<18x1xf32>
    %802 = vector.broadcast %801 : vector<18x1xf32> to vector<18x32xf32>
    %803 = arith.subf %797, %802 : vector<18x32xf32>
    %804 = arith.mulf %803, %803 : vector<18x32xf32>
    %cst_283 = arith.constant dense<0.000000e+00> : vector<18xf32>
    %805 = vector.multi_reduction <add>, %804, %cst_283 [1] : vector<18x32xf32> to vector<18xf32>
    %806 = vector.shape_cast %805 : vector<18xf32> to vector<18x1xf32>
    %cst_284 = arith.constant 3.200000e+01 : f32
    %807 = vector.broadcast %cst_284 : f32 to vector<18x1xf32>
    %808 = arith.divf %806, %807 : vector<18x1xf32>
    %cst_285 = arith.constant 9.99999974E-6 : f32
    %809 = vector.broadcast %cst_285 : f32 to vector<18x1xf32>
    %810 = arith.addf %808, %809 : vector<18x1xf32>
    %811 = math.rsqrt %810 : vector<18x1xf32>
    %812 = vector.broadcast %811 : vector<18x1xf32> to vector<18x32xf32>
    %813 = arith.mulf %803, %812 : vector<18x32xf32>
    %814 = vector.broadcast %594 : vector<1x32xf32> to vector<18x32xf32>
    %815 = arith.mulf %813, %814 : vector<18x32xf32>
    %816 = vector.broadcast %592 : vector<1x32xf32> to vector<18x32xf32>
    %817 = arith.addf %815, %816 : vector<18x32xf32>
    %cst_286 = arith.constant dense<0.000000e+00> : vector<18x6xf32>
    %818 = tpu.matmul %339, %30, %cst_286 {dimension_numbers = #tpu.dot_dimension_numbers<[1], [0], [0], [1], [0, 0, 1, 1], [], []>} : vector<18x32xf32>, vector<32x6xf32>, vector<18x6xf32> -> vector<18x6xf32>
    %819 = vector.broadcast %29 : vector<1x6xf32> to vector<18x6xf32>
    %820 = arith.addf %818, %819 : vector<18x6xf32>
    %c0_287 = arith.constant 0 : index
    %c0_288 = arith.constant 0 : index
    %821 = vector.load %arg42[%c0_287, %c0_288] : memref<18x6xf32, #tpu.memory_space<vmem>>, vector<18x6xf32>
    tpu.vector_store %arg42[%c0_287, %c0_288], %820 {strides = array<i32>} : memref<18x6xf32, #tpu.memory_space<vmem>>, vector<18x6xf32>,
    %cst_289 = arith.constant dense<0.000000e+00> : vector<18x6xf32>
    %822 = tpu.matmul %817, %30, %cst_289 {dimension_numbers = #tpu.dot_dimension_numbers<[1], [0], [0], [1], [0, 0, 1, 1], [], []>} : vector<18x32xf32>, vector<32x6xf32>, vector<18x6xf32> -> vector<18x6xf32>
    %823 = vector.broadcast %29 : vector<1x6xf32> to vector<18x6xf32>
    %824 = arith.addf %822, %823 : vector<18x6xf32>
    %c0_290 = arith.constant 0 : index
    %c0_291 = arith.constant 0 : index
    %825 = vector.load %arg43[%c0_290, %c0_291] : memref<18x6xf32, #tpu.memory_space<vmem>>, vector<18x6xf32>
    tpu.vector_store %arg43[%c0_290, %c0_291], %824 {strides = array<i32>} : memref<18x6xf32, #tpu.memory_space<vmem>>, vector<18x6xf32>,
    return
  }
}

</mosaic_0001>

<llo_original>
// kernel: mdm_any_forward.1
$region0: #{mdm_any_forward.1}
  #allocation0 [shape = 'u32[]', space=smem, size = 0x4, offset = 0x4, fixed_abs, tag = 'smem constant byte address 0x4 - core index']
  #allocation1 [shape = 'u32[144,128]{1,0:T(1,128)}', space=vmem, size = 0x12000, scoped, tag = 'internal scratch']
  %s0 = inlined_call_operand.smem [shape: u32[44], index: -1, kind: input, shape index: {}]
  %s1 = sld [smem:[%s0]]
  %s2 = scalar_lea.smem %s0, 1
  %s3 = sld [smem:[%s2]]
  %s4 = scalar_lea.smem %s0, 2
  %s5 = sld [smem:[%s4]]
  %s6 = scalar_lea.smem %s0, 3
  %s7 = sld [smem:[%s6]]
  %s8 = scalar_lea.smem %s0, 4
  %s9 = sld [smem:[%s8]]
  %s10 = scalar_lea.smem %s0, 5
  %s11 = sld [smem:[%s10]]
  %s12 = scalar_lea.smem %s0, 6
  %s13 = sld [smem:[%s12]]
  %s14 = scalar_lea.smem %s0, 7
  %s15 = sld [smem:[%s14]]
  %s16 = scalar_lea.smem %s0, 8
  %s17 = sld [smem:[%s16]]
  %s18 = scalar_lea.smem %s0, 9
  %s19 = sld [smem:[%s18]]
  %s20 = scalar_lea.smem %s0, 10
  %s21 = sld [smem:[%s20]]
  %s22 = scalar_lea.smem %s0, 11
  %s23 = sld [smem:[%s22]]
  %s24 = scalar_lea.smem %s0, 12
  %s25 = sld [smem:[%s24]]
  %s26 = scalar_lea.smem %s0, 13
  %s27 = sld [smem:[%s26]]
  %s28 = scalar_lea.smem %s0, 14
  %s29 = sld [smem:[%s28]]
  %s30 = scalar_lea.smem %s0, 15
  %s31 = sld [smem:[%s30]]
  %s32 = scalar_lea.smem %s0, 16
  %s33 = sld [smem:[%s32]]
  %s34 = scalar_lea.smem %s0, 17
  %s35 = sld [smem:[%s34]]
  %s36 = scalar_lea.smem %s0, 18
  %s37 = sld [smem:[%s36]]
  %s38 = scalar_lea.smem %s0, 19
  %s39 = sld [smem:[%s38]]
  %s40 = scalar_lea.smem %s0, 20
  %s41 = sld [smem:[%s40]]
  %s42 = scalar_lea.smem %s0, 21
  %s43 = sld [smem:[%s42]]
  %s44 = scalar_lea.smem %s0, 22
  %s45 = sld [smem:[%s44]]
  %s46 = scalar_lea.smem %s0, 23
  %s47 = sld [smem:[%s46]]
  %s48 = scalar_lea.smem %s0, 24
  %s49 = sld [smem:[%s48]]
  %s50 = scalar_lea.smem %s0, 25
  %s51 = sld [smem:[%s50]]
  %s52 = scalar_lea.smem %s0, 26
  %s53 = sld [smem:[%s52]]
  %s54 = scalar_lea.smem %s0, 27
  %s55 = sld [smem:[%s54]]
  %s56 = scalar_lea.smem %s0, 28
  %s57 = sld [smem:[%s56]]
  %s58 = scalar_lea.smem %s0, 29
  %s59 = sld [smem:[%s58]]
  %s60 = scalar_lea.smem %s0, 30
  %s61 = sld [smem:[%s60]]
  %s62 = scalar_lea.smem %s0, 31
  %s63 = sld [smem:[%s62]]
  %s64 = scalar_lea.smem %s0, 32
  %s65 = sld [smem:[%s64]]
  %s66 = scalar_lea.smem %s0, 33
  %s67 = sld [smem:[%s66]]
  %s68 = scalar_lea.smem %s0, 34
  %s69 = sld [smem:[%s68]]
  %s70 = scalar_lea.smem %s0, 35
  %s71 = sld [smem:[%s70]]
  %s72 = scalar_lea.smem %s0, 36
  %s73 = sld [smem:[%s72]]
  %s74 = scalar_lea.smem %s0, 37
  %s75 = sld [smem:[%s74]]
  %s76 = scalar_lea.smem %s0, 38
  %s77 = sld [smem:[%s76]]
  %s78 = scalar_lea.smem %s0, 39
  %s79 = sld [smem:[%s78]]
  %s80 = scalar_lea.smem %s0, 40
  %s81 = sld [smem:[%s80]]
  %s82 = scalar_lea.smem %s0, 41
  %s83 = sld [smem:[%s82]]
  %s84 = scalar_lea.smem %s0, 42
  %s85 = sld [smem:[%s84]]
  %s86 = scalar_lea.smem %s0, 43
  %s87 = sld [smem:[%s86]]
  %88 = xla_tuple %s85, %s87
  %s89 = sld [smem:[#allocation0]]
  $region186: #{mdm_any_forward.1} parent=0
    _
  %s91 = ssub.s32 1, %s89
  %s92 = scalar_select 0, %s91, %s89
  // Predicated region
  $region2: #{mdm_any_forward.1} parent=0 // pred_check
    _
  $region3: #{mdm_any_forward.1} parent=0 // pred_check_branch
    %94 = sbr.rel (0) target = $region5
  $region4: #{mdm_any_forward.1} parent=0 // pred_region
    _
  $region5: #{mdm_any_forward.1} parent=0 // pred_fallthru
    _
  // Predicated region
  $region6: #{mdm_any_forward.1} parent=0 // pred_check
    _
  $region7: #{mdm_any_forward.1} parent=0 // pred_check_branch
    %96 = sbr.rel (0) target = $region9
  $region8: #{mdm_any_forward.1} parent=0 // pred_region
    _
  $region9: #{mdm_any_forward.1} parent=0 // pred_fallthru
    _
  // Predicated region
  $region10: #{mdm_any_forward.1} parent=0 // pred_check
    _
  $region11: #{mdm_any_forward.1} parent=0 // pred_check_branch
    %98 = sbr.rel (0) target = $region13
  $region12: #{mdm_any_forward.1} parent=0 // pred_region
    _
  $region13: #{mdm_any_forward.1} parent=0 // pred_fallthru
    _
  // Predicated region
  $region14: #{mdm_any_forward.1} parent=0 // pred_check
    _
  $region15: #{mdm_any_forward.1} parent=0 // pred_check_branch
    %100 = sbr.rel (0) target = $region17
  $region16: #{mdm_any_forward.1} parent=0 // pred_region
    _
  $region17: #{mdm_any_forward.1} parent=0 // pred_fallthru
    _
  // Predicated region
  $region18: #{mdm_any_forward.1} parent=0 // pred_check
    _
  $region19: #{mdm_any_forward.1} parent=0 // pred_check_branch
    %102 = sbr.rel (0) target = $region21
  $region20: #{mdm_any_forward.1} parent=0 // pred_region
    _
  $region21: #{mdm_any_forward.1} parent=0 // pred_fallthru
    _
  // Predicated region
  $region22: #{mdm_any_forward.1} parent=0 // pred_check
    _
  $region23: #{mdm_any_forward.1} parent=0 // pred_check_branch
    %104 = sbr.rel (0) target = $region25
  $region24: #{mdm_any_forward.1} parent=0 // pred_region
    _
  $region25: #{mdm_any_forward.1} parent=0 // pred_fallthru
    _
  // Predicated region
  $region26: #{mdm_any_forward.1} parent=0 // pred_check
    _
  $region27: #{mdm_any_forward.1} parent=0 // pred_check_branch
    %106 = sbr.rel (0) target = $region29
  $region28: #{mdm_any_forward.1} parent=0 // pred_region
    _
  $region29: #{mdm_any_forward.1} parent=0 // pred_fallthru
    _
  // Predicated region
  $region30: #{mdm_any_forward.1} parent=0 // pred_check
    _
  $region31: #{mdm_any_forward.1} parent=0 // pred_check_branch
    %108 = sbr.rel (0) target = $region33
  $region32: #{mdm_any_forward.1} parent=0 // pred_region
    _
  $region33: #{mdm_any_forward.1} parent=0 // pred_fallthru
    _
  // Predicated region
  $region34: #{mdm_any_forward.1} parent=0 // pred_check
    _
  $region35: #{mdm_any_forward.1} parent=0 // pred_check_branch
    %110 = sbr.rel (0) target = $region37
  $region36: #{mdm_any_forward.1} parent=0 // pred_region
    _
  $region37: #{mdm_any_forward.1} parent=0 // pred_fallthru
    _
  // Predicated region
  $region38: #{mdm_any_forward.1} parent=0 // pred_check
    _
  $region39: #{mdm_any_forward.1} parent=0 // pred_check_branch
    %112 = sbr.rel (0) target = $region41
  $region40: #{mdm_any_forward.1} parent=0 // pred_region
    _
  $region41: #{mdm_any_forward.1} parent=0 // pred_fallthru
    _
  // Predicated region
  $region42: #{mdm_any_forward.1} parent=0 // pred_check
    _
  $region43: #{mdm_any_forward.1} parent=0 // pred_check_branch
    %114 = sbr.rel (0) target = $region45
  $region44: #{mdm_any_forward.1} parent=0 // pred_region
    _
  $region45: #{mdm_any_forward.1} parent=0 // pred_fallthru
    _
  // Predicated region
  $region46: #{mdm_any_forward.1} parent=0 // pred_check
    _
  $region47: #{mdm_any_forward.1} parent=0 // pred_check_branch
    %116 = sbr.rel (0) target = $region49
  $region48: #{mdm_any_forward.1} parent=0 // pred_region
    _
  $region49: #{mdm_any_forward.1} parent=0 // pred_fallthru
    _
  // Predicated region
  $region50: #{mdm_any_forward.1} parent=0 // pred_check
    _
  $region51: #{mdm_any_forward.1} parent=0 // pred_check_branch
    %118 = sbr.rel (0) target = $region53
  $region52: #{mdm_any_forward.1} parent=0 // pred_region
    _
  $region53: #{mdm_any_forward.1} parent=0 // pred_fallthru
    _
  // Predicated region
  $region54: #{mdm_any_forward.1} parent=0 // pred_check
    _
  $region55: #{mdm_any_forward.1} parent=0 // pred_check_branch
    %120 = sbr.rel (0) target = $region57
  $region56: #{mdm_any_forward.1} parent=0 // pred_region
    _
  $region57: #{mdm_any_forward.1} parent=0 // pred_fallthru
    _
  // Predicated region
  $region58: #{mdm_any_forward.1} parent=0 // pred_check
    _
  $region59: #{mdm_any_forward.1} parent=0 // pred_check_branch
    %122 = sbr.rel (0) target = $region61
  $region60: #{mdm_any_forward.1} parent=0 // pred_region
    _
  $region61: #{mdm_any_forward.1} parent=0 // pred_fallthru
    _
  // Predicated region
  $region62: #{mdm_any_forward.1} parent=0 // pred_check
    _
  $region63: #{mdm_any_forward.1} parent=0 // pred_check_branch
    %124 = sbr.rel (0) target = $region65
  $region64: #{mdm_any_forward.1} parent=0 // pred_region
    _
  $region65: #{mdm_any_forward.1} parent=0 // pred_fallthru
    _
  // Predicated region
  $region66: #{mdm_any_forward.1} parent=0 // pred_check
    _
  $region67: #{mdm_any_forward.1} parent=0 // pred_check_branch
    %126 = sbr.rel (0) target = $region69
  $region68: #{mdm_any_forward.1} parent=0 // pred_region
    _
  $region69: #{mdm_any_forward.1} parent=0 // pred_fallthru
    _
  // Predicated region
  $region70: #{mdm_any_forward.1} parent=0 // pred_check
    _
  $region71: #{mdm_any_forward.1} parent=0 // pred_check_branch
    %128 = sbr.rel (0) target = $region73
  $region72: #{mdm_any_forward.1} parent=0 // pred_region
    _
  $region73: #{mdm_any_forward.1} parent=0 // pred_fallthru
    _
  // Predicated region
  $region74: #{mdm_any_forward.1} parent=0 // pred_check
    _
  $region75: #{mdm_any_forward.1} parent=0 // pred_check_branch
    %130 = sbr.rel (0) target = $region77
  $region76: #{mdm_any_forward.1} parent=0 // pred_region
    _
  $region77: #{mdm_any_forward.1} parent=0 // pred_fallthru
    _
  // Predicated region
  $region78: #{mdm_any_forward.1} parent=0 // pred_check
    _
  $region79: #{mdm_any_forward.1} parent=0 // pred_check_branch
    %132 = sbr.rel (0) target = $region81
  $region80: #{mdm_any_forward.1} parent=0 // pred_region
    _
  $region81: #{mdm_any_forward.1} parent=0 // pred_fallthru
    _
  // Predicated region
  $region82: #{mdm_any_forward.1} parent=0 // pred_check
    _
  $region83: #{mdm_any_forward.1} parent=0 // pred_check_branch
    %134 = sbr.rel (0) target = $region85
  $region84: #{mdm_any_forward.1} parent=0 // pred_region
    _
  $region85: #{mdm_any_forward.1} parent=0 // pred_fallthru
    _
  // Predicated region
  $region86: #{mdm_any_forward.1} parent=0 // pred_check
    _
  $region87: #{mdm_any_forward.1} parent=0 // pred_check_branch
    %136 = sbr.rel (0) target = $region89
  $region88: #{mdm_any_forward.1} parent=0 // pred_region
    _
  $region89: #{mdm_any_forward.1} parent=0 // pred_fallthru
    _
  // Predicated region
  $region90: #{mdm_any_forward.1} parent=0 // pred_check
    _
  $region91: #{mdm_any_forward.1} parent=0 // pred_check_branch
    %138 = sbr.rel (0) target = $region93
  $region92: #{mdm_any_forward.1} parent=0 // pred_region
    _
  $region93: #{mdm_any_forward.1} parent=0 // pred_fallthru
    _
  // Predicated region
  $region94: #{mdm_any_forward.1} parent=0 // pred_check
    _
  $region95: #{mdm_any_forward.1} parent=0 // pred_check_branch
    %140 = sbr.rel (0) target = $region97
  $region96: #{mdm_any_forward.1} parent=0 // pred_region
    _
  $region97: #{mdm_any_forward.1} parent=0 // pred_fallthru
    _
  // Predicated region
  $region98: #{mdm_any_forward.1} parent=0 // pred_check
    _
  $region99: #{mdm_any_forward.1} parent=0 // pred_check_branch
    %142 = sbr.rel (0) target = $region101
  $region100: #{mdm_any_forward.1} parent=0 // pred_region
    _
  $region101: #{mdm_any_forward.1} parent=0 // pred_fallthru
    _
  // Predicated region
  $region102: #{mdm_any_forward.1} parent=0 // pred_check
    _
  $region103: #{mdm_any_forward.1} parent=0 // pred_check_branch
    %144 = sbr.rel (0) target = $region105
  $region104: #{mdm_any_forward.1} parent=0 // pred_region
    _
  $region105: #{mdm_any_forward.1} parent=0 // pred_fallthru
    _
  // Predicated region
  $region106: #{mdm_any_forward.1} parent=0 // pred_check
    _
  $region107: #{mdm_any_forward.1} parent=0 // pred_check_branch
    %146 = sbr.rel (0) target = $region109
  $region108: #{mdm_any_forward.1} parent=0 // pred_region
    _
  $region109: #{mdm_any_forward.1} parent=0 // pred_fallthru
    _
  // Predicated region
  $region110: #{mdm_any_forward.1} parent=0 // pred_check
    _
  $region111: #{mdm_any_forward.1} parent=0 // pred_check_branch
    %148 = sbr.rel (0) target = $region113
  $region112: #{mdm_any_forward.1} parent=0 // pred_region
    _
  $region113: #{mdm_any_forward.1} parent=0 // pred_fallthru
    _
  // Predicated region
  $region114: #{mdm_any_forward.1} parent=0 // pred_check
    _
  $region115: #{mdm_any_forward.1} parent=0 // pred_check_branch
    %150 = sbr.rel (0) target = $region117
  $region116: #{mdm_any_forward.1} parent=0 // pred_region
    _
  $region117: #{mdm_any_forward.1} parent=0 // pred_fallthru
    _
  // Predicated region
  $region118: #{mdm_any_forward.1} parent=0 // pred_check
    _
  $region119: #{mdm_any_forward.1} parent=0 // pred_check_branch
    %152 = sbr.rel (0) target = $region121
  $region120: #{mdm_any_forward.1} parent=0 // pred_region
    _
  $region121: #{mdm_any_forward.1} parent=0 // pred_fallthru
    _
  // Predicated region
  $region122: #{mdm_any_forward.1} parent=0 // pred_check
    _
  $region123: #{mdm_any_forward.1} parent=0 // pred_check_branch
    %154 = sbr.rel (0) target = $region125
  $region124: #{mdm_any_forward.1} parent=0 // pred_region
    _
  $region125: #{mdm_any_forward.1} parent=0 // pred_fallthru
    _
  // Predicated region
  $region126: #{mdm_any_forward.1} parent=0 // pred_check
    _
  $region127: #{mdm_any_forward.1} parent=0 // pred_check_branch
    %156 = sbr.rel (0) target = $region129
  $region128: #{mdm_any_forward.1} parent=0 // pred_region
    _
  $region129: #{mdm_any_forward.1} parent=0 // pred_fallthru
    _
  // Predicated region
  $region130: #{mdm_any_forward.1} parent=0 // pred_check
    _
  $region131: #{mdm_any_forward.1} parent=0 // pred_check_branch
    %158 = sbr.rel (0) target = $region133
  $region132: #{mdm_any_forward.1} parent=0 // pred_region
    _
  $region133: #{mdm_any_forward.1} parent=0 // pred_fallthru
    _
  // Predicated region
  $region134: #{mdm_any_forward.1} parent=0 // pred_check
    _
  $region135: #{mdm_any_forward.1} parent=0 // pred_check_branch
    %160 = sbr.rel (0) target = $region137
  $region136: #{mdm_any_forward.1} parent=0 // pred_region
    _
  $region137: #{mdm_any_forward.1} parent=0 // pred_fallthru
    _
  // Predicated region
  $region138: #{mdm_any_forward.1} parent=0 // pred_check
    _
  $region139: #{mdm_any_forward.1} parent=0 // pred_check_branch
    %162 = sbr.rel (0) target = $region141
  $region140: #{mdm_any_forward.1} parent=0 // pred_region
    _
  $region141: #{mdm_any_forward.1} parent=0 // pred_fallthru
    _
  // Predicated region
  $region142: #{mdm_any_forward.1} parent=0 // pred_check
    _
  $region143: #{mdm_any_forward.1} parent=0 // pred_check_branch
    %164 = sbr.rel (0) target = $region145
  $region144: #{mdm_any_forward.1} parent=0 // pred_region
    _
  $region145: #{mdm_any_forward.1} parent=0 // pred_fallthru
    _
  // Predicated region
  $region146: #{mdm_any_forward.1} parent=0 // pred_check
    _
  $region147: #{mdm_any_forward.1} parent=0 // pred_check_branch
    %166 = sbr.rel (0) target = $region149
  $region148: #{mdm_any_forward.1} parent=0 // pred_region
    _
  $region149: #{mdm_any_forward.1} parent=0 // pred_fallthru
    _
  // Predicated region
  $region150: #{mdm_any_forward.1} parent=0 // pred_check
    _
  $region151: #{mdm_any_forward.1} parent=0 // pred_check_branch
    %168 = sbr.rel (0) target = $region153
  $region152: #{mdm_any_forward.1} parent=0 // pred_region
    _
  $region153: #{mdm_any_forward.1} parent=0 // pred_fallthru
    _
  // Predicated region
  $region154: #{mdm_any_forward.1} parent=0 // pred_check
    _
  $region155: #{mdm_any_forward.1} parent=0 // pred_check_branch
    %170 = sbr.rel (0) target = $region157
  $region156: #{mdm_any_forward.1} parent=0 // pred_region
    _
  $region157: #{mdm_any_forward.1} parent=0 // pred_fallthru
    _
  // Predicated region
  $region158: #{mdm_any_forward.1} parent=0 // pred_check
    _
  $region159: #{mdm_any_forward.1} parent=0 // pred_check_branch
    %172 = sbr.rel (0) target = $region161
  $region160: #{mdm_any_forward.1} parent=0 // pred_region
    _
  $region161: #{mdm_any_forward.1} parent=0 // pred_fallthru
    _
  // Predicated region
  $region162: #{mdm_any_forward.1} parent=0 // pred_check
    _
  $region163: #{mdm_any_forward.1} parent=0 // pred_check_branch
    %174 = sbr.rel (0) target = $region165
  $region164: #{mdm_any_forward.1} parent=0 // pred_region
    _
  $region165: #{mdm_any_forward.1} parent=0 // pred_fallthru
    _
  // Predicated region
  $region166: #{mdm_any_forward.1} parent=0 // pred_check
    _
  $region167: #{mdm_any_forward.1} parent=0 // pred_check_branch
    %176 = sbr.rel (0) target = $region169
  $region168: #{mdm_any_forward.1} parent=0 // pred_region
    _
  $region169: #{mdm_any_forward.1} parent=0 // pred_fallthru
    _
  %v177 = vld [vmem:[%s1] sm:$0xff]
  %v178 = vld [vmem:[%s1 + $0x8] sm:$0xff]
  %v179 = vld [vmem:[%s1 + $0x10] sm:$0x3]
  %v180 = vld [vmem:[%s3] sm:$0xff]
  %v181 = vld [vmem:[%s3 + $0x8] sm:$0xff]
  %v182 = vld [vmem:[%s3 + $0x10] sm:$0x3]
  %v183 = vld [vmem:[%s5] sm:$0xff]
  %v184 = vld [vmem:[%s5 + $0x8] sm:$0xff]
  %v185 = vld [vmem:[%s5 + $0x10] sm:$0x3]
  %v186 = vld [vmem:[%s7] sm:$0x1]
  %v187 = vld [vmem:[%s7 + $0x1] sm:$0x1]
  %v188 = vld [vmem:[%s9] sm:$0x1]
  %v189 = vld [vmem:[%s9 + $0x1] sm:$0x1]
  %v190 = vld [vmem:[%s11] sm:$0x1]
  %v191 = vld [vmem:[%s11 + $0x1] sm:$0x1]
  %v192 = vld [vmem:[%s13] sm:$0x1]
  %v193 = vld [vmem:[%s13 + $0x1] sm:$0x1]
  %v194 = vld [vmem:[%s15] sm:$0x1]
  %v195 = vld [vmem:[%s15 + $0x1] sm:$0x1]
  %v196 = vld [vmem:[%s17] sm:$0x1]
  %v197 = vld [vmem:[%s17 + $0x1] sm:$0x1]
  %v198 = vld [vmem:[%s19] sm:$0x1]
  %v199 = vld [vmem:[%s19 + $0x1] sm:$0x1]
  %v200 = vld [vmem:[%s21] sm:$0x1]
  %v201 = vld [vmem:[%s21 + $0x1] sm:$0x1]
  %v202 = vld [vmem:[%s23] sm:$0xff]
  %v203 = vld [vmem:[%s23 + $0x8] sm:$0xff]
  %v204 = vld [vmem:[%s23 + $0x10] sm:$0xff]
  %v205 = vld [vmem:[%s23 + $0x18] sm:$0xff]
  %v206 = vld [vmem:[%s23 + $0x20] sm:$0xff]
  %v207 = vld [vmem:[%s23 + $0x28] sm:$0xff]
  %v208 = vld [vmem:[%s23 + $0x30] sm:$0xff]
  %v209 = vld [vmem:[%s23 + $0x38] sm:$0xff]
  %v210 = vld [vmem:[%s25] sm:$0xff]
  %v211 = vld [vmem:[%s25 + $0x8] sm:$0xff]
  %v212 = vld [vmem:[%s25 + $0x10] sm:$0xff]
  %v213 = vld [vmem:[%s25 + $0x18] sm:$0xff]
  %v214 = vld [vmem:[%s25 + $0x20] sm:$0xff]
  %v215 = vld [vmem:[%s25 + $0x28] sm:$0xff]
  %v216 = vld [vmem:[%s25 + $0x30] sm:$0xff]
  %v217 = vld [vmem:[%s25 + $0x38] sm:$0xff]
  %v218 = vld [vmem:[%s25 + $0x40] sm:$0xff]
  %v219 = vld [vmem:[%s25 + $0x48] sm:$0xff]
  %v220 = vld [vmem:[%s25 + $0x50] sm:$0xff]
  %v221 = vld [vmem:[%s25 + $0x58] sm:$0xff]
  %v222 = vld [vmem:[%s25 + $0x60] sm:$0xff]
  %v223 = vld [vmem:[%s25 + $0x68] sm:$0xff]
  %v224 = vld [vmem:[%s25 + $0x70] sm:$0xff]
  %v225 = vld [vmem:[%s25 + $0x78] sm:$0xff]
  %v226 = vld [vmem:[%s27] sm:$0xff]
  %v227 = vld [vmem:[%s27 + $0x8] sm:$0xff]
  %v228 = vld [vmem:[%s27 + $0x10] sm:$0xff]
  %v229 = vld [vmem:[%s27 + $0x18] sm:$0xff]
  %v230 = vld [vmem:[%s27 + $0x20] sm:$0xff]
  %v231 = vld [vmem:[%s27 + $0x28] sm:$0xff]
  %v232 = vld [vmem:[%s27 + $0x30] sm:$0xff]
  %v233 = vld [vmem:[%s27 + $0x38] sm:$0xff]
  %v234 = vld [vmem:[%s29] sm:$0xff]
  %v235 = vld [vmem:[%s29 + $0x8] sm:$0xff]
  %v236 = vld [vmem:[%s29 + $0x10] sm:$0xff]
  %v237 = vld [vmem:[%s29 + $0x18] sm:$0xff]
  %v238 = vld [vmem:[%s29 + $0x20] sm:$0xff]
  %v239 = vld [vmem:[%s29 + $0x28] sm:$0xff]
  %v240 = vld [vmem:[%s29 + $0x30] sm:$0xff]
  %v241 = vld [vmem:[%s29 + $0x38] sm:$0xff]
  %v242 = vld [vmem:[%s31] sm:$0x1]
  %v243 = vld [vmem:[%s33] sm:$0x3f]
  %v244 = vld [vmem:[%s35] sm:$0x1]
  %v245 = vld [vmem:[%s35 + $0x1] sm:$0x1]
  %v246 = vld [vmem:[%s37] sm:$0x1]
  %v247 = vld [vmem:[%s37 + $0x1] sm:$0x1]
  %v248 = vld [vmem:[%s39] sm:$0x1]
  %v249 = vld [vmem:[%s39 + $0x1] sm:$0x1]
  %v250 = vld [vmem:[%s41] sm:$0x1]
  %v251 = vld [vmem:[%s41 + $0x1] sm:$0x1]
  %v252 = vld [vmem:[%s43] sm:$0x1]
  %v253 = vld [vmem:[%s43 + $0x1] sm:$0x1]
  %v254 = vld [vmem:[%s45] sm:$0x1]
  %v255 = vld [vmem:[%s45 + $0x1] sm:$0x1]
  %v256 = vld [vmem:[%s47] sm:$0x1]
  %v257 = vld [vmem:[%s47 + $0x1] sm:$0x1]
  %v258 = vld [vmem:[%s49] sm:$0x1]
  %v259 = vld [vmem:[%s49 + $0x1] sm:$0x1]
  %v260 = vld [vmem:[%s51] sm:$0xff]
  %v261 = vld [vmem:[%s51 + $0x8] sm:$0xff]
  %v262 = vld [vmem:[%s51 + $0x10] sm:$0xff]
  %v263 = vld [vmem:[%s51 + $0x18] sm:$0xff]
  %v264 = vld [vmem:[%s51 + $0x20] sm:$0xff]
  %v265 = vld [vmem:[%s51 + $0x28] sm:$0xff]
  %v266 = vld [vmem:[%s51 + $0x30] sm:$0xff]
  %v267 = vld [vmem:[%s51 + $0x38] sm:$0xff]
  %v268 = vld [vmem:[%s53] sm:$0xff]
  %v269 = vld [vmem:[%s53 + $0x8] sm:$0xff]
  %v270 = vld [vmem:[%s53 + $0x10] sm:$0xff]
  %v271 = vld [vmem:[%s53 + $0x18] sm:$0xff]
  %v272 = vld [vmem:[%s53 + $0x20] sm:$0xff]
  %v273 = vld [vmem:[%s53 + $0x28] sm:$0xff]
  %v274 = vld [vmem:[%s53 + $0x30] sm:$0xff]
  %v275 = vld [vmem:[%s53 + $0x38] sm:$0xff]
  %v276 = vld [vmem:[%s53 + $0x40] sm:$0xff]
  %v277 = vld [vmem:[%s53 + $0x48] sm:$0xff]
  %v278 = vld [vmem:[%s53 + $0x50] sm:$0xff]
  %v279 = vld [vmem:[%s53 + $0x58] sm:$0xff]
  %v280 = vld [vmem:[%s53 + $0x60] sm:$0xff]
  %v281 = vld [vmem:[%s53 + $0x68] sm:$0xff]
  %v282 = vld [vmem:[%s53 + $0x70] sm:$0xff]
  %v283 = vld [vmem:[%s53 + $0x78] sm:$0xff]
  %v284 = vld [vmem:[%s55] sm:$0xff]
  %v285 = vld [vmem:[%s55 + $0x8] sm:$0xff]
  %v286 = vld [vmem:[%s55 + $0x10] sm:$0xff]
  %v287 = vld [vmem:[%s55 + $0x18] sm:$0xff]
  %v288 = vld [vmem:[%s55 + $0x20] sm:$0xff]
  %v289 = vld [vmem:[%s55 + $0x28] sm:$0xff]
  %v290 = vld [vmem:[%s55 + $0x30] sm:$0xff]
  %v291 = vld [vmem:[%s55 + $0x38] sm:$0xff]
  %v292 = vld [vmem:[%s57] sm:$0xff]
  %v293 = vld [vmem:[%s57 + $0x8] sm:$0xff]
  %v294 = vld [vmem:[%s57 + $0x10] sm:$0xff]
  %v295 = vld [vmem:[%s57 + $0x18] sm:$0xff]
  %v296 = vld [vmem:[%s57 + $0x20] sm:$0xff]
  %v297 = vld [vmem:[%s57 + $0x28] sm:$0xff]
  %v298 = vld [vmem:[%s57 + $0x30] sm:$0xff]
  %v299 = vld [vmem:[%s57 + $0x38] sm:$0xff]
  %v300 = vld [vmem:[%s59] sm:$0x1]
  %v301 = vld [vmem:[%s61] sm:$0xff]
  %v302 = vld [vmem:[%s61 + $0x8] sm:$0xff]
  %v303 = vld [vmem:[%s61 + $0x10] sm:$0xff]
  %v304 = vld [vmem:[%s61 + $0x18] sm:$0xff]
  %v305 = vld [vmem:[%s63] sm:$0x1]
  %v306 = vld [vmem:[%s65] sm:$0xff]
  %v307 = vld [vmem:[%s65 + $0x8] sm:$0xff]
  %v308 = vld [vmem:[%s67] sm:$0x1]
  %v309 = vld [vmem:[%s69] sm:$0x1]
  %v310 = vld [vmem:[%s71] sm:$0xff]
  %v311 = vld [vmem:[%s71 + $0x8] sm:$0xff]
  %v312 = vld [vmem:[%s71 + $0x10] sm:$0xff]
  %v313 = vld [vmem:[%s71 + $0x18] sm:$0xff]
  %v314 = vld [vmem:[%s73] sm:$0xff]
  %v315 = vld [vmem:[%s73 + $0x8] sm:$0xff]
  %v316 = vld [vmem:[%s73 + $0x10] sm:$0xff]
  %v317 = vld [vmem:[%s73 + $0x18] sm:$0xff]
  %v318 = vld [vmem:[%s75] sm:$0xff]
  %v319 = vld [vmem:[%s75 + $0x8] sm:$0xff]
  %v320 = vld [vmem:[%s75 + $0x10] sm:$0x3]
  %v321 = vld [vmem:[%s77] sm:$0x3]
  %v322 = vld [vmem:[%s79] sm:$0x3]
  %v323 = vld [vmem:[%s81] sm:$0xff]
  %v324 = vld [vmem:[%s81 + $0x8] sm:$0xff]
  %v325 = vld [vmem:[%s83] sm:$0xff]
  %v326 = vld [vmem:[%s83 + $0x8] sm:$0xff]
  %v328 = vlaneseq
  %v329 = vshrl.u32 %v328, 7
  %v330 = vsub.s32 0, %v329
  %v331 = vrot.slane %v308, %v330
  %vm333 = vcmask 261120
  %v335 = vsel %vm333, %v321, 0
  %337 = vmatprep.subr.mxu0 0.0
  %338 = vmatpush1.msra.mxu0 %v310
  %339 = vmatprep.subr.mxu0 0.0
  %340 = vmatpush1.msra.mxu0 %v311
  %341 = vmatprep.subr.mxu0 0.0
  %342 = vmatpush1.msra.mxu0 %v312
  %343 = vmatprep.subr.mxu0 0.0
  %344 = vmatpush1.msra.mxu0 %v313
  %345 = vmatprep.subr.mxu0 0.0
  %346 = vmatpush1.msra.mxu0 0.0
  %347 = vmatprep.subr.mxu0 0.0
  %348 = vmatpush1.msra.mxu0 0.0
  %349 = vmatprep.subr.mxu0 0.0
  %350 = vmatpush1.msra.mxu0 0.0
  %351 = vmatprep.subr.mxu0 0.0
  %352 = vmatpush1.msra.mxu0 0.0
  %353 = vmatprep.subr.mxu0 0.0
  %354 = vmatpush1.msra.mxu0 0.0
  %355 = vmatprep.subr.mxu0 0.0
  %356 = vmatpush1.msra.mxu0 0.0
  %357 = vmatprep.subr.mxu0 0.0
  %358 = vmatpush1.msra.mxu0 0.0
  %359 = vmatprep.subr.mxu0 0.0
  %360 = vmatpush1.msra.mxu0 0.0
  %361 = vmatprep.subr.mxu0 0.0
  %362 = vmatpush1.msra.mxu0 0.0
  %363 = vmatprep.subr.mxu0 0.0
  %364 = vmatpush1.msra.mxu0 0.0
  %365 = vmatprep.subr.mxu0 0.0
  %366 = vmatpush1.msra.mxu0 0.0
  %367 = vmatprep.subr.mxu0 0.0
  %368 = vmatpush1.msra.mxu0 0.0
  %369 = vmatprep.subr.mxu0 0.0
  %370 = vmatpush1.msra.mxu0 0.0
  %371 = vmatprep.subr.mxu0 0.0
  %372 = vmatpush1.msra.mxu0 0.0
  %373 = vmatprep.subr.mxu0 0.0
  %374 = vmatpush1.msra.mxu0 0.0
  %375 = vmatprep.subr.mxu0 0.0
  %376 = vmatpush1.msra.mxu0 0.0
  %377 = vmatprep.subr.mxu0 0.0
  %378 = vmatpush1.msra.mxu0 0.0
  %379 = vmatprep.subr.mxu0 0.0
  %380 = vmatpush1.msra.mxu0 0.0
  %381 = vmatprep.subr.mxu0 0.0
  %382 = vmatpush1.msra.mxu0 0.0
  %383 = vmatprep.subr.mxu0 0.0
  %384 = vmatpush1.msra.mxu0 0.0
  %385 = vmatprep.subr.mxu0 0.0
  %386 = vmatpush1.msra.mxu0 0.0
  %387 = vmatprep.subr.mxu0 0.0
  %388 = vmatpush1.msra.mxu0 0.0
  %389 = vmatprep.subr.mxu0 0.0
  %390 = vmatpush1.msra.mxu0 0.0
  %391 = vmatprep.subr.mxu0 0.0
  %392 = vmatpush1.msra.mxu0 0.0
  %393 = vmatprep.subr.mxu0 0.0
  %394 = vmatpush1.msra.mxu0 0.0
  %395 = vmatprep.subr.mxu0 0.0
  %396 = vmatpush1.msra.mxu0 0.0
  %397 = vmatprep.subr.mxu0 0.0
  %398 = vmatpush1.msra.mxu0 0.0
  %399 = vmatprep.subr.mxu0 0.0
  %400 = vmatpush1.msra.mxu0 0.0
  %401 = vmatprep.mubr.f32.mxu0 0.0
  %402 = vmatmul.mubr.f32.gmra.mrb[0].mxu0 %v335
  %v403 = vpop.f32.mrb[0].mxu0
  %v404 = vadd.f32 %v331, %v403
  %v405 = vpop.f32.mrb[0].mxu0
  %406 = vdwg.mxu0
  %v407 = vxor.u32 %v404, 2147483648
  %v408 = vmul.f32 %v407, 1.442695
  %v409 = vpow.pop %v408
  %v410 = vadd.f32 %v409, 1.0
  %v411 = vrcp.pop %v410
  %v412 = vmul.f32 1.0, %v411
  %v413 = vmul.f32 %v404, %v412
  %v415 = vlaneseq
  %v416 = vshrl.u32 %v415, 7
  %v417 = vsub.s32 0, %v416
  %v418 = vrot.slane %v309, %v417
  %v421 = vsel %vm333, %v413, 0
  %423 = vmatprep.subr.mxu0 0.0
  %424 = vmatpush1.msra.mxu0 %v314
  %425 = vmatprep.subr.mxu0 0.0
  %426 = vmatpush1.msra.mxu0 %v315
  %427 = vmatprep.subr.mxu0 0.0
  %428 = vmatpush1.msra.mxu0 %v316
  %429 = vmatprep.subr.mxu0 0.0
  %430 = vmatpush1.msra.mxu0 %v317
  %431 = vmatprep.subr.mxu0 0.0
  %432 = vmatpush1.msra.mxu0 0.0
  %433 = vmatprep.subr.mxu0 0.0
  %434 = vmatpush1.msra.mxu0 0.0
  %435 = vmatprep.subr.mxu0 0.0
  %436 = vmatpush1.msra.mxu0 0.0
  %437 = vmatprep.subr.mxu0 0.0
  %438 = vmatpush1.msra.mxu0 0.0
  %439 = vmatprep.subr.mxu0 0.0
  %440 = vmatpush1.msra.mxu0 0.0
  %441 = vmatprep.subr.mxu0 0.0
  %442 = vmatpush1.msra.mxu0 0.0
  %443 = vmatprep.subr.mxu0 0.0
  %444 = vmatpush1.msra.mxu0 0.0
  %445 = vmatprep.subr.mxu0 0.0
  %446 = vmatpush1.msra.mxu0 0.0
  %447 = vmatprep.subr.mxu0 0.0
  %448 = vmatpush1.msra.mxu0 0.0
  %449 = vmatprep.subr.mxu0 0.0
  %450 = vmatpush1.msra.mxu0 0.0
  %451 = vmatprep.subr.mxu0 0.0
  %452 = vmatpush1.msra.mxu0 0.0
  %453 = vmatprep.subr.mxu0 0.0
  %454 = vmatpush1.msra.mxu0 0.0
  %455 = vmatprep.subr.mxu0 0.0
  %456 = vmatpush1.msra.mxu0 0.0
  %457 = vmatprep.subr.mxu0 0.0
  %458 = vmatpush1.msra.mxu0 0.0
  %459 = vmatprep.subr.mxu0 0.0
  %460 = vmatpush1.msra.mxu0 0.0
  %461 = vmatprep.subr.mxu0 0.0
  %462 = vmatpush1.msra.mxu0 0.0
  %463 = vmatprep.subr.mxu0 0.0
  %464 = vmatpush1.msra.mxu0 0.0
  %465 = vmatprep.subr.mxu0 0.0
  %466 = vmatpush1.msra.mxu0 0.0
  %467 = vmatprep.subr.mxu0 0.0
  %468 = vmatpush1.msra.mxu0 0.0
  %469 = vmatprep.subr.mxu0 0.0
  %470 = vmatpush1.msra.mxu0 0.0
  %471 = vmatprep.subr.mxu0 0.0
  %472 = vmatpush1.msra.mxu0 0.0
  %473 = vmatprep.subr.mxu0 0.0
  %474 = vmatpush1.msra.mxu0 0.0
  %475 = vmatprep.subr.mxu0 0.0
  %476 = vmatpush1.msra.mxu0 0.0
  %477 = vmatprep.subr.mxu0 0.0
  %478 = vmatpush1.msra.mxu0 0.0
  %479 = vmatprep.subr.mxu0 0.0
  %480 = vmatpush1.msra.mxu0 0.0
  %481 = vmatprep.subr.mxu0 0.0
  %482 = vmatpush1.msra.mxu0 0.0
  %483 = vmatprep.subr.mxu0 0.0
  %484 = vmatpush1.msra.mxu0 0.0
  %485 = vmatprep.subr.mxu0 0.0
  %486 = vmatpush1.msra.mxu0 0.0
  %487 = vmatprep.mubr.f32.mxu0 0.0
  %488 = vmatmul.mubr.f32.gmra.mrb[0].mxu0 %v421
  %v489 = vpop.f32.mrb[0].mxu0
  %v490 = vadd.f32 %v418, %v489
  %v491 = vpop.f32.mrb[0].mxu0
  %492 = vdwg.mxu0
  %v494 = vlaneseq
  %v495 = vshrl.u32 %v494, 7
  %v496 = vsub.s32 0, %v495
  %v497 = vrot.slane %v305, %v496
  %vm499 = vcmask 130048
  %v501 = vsel %vm499, %v322, 0
  %503 = vmatprep.subr.mxu0 0.0
  %504 = vmatpush1.msra.mxu0 %v306
  %505 = vmatprep.subr.mxu0 0.0
  %506 = vmatpush1.msra.mxu0 %v307
  %507 = vmatprep.subr.mxu0 0.0
  %508 = vmatpush1.msra.mxu0 0.0
  %509 = vmatprep.subr.mxu0 0.0
  %510 = vmatpush1.msra.mxu0 0.0
  %511 = vmatprep.subr.mxu0 0.0
  %512 = vmatpush1.msra.mxu0 0.0
  %513 = vmatprep.subr.mxu0 0.0
  %514 = vmatpush1.msra.mxu0 0.0
  %515 = vmatprep.subr.mxu0 0.0
  %516 = vmatpush1.msra.mxu0 0.0
  %517 = vmatprep.subr.mxu0 0.0
  %518 = vmatpush1.msra.mxu0 0.0
  %519 = vmatprep.subr.mxu0 0.0
  %520 = vmatpush1.msra.mxu0 0.0
  %521 = vmatprep.subr.mxu0 0.0
  %522 = vmatpush1.msra.mxu0 0.0
  %523 = vmatprep.subr.mxu0 0.0
  %524 = vmatpush1.msra.mxu0 0.0
  %525 = vmatprep.subr.mxu0 0.0
  %526 = vmatpush1.msra.mxu0 0.0
  %527 = vmatprep.subr.mxu0 0.0
  %528 = vmatpush1.msra.mxu0 0.0
  %529 = vmatprep.subr.mxu0 0.0
  %530 = vmatpush1.msra.mxu0 0.0
  %531 = vmatprep.subr.mxu0 0.0
  %532 = vmatpush1.msra.mxu0 0.0
  %533 = vmatprep.subr.mxu0 0.0
  %534 = vmatpush1.msra.mxu0 0.0
  %535 = vmatprep.subr.mxu0 0.0
  %536 = vmatpush1.msra.mxu0 0.0
  %537 = vmatprep.subr.mxu0 0.0
  %538 = vmatpush1.msra.mxu0 0.0
  %539 = vmatprep.subr.mxu0 0.0
  %540 = vmatpush1.msra.mxu0 0.0
  %541 = vmatprep.subr.mxu0 0.0
  %542 = vmatpush1.msra.mxu0 0.0
  %543 = vmatprep.subr.mxu0 0.0
  %544 = vmatpush1.msra.mxu0 0.0
  %545 = vmatprep.subr.mxu0 0.0
  %546 = vmatpush1.msra.mxu0 0.0
  %547 = vmatprep.subr.mxu0 0.0
  %548 = vmatpush1.msra.mxu0 0.0
  %549 = vmatprep.subr.mxu0 0.0
  %550 = vmatpush1.msra.mxu0 0.0
  %551 = vmatprep.subr.mxu0 0.0
  %552 = vmatpush1.msra.mxu0 0.0
  %553 = vmatprep.subr.mxu0 0.0
  %554 = vmatpush1.msra.mxu0 0.0
  %555 = vmatprep.subr.mxu0 0.0
  %556 = vmatpush1.msra.mxu0 0.0
  %557 = vmatprep.subr.mxu0 0.0
  %558 = vmatpush1.msra.mxu0 0.0
  %559 = vmatprep.subr.mxu0 0.0
  %560 = vmatpush1.msra.mxu0 0.0
  %561 = vmatprep.subr.mxu0 0.0
  %562 = vmatpush1.msra.mxu0 0.0
  %563 = vmatprep.subr.mxu0 0.0
  %564 = vmatpush1.msra.mxu0 0.0
  %565 = vmatprep.subr.mxu0 0.0
  %566 = vmatpush1.msra.mxu0 0.0
  %567 = vmatprep.mubr.f32.mxu0 0.0
  %568 = vmatmul.mubr.f32.gmra.mrb[0].mxu0 %v501
  %v569 = vpop.f32.mrb[0].mxu0
  %v570 = vadd.f32 %v497, %v569
  %v571 = vpop.f32.mrb[0].mxu0
  %572 = vdwg.mxu0
  %v573 = vadd.f32 %v490, %v570
  %v575 = vlaneseq
  %v576 = vshrl.u32 %v575, 7
  %v577 = vsub.s32 0, %v576
  %v578 = vrot.slane %v242, %v577
  %vm580 = vcmask 48128
  %v582 = vsel %vm580, %v323, 0
  %v585 = vsel %vm580, %v324, 0
  %vm587 = vcmask 1045504
  %v589 = vsel %vm587, %v243, 0
  %591 = vmatprep.subr.mxu0 0.0
  %592 = vmatpush1.msra.mxu0 %v589
  %593 = vmatprep.subr.mxu0 0.0
  %594 = vmatpush1.msra.mxu0 0.0
  %595 = vmatprep.subr.mxu0 0.0
  %596 = vmatpush1.msra.mxu0 0.0
  %597 = vmatprep.subr.mxu0 0.0
  %598 = vmatpush1.msra.mxu0 0.0
  %599 = vmatprep.subr.mxu0 0.0
  %600 = vmatpush1.msra.mxu0 0.0
  %601 = vmatprep.subr.mxu0 0.0
  %602 = vmatpush1.msra.mxu0 0.0
  %603 = vmatprep.subr.mxu0 0.0
  %604 = vmatpush1.msra.mxu0 0.0
  %605 = vmatprep.subr.mxu0 0.0
  %606 = vmatpush1.msra.mxu0 0.0
  %607 = vmatprep.subr.mxu0 0.0
  %608 = vmatpush1.msra.mxu0 0.0
  %609 = vmatprep.subr.mxu0 0.0
  %610 = vmatpush1.msra.mxu0 0.0
  %611 = vmatprep.subr.mxu0 0.0
  %612 = vmatpush1.msra.mxu0 0.0
  %613 = vmatprep.subr.mxu0 0.0
  %614 = vmatpush1.msra.mxu0 0.0
  %615 = vmatprep.subr.mxu0 0.0
  %616 = vmatpush1.msra.mxu0 0.0
  %617 = vmatprep.subr.mxu0 0.0
  %618 = vmatpush1.msra.mxu0 0.0
  %619 = vmatprep.subr.mxu0 0.0
  %620 = vmatpush1.msra.mxu0 0.0
  %621 = vmatprep.subr.mxu0 0.0
  %622 = vmatpush1.msra.mxu0 0.0
  %623 = vmatprep.subr.mxu0 0.0
  %624 = vmatpush1.msra.mxu0 0.0
  %625 = vmatprep.subr.mxu0 0.0
  %626 = vmatpush1.msra.mxu0 0.0
  %627 = vmatprep.subr.mxu0 0.0
  %628 = vmatpush1.msra.mxu0 0.0
  %629 = vmatprep.subr.mxu0 0.0
  %630 = vmatpush1.msra.mxu0 0.0
  %631 = vmatprep.subr.mxu0 0.0
  %632 = vmatpush1.msra.mxu0 0.0
  %633 = vmatprep.subr.mxu0 0.0
  %634 = vmatpush1.msra.mxu0 0.0
  %635 = vmatprep.subr.mxu0 0.0
  %636 = vmatpush1.msra.mxu0 0.0
  %637 = vmatprep.subr.mxu0 0.0
  %638 = vmatpush1.msra.mxu0 0.0
  %639 = vmatprep.subr.mxu0 0.0
  %640 = vmatpush1.msra.mxu0 0.0
  %641 = vmatprep.subr.mxu0 0.0
  %642 = vmatpush1.msra.mxu0 0.0
  %643 = vmatprep.subr.mxu0 0.0
  %644 = vmatpush1.msra.mxu0 0.0
  %645 = vmatprep.subr.mxu0 0.0
  %646 = vmatpush1.msra.mxu0 0.0
  %647 = vmatprep.subr.mxu0 0.0
  %648 = vmatpush1.msra.mxu0 0.0
  %649 = vmatprep.subr.mxu0 0.0
  %650 = vmatpush1.msra.mxu0 0.0
  %651 = vmatprep.subr.mxu0 0.0
  %652 = vmatpush1.msra.mxu0 0.0
  %653 = vmatprep.subr.mxu0 0.0
  %654 = vmatpush1.msra.mxu0 0.0
  %655 = vmatprep.mubr.f32.mxu0 0.0
  %656 = vmatmul.mubr.f32.gmra.mrb[0].mxu0 %v582
  %v657 = vpop.f32.mrb[0].mxu0
  %v658 = vadd.f32 %v578, %v657
  %v659 = vpop.f32.mrb[0].mxu0
  %660 = vmatprep.mubr.f32.mxu0 0.0
  %661 = vmatmul.mubr.f32.gmra.mrb[0].mxu0 %v585
  %v662 = vpop.f32.mrb[0].mxu0
  %v663 = vadd.f32 %v578, %v662
  %v664 = vpop.f32.mrb[0].mxu0
  %665 = vdwg.mxu0
  %v667 = vsel %vm499, %v183, 0
  %v670 = vsel %vm499, %v184, 0
  %v673 = vsel %vm499, %v185, 0
  %675 = vmatprep.subr.mxu0 0.0
  %676 = vmatpush1.msra.mxu0 %v658
  %677 = vmatprep.subr.mxu0 0.0
  %678 = vmatpush1.msra.mxu0 %v663
  %679 = vmatprep.subr.mxu0 0.0
  %680 = vmatpush1.msra.mxu0 0.0
  %681 = vmatprep.subr.mxu0 0.0
  %682 = vmatpush1.msra.mxu0 0.0
  %683 = vmatprep.subr.mxu0 0.0
  %684 = vmatpush1.msra.mxu0 0.0
  %685 = vmatprep.subr.mxu0 0.0
  %686 = vmatpush1.msra.mxu0 0.0
  %687 = vmatprep.subr.mxu0 0.0
  %688 = vmatpush1.msra.mxu0 0.0
  %689 = vmatprep.subr.mxu0 0.0
  %690 = vmatpush1.msra.mxu0 0.0
  %691 = vmatprep.subr.mxu0 0.0
  %692 = vmatpush1.msra.mxu0 0.0
  %693 = vmatprep.subr.mxu0 0.0
  %694 = vmatpush1.msra.mxu0 0.0
  %695 = vmatprep.subr.mxu0 0.0
  %696 = vmatpush1.msra.mxu0 0.0
  %697 = vmatprep.subr.mxu0 0.0
  %698 = vmatpush1.msra.mxu0 0.0
  %699 = vmatprep.subr.mxu0 0.0
  %700 = vmatpush1.msra.mxu0 0.0
  %701 = vmatprep.subr.mxu0 0.0
  %702 = vmatpush1.msra.mxu0 0.0
  %703 = vmatprep.subr.mxu0 0.0
  %704 = vmatpush1.msra.mxu0 0.0
  %705 = vmatprep.subr.mxu0 0.0
  %706 = vmatpush1.msra.mxu0 0.0
  %707 = vmatprep.subr.mxu0 0.0
  %708 = vmatpush1.msra.mxu0 0.0
  %709 = vmatprep.subr.mxu0 0.0
  %710 = vmatpush1.msra.mxu0 0.0
  %711 = vmatprep.subr.mxu0 0.0
  %712 = vmatpush1.msra.mxu0 0.0
  %713 = vmatprep.subr.mxu0 0.0
  %714 = vmatpush1.msra.mxu0 0.0
  %715 = vmatprep.subr.mxu0 0.0
  %716 = vmatpush1.msra.mxu0 0.0
  %717 = vmatprep.subr.mxu0 0.0
  %718 = vmatpush1.msra.mxu0 0.0
  %719 = vmatprep.subr.mxu0 0.0
  %720 = vmatpush1.msra.mxu0 0.0
  %721 = vmatprep.subr.mxu0 0.0
  %722 = vmatpush1.msra.mxu0 0.0
  %723 = vmatprep.subr.mxu0 0.0
  %724 = vmatpush1.msra.mxu0 0.0
  %725 = vmatprep.subr.mxu0 0.0
  %726 = vmatpush1.msra.mxu0 0.0
  %727 = vmatprep.subr.mxu0 0.0
  %728 = vmatpush1.msra.mxu0 0.0
  %729 = vmatprep.subr.mxu0 0.0
  %730 = vmatpush1.msra.mxu0 0.0
  %731 = vmatprep.subr.mxu0 0.0
  %732 = vmatpush1.msra.mxu0 0.0
  %733 = vmatprep.subr.mxu0 0.0
  %734 = vmatpush1.msra.mxu0 0.0
  %735 = vmatprep.subr.mxu0 0.0
  %736 = vmatpush1.msra.mxu0 0.0
  %737 = vmatprep.subr.mxu0 0.0
  %738 = vmatpush1.msra.mxu0 0.0
  %739 = vmatprep.mubr.f32.mxu0 0.0
  %740 = vmatmul.mubr.f32.gmra.mrb[0].mxu0 %v667
  %v741 = vpop.f32.mrb[0].mxu0
  %v742 = vadd.f32 0.0, %v741
  %v743 = vpop.f32.mrb[0].mxu0
  %744 = vmatprep.mubr.f32.mxu0 0.0
  %745 = vmatmul.mubr.f32.gmra.mrb[0].mxu0 %v670
  %v746 = vpop.f32.mrb[0].mxu0
  %v747 = vadd.f32 0.0, %v746
  %v748 = vpop.f32.mrb[0].mxu0
  %749 = vmatprep.mubr.f32.mxu0 0.0
  %750 = vmatmul.mubr.f32.gmra.mrb[0].mxu0 %v673
  %v751 = vpop.f32.mrb[0].mxu0
  %v752 = vadd.f32 0.0, %v751
  %v753 = vpop.f32.mrb[0].mxu0
  %754 = vdwg.mxu0
  %vm755 = vcmask 15360
  %v757 = vsel %vm755, %v180, 0
  %v760 = vsel %vm755, %v181, 0
  %v763 = vsel %vm755, %v182, 0
  %vm765 = vcmask 1041408
  %v767 = vsel %vm765, %v573, 0
  %769 = vmatprep.subr.mxu0 0.0
  %770 = vmatpush1.msra.mxu0 %v767
  %771 = vmatprep.subr.mxu0 0.0
  %772 = vmatpush1.msra.mxu0 0.0
  %773 = vmatprep.subr.mxu0 0.0
  %774 = vmatpush1.msra.mxu0 0.0
  %775 = vmatprep.subr.mxu0 0.0
  %776 = vmatpush1.msra.mxu0 0.0
  %777 = vmatprep.subr.mxu0 0.0
  %778 = vmatpush1.msra.mxu0 0.0
  %779 = vmatprep.subr.mxu0 0.0
  %780 = vmatpush1.msra.mxu0 0.0
  %781 = vmatprep.subr.mxu0 0.0
  %782 = vmatpush1.msra.mxu0 0.0
  %783 = vmatprep.subr.mxu0 0.0
  %784 = vmatpush1.msra.mxu0 0.0
  %785 = vmatprep.subr.mxu0 0.0
  %786 = vmatpush1.msra.mxu0 0.0
  %787 = vmatprep.subr.mxu0 0.0
  %788 = vmatpush1.msra.mxu0 0.0
  %789 = vmatprep.subr.mxu0 0.0
  %790 = vmatpush1.msra.mxu0 0.0
  %791 = vmatprep.subr.mxu0 0.0
  %792 = vmatpush1.msra.mxu0 0.0
  %793 = vmatprep.subr.mxu0 0.0
  %794 = vmatpush1.msra.mxu0 0.0
  %795 = vmatprep.subr.mxu0 0.0
  %796 = vmatpush1.msra.mxu0 0.0
  %797 = vmatprep.subr.mxu0 0.0
  %798 = vmatpush1.msra.mxu0 0.0
  %799 = vmatprep.subr.mxu0 0.0
  %800 = vmatpush1.msra.mxu0 0.0
  %801 = vmatprep.subr.mxu0 0.0
  %802 = vmatpush1.msra.mxu0 0.0
  %803 = vmatprep.subr.mxu0 0.0
  %804 = vmatpush1.msra.mxu0 0.0
  %805 = vmatprep.subr.mxu0 0.0
  %806 = vmatpush1.msra.mxu0 0.0
  %807 = vmatprep.subr.mxu0 0.0
  %808 = vmatpush1.msra.mxu0 0.0
  %809 = vmatprep.subr.mxu0 0.0
  %810 = vmatpush1.msra.mxu0 0.0
  %811 = vmatprep.subr.mxu0 0.0
  %812 = vmatpush1.msra.mxu0 0.0
  %813 = vmatprep.subr.mxu0 0.0
  %814 = vmatpush1.msra.mxu0 0.0
  %815 = vmatprep.subr.mxu0 0.0
  %816 = vmatpush1.msra.mxu0 0.0
  %817 = vmatprep.subr.mxu0 0.0
  %818 = vmatpush1.msra.mxu0 0.0
  %819 = vmatprep.subr.mxu0 0.0
  %820 = vmatpush1.msra.mxu0 0.0
  %821 = vmatprep.subr.mxu0 0.0
  %822 = vmatpush1.msra.mxu0 0.0
  %823 = vmatprep.subr.mxu0 0.0
  %824 = vmatpush1.msra.mxu0 0.0
  %825 = vmatprep.subr.mxu0 0.0
  %826 = vmatpush1.msra.mxu0 0.0
  %827 = vmatprep.subr.mxu0 0.0
  %828 = vmatpush1.msra.mxu0 0.0
  %829 = vmatprep.subr.mxu0 0.0
  %830 = vmatpush1.msra.mxu0 0.0
  %831 = vmatprep.subr.mxu0 0.0
  %832 = vmatpush1.msra.mxu0 0.0
  %833 = vmatprep.mubr.f32.mxu0 0.0
  %834 = vmatmul.mubr.f32.gmra.mrb[0].mxu0 %v757
  %v835 = vpop.f32.mrb[0].mxu0
  %v836 = vadd.f32 %v742, %v835
  %v837 = vpop.f32.mrb[0].mxu0
  %838 = vmatprep.mubr.f32.mxu0 0.0
  %839 = vmatmul.mubr.f32.gmra.mrb[0].mxu0 %v760
  %v840 = vpop.f32.mrb[0].mxu0
  %v841 = vadd.f32 %v747, %v840
  %v842 = vpop.f32.mrb[0].mxu0
  %843 = vmatprep.mubr.f32.mxu0 0.0
  %844 = vmatmul.mubr.f32.gmra.mrb[0].mxu0 %v763
  %v845 = vpop.f32.mrb[0].mxu0
  %v846 = vadd.f32 %v752, %v845
  %v847 = vpop.f32.mrb[0].mxu0
  %848 = vdwg.mxu0
  %v849 = vadd.f32 %v836, %v318
  %v850 = vadd.f32 %v841, %v319
  %v851 = vadd.f32 %v846, %v320
  %v853 = vsel %vm580, %v325, 0
  %v856 = vsel %vm580, %v326, 0
  %858 = vmatprep.subr.mxu0 0.0
  %859 = vmatpush1.msra.mxu0 %v589
  %860 = vmatprep.subr.mxu0 0.0
  %861 = vmatpush1.msra.mxu0 0.0
  %862 = vmatprep.subr.mxu0 0.0
  %863 = vmatpush1.msra.mxu0 0.0
  %864 = vmatprep.subr.mxu0 0.0
  %865 = vmatpush1.msra.mxu0 0.0
  %866 = vmatprep.subr.mxu0 0.0
  %867 = vmatpush1.msra.mxu0 0.0
  %868 = vmatprep.subr.mxu0 0.0
  %869 = vmatpush1.msra.mxu0 0.0
  %870 = vmatprep.subr.mxu0 0.0
  %871 = vmatpush1.msra.mxu0 0.0
  %872 = vmatprep.subr.mxu0 0.0
  %873 = vmatpush1.msra.mxu0 0.0
  %874 = vmatprep.subr.mxu0 0.0
  %875 = vmatpush1.msra.mxu0 0.0
  %876 = vmatprep.subr.mxu0 0.0
  %877 = vmatpush1.msra.mxu0 0.0
  %878 = vmatprep.subr.mxu0 0.0
  %879 = vmatpush1.msra.mxu0 0.0
  %880 = vmatprep.subr.mxu0 0.0
  %881 = vmatpush1.msra.mxu0 0.0
  %882 = vmatprep.subr.mxu0 0.0
  %883 = vmatpush1.msra.mxu0 0.0
  %884 = vmatprep.subr.mxu0 0.0
  %885 = vmatpush1.msra.mxu0 0.0
  %886 = vmatprep.subr.mxu0 0.0
  %887 = vmatpush1.msra.mxu0 0.0
  %888 = vmatprep.subr.mxu0 0.0
  %889 = vmatpush1.msra.mxu0 0.0
  %890 = vmatprep.subr.mxu0 0.0
  %891 = vmatpush1.msra.mxu0 0.0
  %892 = vmatprep.subr.mxu0 0.0
  %893 = vmatpush1.msra.mxu0 0.0
  %894 = vmatprep.subr.mxu0 0.0
  %895 = vmatpush1.msra.mxu0 0.0
  %896 = vmatprep.subr.mxu0 0.0
  %897 = vmatpush1.msra.mxu0 0.0
  %898 = vmatprep.subr.mxu0 0.0
  %899 = vmatpush1.msra.mxu0 0.0
  %900 = vmatprep.subr.mxu0 0.0
  %901 = vmatpush1.msra.mxu0 0.0
  %902 = vmatprep.subr.mxu0 0.0
  %903 = vmatpush1.msra.mxu0 0.0
  %904 = vmatprep.subr.mxu0 0.0
  %905 = vmatpush1.msra.mxu0 0.0
  %906 = vmatprep.subr.mxu0 0.0
  %907 = vmatpush1.msra.mxu0 0.0
  %908 = vmatprep.subr.mxu0 0.0
  %909 = vmatpush1.msra.mxu0 0.0
  %910 = vmatprep.subr.mxu0 0.0
  %911 = vmatpush1.msra.mxu0 0.0
  %912 = vmatprep.subr.mxu0 0.0
  %913 = vmatpush1.msra.mxu0 0.0
  %914 = vmatprep.subr.mxu0 0.0
  %915 = vmatpush1.msra.mxu0 0.0
  %916 = vmatprep.subr.mxu0 0.0
  %917 = vmatpush1.msra.mxu0 0.0
  %918 = vmatprep.subr.mxu0 0.0
  %919 = vmatpush1.msra.mxu0 0.0
  %920 = vmatprep.subr.mxu0 0.0
  %921 = vmatpush1.msra.mxu0 0.0
  %922 = vmatprep.mubr.f32.mxu0 0.0
  %923 = vmatmul.mubr.f32.gmra.mrb[0].mxu0 %v853
  %v924 = vpop.f32.mrb[0].mxu0
  %v925 = vadd.f32 %v578, %v924
  %v926 = vpop.f32.mrb[0].mxu0
  %927 = vmatprep.mubr.f32.mxu0 0.0
  %928 = vmatmul.mubr.f32.gmra.mrb[0].mxu0 %v856
  %v929 = vpop.f32.mrb[0].mxu0
  %v930 = vadd.f32 %v578, %v929
  %v931 = vpop.f32.mrb[0].mxu0
  %932 = vdwg.mxu0
  %933 = vmatprep.subr.mxu0 0.0
  %934 = vmatpush1.msra.mxu0 %v925
  %935 = vmatprep.subr.mxu0 0.0
  %936 = vmatpush1.msra.mxu0 %v930
  %937 = vmatprep.subr.mxu0 0.0
  %938 = vmatpush1.msra.mxu0 0.0
  %939 = vmatprep.subr.mxu0 0.0
  %940 = vmatpush1.msra.mxu0 0.0
  %941 = vmatprep.subr.mxu0 0.0
  %942 = vmatpush1.msra.mxu0 0.0
  %943 = vmatprep.subr.mxu0 0.0
  %944 = vmatpush1.msra.mxu0 0.0
  %945 = vmatprep.subr.mxu0 0.0
  %946 = vmatpush1.msra.mxu0 0.0
  %947 = vmatprep.subr.mxu0 0.0
  %948 = vmatpush1.msra.mxu0 0.0
  %949 = vmatprep.subr.mxu0 0.0
  %950 = vmatpush1.msra.mxu0 0.0
  %951 = vmatprep.subr.mxu0 0.0
  %952 = vmatpush1.msra.mxu0 0.0
  %953 = vmatprep.subr.mxu0 0.0
  %954 = vmatpush1.msra.mxu0 0.0
  %955 = vmatprep.subr.mxu0 0.0
  %956 = vmatpush1.msra.mxu0 0.0
  %957 = vmatprep.subr.mxu0 0.0
  %958 = vmatpush1.msra.mxu0 0.0
  %959 = vmatprep.subr.mxu0 0.0
  %960 = vmatpush1.msra.mxu0 0.0
  %961 = vmatprep.subr.mxu0 0.0
  %962 = vmatpush1.msra.mxu0 0.0
  %963 = vmatprep.subr.mxu0 0.0
  %964 = vmatpush1.msra.mxu0 0.0
  %965 = vmatprep.subr.mxu0 0.0
  %966 = vmatpush1.msra.mxu0 0.0
  %967 = vmatprep.subr.mxu0 0.0
  %968 = vmatpush1.msra.mxu0 0.0
  %969 = vmatprep.subr.mxu0 0.0
  %970 = vmatpush1.msra.mxu0 0.0
  %971 = vmatprep.subr.mxu0 0.0
  %972 = vmatpush1.msra.mxu0 0.0
  %973 = vmatprep.subr.mxu0 0.0
  %974 = vmatpush1.msra.mxu0 0.0
  %975 = vmatprep.subr.mxu0 0.0
  %976 = vmatpush1.msra.mxu0 0.0
  %977 = vmatprep.subr.mxu0 0.0
  %978 = vmatpush1.msra.mxu0 0.0
  %979 = vmatprep.subr.mxu0 0.0
  %980 = vmatpush1.msra.mxu0 0.0
  %981 = vmatprep.subr.mxu0 0.0
  %982 = vmatpush1.msra.mxu0 0.0
  %983 = vmatprep.subr.mxu0 0.0
  %984 = vmatpush1.msra.mxu0 0.0
  %985 = vmatprep.subr.mxu0 0.0
  %986 = vmatpush1.msra.mxu0 0.0
  %987 = vmatprep.subr.mxu0 0.0
  %988 = vmatpush1.msra.mxu0 0.0
  %989 = vmatprep.subr.mxu0 0.0
  %990 = vmatpush1.msra.mxu0 0.0
  %991 = vmatprep.subr.mxu0 0.0
  %992 = vmatpush1.msra.mxu0 0.0
  %993 = vmatprep.subr.mxu0 0.0
  %994 = vmatpush1.msra.mxu0 0.0
  %995 = vmatprep.subr.mxu0 0.0
  %996 = vmatpush1.msra.mxu0 0.0
  %997 = vmatprep.mubr.f32.mxu0 0.0
  %998 = vmatmul.mubr.f32.gmra.mrb[0].mxu0 %v667
  %v999 = vpop.f32.mrb[0].mxu0
  %v1000 = vadd.f32 0.0, %v999
  %v1001 = vpop.f32.mrb[0].mxu0
  %1002 = vmatprep.mubr.f32.mxu0 0.0
  %1003 = vmatmul.mubr.f32.gmra.mrb[0].mxu0 %v670
  %v1004 = vpop.f32.mrb[0].mxu0
  %v1005 = vadd.f32 0.0, %v1004
  %v1006 = vpop.f32.mrb[0].mxu0
  %1007 = vmatprep.mubr.f32.mxu0 0.0
  %1008 = vmatmul.mubr.f32.gmra.mrb[0].mxu0 %v673
  %v1009 = vpop.f32.mrb[0].mxu0
  %v1010 = vadd.f32 0.0, %v1009
  %v1011 = vpop.f32.mrb[0].mxu0
  %1012 = vdwg.mxu0
  %1013 = vmatprep.subr.mxu0 0.0
  %1014 = vmatpush1.msra.mxu0 %v767
  %1015 = vmatprep.subr.mxu0 0.0
  %1016 = vmatpush1.msra.mxu0 0.0
  %1017 = vmatprep.subr.mxu0 0.0
  %1018 = vmatpush1.msra.mxu0 0.0
  %1019 = vmatprep.subr.mxu0 0.0
  %1020 = vmatpush1.msra.mxu0 0.0
  %1021 = vmatprep.subr.mxu0 0.0
  %1022 = vmatpush1.msra.mxu0 0.0
  %1023 = vmatprep.subr.mxu0 0.0
  %1024 = vmatpush1.msra.mxu0 0.0
  %1025 = vmatprep.subr.mxu0 0.0
  %1026 = vmatpush1.msra.mxu0 0.0
  %1027 = vmatprep.subr.mxu0 0.0
  %1028 = vmatpush1.msra.mxu0 0.0
  %1029 = vmatprep.subr.mxu0 0.0
  %1030 = vmatpush1.msra.mxu0 0.0
  %1031 = vmatprep.subr.mxu0 0.0
  %1032 = vmatpush1.msra.mxu0 0.0
  %1033 = vmatprep.subr.mxu0 0.0
  %1034 = vmatpush1.msra.mxu0 0.0
  %1035 = vmatprep.subr.mxu0 0.0
  %1036 = vmatpush1.msra.mxu0 0.0
  %1037 = vmatprep.subr.mxu0 0.0
  %1038 = vmatpush1.msra.mxu0 0.0
  %1039 = vmatprep.subr.mxu0 0.0
  %1040 = vmatpush1.msra.mxu0 0.0
  %1041 = vmatprep.subr.mxu0 0.0
  %1042 = vmatpush1.msra.mxu0 0.0
  %1043 = vmatprep.subr.mxu0 0.0
  %1044 = vmatpush1.msra.mxu0 0.0
  %1045 = vmatprep.subr.mxu0 0.0
  %1046 = vmatpush1.msra.mxu0 0.0
  %1047 = vmatprep.subr.mxu0 0.0
  %1048 = vmatpush1.msra.mxu0 0.0
  %1049 = vmatprep.subr.mxu0 0.0
  %1050 = vmatpush1.msra.mxu0 0.0
  %1051 = vmatprep.subr.mxu0 0.0
  %1052 = vmatpush1.msra.mxu0 0.0
  %1053 = vmatprep.subr.mxu0 0.0
  %1054 = vmatpush1.msra.mxu0 0.0
  %1055 = vmatprep.subr.mxu0 0.0
  %1056 = vmatpush1.msra.mxu0 0.0
  %1057 = vmatprep.subr.mxu0 0.0
  %1058 = vmatpush1.msra.mxu0 0.0
  %1059 = vmatprep.subr.mxu0 0.0
  %1060 = vmatpush1.msra.mxu0 0.0
  %1061 = vmatprep.subr.mxu0 0.0
  %1062 = vmatpush1.msra.mxu0 0.0
  %1063 = vmatprep.subr.mxu0 0.0
  %1064 = vmatpush1.msra.mxu0 0.0
  %1065 = vmatprep.subr.mxu0 0.0
  %1066 = vmatpush1.msra.mxu0 0.0
  %1067 = vmatprep.subr.mxu0 0.0
  %1068 = vmatpush1.msra.mxu0 0.0
  %1069 = vmatprep.subr.mxu0 0.0
  %1070 = vmatpush1.msra.mxu0 0.0
  %1071 = vmatprep.subr.mxu0 0.0
  %1072 = vmatpush1.msra.mxu0 0.0
  %1073 = vmatprep.subr.mxu0 0.0
  %1074 = vmatpush1.msra.mxu0 0.0
  %1075 = vmatprep.subr.mxu0 0.0
  %1076 = vmatpush1.msra.mxu0 0.0
  %1077 = vmatprep.mubr.f32.mxu0 0.0
  %1078 = vmatmul.mubr.f32.gmra.mrb[0].mxu0 %v757
  %v1079 = vpop.f32.mrb[0].mxu0
  %v1080 = vadd.f32 %v1000, %v1079
  %v1081 = vpop.f32.mrb[0].mxu0
  %1082 = vmatprep.mubr.f32.mxu0 0.0
  %1083 = vmatmul.mubr.f32.gmra.mrb[0].mxu0 %v760
  %v1084 = vpop.f32.mrb[0].mxu0
  %v1085 = vadd.f32 %v1005, %v1084
  %v1086 = vpop.f32.mrb[0].mxu0
  %1087 = vmatprep.mubr.f32.mxu0 0.0
  %1088 = vmatmul.mubr.f32.gmra.mrb[0].mxu0 %v763
  %v1089 = vpop.f32.mrb[0].mxu0
  %v1090 = vadd.f32 %v1010, %v1089
  %v1091 = vpop.f32.mrb[0].mxu0
  %1092 = vdwg.mxu0
  %v1093 = vadd.f32 %v1080, %v318
  %v1094 = vadd.f32 %v1085, %v319
  %v1095 = vadd.f32 %v1090, %v320
  %v1097 = vlaneseq
  %v1098 = vshrl.u32 %v1097, 7
  %v1099 = vsub.s32 0, %v1098
  %v1100 = vrot.slane %v192, %v1099
  %v1103 = vsel %vm333, %v849, 0
  %v1106 = vsel %vm333, %v850, 0
  %v1109 = vsel %vm333, %v851, 0
  %1111 = vmatprep.subr.mxu0 0.0
  %1112 = vmatpush1.msra.mxu0 %v234
  %1113 = vmatprep.subr.mxu0 0.0
  %1114 = vmatpush1.msra.mxu0 %v235
  %1115 = vmatprep.subr.mxu0 0.0
  %1116 = vmatpush1.msra.mxu0 %v236
  %1117 = vmatprep.subr.mxu0 0.0
  %1118 = vmatpush1.msra.mxu0 %v237
  %1119 = vmatprep.subr.mxu0 0.0
  %1120 = vmatpush1.msra.mxu0 0.0
  %1121 = vmatprep.subr.mxu0 0.0
  %1122 = vmatpush1.msra.mxu0 0.0
  %1123 = vmatprep.subr.mxu0 0.0
  %1124 = vmatpush1.msra.mxu0 0.0
  %1125 = vmatprep.subr.mxu0 0.0
  %1126 = vmatpush1.msra.mxu0 0.0
  %1127 = vmatprep.subr.mxu0 0.0
  %1128 = vmatpush1.msra.mxu0 0.0
  %1129 = vmatprep.subr.mxu0 0.0
  %1130 = vmatpush1.msra.mxu0 0.0
  %1131 = vmatprep.subr.mxu0 0.0
  %1132 = vmatpush1.msra.mxu0 0.0
  %1133 = vmatprep.subr.mxu0 0.0
  %1134 = vmatpush1.msra.mxu0 0.0
  %1135 = vmatprep.subr.mxu0 0.0
  %1136 = vmatpush1.msra.mxu0 0.0
  %1137 = vmatprep.subr.mxu0 0.0
  %1138 = vmatpush1.msra.mxu0 0.0
  %1139 = vmatprep.subr.mxu0 0.0
  %1140 = vmatpush1.msra.mxu0 0.0
  %1141 = vmatprep.subr.mxu0 0.0
  %1142 = vmatpush1.msra.mxu0 0.0
  %1143 = vmatprep.subr.mxu0 0.0
  %1144 = vmatpush1.msra.mxu0 0.0
  %1145 = vmatprep.subr.mxu0 0.0
  %1146 = vmatpush1.msra.mxu0 0.0
  %1147 = vmatprep.subr.mxu0 0.0
  %1148 = vmatpush1.msra.mxu0 0.0
  %1149 = vmatprep.subr.mxu0 0.0
  %1150 = vmatpush1.msra.mxu0 0.0
  %1151 = vmatprep.subr.mxu0 0.0
  %1152 = vmatpush1.msra.mxu0 0.0
  %1153 = vmatprep.subr.mxu0 0.0
  %1154 = vmatpush1.msra.mxu0 0.0
  %1155 = vmatprep.subr.mxu0 0.0
  %1156 = vmatpush1.msra.mxu0 0.0
  %1157 = vmatprep.subr.mxu0 0.0
  %1158 = vmatpush1.msra.mxu0 0.0
  %1159 = vmatprep.subr.mxu0 0.0
  %1160 = vmatpush1.msra.mxu0 0.0
  %1161 = vmatprep.subr.mxu0 0.0
  %1162 = vmatpush1.msra.mxu0 0.0
  %1163 = vmatprep.subr.mxu0 0.0
  %1164 = vmatpush1.msra.mxu0 0.0
  %1165 = vmatprep.subr.mxu0 0.0
  %1166 = vmatpush1.msra.mxu0 0.0
  %1167 = vmatprep.subr.mxu0 0.0
  %1168 = vmatpush1.msra.mxu0 0.0
  %1169 = vmatprep.subr.mxu0 0.0
  %1170 = vmatpush1.msra.mxu0 0.0
  %1171 = vmatprep.subr.mxu0 0.0
  %1172 = vmatpush1.msra.mxu0 0.0
  %1173 = vmatprep.subr.mxu0 0.0
  %1174 = vmatpush1.msra.mxu0 0.0
  %1175 = vmatprep.mubr.f32.mxu0 0.0
  %1176 = vmatmul.mubr.f32.gmra.mrb[0].mxu0 %v1103
  %v1177 = vpop.f32.mrb[0].mxu0
  %v1178 = vadd.f32 %v1100, %v1177
  %v1179 = vpop.f32.mrb[0].mxu0
  %1180 = vmatprep.mubr.f32.mxu0 0.0
  %1181 = vmatmul.mubr.f32.gmra.mrb[0].mxu0 %v1106
  %v1182 = vpop.f32.mrb[0].mxu0
  %v1183 = vadd.f32 %v1100, %v1182
  %v1184 = vpop.f32.mrb[0].mxu0
  %1185 = vmatprep.mubr.f32.mxu0 0.0
  %1186 = vmatmul.mubr.f32.gmra.mrb[0].mxu0 %v1109
  %v1187 = vpop.f32.mrb[0].mxu0
  %v1188 = vadd.f32 %v1100, %v1187
  %v1189 = vpop.f32.mrb[0].mxu0
  %1190 = vdwg.mxu0
  %v1191 = vmul.f32 %v1178, 0.25
  %v1192 = vmul.f32 %v1183, 0.25
  %v1193 = vmul.f32 %v1188, 0.25
  %1197 = vrot.lane.b32.xlu0 %v1178, 96
  %v1198 = vpop.permute.xlu0 %1197
  %1199 = vrot.lane.b32.xlu0 %v1183, 96
  %v1200 = vpop.permute.xlu0 %1199
  %1201 = vrot.lane.b32.xlu0 %v1188, 96
  %v1202 = vpop.permute.xlu0 %1201
  %v1204 = vsel %vm499, %v1191, 0
  %v1207 = vsel %vm499, %v1192, 0
  %v1210 = vsel %vm499, %v1193, 0
  %v1212 = vsel %vm499, %v1198, 0
  %v1214 = vsel %vm499, %v1200, 0
  %v1216 = vsel %vm499, %v1202, 0
  %1218 = vmatprep.subr.mxu0 0.0
  %1219 = vmatpush1.xpose.msra.mxu0 %v1212
  %1220 = vmatprep.subr.mxu0 0.0
  %1221 = vmatpush1.xpose.msra.mxu0 %v1214
  %1222 = vmatprep.subr.mxu0 0.0
  %1223 = vmatpush1.xpose.msra.mxu0 %v1216
  %1224 = vmatprep.subr.mxu0 0.0
  %1225 = vmatpush1.xpose.msra.mxu0 0.0
  %1226 = vmatprep.subr.mxu0 0.0
  %1227 = vmatpush1.xpose.msra.mxu0 0.0
  %1228 = vmatprep.subr.mxu0 0.0
  %1229 = vmatpush1.xpose.msra.mxu0 0.0
  %1230 = vmatprep.subr.mxu0 0.0
  %1231 = vmatpush1.xpose.msra.mxu0 0.0
  %1232 = vmatprep.subr.mxu0 0.0
  %1233 = vmatpush1.xpose.msra.mxu0 0.0
  %1234 = vmatprep.subr.mxu0 0.0
  %1235 = vmatpush1.xpose.msra.mxu0 0.0
  %1236 = vmatprep.subr.mxu0 0.0
  %1237 = vmatpush1.xpose.msra.mxu0 0.0
  %1238 = vmatprep.subr.mxu0 0.0
  %1239 = vmatpush1.xpose.msra.mxu0 0.0
  %1240 = vmatprep.subr.mxu0 0.0
  %1241 = vmatpush1.xpose.msra.mxu0 0.0
  %1242 = vmatprep.subr.mxu0 0.0
  %1243 = vmatpush1.xpose.msra.mxu0 0.0
  %1244 = vmatprep.subr.mxu0 0.0
  %1245 = vmatpush1.xpose.msra.mxu0 0.0
  %1246 = vmatprep.subr.mxu0 0.0
  %1247 = vmatpush1.xpose.msra.mxu0 0.0
  %1248 = vmatprep.subr.mxu0 0.0
  %1249 = vmatpush1.xpose.msra.mxu0 0.0
  %1250 = vmatprep.subr.mxu0 0.0
  %1251 = vmatpush1.xpose.msra.mxu0 0.0
  %1252 = vmatprep.subr.mxu0 0.0
  %1253 = vmatpush1.xpose.msra.mxu0 0.0
  %1254 = vmatprep.subr.mxu0 0.0
  %1255 = vmatpush1.xpose.msra.mxu0 0.0
  %1256 = vmatprep.subr.mxu0 0.0
  %1257 = vmatpush1.xpose.msra.mxu0 0.0
  %1258 = vmatprep.subr.mxu0 0.0
  %1259 = vmatpush1.xpose.msra.mxu0 0.0
  %1260 = vmatprep.subr.mxu0 0.0
  %1261 = vmatpush1.xpose.msra.mxu0 0.0
  %1262 = vmatprep.subr.mxu0 0.0
  %1263 = vmatpush1.xpose.msra.mxu0 0.0
  %1264 = vmatprep.subr.mxu0 0.0
  %1265 = vmatpush1.xpose.msra.mxu0 0.0
  %1266 = vmatprep.subr.mxu0 0.0
  %1267 = vmatpush1.xpose.msra.mxu0 0.0
  %1268 = vmatprep.subr.mxu0 0.0
  %1269 = vmatpush1.xpose.msra.mxu0 0.0
  %1270 = vmatprep.subr.mxu0 0.0
  %1271 = vmatpush1.xpose.msra.mxu0 0.0
  %1272 = vmatprep.subr.mxu0 0.0
  %1273 = vmatpush1.xpose.msra.mxu0 0.0
  %1274 = vmatprep.subr.mxu0 0.0
  %1275 = vmatpush1.xpose.msra.mxu0 0.0
  %1276 = vmatprep.subr.mxu0 0.0
  %1277 = vmatpush1.xpose.msra.mxu0 0.0
  %1278 = vmatprep.subr.mxu0 0.0
  %1279 = vmatpush1.xpose.msra.mxu0 0.0
  %1280 = vmatprep.subr.mxu0 0.0
  %1281 = vmatpush1.xpose.msra.mxu0 0.0
  %1282 = vmatprep.mubr.f32.mxu0 0.0
  %1283 = vmatmul.mubr.f32.gmra.mrb[0].mxu0 %v1204
  %v1284 = vpop.f32.mrb[0].mxu0
  %v1285 = vadd.f32 %v177, %v1284
  %v1286 = vpop.f32.mrb[0].mxu0
  %1287 = vmatprep.mubr.f32.mxu0 0.0
  %1288 = vmatmul.mubr.f32.gmra.mrb[0].mxu0 %v1207
  %v1289 = vpop.f32.mrb[0].mxu0
  %v1290 = vadd.f32 %v178, %v1289
  %v1291 = vpop.f32.mrb[0].mxu0
  %1292 = vmatprep.mubr.f32.mxu0 0.0
  %1293 = vmatmul.mubr.f32.gmra.mrb[0].mxu0 %v1210
  %v1294 = vpop.f32.mrb[0].mxu0
  %v1295 = vadd.f32 %v179, %v1294
  %v1296 = vpop.f32.mrb[0].mxu0
  %1297 = vdwg.mxu0
  %vm1298 = vcmask 146432
  %v1299 = vsel %vm1298, %v1285, -inf
  %1300 = vmax.xlane.f32.xlu0 %v1299
  %v1301 = vpop.xlane.xlu0 %1300
  %v1302 = vsel %vm1298, %v1290, -inf
  %1303 = vmax.xlane.f32.xlu0 %v1302
  %v1304 = vpop.xlane.xlu0 %1303
  %vm1305 = vcmask 140288
  %v1306 = vsel %vm1305, %v1295, -inf
  %1307 = vmax.xlane.f32.xlu0 %v1306
  %v1308 = vpop.xlane.xlu0 %1307
  %v1309 = vsub.f32 %v1285, %v1301
  %v1310 = vsub.f32 %v1290, %v1304
  %v1311 = vsub.f32 %v1295, %v1308
  %v1312 = vmul.f32 %v1309, 1.442695
  %v1313 = vpow.pop %v1312
  %v1314 = vmul.f32 %v1310, 1.442695
  %v1315 = vpow.pop %v1314
  %v1316 = vmul.f32 %v1311, 1.442695
  %v1317 = vpow.pop %v1316
  %v1318 = vsel %vm1298, %v1313, 0.0
  %1319 = vadd.xlane.f32.xlu0 %v1318
  %v1320 = vpop.xlane.xlu0 %1319
  %v1321 = vsel %vm1298, %v1315, 0.0
  %1322 = vadd.xlane.f32.xlu0 %v1321
  %v1323 = vpop.xlane.xlu0 %1322
  %v1324 = vsel %vm1305, %v1317, 0.0
  %1325 = vadd.xlane.f32.xlu0 %v1324
  %v1326 = vpop.xlane.xlu0 %1325
  %v1327 = vrcp.pop %v1320
  %v1328 = vrcp.pop %v1323
  %v1329 = vrcp.pop %v1326
  %1330 = vrot.lane.b32.xlu0 %v1178, 64
  %v1331 = vpop.permute.xlu0 %1330
  %1332 = vrot.lane.b32.xlu0 %v1183, 64
  %v1333 = vpop.permute.xlu0 %1332
  %1334 = vrot.lane.b32.xlu0 %v1188, 64
  %v1335 = vpop.permute.xlu0 %1334
  %v1339 = vsel %vm1298, %v1313, 0
  %v1342 = vsel %vm1298, %v1315, 0
  %v1345 = vsel %vm1298, %v1317, 0
  %v1347 = vsel %vm765, %v1335, 0
  %1349 = vmatprep.subr.mxu0 0.0
  %1350 = vmatpush1.msra.mxu0 %v1331
  %1351 = vmatprep.subr.mxu0 0.0
  %1352 = vmatpush1.msra.mxu0 %v1333
  %1353 = vmatprep.subr.mxu0 0.0
  %1354 = vmatpush1.msra.mxu0 %v1347
  %1355 = vmatprep.subr.mxu0 0.0
  %1356 = vmatpush1.msra.mxu0 0.0
  %1357 = vmatprep.subr.mxu0 0.0
  %1358 = vmatpush1.msra.mxu0 0.0
  %1359 = vmatprep.subr.mxu0 0.0
  %1360 = vmatpush1.msra.mxu0 0.0
  %1361 = vmatprep.subr.mxu0 0.0
  %1362 = vmatpush1.msra.mxu0 0.0
  %1363 = vmatprep.subr.mxu0 0.0
  %1364 = vmatpush1.msra.mxu0 0.0
  %1365 = vmatprep.subr.mxu0 0.0
  %1366 = vmatpush1.msra.mxu0 0.0
  %1367 = vmatprep.subr.mxu0 0.0
  %1368 = vmatpush1.msra.mxu0 0.0
  %1369 = vmatprep.subr.mxu0 0.0
  %1370 = vmatpush1.msra.mxu0 0.0
  %1371 = vmatprep.subr.mxu0 0.0
  %1372 = vmatpush1.msra.mxu0 0.0
  %1373 = vmatprep.subr.mxu0 0.0
  %1374 = vmatpush1.msra.mxu0 0.0
  %1375 = vmatprep.subr.mxu0 0.0
  %1376 = vmatpush1.msra.mxu0 0.0
  %1377 = vmatprep.subr.mxu0 0.0
  %1378 = vmatpush1.msra.mxu0 0.0
  %1379 = vmatprep.subr.mxu0 0.0
  %1380 = vmatpush1.msra.mxu0 0.0
  %1381 = vmatprep.subr.mxu0 0.0
  %1382 = vmatpush1.msra.mxu0 0.0
  %1383 = vmatprep.subr.mxu0 0.0
  %1384 = vmatpush1.msra.mxu0 0.0
  %1385 = vmatprep.subr.mxu0 0.0
  %1386 = vmatpush1.msra.mxu0 0.0
  %1387 = vmatprep.subr.mxu0 0.0
  %1388 = vmatpush1.msra.mxu0 0.0
  %1389 = vmatprep.subr.mxu0 0.0
  %1390 = vmatpush1.msra.mxu0 0.0
  %1391 = vmatprep.subr.mxu0 0.0
  %1392 = vmatpush1.msra.mxu0 0.0
  %1393 = vmatprep.subr.mxu0 0.0
  %1394 = vmatpush1.msra.mxu0 0.0
  %1395 = vmatprep.subr.mxu0 0.0
  %1396 = vmatpush1.msra.mxu0 0.0
  %1397 = vmatprep.subr.mxu0 0.0
  %1398 = vmatpush1.msra.mxu0 0.0
  %1399 = vmatprep.subr.mxu0 0.0
  %1400 = vmatpush1.msra.mxu0 0.0
  %1401 = vmatprep.subr.mxu0 0.0
  %1402 = vmatpush1.msra.mxu0 0.0
  %1403 = vmatprep.subr.mxu0 0.0
  %1404 = vmatpush1.msra.mxu0 0.0
  %1405 = vmatprep.subr.mxu0 0.0
  %1406 = vmatpush1.msra.mxu0 0.0
  %1407 = vmatprep.subr.mxu0 0.0
  %1408 = vmatpush1.msra.mxu0 0.0
  %1409 = vmatprep.subr.mxu0 0.0
  %1410 = vmatpush1.msra.mxu0 0.0
  %1411 = vmatprep.subr.mxu0 0.0
  %1412 = vmatpush1.msra.mxu0 0.0
  %1413 = vmatprep.mubr.f32.mxu0 0.0
  %1414 = vmatmul.mubr.f32.gmra.mrb[0].mxu0 %v1339
  %v1415 = vpop.f32.mrb[0].mxu0
  %v1416 = vadd.f32 0.0, %v1415
  %v1417 = vpop.f32.mrb[0].mxu0
  %1418 = vmatprep.mubr.f32.mxu0 0.0
  %1419 = vmatmul.mubr.f32.gmra.mrb[0].mxu0 %v1342
  %v1420 = vpop.f32.mrb[0].mxu0
  %v1421 = vadd.f32 0.0, %v1420
  %v1422 = vpop.f32.mrb[0].mxu0
  %1423 = vmatprep.mubr.f32.mxu0 0.0
  %1424 = vmatmul.mubr.f32.gmra.mrb[0].mxu0 %v1345
  %v1425 = vpop.f32.mrb[0].mxu0
  %v1426 = vadd.f32 0.0, %v1425
  %v1427 = vpop.f32.mrb[0].mxu0
  %1428 = vdwg.mxu0
  %v1429 = vmul.f32 %v1416, %v1327
  %v1430 = vmul.f32 %v1421, %v1328
  %v1431 = vmul.f32 %v1426, %v1329
  %1432 = vrot.lane.b32.xlu0 %v1191, 112
  %v1433 = vpop.permute.xlu0 %1432
  %1434 = vrot.lane.b32.xlu0 %v1192, 112
  %v1435 = vpop.permute.xlu0 %1434
  %1436 = vrot.lane.b32.xlu0 %v1193, 112
  %v1437 = vpop.permute.xlu0 %1436
  %1438 = vrot.lane.b32.xlu0 %v1178, 80
  %v1439 = vpop.permute.xlu0 %1438
  %1440 = vrot.lane.b32.xlu0 %v1183, 80
  %v1441 = vpop.permute.xlu0 %1440
  %1442 = vrot.lane.b32.xlu0 %v1188, 80
  %v1443 = vpop.permute.xlu0 %1442
  %v1444 = vsel %vm499, %v1433, 0
  %v1446 = vsel %vm499, %v1435, 0
  %v1448 = vsel %vm499, %v1437, 0
  %v1450 = vsel %vm499, %v1439, 0
  %v1452 = vsel %vm499, %v1441, 0
  %v1454 = vsel %vm499, %v1443, 0
  %1456 = vmatprep.subr.mxu0 0.0
  %1457 = vmatpush1.xpose.msra.mxu0 %v1450
  %1458 = vmatprep.subr.mxu0 0.0
  %1459 = vmatpush1.xpose.msra.mxu0 %v1452
  %1460 = vmatprep.subr.mxu0 0.0
  %1461 = vmatpush1.xpose.msra.mxu0 %v1454
  %1462 = vmatprep.subr.mxu0 0.0
  %1463 = vmatpush1.xpose.msra.mxu0 0.0
  %1464 = vmatprep.subr.mxu0 0.0
  %1465 = vmatpush1.xpose.msra.mxu0 0.0
  %1466 = vmatprep.subr.mxu0 0.0
  %1467 = vmatpush1.xpose.msra.mxu0 0.0
  %1468 = vmatprep.subr.mxu0 0.0
  %1469 = vmatpush1.xpose.msra.mxu0 0.0
  %1470 = vmatprep.subr.mxu0 0.0
  %1471 = vmatpush1.xpose.msra.mxu0 0.0
  %1472 = vmatprep.subr.mxu0 0.0
  %1473 = vmatpush1.xpose.msra.mxu0 0.0
  %1474 = vmatprep.subr.mxu0 0.0
  %1475 = vmatpush1.xpose.msra.mxu0 0.0
  %1476 = vmatprep.subr.mxu0 0.0
  %1477 = vmatpush1.xpose.msra.mxu0 0.0
  %1478 = vmatprep.subr.mxu0 0.0
  %1479 = vmatpush1.xpose.msra.mxu0 0.0
  %1480 = vmatprep.subr.mxu0 0.0
  %1481 = vmatpush1.xpose.msra.mxu0 0.0
  %1482 = vmatprep.subr.mxu0 0.0
  %1483 = vmatpush1.xpose.msra.mxu0 0.0
  %1484 = vmatprep.subr.mxu0 0.0
  %1485 = vmatpush1.xpose.msra.mxu0 0.0
  %1486 = vmatprep.subr.mxu0 0.0
  %1487 = vmatpush1.xpose.msra.mxu0 0.0
  %1488 = vmatprep.subr.mxu0 0.0
  %1489 = vmatpush1.xpose.msra.mxu0 0.0
  %1490 = vmatprep.subr.mxu0 0.0
  %1491 = vmatpush1.xpose.msra.mxu0 0.0
  %1492 = vmatprep.subr.mxu0 0.0
  %1493 = vmatpush1.xpose.msra.mxu0 0.0
  %1494 = vmatprep.subr.mxu0 0.0
  %1495 = vmatpush1.xpose.msra.mxu0 0.0
  %1496 = vmatprep.subr.mxu0 0.0
  %1497 = vmatpush1.xpose.msra.mxu0 0.0
  %1498 = vmatprep.subr.mxu0 0.0
  %1499 = vmatpush1.xpose.msra.mxu0 0.0
  %1500 = vmatprep.subr.mxu0 0.0
  %1501 = vmatpush1.xpose.msra.mxu0 0.0
  %1502 = vmatprep.subr.mxu0 0.0
  %1503 = vmatpush1.xpose.msra.mxu0 0.0
  %1504 = vmatprep.subr.mxu0 0.0
  %1505 = vmatpush1.xpose.msra.mxu0 0.0
  %1506 = vmatprep.subr.mxu0 0.0
  %1507 = vmatpush1.xpose.msra.mxu0 0.0
  %1508 = vmatprep.subr.mxu0 0.0
  %1509 = vmatpush1.xpose.msra.mxu0 0.0
  %1510 = vmatprep.subr.mxu0 0.0
  %1511 = vmatpush1.xpose.msra.mxu0 0.0
  %1512 = vmatprep.subr.mxu0 0.0
  %1513 = vmatpush1.xpose.msra.mxu0 0.0
  %1514 = vmatprep.subr.mxu0 0.0
  %1515 = vmatpush1.xpose.msra.mxu0 0.0
  %1516 = vmatprep.subr.mxu0 0.0
  %1517 = vmatpush1.xpose.msra.mxu0 0.0
  %1518 = vmatprep.subr.mxu0 0.0
  %1519 = vmatpush1.xpose.msra.mxu0 0.0
  %1520 = vmatprep.mubr.f32.mxu0 0.0
  %1521 = vmatmul.mubr.f32.gmra.mrb[0].mxu0 %v1444
  %v1522 = vpop.f32.mrb[0].mxu0
  %v1523 = vadd.f32 %v177, %v1522
  %v1524 = vpop.f32.mrb[0].mxu0
  %1525 = vmatprep.mubr.f32.mxu0 0.0
  %1526 = vmatmul.mubr.f32.gmra.mrb[0].mxu0 %v1446
  %v1527 = vpop.f32.mrb[0].mxu0
  %v1528 = vadd.f32 %v178, %v1527
  %v1529 = vpop.f32.mrb[0].mxu0
  %1530 = vmatprep.mubr.f32.mxu0 0.0
  %1531 = vmatmul.mubr.f32.gmra.mrb[0].mxu0 %v1448
  %v1532 = vpop.f32.mrb[0].mxu0
  %v1533 = vadd.f32 %v179, %v1532
  %v1534 = vpop.f32.mrb[0].mxu0
  %1535 = vdwg.mxu0
  %v1536 = vsel %vm1298, %v1523, -inf
  %1537 = vmax.xlane.f32.xlu0 %v1536
  %v1538 = vpop.xlane.xlu0 %1537
  %v1539 = vsel %vm1298, %v1528, -inf
  %1540 = vmax.xlane.f32.xlu0 %v1539
  %v1541 = vpop.xlane.xlu0 %1540
  %v1542 = vsel %vm1305, %v1533, -inf
  %1543 = vmax.xlane.f32.xlu0 %v1542
  %v1544 = vpop.xlane.xlu0 %1543
  %v1545 = vsub.f32 %v1523, %v1538
  %v1546 = vsub.f32 %v1528, %v1541
  %v1547 = vsub.f32 %v1533, %v1544
  %v1548 = vmul.f32 %v1545, 1.442695
  %v1549 = vpow.pop %v1548
  %v1550 = vmul.f32 %v1546, 1.442695
  %v1551 = vpow.pop %v1550
  %v1552 = vmul.f32 %v1547, 1.442695
  %v1553 = vpow.pop %v1552
  %v1554 = vsel %vm1298, %v1549, 0.0
  %1555 = vadd.xlane.f32.xlu0 %v1554
  %v1556 = vpop.xlane.xlu0 %1555
  %v1557 = vsel %vm1298, %v1551, 0.0
  %1558 = vadd.xlane.f32.xlu0 %v1557
  %v1559 = vpop.xlane.xlu0 %1558
  %v1560 = vsel %vm1305, %v1553, 0.0
  %1561 = vadd.xlane.f32.xlu0 %v1560
  %v1562 = vpop.xlane.xlu0 %1561
  %v1563 = vrcp.pop %v1556
  %v1564 = vrcp.pop %v1559
  %v1565 = vrcp.pop %v1562
  %1566 = vrot.lane.b32.xlu0 %v1178, 48
  %v1567 = vpop.permute.xlu0 %1566
  %1568 = vrot.lane.b32.xlu0 %v1183, 48
  %v1569 = vpop.permute.xlu0 %1568
  %1570 = vrot.lane.b32.xlu0 %v1188, 48
  %v1571 = vpop.permute.xlu0 %1570
  %v1575 = vsel %vm1298, %v1549, 0
  %v1578 = vsel %vm1298, %v1551, 0
  %v1581 = vsel %vm1298, %v1553, 0
  %v1583 = vsel %vm765, %v1571, 0
  %1585 = vmatprep.subr.mxu0 0.0
  %1586 = vmatpush1.msra.mxu0 %v1567
  %1587 = vmatprep.subr.mxu0 0.0
  %1588 = vmatpush1.msra.mxu0 %v1569
  %1589 = vmatprep.subr.mxu0 0.0
  %1590 = vmatpush1.msra.mxu0 %v1583
  %1591 = vmatprep.subr.mxu0 0.0
  %1592 = vmatpush1.msra.mxu0 0.0
  %1593 = vmatprep.subr.mxu0 0.0
  %1594 = vmatpush1.msra.mxu0 0.0
  %1595 = vmatprep.subr.mxu0 0.0
  %1596 = vmatpush1.msra.mxu0 0.0
  %1597 = vmatprep.subr.mxu0 0.0
  %1598 = vmatpush1.msra.mxu0 0.0
  %1599 = vmatprep.subr.mxu0 0.0
  %1600 = vmatpush1.msra.mxu0 0.0
  %1601 = vmatprep.subr.mxu0 0.0
  %1602 = vmatpush1.msra.mxu0 0.0
  %1603 = vmatprep.subr.mxu0 0.0
  %1604 = vmatpush1.msra.mxu0 0.0
  %1605 = vmatprep.subr.mxu0 0.0
  %1606 = vmatpush1.msra.mxu0 0.0
  %1607 = vmatprep.subr.mxu0 0.0
  %1608 = vmatpush1.msra.mxu0 0.0
  %1609 = vmatprep.subr.mxu0 0.0
  %1610 = vmatpush1.msra.mxu0 0.0
  %1611 = vmatprep.subr.mxu0 0.0
  %1612 = vmatpush1.msra.mxu0 0.0
  %1613 = vmatprep.subr.mxu0 0.0
  %1614 = vmatpush1.msra.mxu0 0.0
  %1615 = vmatprep.subr.mxu0 0.0
  %1616 = vmatpush1.msra.mxu0 0.0
  %1617 = vmatprep.subr.mxu0 0.0
  %1618 = vmatpush1.msra.mxu0 0.0
  %1619 = vmatprep.subr.mxu0 0.0
  %1620 = vmatpush1.msra.mxu0 0.0
  %1621 = vmatprep.subr.mxu0 0.0
  %1622 = vmatpush1.msra.mxu0 0.0
  %1623 = vmatprep.subr.mxu0 0.0
  %1624 = vmatpush1.msra.mxu0 0.0
  %1625 = vmatprep.subr.mxu0 0.0
  %1626 = vmatpush1.msra.mxu0 0.0
  %1627 = vmatprep.subr.mxu0 0.0
  %1628 = vmatpush1.msra.mxu0 0.0
  %1629 = vmatprep.subr.mxu0 0.0
  %1630 = vmatpush1.msra.mxu0 0.0
  %1631 = vmatprep.subr.mxu0 0.0
  %1632 = vmatpush1.msra.mxu0 0.0
  %1633 = vmatprep.subr.mxu0 0.0
  %1634 = vmatpush1.msra.mxu0 0.0
  %1635 = vmatprep.subr.mxu0 0.0
  %1636 = vmatpush1.msra.mxu0 0.0
  %1637 = vmatprep.subr.mxu0 0.0
  %1638 = vmatpush1.msra.mxu0 0.0
  %1639 = vmatprep.subr.mxu0 0.0
  %1640 = vmatpush1.msra.mxu0 0.0
  %1641 = vmatprep.subr.mxu0 0.0
  %1642 = vmatpush1.msra.mxu0 0.0
  %1643 = vmatprep.subr.mxu0 0.0
  %1644 = vmatpush1.msra.mxu0 0.0
  %1645 = vmatprep.subr.mxu0 0.0
  %1646 = vmatpush1.msra.mxu0 0.0
  %1647 = vmatprep.subr.mxu0 0.0
  %1648 = vmatpush1.msra.mxu0 0.0
  %1649 = vmatprep.mubr.f32.mxu0 0.0
  %1650 = vmatmul.mubr.f32.gmra.mrb[0].mxu0 %v1575
  %v1651 = vpop.f32.mrb[0].mxu0
  %v1652 = vadd.f32 0.0, %v1651
  %v1653 = vpop.f32.mrb[0].mxu0
  %1654 = vmatprep.mubr.f32.mxu0 0.0
  %1655 = vmatmul.mubr.f32.gmra.mrb[0].mxu0 %v1578
  %v1656 = vpop.f32.mrb[0].mxu0
  %v1657 = vadd.f32 0.0, %v1656
  %v1658 = vpop.f32.mrb[0].mxu0
  %1659 = vmatprep.mubr.f32.mxu0 0.0
  %1660 = vmatmul.mubr.f32.gmra.mrb[0].mxu0 %v1581
  %v1661 = vpop.f32.mrb[0].mxu0
  %v1662 = vadd.f32 0.0, %v1661
  %v1663 = vpop.f32.mrb[0].mxu0
  %1664 = vdwg.mxu0
  %v1665 = vmul.f32 %v1652, %v1563
  %v1666 = vmul.f32 %v1657, %v1564
  %v1667 = vmul.f32 %v1662, %v1565
  %v1669 = vsel %vm499, %v1665, 0
  %v1672 = vsel %vm499, %v1666, 0
  %v1675 = vsel %vm499, %v1667, 0
  %1677 = vmatprep.subr.mxu0 0.0
  %1678 = vmatpush1.msra.mxu0 %v228
  %1679 = vmatprep.subr.mxu0 0.0
  %1680 = vmatpush1.msra.mxu0 %v229
  %1681 = vmatprep.subr.mxu0 0.0
  %1682 = vmatpush1.msra.mxu0 0.0
  %1683 = vmatprep.subr.mxu0 0.0
  %1684 = vmatpush1.msra.mxu0 0.0
  %1685 = vmatprep.subr.mxu0 0.0
  %1686 = vmatpush1.msra.mxu0 0.0
  %1687 = vmatprep.subr.mxu0 0.0
  %1688 = vmatpush1.msra.mxu0 0.0
  %1689 = vmatprep.subr.mxu0 0.0
  %1690 = vmatpush1.msra.mxu0 0.0
  %1691 = vmatprep.subr.mxu0 0.0
  %1692 = vmatpush1.msra.mxu0 0.0
  %1693 = vmatprep.subr.mxu0 0.0
  %1694 = vmatpush1.msra.mxu0 0.0
  %1695 = vmatprep.subr.mxu0 0.0
  %1696 = vmatpush1.msra.mxu0 0.0
  %1697 = vmatprep.subr.mxu0 0.0
  %1698 = vmatpush1.msra.mxu0 0.0
  %1699 = vmatprep.subr.mxu0 0.0
  %1700 = vmatpush1.msra.mxu0 0.0
  %1701 = vmatprep.subr.mxu0 0.0
  %1702 = vmatpush1.msra.mxu0 0.0
  %1703 = vmatprep.subr.mxu0 0.0
  %1704 = vmatpush1.msra.mxu0 0.0
  %1705 = vmatprep.subr.mxu0 0.0
  %1706 = vmatpush1.msra.mxu0 0.0
  %1707 = vmatprep.subr.mxu0 0.0
  %1708 = vmatpush1.msra.mxu0 0.0
  %1709 = vmatprep.subr.mxu0 0.0
  %1710 = vmatpush1.msra.mxu0 0.0
  %1711 = vmatprep.subr.mxu0 0.0
  %1712 = vmatpush1.msra.mxu0 0.0
  %1713 = vmatprep.subr.mxu0 0.0
  %1714 = vmatpush1.msra.mxu0 0.0
  %1715 = vmatprep.subr.mxu0 0.0
  %1716 = vmatpush1.msra.mxu0 0.0
  %1717 = vmatprep.subr.mxu0 0.0
  %1718 = vmatpush1.msra.mxu0 0.0
  %1719 = vmatprep.subr.mxu0 0.0
  %1720 = vmatpush1.msra.mxu0 0.0
  %1721 = vmatprep.subr.mxu0 0.0
  %1722 = vmatpush1.msra.mxu0 0.0
  %1723 = vmatprep.subr.mxu0 0.0
  %1724 = vmatpush1.msra.mxu0 0.0
  %1725 = vmatprep.subr.mxu0 0.0
  %1726 = vmatpush1.msra.mxu0 0.0
  %1727 = vmatprep.subr.mxu0 0.0
  %1728 = vmatpush1.msra.mxu0 0.0
  %1729 = vmatprep.subr.mxu0 0.0
  %1730 = vmatpush1.msra.mxu0 0.0
  %1731 = vmatprep.subr.mxu0 0.0
  %1732 = vmatpush1.msra.mxu0 0.0
  %1733 = vmatprep.subr.mxu0 0.0
  %1734 = vmatpush1.msra.mxu0 0.0
  %1735 = vmatprep.subr.mxu0 0.0
  %1736 = vmatpush1.msra.mxu0 0.0
  %1737 = vmatprep.subr.mxu0 0.0
  %1738 = vmatpush1.msra.mxu0 0.0
  %1739 = vmatprep.subr.mxu0 0.0
  %1740 = vmatpush1.msra.mxu0 0.0
  %1741 = vmatprep.mubr.f32.mxu0 0.0
  %1742 = vmatmul.mubr.f32.gmra.mrb[0].mxu0 %v1669
  %v1743 = vpop.f32.mrb[0].mxu0
  %v1744 = vadd.f32 0.0, %v1743
  %v1745 = vpop.f32.mrb[0].mxu0
  %1746 = vmatprep.mubr.f32.mxu0 0.0
  %1747 = vmatmul.mubr.f32.gmra.mrb[0].mxu0 %v1672
  %v1748 = vpop.f32.mrb[0].mxu0
  %v1749 = vadd.f32 0.0, %v1748
  %v1750 = vpop.f32.mrb[0].mxu0
  %1751 = vmatprep.mubr.f32.mxu0 0.0
  %1752 = vmatmul.mubr.f32.gmra.mrb[0].mxu0 %v1675
  %v1753 = vpop.f32.mrb[0].mxu0
  %v1754 = vadd.f32 0.0, %v1753
  %v1755 = vpop.f32.mrb[0].mxu0
  %1756 = vdwg.mxu0
  %v1758 = vsel %vm499, %v1429, 0
  %v1761 = vsel %vm499, %v1430, 0
  %v1764 = vsel %vm499, %v1431, 0
  %1766 = vmatprep.subr.mxu0 0.0
  %1767 = vmatpush1.msra.mxu0 %v226
  %1768 = vmatprep.subr.mxu0 0.0
  %1769 = vmatpush1.msra.mxu0 %v227
  %1770 = vmatprep.subr.mxu0 0.0
  %1771 = vmatpush1.msra.mxu0 0.0
  %1772 = vmatprep.subr.mxu0 0.0
  %1773 = vmatpush1.msra.mxu0 0.0
  %1774 = vmatprep.subr.mxu0 0.0
  %1775 = vmatpush1.msra.mxu0 0.0
  %1776 = vmatprep.subr.mxu0 0.0
  %1777 = vmatpush1.msra.mxu0 0.0
  %1778 = vmatprep.subr.mxu0 0.0
  %1779 = vmatpush1.msra.mxu0 0.0
  %1780 = vmatprep.subr.mxu0 0.0
  %1781 = vmatpush1.msra.mxu0 0.0
  %1782 = vmatprep.subr.mxu0 0.0
  %1783 = vmatpush1.msra.mxu0 0.0
  %1784 = vmatprep.subr.mxu0 0.0
  %1785 = vmatpush1.msra.mxu0 0.0
  %1786 = vmatprep.subr.mxu0 0.0
  %1787 = vmatpush1.msra.mxu0 0.0
  %1788 = vmatprep.subr.mxu0 0.0
  %1789 = vmatpush1.msra.mxu0 0.0
  %1790 = vmatprep.subr.mxu0 0.0
  %1791 = vmatpush1.msra.mxu0 0.0
  %1792 = vmatprep.subr.mxu0 0.0
  %1793 = vmatpush1.msra.mxu0 0.0
  %1794 = vmatprep.subr.mxu0 0.0
  %1795 = vmatpush1.msra.mxu0 0.0
  %1796 = vmatprep.subr.mxu0 0.0
  %1797 = vmatpush1.msra.mxu0 0.0
  %1798 = vmatprep.subr.mxu0 0.0
  %1799 = vmatpush1.msra.mxu0 0.0
  %1800 = vmatprep.subr.mxu0 0.0
  %1801 = vmatpush1.msra.mxu0 0.0
  %1802 = vmatprep.subr.mxu0 0.0
  %1803 = vmatpush1.msra.mxu0 0.0
  %1804 = vmatprep.subr.mxu0 0.0
  %1805 = vmatpush1.msra.mxu0 0.0
  %1806 = vmatprep.subr.mxu0 0.0
  %1807 = vmatpush1.msra.mxu0 0.0
  %1808 = vmatprep.subr.mxu0 0.0
  %1809 = vmatpush1.msra.mxu0 0.0
  %1810 = vmatprep.subr.mxu0 0.0
  %1811 = vmatpush1.msra.mxu0 0.0
  %1812 = vmatprep.subr.mxu0 0.0
  %1813 = vmatpush1.msra.mxu0 0.0
  %1814 = vmatprep.subr.mxu0 0.0
  %1815 = vmatpush1.msra.mxu0 0.0
  %1816 = vmatprep.subr.mxu0 0.0
  %1817 = vmatpush1.msra.mxu0 0.0
  %1818 = vmatprep.subr.mxu0 0.0
  %1819 = vmatpush1.msra.mxu0 0.0
  %1820 = vmatprep.subr.mxu0 0.0
  %1821 = vmatpush1.msra.mxu0 0.0
  %1822 = vmatprep.subr.mxu0 0.0
  %1823 = vmatpush1.msra.mxu0 0.0
  %1824 = vmatprep.subr.mxu0 0.0
  %1825 = vmatpush1.msra.mxu0 0.0
  %1826 = vmatprep.subr.mxu0 0.0
  %1827 = vmatpush1.msra.mxu0 0.0
  %1828 = vmatprep.subr.mxu0 0.0
  %1829 = vmatpush1.msra.mxu0 0.0
  %1830 = vmatprep.mubr.f32.mxu0 0.0
  %1831 = vmatmul.mubr.f32.gmra.mrb[0].mxu0 %v1758
  %v1832 = vpop.f32.mrb[0].mxu0
  %v1833 = vadd.f32 %v1744, %v1832
  %v1834 = vpop.f32.mrb[0].mxu0
  %1835 = vmatprep.mubr.f32.mxu0 0.0
  %1836 = vmatmul.mubr.f32.gmra.mrb[0].mxu0 %v1761
  %v1837 = vpop.f32.mrb[0].mxu0
  %v1838 = vadd.f32 %v1749, %v1837
  %v1839 = vpop.f32.mrb[0].mxu0
  %1840 = vmatprep.mubr.f32.mxu0 0.0
  %1841 = vmatmul.mubr.f32.gmra.mrb[0].mxu0 %v1764
  %v1842 = vpop.f32.mrb[0].mxu0
  %v1843 = vadd.f32 %v1754, %v1842
  %v1844 = vpop.f32.mrb[0].mxu0
  %1845 = vdwg.mxu0
  %v1847 = vlaneseq
  %v1848 = vshrl.u32 %v1847, 7
  %v1849 = vsub.s32 0, %v1848
  %v1850 = vrot.slane %v190, %v1849
  %v1852 = vadd.f32 %v1833, %v1850
  %v1853 = vadd.f32 %v1838, %v1850
  %v1854 = vadd.f32 %v1843, %v1850
  %v1855 = vadd.f32 %v849, %v1852
  %v1856 = vadd.f32 %v850, %v1853
  %v1857 = vadd.f32 %v851, %v1854
  %v1858 = vsel %vm333, %v1855, 0.0
  %1859 = vadd.xlane.f32.xlu0 %v1858
  %v1860 = vpop.xlane.xlu0 %1859
  %v1861 = vsel %vm333, %v1856, 0.0
  %1862 = vadd.xlane.f32.xlu0 %v1861
  %v1863 = vpop.xlane.xlu0 %1862
  %vm1864 = vcmask 254976
  %v1865 = vsel %vm1864, %v1857, 0.0
  %1866 = vadd.xlane.f32.xlu0 %v1865
  %v1867 = vpop.xlane.xlu0 %1866
  %v1868 = vrcp.pop 32.0
  %v1869 = vmul.f32 %v1860, %v1868
  %v1870 = vmul.f32 %v1863, %v1868
  %v1871 = vmul.f32 %v1867, %v1868
  %v1872 = vsub.f32 %v1855, %v1869
  %v1873 = vsub.f32 %v1856, %v1870
  %v1874 = vsub.f32 %v1857, %v1871
  %v1875 = vmul.f32 %v1872, %v1872
  %v1876 = vmul.f32 %v1873, %v1873
  %v1877 = vmul.f32 %v1874, %v1874
  %v1878 = vsel %vm333, %v1875, 0.0
  %1879 = vadd.xlane.f32.xlu0 %v1878
  %v1880 = vpop.xlane.xlu0 %1879
  %v1881 = vsel %vm333, %v1876, 0.0
  %1882 = vadd.xlane.f32.xlu0 %v1881
  %v1883 = vpop.xlane.xlu0 %1882
  %v1884 = vsel %vm1864, %v1877, 0.0
  %1885 = vadd.xlane.f32.xlu0 %v1884
  %v1886 = vpop.xlane.xlu0 %1885
  %v1887 = vmul.f32 %v1880, %v1868
  %v1888 = vmul.f32 %v1883, %v1868
  %v1889 = vmul.f32 %v1886, %v1868
  %v1890 = vadd.f32 %v1887, 1e-05
  %v1891 = vadd.f32 %v1888, 1e-05
  %v1892 = vadd.f32 %v1889, 1e-05
  %v1893 = vrsqrt.pop %v1890
  %v1894 = vrsqrt.pop %v1891
  %v1895 = vrsqrt.pop %v1892
  %v1896 = vmul.f32 %v1872, %v1893
  %v1897 = vmul.f32 %v1873, %v1894
  %v1898 = vmul.f32 %v1874, %v1895
  %v1900 = vlaneseq
  %v1901 = vshrl.u32 %v1900, 7
  %v1902 = vsub.s32 0, %v1901
  %v1903 = vrot.slane %v196, %v1902
  %v1905 = vmul.f32 %v1896, %v1903
  %v1906 = vmul.f32 %v1897, %v1903
  %v1907 = vmul.f32 %v1898, %v1903
  %v1909 = vlaneseq
  %v1910 = vshrl.u32 %v1909, 7
  %v1911 = vsub.s32 0, %v1910
  %v1912 = vrot.slane %v194, %v1911
  %v1914 = vadd.f32 %v1905, %v1912
  %v1915 = vadd.f32 %v1906, %v1912
  %v1916 = vadd.f32 %v1907, %v1912
  %v1918 = vlaneseq
  %v1919 = vshrl.u32 %v1918, 7
  %v1920 = vsub.s32 0, %v1919
  %v1921 = vrot.slane %v186, %v1920
  %v1924 = vsel %vm333, %v1914, 0
  %v1927 = vsel %vm333, %v1915, 0
  %v1930 = vsel %vm333, %v1916, 0
  %1932 = vmatprep.subr.mxu0 0.0
  %1933 = vmatpush1.msra.mxu0 %v202
  %1934 = vmatprep.subr.mxu0 0.0
  %1935 = vmatpush1.msra.mxu0 %v203
  %1936 = vmatprep.subr.mxu0 0.0
  %1937 = vmatpush1.msra.mxu0 %v204
  %1938 = vmatprep.subr.mxu0 0.0
  %1939 = vmatpush1.msra.mxu0 %v205
  %1940 = vmatprep.subr.mxu0 0.0
  %1941 = vmatpush1.msra.mxu0 0.0
  %1942 = vmatprep.subr.mxu0 0.0
  %1943 = vmatpush1.msra.mxu0 0.0
  %1944 = vmatprep.subr.mxu0 0.0
  %1945 = vmatpush1.msra.mxu0 0.0
  %1946 = vmatprep.subr.mxu0 0.0
  %1947 = vmatpush1.msra.mxu0 0.0
  %1948 = vmatprep.subr.mxu0 0.0
  %1949 = vmatpush1.msra.mxu0 0.0
  %1950 = vmatprep.subr.mxu0 0.0
  %1951 = vmatpush1.msra.mxu0 0.0
  %1952 = vmatprep.subr.mxu0 0.0
  %1953 = vmatpush1.msra.mxu0 0.0
  %1954 = vmatprep.subr.mxu0 0.0
  %1955 = vmatpush1.msra.mxu0 0.0
  %1956 = vmatprep.subr.mxu0 0.0
  %1957 = vmatpush1.msra.mxu0 0.0
  %1958 = vmatprep.subr.mxu0 0.0
  %1959 = vmatpush1.msra.mxu0 0.0
  %1960 = vmatprep.subr.mxu0 0.0
  %1961 = vmatpush1.msra.mxu0 0.0
  %1962 = vmatprep.subr.mxu0 0.0
  %1963 = vmatpush1.msra.mxu0 0.0
  %1964 = vmatprep.subr.mxu0 0.0
  %1965 = vmatpush1.msra.mxu0 0.0
  %1966 = vmatprep.subr.mxu0 0.0
  %1967 = vmatpush1.msra.mxu0 0.0
  %1968 = vmatprep.subr.mxu0 0.0
  %1969 = vmatpush1.msra.mxu0 0.0
  %1970 = vmatprep.subr.mxu0 0.0
  %1971 = vmatpush1.msra.mxu0 0.0
  %1972 = vmatprep.subr.mxu0 0.0
  %1973 = vmatpush1.msra.mxu0 0.0
  %1974 = vmatprep.subr.mxu0 0.0
  %1975 = vmatpush1.msra.mxu0 0.0
  %1976 = vmatprep.subr.mxu0 0.0
  %1977 = vmatpush1.msra.mxu0 0.0
  %1978 = vmatprep.subr.mxu0 0.0
  %1979 = vmatpush1.msra.mxu0 0.0
  %1980 = vmatprep.subr.mxu0 0.0
  %1981 = vmatpush1.msra.mxu0 0.0
  %1982 = vmatprep.subr.mxu0 0.0
  %1983 = vmatpush1.msra.mxu0 0.0
  %1984 = vmatprep.subr.mxu0 0.0
  %1985 = vmatpush1.msra.mxu0 0.0
  %1986 = vmatprep.subr.mxu0 0.0
  %1987 = vmatpush1.msra.mxu0 0.0
  %1988 = vmatprep.subr.mxu0 0.0
  %1989 = vmatpush1.msra.mxu0 0.0
  %1990 = vmatprep.subr.mxu0 0.0
  %1991 = vmatpush1.msra.mxu0 0.0
  %1992 = vmatprep.subr.mxu0 0.0
  %1993 = vmatpush1.msra.mxu0 0.0
  %1994 = vmatprep.subr.mxu0 0.0
  %1995 = vmatpush1.msra.mxu0 0.0
  %1996 = vmatprep.mubr.f32.mxu0 0.0
  %1997 = vmatmul.mubr.f32.gmra.mrb[0].mxu0 %v1924
  %v1998 = vpop.f32.mrb[0].mxu0
  %v1999 = vadd.f32 %v1921, %v1998
  %v2000 = vpop.f32.mrb[0].mxu0
  %2001 = vmatprep.mubr.f32.mxu0 0.0
  %2002 = vmatmul.mubr.f32.gmra.mrb[0].mxu0 %v1927
  %v2003 = vpop.f32.mrb[0].mxu0
  %v2004 = vadd.f32 %v1921, %v2003
  %v2005 = vpop.f32.mrb[0].mxu0
  %2006 = vmatprep.mubr.f32.mxu0 0.0
  %2007 = vmatmul.mubr.f32.gmra.mrb[0].mxu0 %v1930
  %v2008 = vpop.f32.mrb[0].mxu0
  %v2009 = vadd.f32 %v1921, %v2008
  %v2010 = vpop.f32.mrb[0].mxu0
  %2011 = vdwg.mxu0
  %v2012 = vmul.f32 %v1999, %v1999
  %v2013 = vmul.f32 %v2004, %v2004
  %v2014 = vmul.f32 %v2009, %v2009
  %v2015 = vmul.f32 %v1999, %v2012
  %v2016 = vmul.f32 %v2004, %v2013
  %v2017 = vmul.f32 %v2009, %v2014
  %v2018 = vmul.f32 %v2015, 0.044715
  %v2019 = vmul.f32 %v2016, 0.044715
  %v2020 = vmul.f32 %v2017, 0.044715
  %v2021 = vadd.f32 %v1999, %v2018
  %v2022 = vadd.f32 %v2004, %v2019
  %v2023 = vadd.f32 %v2009, %v2020
  %v2024 = vmul.f32 %v2021, 0.7978846
  %v2025 = vmul.f32 %v2022, 0.7978846
  %v2026 = vmul.f32 %v2023, 0.7978846
  %v2027 = vtanh.pop %v2024
  %v2028 = vtanh.pop %v2025
  %v2029 = vtanh.pop %v2026
  %v2030 = vadd.f32 %v2027, 1.0
  %v2031 = vadd.f32 %v2028, 1.0
  %v2032 = vadd.f32 %v2029, 1.0
  %v2033 = vmul.f32 %v2030, 0.5
  %v2034 = vmul.f32 %v2031, 0.5
  %v2035 = vmul.f32 %v2032, 0.5
  %v2036 = vmul.f32 %v1999, %v2033
  %v2037 = vmul.f32 %v2004, %v2034
  %v2038 = vmul.f32 %v2009, %v2035
  %v2040 = vlaneseq
  %v2041 = vshrl.u32 %v2040, 7
  %v2042 = vsub.s32 0, %v2041
  %v2043 = vrot.slane %v188, %v2042
  %vm2045 = vcmask 523264
  %v2047 = vsel %vm2045, %v2036, 0
  %v2050 = vsel %vm2045, %v2037, 0
  %v2053 = vsel %vm2045, %v2038, 0
  %2055 = vmatprep.subr.mxu0 0.0
  %2056 = vmatpush1.msra.mxu0 %v210
  %2057 = vmatprep.subr.mxu0 0.0
  %2058 = vmatpush1.msra.mxu0 %v211
  %2059 = vmatprep.subr.mxu0 0.0
  %2060 = vmatpush1.msra.mxu0 %v212
  %2061 = vmatprep.subr.mxu0 0.0
  %2062 = vmatpush1.msra.mxu0 %v213
  %2063 = vmatprep.subr.mxu0 0.0
  %2064 = vmatpush1.msra.mxu0 %v214
  %2065 = vmatprep.subr.mxu0 0.0
  %2066 = vmatpush1.msra.mxu0 %v215
  %2067 = vmatprep.subr.mxu0 0.0
  %2068 = vmatpush1.msra.mxu0 %v216
  %2069 = vmatprep.subr.mxu0 0.0
  %2070 = vmatpush1.msra.mxu0 %v217
  %2071 = vmatprep.subr.mxu0 0.0
  %2072 = vmatpush1.msra.mxu0 0.0
  %2073 = vmatprep.subr.mxu0 0.0
  %2074 = vmatpush1.msra.mxu0 0.0
  %2075 = vmatprep.subr.mxu0 0.0
  %2076 = vmatpush1.msra.mxu0 0.0
  %2077 = vmatprep.subr.mxu0 0.0
  %2078 = vmatpush1.msra.mxu0 0.0
  %2079 = vmatprep.subr.mxu0 0.0
  %2080 = vmatpush1.msra.mxu0 0.0
  %2081 = vmatprep.subr.mxu0 0.0
  %2082 = vmatpush1.msra.mxu0 0.0
  %2083 = vmatprep.subr.mxu0 0.0
  %2084 = vmatpush1.msra.mxu0 0.0
  %2085 = vmatprep.subr.mxu0 0.0
  %2086 = vmatpush1.msra.mxu0 0.0
  %2087 = vmatprep.subr.mxu0 0.0
  %2088 = vmatpush1.msra.mxu0 0.0
  %2089 = vmatprep.subr.mxu0 0.0
  %2090 = vmatpush1.msra.mxu0 0.0
  %2091 = vmatprep.subr.mxu0 0.0
  %2092 = vmatpush1.msra.mxu0 0.0
  %2093 = vmatprep.subr.mxu0 0.0
  %2094 = vmatpush1.msra.mxu0 0.0
  %2095 = vmatprep.subr.mxu0 0.0
  %2096 = vmatpush1.msra.mxu0 0.0
  %2097 = vmatprep.subr.mxu0 0.0
  %2098 = vmatpush1.msra.mxu0 0.0
  %2099 = vmatprep.subr.mxu0 0.0
  %2100 = vmatpush1.msra.mxu0 0.0
  %2101 = vmatprep.subr.mxu0 0.0
  %2102 = vmatpush1.msra.mxu0 0.0
  %2103 = vmatprep.subr.mxu0 0.0
  %2104 = vmatpush1.msra.mxu0 0.0
  %2105 = vmatprep.subr.mxu0 0.0
  %2106 = vmatpush1.msra.mxu0 0.0
  %2107 = vmatprep.subr.mxu0 0.0
  %2108 = vmatpush1.msra.mxu0 0.0
  %2109 = vmatprep.subr.mxu0 0.0
  %2110 = vmatpush1.msra.mxu0 0.0
  %2111 = vmatprep.subr.mxu0 0.0
  %2112 = vmatpush1.msra.mxu0 0.0
  %2113 = vmatprep.subr.mxu0 0.0
  %2114 = vmatpush1.msra.mxu0 0.0
  %2115 = vmatprep.subr.mxu0 0.0
  %2116 = vmatpush1.msra.mxu0 0.0
  %2117 = vmatprep.subr.mxu0 0.0
  %2118 = vmatpush1.msra.mxu0 0.0
  %2119 = vmatprep.mubr.f32.mxu0 0.0
  %2120 = vmatmul.mubr.f32.gmra.mrb[0].mxu0 %v2047
  %v2121 = vpop.f32.mrb[0].mxu0
  %v2122 = vadd.f32 %v2043, %v2121
  %v2123 = vpop.f32.mrb[0].mxu0
  %2124 = vmatprep.mubr.f32.mxu0 0.0
  %2125 = vmatmul.mubr.f32.gmra.mrb[0].mxu0 %v2050
  %v2126 = vpop.f32.mrb[0].mxu0
  %v2127 = vadd.f32 %v2043, %v2126
  %v2128 = vpop.f32.mrb[0].mxu0
  %2129 = vmatprep.mubr.f32.mxu0 0.0
  %2130 = vmatmul.mubr.f32.gmra.mrb[0].mxu0 %v2053
  %v2131 = vpop.f32.mrb[0].mxu0
  %v2132 = vadd.f32 %v2043, %v2131
  %v2133 = vpop.f32.mrb[0].mxu0
  %2134 = vdwg.mxu0
  %v2135 = vadd.f32 %v1914, %v2122
  %v2136 = vadd.f32 %v1915, %v2127
  %v2137 = vadd.f32 %v1916, %v2132
  %v2138 = vsel %vm333, %v2135, 0.0
  %2139 = vadd.xlane.f32.xlu0 %v2138
  %v2140 = vpop.xlane.xlu0 %2139
  %v2141 = vsel %vm333, %v2136, 0.0
  %2142 = vadd.xlane.f32.xlu0 %v2141
  %v2143 = vpop.xlane.xlu0 %2142
  %v2144 = vsel %vm1864, %v2137, 0.0
  %2145 = vadd.xlane.f32.xlu0 %v2144
  %v2146 = vpop.xlane.xlu0 %2145
  %v2147 = vmul.f32 %v2140, %v1868
  %v2148 = vmul.f32 %v2143, %v1868
  %v2149 = vmul.f32 %v2146, %v1868
  %v2150 = vsub.f32 %v2135, %v2147
  %v2151 = vsub.f32 %v2136, %v2148
  %v2152 = vsub.f32 %v2137, %v2149
  %v2153 = vmul.f32 %v2150, %v2150
  %v2154 = vmul.f32 %v2151, %v2151
  %v2155 = vmul.f32 %v2152, %v2152
  %v2156 = vsel %vm333, %v2153, 0.0
  %2157 = vadd.xlane.f32.xlu0 %v2156
  %v2158 = vpop.xlane.xlu0 %2157
  %v2159 = vsel %vm333, %v2154, 0.0
  %2160 = vadd.xlane.f32.xlu0 %v2159
  %v2161 = vpop.xlane.xlu0 %2160
  %v2162 = vsel %vm1864, %v2155, 0.0
  %2163 = vadd.xlane.f32.xlu0 %v2162
  %v2164 = vpop.xlane.xlu0 %2163
  %v2165 = vmul.f32 %v2158, %v1868
  %v2166 = vmul.f32 %v2161, %v1868
  %v2167 = vmul.f32 %v2164, %v1868
  %v2168 = vadd.f32 %v2165, 1e-05
  %v2169 = vadd.f32 %v2166, 1e-05
  %v2170 = vadd.f32 %v2167, 1e-05
  %v2171 = vrsqrt.pop %v2168
  %v2172 = vrsqrt.pop %v2169
  %v2173 = vrsqrt.pop %v2170
  %v2174 = vmul.f32 %v2150, %v2171
  %v2175 = vmul.f32 %v2151, %v2172
  %v2176 = vmul.f32 %v2152, %v2173
  %v2178 = vlaneseq
  %v2179 = vshrl.u32 %v2178, 7
  %v2180 = vsub.s32 0, %v2179
  %v2181 = vrot.slane %v200, %v2180
  %v2183 = vmul.f32 %v2174, %v2181
  %v2184 = vmul.f32 %v2175, %v2181
  %v2185 = vmul.f32 %v2176, %v2181
  %v2187 = vlaneseq
  %v2188 = vshrl.u32 %v2187, 7
  %v2189 = vsub.s32 0, %v2188
  %v2190 = vrot.slane %v198, %v2189
  %v2192 = vadd.f32 %v2183, %v2190
  %v2193 = vadd.f32 %v2184, %v2190
  %v2194 = vadd.f32 %v2185, %v2190
  %v2196 = vlaneseq
  %v2197 = vshrl.u32 %v2196, 7
  %v2198 = vsub.s32 0, %v2197
  %v2199 = vrot.slane %v193, %v2198
  %v2202 = vsel %vm333, %v2192, 0
  %v2205 = vsel %vm333, %v2193, 0
  %v2208 = vsel %vm333, %v2194, 0
  %2210 = vmatprep.subr.mxu0 0.0
  %2211 = vmatpush1.msra.mxu0 %v238
  %2212 = vmatprep.subr.mxu0 0.0
  %2213 = vmatpush1.msra.mxu0 %v239
  %2214 = vmatprep.subr.mxu0 0.0
  %2215 = vmatpush1.msra.mxu0 %v240
  %2216 = vmatprep.subr.mxu0 0.0
  %2217 = vmatpush1.msra.mxu0 %v241
  %2218 = vmatprep.subr.mxu0 0.0
  %2219 = vmatpush1.msra.mxu0 0.0
  %2220 = vmatprep.subr.mxu0 0.0
  %2221 = vmatpush1.msra.mxu0 0.0
  %2222 = vmatprep.subr.mxu0 0.0
  %2223 = vmatpush1.msra.mxu0 0.0
  %2224 = vmatprep.subr.mxu0 0.0
  %2225 = vmatpush1.msra.mxu0 0.0
  %2226 = vmatprep.subr.mxu0 0.0
  %2227 = vmatpush1.msra.mxu0 0.0
  %2228 = vmatprep.subr.mxu0 0.0
  %2229 = vmatpush1.msra.mxu0 0.0
  %2230 = vmatprep.subr.mxu0 0.0
  %2231 = vmatpush1.msra.mxu0 0.0
  %2232 = vmatprep.subr.mxu0 0.0
  %2233 = vmatpush1.msra.mxu0 0.0
  %2234 = vmatprep.subr.mxu0 0.0
  %2235 = vmatpush1.msra.mxu0 0.0
  %2236 = vmatprep.subr.mxu0 0.0
  %2237 = vmatpush1.msra.mxu0 0.0
  %2238 = vmatprep.subr.mxu0 0.0
  %2239 = vmatpush1.msra.mxu0 0.0
  %2240 = vmatprep.subr.mxu0 0.0
  %2241 = vmatpush1.msra.mxu0 0.0
  %2242 = vmatprep.subr.mxu0 0.0
  %2243 = vmatpush1.msra.mxu0 0.0
  %2244 = vmatprep.subr.mxu0 0.0
  %2245 = vmatpush1.msra.mxu0 0.0
  %2246 = vmatprep.subr.mxu0 0.0
  %2247 = vmatpush1.msra.mxu0 0.0
  %2248 = vmatprep.subr.mxu0 0.0
  %2249 = vmatpush1.msra.mxu0 0.0
  %2250 = vmatprep.subr.mxu0 0.0
  %2251 = vmatpush1.msra.mxu0 0.0
  %2252 = vmatprep.subr.mxu0 0.0
  %2253 = vmatpush1.msra.mxu0 0.0
  %2254 = vmatprep.subr.mxu0 0.0
  %2255 = vmatpush1.msra.mxu0 0.0
  %2256 = vmatprep.subr.mxu0 0.0
  %2257 = vmatpush1.msra.mxu0 0.0
  %2258 = vmatprep.subr.mxu0 0.0
  %2259 = vmatpush1.msra.mxu0 0.0
  %2260 = vmatprep.subr.mxu0 0.0
  %2261 = vmatpush1.msra.mxu0 0.0
  %2262 = vmatprep.subr.mxu0 0.0
  %2263 = vmatpush1.msra.mxu0 0.0
  %2264 = vmatprep.subr.mxu0 0.0
  %2265 = vmatpush1.msra.mxu0 0.0
  %2266 = vmatprep.subr.mxu0 0.0
  %2267 = vmatpush1.msra.mxu0 0.0
  %2268 = vmatprep.subr.mxu0 0.0
  %2269 = vmatpush1.msra.mxu0 0.0
  %2270 = vmatprep.subr.mxu0 0.0
  %2271 = vmatpush1.msra.mxu0 0.0
  %2272 = vmatprep.subr.mxu0 0.0
  %2273 = vmatpush1.msra.mxu0 0.0
  %2274 = vmatprep.mubr.f32.mxu0 0.0
  %2275 = vmatmul.mubr.f32.gmra.mrb[0].mxu0 %v2202
  %v2276 = vpop.f32.mrb[0].mxu0
  %v2277 = vadd.f32 %v2199, %v2276
  %v2278 = vpop.f32.mrb[0].mxu0
  %2279 = vmatprep.mubr.f32.mxu0 0.0
  %2280 = vmatmul.mubr.f32.gmra.mrb[0].mxu0 %v2205
  %v2281 = vpop.f32.mrb[0].mxu0
  %v2282 = vadd.f32 %v2199, %v2281
  %v2283 = vpop.f32.mrb[0].mxu0
  %2284 = vmatprep.mubr.f32.mxu0 0.0
  %2285 = vmatmul.mubr.f32.gmra.mrb[0].mxu0 %v2208
  %v2286 = vpop.f32.mrb[0].mxu0
  %v2287 = vadd.f32 %v2199, %v2286
  %v2288 = vpop.f32.mrb[0].mxu0
  %2289 = vdwg.mxu0
  %v2290 = vmul.f32 %v2277, 0.25
  %v2291 = vmul.f32 %v2282, 0.25
  %v2292 = vmul.f32 %v2287, 0.25
  %2296 = vrot.lane.b32.xlu0 %v2277, 96
  %v2297 = vpop.permute.xlu0 %2296
  %2298 = vrot.lane.b32.xlu0 %v2282, 96
  %v2299 = vpop.permute.xlu0 %2298
  %2300 = vrot.lane.b32.xlu0 %v2287, 96
  %v2301 = vpop.permute.xlu0 %2300
  %v2303 = vsel %vm499, %v2290, 0
  %v2306 = vsel %vm499, %v2291, 0
  %v2309 = vsel %vm499, %v2292, 0
  %v2311 = vsel %vm499, %v2297, 0
  %v2313 = vsel %vm499, %v2299, 0
  %v2315 = vsel %vm499, %v2301, 0
  %2317 = vmatprep.subr.mxu0 0.0
  %2318 = vmatpush1.xpose.msra.mxu0 %v2311
  %2319 = vmatprep.subr.mxu0 0.0
  %2320 = vmatpush1.xpose.msra.mxu0 %v2313
  %2321 = vmatprep.subr.mxu0 0.0
  %2322 = vmatpush1.xpose.msra.mxu0 %v2315
  %2323 = vmatprep.subr.mxu0 0.0
  %2324 = vmatpush1.xpose.msra.mxu0 0.0
  %2325 = vmatprep.subr.mxu0 0.0
  %2326 = vmatpush1.xpose.msra.mxu0 0.0
  %2327 = vmatprep.subr.mxu0 0.0
  %2328 = vmatpush1.xpose.msra.mxu0 0.0
  %2329 = vmatprep.subr.mxu0 0.0
  %2330 = vmatpush1.xpose.msra.mxu0 0.0
  %2331 = vmatprep.subr.mxu0 0.0
  %2332 = vmatpush1.xpose.msra.mxu0 0.0
  %2333 = vmatprep.subr.mxu0 0.0
  %2334 = vmatpush1.xpose.msra.mxu0 0.0
  %2335 = vmatprep.subr.mxu0 0.0
  %2336 = vmatpush1.xpose.msra.mxu0 0.0
  %2337 = vmatprep.subr.mxu0 0.0
  %2338 = vmatpush1.xpose.msra.mxu0 0.0
  %2339 = vmatprep.subr.mxu0 0.0
  %2340 = vmatpush1.xpose.msra.mxu0 0.0
  %2341 = vmatprep.subr.mxu0 0.0
  %2342 = vmatpush1.xpose.msra.mxu0 0.0
  %2343 = vmatprep.subr.mxu0 0.0
  %2344 = vmatpush1.xpose.msra.mxu0 0.0
  %2345 = vmatprep.subr.mxu0 0.0
  %2346 = vmatpush1.xpose.msra.mxu0 0.0
  %2347 = vmatprep.subr.mxu0 0.0
  %2348 = vmatpush1.xpose.msra.mxu0 0.0
  %2349 = vmatprep.subr.mxu0 0.0
  %2350 = vmatpush1.xpose.msra.mxu0 0.0
  %2351 = vmatprep.subr.mxu0 0.0
  %2352 = vmatpush1.xpose.msra.mxu0 0.0
  %2353 = vmatprep.subr.mxu0 0.0
  %2354 = vmatpush1.xpose.msra.mxu0 0.0
  %2355 = vmatprep.subr.mxu0 0.0
  %2356 = vmatpush1.xpose.msra.mxu0 0.0
  %2357 = vmatprep.subr.mxu0 0.0
  %2358 = vmatpush1.xpose.msra.mxu0 0.0
  %2359 = vmatprep.subr.mxu0 0.0
  %2360 = vmatpush1.xpose.msra.mxu0 0.0
  %2361 = vmatprep.subr.mxu0 0.0
  %2362 = vmatpush1.xpose.msra.mxu0 0.0
  %2363 = vmatprep.subr.mxu0 0.0
  %2364 = vmatpush1.xpose.msra.mxu0 0.0
  %2365 = vmatprep.subr.mxu0 0.0
  %2366 = vmatpush1.xpose.msra.mxu0 0.0
  %2367 = vmatprep.subr.mxu0 0.0
  %2368 = vmatpush1.xpose.msra.mxu0 0.0
  %2369 = vmatprep.subr.mxu0 0.0
  %2370 = vmatpush1.xpose.msra.mxu0 0.0
  %2371 = vmatprep.subr.mxu0 0.0
  %2372 = vmatpush1.xpose.msra.mxu0 0.0
  %2373 = vmatprep.subr.mxu0 0.0
  %2374 = vmatpush1.xpose.msra.mxu0 0.0
  %2375 = vmatprep.subr.mxu0 0.0
  %2376 = vmatpush1.xpose.msra.mxu0 0.0
  %2377 = vmatprep.subr.mxu0 0.0
  %2378 = vmatpush1.xpose.msra.mxu0 0.0
  %2379 = vmatprep.subr.mxu0 0.0
  %2380 = vmatpush1.xpose.msra.mxu0 0.0
  %2381 = vmatprep.mubr.f32.mxu0 0.0
  %2382 = vmatmul.mubr.f32.gmra.mrb[0].mxu0 %v2303
  %v2383 = vpop.f32.mrb[0].mxu0
  %v2384 = vadd.f32 %v177, %v2383
  %v2385 = vpop.f32.mrb[0].mxu0
  %2386 = vmatprep.mubr.f32.mxu0 0.0
  %2387 = vmatmul.mubr.f32.gmra.mrb[0].mxu0 %v2306
  %v2388 = vpop.f32.mrb[0].mxu0
  %v2389 = vadd.f32 %v178, %v2388
  %v2390 = vpop.f32.mrb[0].mxu0
  %2391 = vmatprep.mubr.f32.mxu0 0.0
  %2392 = vmatmul.mubr.f32.gmra.mrb[0].mxu0 %v2309
  %v2393 = vpop.f32.mrb[0].mxu0
  %v2394 = vadd.f32 %v179, %v2393
  %v2395 = vpop.f32.mrb[0].mxu0
  %2396 = vdwg.mxu0
  %v2397 = vsel %vm1298, %v2384, -inf
  %2398 = vmax.xlane.f32.xlu0 %v2397
  %v2399 = vpop.xlane.xlu0 %2398
  %v2400 = vsel %vm1298, %v2389, -inf
  %2401 = vmax.xlane.f32.xlu0 %v2400
  %v2402 = vpop.xlane.xlu0 %2401
  %v2403 = vsel %vm1305, %v2394, -inf
  %2404 = vmax.xlane.f32.xlu0 %v2403
  %v2405 = vpop.xlane.xlu0 %2404
  %v2406 = vsub.f32 %v2384, %v2399
  %v2407 = vsub.f32 %v2389, %v2402
  %v2408 = vsub.f32 %v2394, %v2405
  %v2409 = vmul.f32 %v2406, 1.442695
  %v2410 = vpow.pop %v2409
  %v2411 = vmul.f32 %v2407, 1.442695
  %v2412 = vpow.pop %v2411
  %v2413 = vmul.f32 %v2408, 1.442695
  %v2414 = vpow.pop %v2413
  %v2415 = vsel %vm1298, %v2410, 0.0
  %2416 = vadd.xlane.f32.xlu0 %v2415
  %v2417 = vpop.xlane.xlu0 %2416
  %v2418 = vsel %vm1298, %v2412, 0.0
  %2419 = vadd.xlane.f32.xlu0 %v2418
  %v2420 = vpop.xlane.xlu0 %2419
  %v2421 = vsel %vm1305, %v2414, 0.0
  %2422 = vadd.xlane.f32.xlu0 %v2421
  %v2423 = vpop.xlane.xlu0 %2422
  %v2424 = vrcp.pop %v2417
  %v2425 = vrcp.pop %v2420
  %v2426 = vrcp.pop %v2423
  %2427 = vrot.lane.b32.xlu0 %v2277, 64
  %v2428 = vpop.permute.xlu0 %2427
  %2429 = vrot.lane.b32.xlu0 %v2282, 64
  %v2430 = vpop.permute.xlu0 %2429
  %2431 = vrot.lane.b32.xlu0 %v2287, 64
  %v2432 = vpop.permute.xlu0 %2431
  %v2436 = vsel %vm1298, %v2410, 0
  %v2439 = vsel %vm1298, %v2412, 0
  %v2442 = vsel %vm1298, %v2414, 0
  %v2444 = vsel %vm765, %v2432, 0
  %2446 = vmatprep.subr.mxu0 0.0
  %2447 = vmatpush1.msra.mxu0 %v2428
  %2448 = vmatprep.subr.mxu0 0.0
  %2449 = vmatpush1.msra.mxu0 %v2430
  %2450 = vmatprep.subr.mxu0 0.0
  %2451 = vmatpush1.msra.mxu0 %v2444
  %2452 = vmatprep.subr.mxu0 0.0
  %2453 = vmatpush1.msra.mxu0 0.0
  %2454 = vmatprep.subr.mxu0 0.0
  %2455 = vmatpush1.msra.mxu0 0.0
  %2456 = vmatprep.subr.mxu0 0.0
  %2457 = vmatpush1.msra.mxu0 0.0
  %2458 = vmatprep.subr.mxu0 0.0
  %2459 = vmatpush1.msra.mxu0 0.0
  %2460 = vmatprep.subr.mxu0 0.0
  %2461 = vmatpush1.msra.mxu0 0.0
  %2462 = vmatprep.subr.mxu0 0.0
  %2463 = vmatpush1.msra.mxu0 0.0
  %2464 = vmatprep.subr.mxu0 0.0
  %2465 = vmatpush1.msra.mxu0 0.0
  %2466 = vmatprep.subr.mxu0 0.0
  %2467 = vmatpush1.msra.mxu0 0.0
  %2468 = vmatprep.subr.mxu0 0.0
  %2469 = vmatpush1.msra.mxu0 0.0
  %2470 = vmatprep.subr.mxu0 0.0
  %2471 = vmatpush1.msra.mxu0 0.0
  %2472 = vmatprep.subr.mxu0 0.0
  %2473 = vmatpush1.msra.mxu0 0.0
  %2474 = vmatprep.subr.mxu0 0.0
  %2475 = vmatpush1.msra.mxu0 0.0
  %2476 = vmatprep.subr.mxu0 0.0
  %2477 = vmatpush1.msra.mxu0 0.0
  %2478 = vmatprep.subr.mxu0 0.0
  %2479 = vmatpush1.msra.mxu0 0.0
  %2480 = vmatprep.subr.mxu0 0.0
  %2481 = vmatpush1.msra.mxu0 0.0
  %2482 = vmatprep.subr.mxu0 0.0
  %2483 = vmatpush1.msra.mxu0 0.0
  %2484 = vmatprep.subr.mxu0 0.0
  %2485 = vmatpush1.msra.mxu0 0.0
  %2486 = vmatprep.subr.mxu0 0.0
  %2487 = vmatpush1.msra.mxu0 0.0
  %2488 = vmatprep.subr.mxu0 0.0
  %2489 = vmatpush1.msra.mxu0 0.0
  %2490 = vmatprep.subr.mxu0 0.0
  %2491 = vmatpush1.msra.mxu0 0.0
  %2492 = vmatprep.subr.mxu0 0.0
  %2493 = vmatpush1.msra.mxu0 0.0
  %2494 = vmatprep.subr.mxu0 0.0
  %2495 = vmatpush1.msra.mxu0 0.0
  %2496 = vmatprep.subr.mxu0 0.0
  %2497 = vmatpush1.msra.mxu0 0.0
  %2498 = vmatprep.subr.mxu0 0.0
  %2499 = vmatpush1.msra.mxu0 0.0
  %2500 = vmatprep.subr.mxu0 0.0
  %2501 = vmatpush1.msra.mxu0 0.0
  %2502 = vmatprep.subr.mxu0 0.0
  %2503 = vmatpush1.msra.mxu0 0.0
  %2504 = vmatprep.subr.mxu0 0.0
  %2505 = vmatpush1.msra.mxu0 0.0
  %2506 = vmatprep.subr.mxu0 0.0
  %2507 = vmatpush1.msra.mxu0 0.0
  %2508 = vmatprep.subr.mxu0 0.0
  %2509 = vmatpush1.msra.mxu0 0.0
  %2510 = vmatprep.mubr.f32.mxu0 0.0
  %2511 = vmatmul.mubr.f32.gmra.mrb[0].mxu0 %v2436
  %v2512 = vpop.f32.mrb[0].mxu0
  %v2513 = vadd.f32 0.0, %v2512
  %v2514 = vpop.f32.mrb[0].mxu0
  %2515 = vmatprep.mubr.f32.mxu0 0.0
  %2516 = vmatmul.mubr.f32.gmra.mrb[0].mxu0 %v2439
  %v2517 = vpop.f32.mrb[0].mxu0
  %v2518 = vadd.f32 0.0, %v2517
  %v2519 = vpop.f32.mrb[0].mxu0
  %2520 = vmatprep.mubr.f32.mxu0 0.0
  %2521 = vmatmul.mubr.f32.gmra.mrb[0].mxu0 %v2442
  %v2522 = vpop.f32.mrb[0].mxu0
  %v2523 = vadd.f32 0.0, %v2522
  %v2524 = vpop.f32.mrb[0].mxu0
  %2525 = vdwg.mxu0
  %v2526 = vmul.f32 %v2513, %v2424
  %v2527 = vmul.f32 %v2518, %v2425
  %v2528 = vmul.f32 %v2523, %v2426
  %2529 = vrot.lane.b32.xlu0 %v2290, 112
  %v2530 = vpop.permute.xlu0 %2529
  %2531 = vrot.lane.b32.xlu0 %v2291, 112
  %v2532 = vpop.permute.xlu0 %2531
  %2533 = vrot.lane.b32.xlu0 %v2292, 112
  %v2534 = vpop.permute.xlu0 %2533
  %2535 = vrot.lane.b32.xlu0 %v2277, 80
  %v2536 = vpop.permute.xlu0 %2535
  %2537 = vrot.lane.b32.xlu0 %v2282, 80
  %v2538 = vpop.permute.xlu0 %2537
  %2539 = vrot.lane.b32.xlu0 %v2287, 80
  %v2540 = vpop.permute.xlu0 %2539
  %v2541 = vsel %vm499, %v2530, 0
  %v2543 = vsel %vm499, %v2532, 0
  %v2545 = vsel %vm499, %v2534, 0
  %v2547 = vsel %vm499, %v2536, 0
  %v2549 = vsel %vm499, %v2538, 0
  %v2551 = vsel %vm499, %v2540, 0
  %2553 = vmatprep.subr.mxu0 0.0
  %2554 = vmatpush1.xpose.msra.mxu0 %v2547
  %2555 = vmatprep.subr.mxu0 0.0
  %2556 = vmatpush1.xpose.msra.mxu0 %v2549
  %2557 = vmatprep.subr.mxu0 0.0
  %2558 = vmatpush1.xpose.msra.mxu0 %v2551
  %2559 = vmatprep.subr.mxu0 0.0
  %2560 = vmatpush1.xpose.msra.mxu0 0.0
  %2561 = vmatprep.subr.mxu0 0.0
  %2562 = vmatpush1.xpose.msra.mxu0 0.0
  %2563 = vmatprep.subr.mxu0 0.0
  %2564 = vmatpush1.xpose.msra.mxu0 0.0
  %2565 = vmatprep.subr.mxu0 0.0
  %2566 = vmatpush1.xpose.msra.mxu0 0.0
  %2567 = vmatprep.subr.mxu0 0.0
  %2568 = vmatpush1.xpose.msra.mxu0 0.0
  %2569 = vmatprep.subr.mxu0 0.0
  %2570 = vmatpush1.xpose.msra.mxu0 0.0
  %2571 = vmatprep.subr.mxu0 0.0
  %2572 = vmatpush1.xpose.msra.mxu0 0.0
  %2573 = vmatprep.subr.mxu0 0.0
  %2574 = vmatpush1.xpose.msra.mxu0 0.0
  %2575 = vmatprep.subr.mxu0 0.0
  %2576 = vmatpush1.xpose.msra.mxu0 0.0
  %2577 = vmatprep.subr.mxu0 0.0
  %2578 = vmatpush1.xpose.msra.mxu0 0.0
  %2579 = vmatprep.subr.mxu0 0.0
  %2580 = vmatpush1.xpose.msra.mxu0 0.0
  %2581 = vmatprep.subr.mxu0 0.0
  %2582 = vmatpush1.xpose.msra.mxu0 0.0
  %2583 = vmatprep.subr.mxu0 0.0
  %2584 = vmatpush1.xpose.msra.mxu0 0.0
  %2585 = vmatprep.subr.mxu0 0.0
  %2586 = vmatpush1.xpose.msra.mxu0 0.0
  %2587 = vmatprep.subr.mxu0 0.0
  %2588 = vmatpush1.xpose.msra.mxu0 0.0
  %2589 = vmatprep.subr.mxu0 0.0
  %2590 = vmatpush1.xpose.msra.mxu0 0.0
  %2591 = vmatprep.subr.mxu0 0.0
  %2592 = vmatpush1.xpose.msra.mxu0 0.0
  %2593 = vmatprep.subr.mxu0 0.0
  %2594 = vmatpush1.xpose.msra.mxu0 0.0
  %2595 = vmatprep.subr.mxu0 0.0
  %2596 = vmatpush1.xpose.msra.mxu0 0.0
  %2597 = vmatprep.subr.mxu0 0.0
  %2598 = vmatpush1.xpose.msra.mxu0 0.0
  %2599 = vmatprep.subr.mxu0 0.0
  %2600 = vmatpush1.xpose.msra.mxu0 0.0
  %2601 = vmatprep.subr.mxu0 0.0
  %2602 = vmatpush1.xpose.msra.mxu0 0.0
  %2603 = vmatprep.subr.mxu0 0.0
  %2604 = vmatpush1.xpose.msra.mxu0 0.0
  %2605 = vmatprep.subr.mxu0 0.0
  %2606 = vmatpush1.xpose.msra.mxu0 0.0
  %2607 = vmatprep.subr.mxu0 0.0
  %2608 = vmatpush1.xpose.msra.mxu0 0.0
  %2609 = vmatprep.subr.mxu0 0.0
  %2610 = vmatpush1.xpose.msra.mxu0 0.0
  %2611 = vmatprep.subr.mxu0 0.0
  %2612 = vmatpush1.xpose.msra.mxu0 0.0
  %2613 = vmatprep.subr.mxu0 0.0
  %2614 = vmatpush1.xpose.msra.mxu0 0.0
  %2615 = vmatprep.subr.mxu0 0.0
  %2616 = vmatpush1.xpose.msra.mxu0 0.0
  %2617 = vmatprep.mubr.f32.mxu0 0.0
  %2618 = vmatmul.mubr.f32.gmra.mrb[0].mxu0 %v2541
  %v2619 = vpop.f32.mrb[0].mxu0
  %v2620 = vadd.f32 %v177, %v2619
  %v2621 = vpop.f32.mrb[0].mxu0
  %2622 = vmatprep.mubr.f32.mxu0 0.0
  %2623 = vmatmul.mubr.f32.gmra.mrb[0].mxu0 %v2543
  %v2624 = vpop.f32.mrb[0].mxu0
  %v2625 = vadd.f32 %v178, %v2624
  %v2626 = vpop.f32.mrb[0].mxu0
  %2627 = vmatprep.mubr.f32.mxu0 0.0
  %2628 = vmatmul.mubr.f32.gmra.mrb[0].mxu0 %v2545
  %v2629 = vpop.f32.mrb[0].mxu0
  %v2630 = vadd.f32 %v179, %v2629
  %v2631 = vpop.f32.mrb[0].mxu0
  %2632 = vdwg.mxu0
  %v2633 = vsel %vm1298, %v2620, -inf
  %2634 = vmax.xlane.f32.xlu0 %v2633
  %v2635 = vpop.xlane.xlu0 %2634
  %v2636 = vsel %vm1298, %v2625, -inf
  %2637 = vmax.xlane.f32.xlu0 %v2636
  %v2638 = vpop.xlane.xlu0 %2637
  %v2639 = vsel %vm1305, %v2630, -inf
  %2640 = vmax.xlane.f32.xlu0 %v2639
  %v2641 = vpop.xlane.xlu0 %2640
  %v2642 = vsub.f32 %v2620, %v2635
  %v2643 = vsub.f32 %v2625, %v2638
  %v2644 = vsub.f32 %v2630, %v2641
  %v2645 = vmul.f32 %v2642, 1.442695
  %v2646 = vpow.pop %v2645
  %v2647 = vmul.f32 %v2643, 1.442695
  %v2648 = vpow.pop %v2647
  %v2649 = vmul.f32 %v2644, 1.442695
  %v2650 = vpow.pop %v2649
  %v2651 = vsel %vm1298, %v2646, 0.0
  %2652 = vadd.xlane.f32.xlu0 %v2651
  %v2653 = vpop.xlane.xlu0 %2652
  %v2654 = vsel %vm1298, %v2648, 0.0
  %2655 = vadd.xlane.f32.xlu0 %v2654
  %v2656 = vpop.xlane.xlu0 %2655
  %v2657 = vsel %vm1305, %v2650, 0.0
  %2658 = vadd.xlane.f32.xlu0 %v2657
  %v2659 = vpop.xlane.xlu0 %2658
  %v2660 = vrcp.pop %v2653
  %v2661 = vrcp.pop %v2656
  %v2662 = vrcp.pop %v2659
  %2663 = vrot.lane.b32.xlu0 %v2277, 48
  %v2664 = vpop.permute.xlu0 %2663
  %2665 = vrot.lane.b32.xlu0 %v2282, 48
  %v2666 = vpop.permute.xlu0 %2665
  %2667 = vrot.lane.b32.xlu0 %v2287, 48
  %v2668 = vpop.permute.xlu0 %2667
  %v2672 = vsel %vm1298, %v2646, 0
  %v2675 = vsel %vm1298, %v2648, 0
  %v2678 = vsel %vm1298, %v2650, 0
  %v2680 = vsel %vm765, %v2668, 0
  %2682 = vmatprep.subr.mxu0 0.0
  %2683 = vmatpush1.msra.mxu0 %v2664
  %2684 = vmatprep.subr.mxu0 0.0
  %2685 = vmatpush1.msra.mxu0 %v2666
  %2686 = vmatprep.subr.mxu0 0.0
  %2687 = vmatpush1.msra.mxu0 %v2680
  %2688 = vmatprep.subr.mxu0 0.0
  %2689 = vmatpush1.msra.mxu0 0.0
  %2690 = vmatprep.subr.mxu0 0.0
  %2691 = vmatpush1.msra.mxu0 0.0
  %2692 = vmatprep.subr.mxu0 0.0
  %2693 = vmatpush1.msra.mxu0 0.0
  %2694 = vmatprep.subr.mxu0 0.0
  %2695 = vmatpush1.msra.mxu0 0.0
  %2696 = vmatprep.subr.mxu0 0.0
  %2697 = vmatpush1.msra.mxu0 0.0
  %2698 = vmatprep.subr.mxu0 0.0
  %2699 = vmatpush1.msra.mxu0 0.0
  %2700 = vmatprep.subr.mxu0 0.0
  %2701 = vmatpush1.msra.mxu0 0.0
  %2702 = vmatprep.subr.mxu0 0.0
  %2703 = vmatpush1.msra.mxu0 0.0
  %2704 = vmatprep.subr.mxu0 0.0
  %2705 = vmatpush1.msra.mxu0 0.0
  %2706 = vmatprep.subr.mxu0 0.0
  %2707 = vmatpush1.msra.mxu0 0.0
  %2708 = vmatprep.subr.mxu0 0.0
  %2709 = vmatpush1.msra.mxu0 0.0
  %2710 = vmatprep.subr.mxu0 0.0
  %2711 = vmatpush1.msra.mxu0 0.0
  %2712 = vmatprep.subr.mxu0 0.0
  %2713 = vmatpush1.msra.mxu0 0.0
  %2714 = vmatprep.subr.mxu0 0.0
  %2715 = vmatpush1.msra.mxu0 0.0
  %2716 = vmatprep.subr.mxu0 0.0
  %2717 = vmatpush1.msra.mxu0 0.0
  %2718 = vmatprep.subr.mxu0 0.0
  %2719 = vmatpush1.msra.mxu0 0.0
  %2720 = vmatprep.subr.mxu0 0.0
  %2721 = vmatpush1.msra.mxu0 0.0
  %2722 = vmatprep.subr.mxu0 0.0
  %2723 = vmatpush1.msra.mxu0 0.0
  %2724 = vmatprep.subr.mxu0 0.0
  %2725 = vmatpush1.msra.mxu0 0.0
  %2726 = vmatprep.subr.mxu0 0.0
  %2727 = vmatpush1.msra.mxu0 0.0
  %2728 = vmatprep.subr.mxu0 0.0
  %2729 = vmatpush1.msra.mxu0 0.0
  %2730 = vmatprep.subr.mxu0 0.0
  %2731 = vmatpush1.msra.mxu0 0.0
  %2732 = vmatprep.subr.mxu0 0.0
  %2733 = vmatpush1.msra.mxu0 0.0
  %2734 = vmatprep.subr.mxu0 0.0
  %2735 = vmatpush1.msra.mxu0 0.0
  %2736 = vmatprep.subr.mxu0 0.0
  %2737 = vmatpush1.msra.mxu0 0.0
  %2738 = vmatprep.subr.mxu0 0.0
  %2739 = vmatpush1.msra.mxu0 0.0
  %2740 = vmatprep.subr.mxu0 0.0
  %2741 = vmatpush1.msra.mxu0 0.0
  %2742 = vmatprep.subr.mxu0 0.0
  %2743 = vmatpush1.msra.mxu0 0.0
  %2744 = vmatprep.subr.mxu0 0.0
  %2745 = vmatpush1.msra.mxu0 0.0
  %2746 = vmatprep.mubr.f32.mxu0 0.0
  %2747 = vmatmul.mubr.f32.gmra.mrb[0].mxu0 %v2672
  %v2748 = vpop.f32.mrb[0].mxu0
  %v2749 = vadd.f32 0.0, %v2748
  %v2750 = vpop.f32.mrb[0].mxu0
  %2751 = vmatprep.mubr.f32.mxu0 0.0
  %2752 = vmatmul.mubr.f32.gmra.mrb[0].mxu0 %v2675
  %v2753 = vpop.f32.mrb[0].mxu0
  %v2754 = vadd.f32 0.0, %v2753
  %v2755 = vpop.f32.mrb[0].mxu0
  %2756 = vmatprep.mubr.f32.mxu0 0.0
  %2757 = vmatmul.mubr.f32.gmra.mrb[0].mxu0 %v2678
  %v2758 = vpop.f32.mrb[0].mxu0
  %v2759 = vadd.f32 0.0, %v2758
  %v2760 = vpop.f32.mrb[0].mxu0
  %2761 = vdwg.mxu0
  %v2762 = vmul.f32 %v2749, %v2660
  %v2763 = vmul.f32 %v2754, %v2661
  %v2764 = vmul.f32 %v2759, %v2662
  %v2766 = vsel %vm499, %v2762, 0
  %v2769 = vsel %vm499, %v2763, 0
  %v2772 = vsel %vm499, %v2764, 0
  %2774 = vmatprep.subr.mxu0 0.0
  %2775 = vmatpush1.msra.mxu0 %v232
  %2776 = vmatprep.subr.mxu0 0.0
  %2777 = vmatpush1.msra.mxu0 %v233
  %2778 = vmatprep.subr.mxu0 0.0
  %2779 = vmatpush1.msra.mxu0 0.0
  %2780 = vmatprep.subr.mxu0 0.0
  %2781 = vmatpush1.msra.mxu0 0.0
  %2782 = vmatprep.subr.mxu0 0.0
  %2783 = vmatpush1.msra.mxu0 0.0
  %2784 = vmatprep.subr.mxu0 0.0
  %2785 = vmatpush1.msra.mxu0 0.0
  %2786 = vmatprep.subr.mxu0 0.0
  %2787 = vmatpush1.msra.mxu0 0.0
  %2788 = vmatprep.subr.mxu0 0.0
  %2789 = vmatpush1.msra.mxu0 0.0
  %2790 = vmatprep.subr.mxu0 0.0
  %2791 = vmatpush1.msra.mxu0 0.0
  %2792 = vmatprep.subr.mxu0 0.0
  %2793 = vmatpush1.msra.mxu0 0.0
  %2794 = vmatprep.subr.mxu0 0.0
  %2795 = vmatpush1.msra.mxu0 0.0
  %2796 = vmatprep.subr.mxu0 0.0
  %2797 = vmatpush1.msra.mxu0 0.0
  %2798 = vmatprep.subr.mxu0 0.0
  %2799 = vmatpush1.msra.mxu0 0.0
  %2800 = vmatprep.subr.mxu0 0.0
  %2801 = vmatpush1.msra.mxu0 0.0
  %2802 = vmatprep.subr.mxu0 0.0
  %2803 = vmatpush1.msra.mxu0 0.0
  %2804 = vmatprep.subr.mxu0 0.0
  %2805 = vmatpush1.msra.mxu0 0.0
  %2806 = vmatprep.subr.mxu0 0.0
  %2807 = vmatpush1.msra.mxu0 0.0
  %2808 = vmatprep.subr.mxu0 0.0
  %2809 = vmatpush1.msra.mxu0 0.0
  %2810 = vmatprep.subr.mxu0 0.0
  %2811 = vmatpush1.msra.mxu0 0.0
  %2812 = vmatprep.subr.mxu0 0.0
  %2813 = vmatpush1.msra.mxu0 0.0
  %2814 = vmatprep.subr.mxu0 0.0
  %2815 = vmatpush1.msra.mxu0 0.0
  %2816 = vmatprep.subr.mxu0 0.0
  %2817 = vmatpush1.msra.mxu0 0.0
  %2818 = vmatprep.subr.mxu0 0.0
  %2819 = vmatpush1.msra.mxu0 0.0
  %2820 = vmatprep.subr.mxu0 0.0
  %2821 = vmatpush1.msra.mxu0 0.0
  %2822 = vmatprep.subr.mxu0 0.0
  %2823 = vmatpush1.msra.mxu0 0.0
  %2824 = vmatprep.subr.mxu0 0.0
  %2825 = vmatpush1.msra.mxu0 0.0
  %2826 = vmatprep.subr.mxu0 0.0
  %2827 = vmatpush1.msra.mxu0 0.0
  %2828 = vmatprep.subr.mxu0 0.0
  %2829 = vmatpush1.msra.mxu0 0.0
  %2830 = vmatprep.subr.mxu0 0.0
  %2831 = vmatpush1.msra.mxu0 0.0
  %2832 = vmatprep.subr.mxu0 0.0
  %2833 = vmatpush1.msra.mxu0 0.0
  %2834 = vmatprep.subr.mxu0 0.0
  %2835 = vmatpush1.msra.mxu0 0.0
  %2836 = vmatprep.subr.mxu0 0.0
  %2837 = vmatpush1.msra.mxu0 0.0
  %2838 = vmatprep.mubr.f32.mxu0 0.0
  %2839 = vmatmul.mubr.f32.gmra.mrb[0].mxu0 %v2766
  %v2840 = vpop.f32.mrb[0].mxu0
  %v2841 = vadd.f32 0.0, %v2840
  %v2842 = vpop.f32.mrb[0].mxu0
  %2843 = vmatprep.mubr.f32.mxu0 0.0
  %2844 = vmatmul.mubr.f32.gmra.mrb[0].mxu0 %v2769
  %v2845 = vpop.f32.mrb[0].mxu0
  %v2846 = vadd.f32 0.0, %v2845
  %v2847 = vpop.f32.mrb[0].mxu0
  %2848 = vmatprep.mubr.f32.mxu0 0.0
  %2849 = vmatmul.mubr.f32.gmra.mrb[0].mxu0 %v2772
  %v2850 = vpop.f32.mrb[0].mxu0
  %v2851 = vadd.f32 0.0, %v2850
  %v2852 = vpop.f32.mrb[0].mxu0
  %2853 = vdwg.mxu0
  %v2855 = vsel %vm499, %v2526, 0
  %v2858 = vsel %vm499, %v2527, 0
  %v2861 = vsel %vm499, %v2528, 0
  %2863 = vmatprep.subr.mxu0 0.0
  %2864 = vmatpush1.msra.mxu0 %v230
  %2865 = vmatprep.subr.mxu0 0.0
  %2866 = vmatpush1.msra.mxu0 %v231
  %2867 = vmatprep.subr.mxu0 0.0
  %2868 = vmatpush1.msra.mxu0 0.0
  %2869 = vmatprep.subr.mxu0 0.0
  %2870 = vmatpush1.msra.mxu0 0.0
  %2871 = vmatprep.subr.mxu0 0.0
  %2872 = vmatpush1.msra.mxu0 0.0
  %2873 = vmatprep.subr.mxu0 0.0
  %2874 = vmatpush1.msra.mxu0 0.0
  %2875 = vmatprep.subr.mxu0 0.0
  %2876 = vmatpush1.msra.mxu0 0.0
  %2877 = vmatprep.subr.mxu0 0.0
  %2878 = vmatpush1.msra.mxu0 0.0
  %2879 = vmatprep.subr.mxu0 0.0
  %2880 = vmatpush1.msra.mxu0 0.0
  %2881 = vmatprep.subr.mxu0 0.0
  %2882 = vmatpush1.msra.mxu0 0.0
  %2883 = vmatprep.subr.mxu0 0.0
  %2884 = vmatpush1.msra.mxu0 0.0
  %2885 = vmatprep.subr.mxu0 0.0
  %2886 = vmatpush1.msra.mxu0 0.0
  %2887 = vmatprep.subr.mxu0 0.0
  %2888 = vmatpush1.msra.mxu0 0.0
  %2889 = vmatprep.subr.mxu0 0.0
  %2890 = vmatpush1.msra.mxu0 0.0
  %2891 = vmatprep.subr.mxu0 0.0
  %2892 = vmatpush1.msra.mxu0 0.0
  %2893 = vmatprep.subr.mxu0 0.0
  %2894 = vmatpush1.msra.mxu0 0.0
  %2895 = vmatprep.subr.mxu0 0.0
  %2896 = vmatpush1.msra.mxu0 0.0
  %2897 = vmatprep.subr.mxu0 0.0
  %2898 = vmatpush1.msra.mxu0 0.0
  %2899 = vmatprep.subr.mxu0 0.0
  %2900 = vmatpush1.msra.mxu0 0.0
  %2901 = vmatprep.subr.mxu0 0.0
  %2902 = vmatpush1.msra.mxu0 0.0
  %2903 = vmatprep.subr.mxu0 0.0
  %2904 = vmatpush1.msra.mxu0 0.0
  %2905 = vmatprep.subr.mxu0 0.0
  %2906 = vmatpush1.msra.mxu0 0.0
  %2907 = vmatprep.subr.mxu0 0.0
  %2908 = vmatpush1.msra.mxu0 0.0
  %2909 = vmatprep.subr.mxu0 0.0
  %2910 = vmatpush1.msra.mxu0 0.0
  %2911 = vmatprep.subr.mxu0 0.0
  %2912 = vmatpush1.msra.mxu0 0.0
  %2913 = vmatprep.subr.mxu0 0.0
  %2914 = vmatpush1.msra.mxu0 0.0
  %2915 = vmatprep.subr.mxu0 0.0
  %2916 = vmatpush1.msra.mxu0 0.0
  %2917 = vmatprep.subr.mxu0 0.0
  %2918 = vmatpush1.msra.mxu0 0.0
  %2919 = vmatprep.subr.mxu0 0.0
  %2920 = vmatpush1.msra.mxu0 0.0
  %2921 = vmatprep.subr.mxu0 0.0
  %2922 = vmatpush1.msra.mxu0 0.0
  %2923 = vmatprep.subr.mxu0 0.0
  %2924 = vmatpush1.msra.mxu0 0.0
  %2925 = vmatprep.subr.mxu0 0.0
  %2926 = vmatpush1.msra.mxu0 0.0
  %2927 = vmatprep.mubr.f32.mxu0 0.0
  %2928 = vmatmul.mubr.f32.gmra.mrb[0].mxu0 %v2855
  %v2929 = vpop.f32.mrb[0].mxu0
  %v2930 = vadd.f32 %v2841, %v2929
  %v2931 = vpop.f32.mrb[0].mxu0
  %2932 = vmatprep.mubr.f32.mxu0 0.0
  %2933 = vmatmul.mubr.f32.gmra.mrb[0].mxu0 %v2858
  %v2934 = vpop.f32.mrb[0].mxu0
  %v2935 = vadd.f32 %v2846, %v2934
  %v2936 = vpop.f32.mrb[0].mxu0
  %2937 = vmatprep.mubr.f32.mxu0 0.0
  %2938 = vmatmul.mubr.f32.gmra.mrb[0].mxu0 %v2861
  %v2939 = vpop.f32.mrb[0].mxu0
  %v2940 = vadd.f32 %v2851, %v2939
  %v2941 = vpop.f32.mrb[0].mxu0
  %2942 = vdwg.mxu0
  %v2944 = vlaneseq
  %v2945 = vshrl.u32 %v2944, 7
  %v2946 = vsub.s32 0, %v2945
  %v2947 = vrot.slane %v191, %v2946
  %v2949 = vadd.f32 %v2930, %v2947
  %v2950 = vadd.f32 %v2935, %v2947
  %v2951 = vadd.f32 %v2940, %v2947
  %v2952 = vadd.f32 %v2192, %v2949
  %v2953 = vadd.f32 %v2193, %v2950
  %v2954 = vadd.f32 %v2194, %v2951
  %v2955 = vsel %vm333, %v2952, 0.0
  %2956 = vadd.xlane.f32.xlu0 %v2955
  %v2957 = vpop.xlane.xlu0 %2956
  %v2958 = vsel %vm333, %v2953, 0.0
  %2959 = vadd.xlane.f32.xlu0 %v2958
  %v2960 = vpop.xlane.xlu0 %2959
  %v2961 = vsel %vm1864, %v2954, 0.0
  %2962 = vadd.xlane.f32.xlu0 %v2961
  %v2963 = vpop.xlane.xlu0 %2962
  %v2964 = vmul.f32 %v2957, %v1868
  %v2965 = vmul.f32 %v2960, %v1868
  %v2966 = vmul.f32 %v2963, %v1868
  %v2967 = vsub.f32 %v2952, %v2964
  %v2968 = vsub.f32 %v2953, %v2965
  %v2969 = vsub.f32 %v2954, %v2966
  %v2970 = vmul.f32 %v2967, %v2967
  %v2971 = vmul.f32 %v2968, %v2968
  %v2972 = vmul.f32 %v2969, %v2969
  %v2973 = vsel %vm333, %v2970, 0.0
  %2974 = vadd.xlane.f32.xlu0 %v2973
  %v2975 = vpop.xlane.xlu0 %2974
  %v2976 = vsel %vm333, %v2971, 0.0
  %2977 = vadd.xlane.f32.xlu0 %v2976
  %v2978 = vpop.xlane.xlu0 %2977
  %v2979 = vsel %vm1864, %v2972, 0.0
  %2980 = vadd.xlane.f32.xlu0 %v2979
  %v2981 = vpop.xlane.xlu0 %2980
  %v2982 = vmul.f32 %v2975, %v1868
  %v2983 = vmul.f32 %v2978, %v1868
  %v2984 = vmul.f32 %v2981, %v1868
  %v2985 = vadd.f32 %v2982, 1e-05
  %v2986 = vadd.f32 %v2983, 1e-05
  %v2987 = vadd.f32 %v2984, 1e-05
  %v2988 = vrsqrt.pop %v2985
  %v2989 = vrsqrt.pop %v2986
  %v2990 = vrsqrt.pop %v2987
  %v2991 = vmul.f32 %v2967, %v2988
  %v2992 = vmul.f32 %v2968, %v2989
  %v2993 = vmul.f32 %v2969, %v2990
  %v2995 = vlaneseq
  %v2996 = vshrl.u32 %v2995, 7
  %v2997 = vsub.s32 0, %v2996
  %v2998 = vrot.slane %v197, %v2997
  %v3000 = vmul.f32 %v2991, %v2998
  %v3001 = vmul.f32 %v2992, %v2998
  %v3002 = vmul.f32 %v2993, %v2998
  %v3004 = vlaneseq
  %v3005 = vshrl.u32 %v3004, 7
  %v3006 = vsub.s32 0, %v3005
  %v3007 = vrot.slane %v195, %v3006
  %v3009 = vadd.f32 %v3000, %v3007
  %v3010 = vadd.f32 %v3001, %v3007
  %v3011 = vadd.f32 %v3002, %v3007
  %v3013 = vlaneseq
  %v3014 = vshrl.u32 %v3013, 7
  %v3015 = vsub.s32 0, %v3014
  %v3016 = vrot.slane %v187, %v3015
  %v3019 = vsel %vm333, %v3009, 0
  %v3022 = vsel %vm333, %v3010, 0
  %v3025 = vsel %vm333, %v3011, 0
  %3027 = vmatprep.subr.mxu0 0.0
  %3028 = vmatpush1.msra.mxu0 %v206
  %3029 = vmatprep.subr.mxu0 0.0
  %3030 = vmatpush1.msra.mxu0 %v207
  %3031 = vmatprep.subr.mxu0 0.0
  %3032 = vmatpush1.msra.mxu0 %v208
  %3033 = vmatprep.subr.mxu0 0.0
  %3034 = vmatpush1.msra.mxu0 %v209
  %3035 = vmatprep.subr.mxu0 0.0
  %3036 = vmatpush1.msra.mxu0 0.0
  %3037 = vmatprep.subr.mxu0 0.0
  %3038 = vmatpush1.msra.mxu0 0.0
  %3039 = vmatprep.subr.mxu0 0.0
  %3040 = vmatpush1.msra.mxu0 0.0
  %3041 = vmatprep.subr.mxu0 0.0
  %3042 = vmatpush1.msra.mxu0 0.0
  %3043 = vmatprep.subr.mxu0 0.0
  %3044 = vmatpush1.msra.mxu0 0.0
  %3045 = vmatprep.subr.mxu0 0.0
  %3046 = vmatpush1.msra.mxu0 0.0
  %3047 = vmatprep.subr.mxu0 0.0
  %3048 = vmatpush1.msra.mxu0 0.0
  %3049 = vmatprep.subr.mxu0 0.0
  %3050 = vmatpush1.msra.mxu0 0.0
  %3051 = vmatprep.subr.mxu0 0.0
  %3052 = vmatpush1.msra.mxu0 0.0
  %3053 = vmatprep.subr.mxu0 0.0
  %3054 = vmatpush1.msra.mxu0 0.0
  %3055 = vmatprep.subr.mxu0 0.0
  %3056 = vmatpush1.msra.mxu0 0.0
  %3057 = vmatprep.subr.mxu0 0.0
  %3058 = vmatpush1.msra.mxu0 0.0
  %3059 = vmatprep.subr.mxu0 0.0
  %3060 = vmatpush1.msra.mxu0 0.0
  %3061 = vmatprep.subr.mxu0 0.0
  %3062 = vmatpush1.msra.mxu0 0.0
  %3063 = vmatprep.subr.mxu0 0.0
  %3064 = vmatpush1.msra.mxu0 0.0
  %3065 = vmatprep.subr.mxu0 0.0
  %3066 = vmatpush1.msra.mxu0 0.0
  %3067 = vmatprep.subr.mxu0 0.0
  %3068 = vmatpush1.msra.mxu0 0.0
  %3069 = vmatprep.subr.mxu0 0.0
  %3070 = vmatpush1.msra.mxu0 0.0
  %3071 = vmatprep.subr.mxu0 0.0
  %3072 = vmatpush1.msra.mxu0 0.0
  %3073 = vmatprep.subr.mxu0 0.0
  %3074 = vmatpush1.msra.mxu0 0.0
  %3075 = vmatprep.subr.mxu0 0.0
  %3076 = vmatpush1.msra.mxu0 0.0
  %3077 = vmatprep.subr.mxu0 0.0
  %3078 = vmatpush1.msra.mxu0 0.0
  %3079 = vmatprep.subr.mxu0 0.0
  %3080 = vmatpush1.msra.mxu0 0.0
  %3081 = vmatprep.subr.mxu0 0.0
  %3082 = vmatpush1.msra.mxu0 0.0
  %3083 = vmatprep.subr.mxu0 0.0
  %3084 = vmatpush1.msra.mxu0 0.0
  %3085 = vmatprep.subr.mxu0 0.0
  %3086 = vmatpush1.msra.mxu0 0.0
  %3087 = vmatprep.subr.mxu0 0.0
  %3088 = vmatpush1.msra.mxu0 0.0
  %3089 = vmatprep.subr.mxu0 0.0
  %3090 = vmatpush1.msra.mxu0 0.0
  %3091 = vmatprep.mubr.f32.mxu0 0.0
  %3092 = vmatmul.mubr.f32.gmra.mrb[0].mxu0 %v3019
  %v3093 = vpop.f32.mrb[0].mxu0
  %v3094 = vadd.f32 %v3016, %v3093
  %v3095 = vpop.f32.mrb[0].mxu0
  %3096 = vmatprep.mubr.f32.mxu0 0.0
  %3097 = vmatmul.mubr.f32.gmra.mrb[0].mxu0 %v3022
  %v3098 = vpop.f32.mrb[0].mxu0
  %v3099 = vadd.f32 %v3016, %v3098
  %v3100 = vpop.f32.mrb[0].mxu0
  %3101 = vmatprep.mubr.f32.mxu0 0.0
  %3102 = vmatmul.mubr.f32.gmra.mrb[0].mxu0 %v3025
  %v3103 = vpop.f32.mrb[0].mxu0
  %v3104 = vadd.f32 %v3016, %v3103
  %v3105 = vpop.f32.mrb[0].mxu0
  %3106 = vdwg.mxu0
  %v3107 = vmul.f32 %v3094, %v3094
  %v3108 = vmul.f32 %v3099, %v3099
  %v3109 = vmul.f32 %v3104, %v3104
  %v3110 = vmul.f32 %v3094, %v3107
  %v3111 = vmul.f32 %v3099, %v3108
  %v3112 = vmul.f32 %v3104, %v3109
  %v3113 = vmul.f32 %v3110, 0.044715
  %v3114 = vmul.f32 %v3111, 0.044715
  %v3115 = vmul.f32 %v3112, 0.044715
  %v3116 = vadd.f32 %v3094, %v3113
  %v3117 = vadd.f32 %v3099, %v3114
  %v3118 = vadd.f32 %v3104, %v3115
  %v3119 = vmul.f32 %v3116, 0.7978846
  %v3120 = vmul.f32 %v3117, 0.7978846
  %v3121 = vmul.f32 %v3118, 0.7978846
  %v3122 = vtanh.pop %v3119
  %v3123 = vtanh.pop %v3120
  %v3124 = vtanh.pop %v3121
  %v3125 = vadd.f32 %v3122, 1.0
  %v3126 = vadd.f32 %v3123, 1.0
  %v3127 = vadd.f32 %v3124, 1.0
  %v3128 = vmul.f32 %v3125, 0.5
  %v3129 = vmul.f32 %v3126, 0.5
  %v3130 = vmul.f32 %v3127, 0.5
  %v3131 = vmul.f32 %v3094, %v3128
  %v3132 = vmul.f32 %v3099, %v3129
  %v3133 = vmul.f32 %v3104, %v3130
  %v3135 = vlaneseq
  %v3136 = vshrl.u32 %v3135, 7
  %v3137 = vsub.s32 0, %v3136
  %v3138 = vrot.slane %v189, %v3137
  %v3141 = vsel %vm2045, %v3131, 0
  %v3144 = vsel %vm2045, %v3132, 0
  %v3147 = vsel %vm2045, %v3133, 0
  %3149 = vmatprep.subr.mxu0 0.0
  %3150 = vmatpush1.msra.mxu0 %v218
  %3151 = vmatprep.subr.mxu0 0.0
  %3152 = vmatpush1.msra.mxu0 %v219
  %3153 = vmatprep.subr.mxu0 0.0
  %3154 = vmatpush1.msra.mxu0 %v220
  %3155 = vmatprep.subr.mxu0 0.0
  %3156 = vmatpush1.msra.mxu0 %v221
  %3157 = vmatprep.subr.mxu0 0.0
  %3158 = vmatpush1.msra.mxu0 %v222
  %3159 = vmatprep.subr.mxu0 0.0
  %3160 = vmatpush1.msra.mxu0 %v223
  %3161 = vmatprep.subr.mxu0 0.0
  %3162 = vmatpush1.msra.mxu0 %v224
  %3163 = vmatprep.subr.mxu0 0.0
  %3164 = vmatpush1.msra.mxu0 %v225
  %3165 = vmatprep.subr.mxu0 0.0
  %3166 = vmatpush1.msra.mxu0 0.0
  %3167 = vmatprep.subr.mxu0 0.0
  %3168 = vmatpush1.msra.mxu0 0.0
  %3169 = vmatprep.subr.mxu0 0.0
  %3170 = vmatpush1.msra.mxu0 0.0
  %3171 = vmatprep.subr.mxu0 0.0
  %3172 = vmatpush1.msra.mxu0 0.0
  %3173 = vmatprep.subr.mxu0 0.0
  %3174 = vmatpush1.msra.mxu0 0.0
  %3175 = vmatprep.subr.mxu0 0.0
  %3176 = vmatpush1.msra.mxu0 0.0
  %3177 = vmatprep.subr.mxu0 0.0
  %3178 = vmatpush1.msra.mxu0 0.0
  %3179 = vmatprep.subr.mxu0 0.0
  %3180 = vmatpush1.msra.mxu0 0.0
  %3181 = vmatprep.subr.mxu0 0.0
  %3182 = vmatpush1.msra.mxu0 0.0
  %3183 = vmatprep.subr.mxu0 0.0
  %3184 = vmatpush1.msra.mxu0 0.0
  %3185 = vmatprep.subr.mxu0 0.0
  %3186 = vmatpush1.msra.mxu0 0.0
  %3187 = vmatprep.subr.mxu0 0.0
  %3188 = vmatpush1.msra.mxu0 0.0
  %3189 = vmatprep.subr.mxu0 0.0
  %3190 = vmatpush1.msra.mxu0 0.0
  %3191 = vmatprep.subr.mxu0 0.0
  %3192 = vmatpush1.msra.mxu0 0.0
  %3193 = vmatprep.subr.mxu0 0.0
  %3194 = vmatpush1.msra.mxu0 0.0
  %3195 = vmatprep.subr.mxu0 0.0
  %3196 = vmatpush1.msra.mxu0 0.0
  %3197 = vmatprep.subr.mxu0 0.0
  %3198 = vmatpush1.msra.mxu0 0.0
  %3199 = vmatprep.subr.mxu0 0.0
  %3200 = vmatpush1.msra.mxu0 0.0
  %3201 = vmatprep.subr.mxu0 0.0
  %3202 = vmatpush1.msra.mxu0 0.0
  %3203 = vmatprep.subr.mxu0 0.0
  %3204 = vmatpush1.msra.mxu0 0.0
  %3205 = vmatprep.subr.mxu0 0.0
  %3206 = vmatpush1.msra.mxu0 0.0
  %3207 = vmatprep.subr.mxu0 0.0
  %3208 = vmatpush1.msra.mxu0 0.0
  %3209 = vmatprep.subr.mxu0 0.0
  %3210 = vmatpush1.msra.mxu0 0.0
  %3211 = vmatprep.subr.mxu0 0.0
  %3212 = vmatpush1.msra.mxu0 0.0
  %3213 = vmatprep.mubr.f32.mxu0 0.0
  %3214 = vmatmul.mubr.f32.gmra.mrb[0].mxu0 %v3141
  %v3215 = vpop.f32.mrb[0].mxu0
  %v3216 = vadd.f32 %v3138, %v3215
  %v3217 = vpop.f32.mrb[0].mxu0
  %3218 = vmatprep.mubr.f32.mxu0 0.0
  %3219 = vmatmul.mubr.f32.gmra.mrb[0].mxu0 %v3144
  %v3220 = vpop.f32.mrb[0].mxu0
  %v3221 = vadd.f32 %v3138, %v3220
  %v3222 = vpop.f32.mrb[0].mxu0
  %3223 = vmatprep.mubr.f32.mxu0 0.0
  %3224 = vmatmul.mubr.f32.gmra.mrb[0].mxu0 %v3147
  %v3225 = vpop.f32.mrb[0].mxu0
  %v3226 = vadd.f32 %v3138, %v3225
  %v3227 = vpop.f32.mrb[0].mxu0
  %3228 = vdwg.mxu0
  %v3229 = vadd.f32 %v3009, %v3216
  %v3230 = vadd.f32 %v3010, %v3221
  %v3231 = vadd.f32 %v3011, %v3226
  %v3232 = vsel %vm333, %v3229, 0.0
  %3233 = vadd.xlane.f32.xlu0 %v3232
  %v3234 = vpop.xlane.xlu0 %3233
  %v3235 = vsel %vm333, %v3230, 0.0
  %3236 = vadd.xlane.f32.xlu0 %v3235
  %v3237 = vpop.xlane.xlu0 %3236
  %v3238 = vsel %vm1864, %v3231, 0.0
  %3239 = vadd.xlane.f32.xlu0 %v3238
  %v3240 = vpop.xlane.xlu0 %3239
  %v3241 = vmul.f32 %v3234, %v1868
  %v3242 = vmul.f32 %v3237, %v1868
  %v3243 = vmul.f32 %v3240, %v1868
  %v3244 = vsub.f32 %v3229, %v3241
  %v3245 = vsub.f32 %v3230, %v3242
  %v3246 = vsub.f32 %v3231, %v3243
  %v3247 = vmul.f32 %v3244, %v3244
  %v3248 = vmul.f32 %v3245, %v3245
  %v3249 = vmul.f32 %v3246, %v3246
  %v3250 = vsel %vm333, %v3247, 0.0
  %3251 = vadd.xlane.f32.xlu0 %v3250
  %v3252 = vpop.xlane.xlu0 %3251
  %v3253 = vsel %vm333, %v3248, 0.0
  %3254 = vadd.xlane.f32.xlu0 %v3253
  %v3255 = vpop.xlane.xlu0 %3254
  %v3256 = vsel %vm1864, %v3249, 0.0
  %3257 = vadd.xlane.f32.xlu0 %v3256
  %v3258 = vpop.xlane.xlu0 %3257
  %v3259 = vmul.f32 %v3252, %v1868
  %v3260 = vmul.f32 %v3255, %v1868
  %v3261 = vmul.f32 %v3258, %v1868
  %v3262 = vadd.f32 %v3259, 1e-05
  %v3263 = vadd.f32 %v3260, 1e-05
  %v3264 = vadd.f32 %v3261, 1e-05
  %v3265 = vrsqrt.pop %v3262
  %v3266 = vrsqrt.pop %v3263
  %v3267 = vrsqrt.pop %v3264
  %v3268 = vmul.f32 %v3244, %v3265
  %v3269 = vmul.f32 %v3245, %v3266
  %v3270 = vmul.f32 %v3246, %v3267
  %v3272 = vlaneseq
  %v3273 = vshrl.u32 %v3272, 7
  %v3274 = vsub.s32 0, %v3273
  %v3275 = vrot.slane %v201, %v3274
  %v3277 = vmul.f32 %v3268, %v3275
  %v3278 = vmul.f32 %v3269, %v3275
  %v3279 = vmul.f32 %v3270, %v3275
  %v3281 = vlaneseq
  %v3282 = vshrl.u32 %v3281, 7
  %v3283 = vsub.s32 0, %v3282
  %v3284 = vrot.slane %v199, %v3283
  %v3286 = vadd.f32 %v3277, %v3284
  %v3287 = vadd.f32 %v3278, %v3284
  %v3288 = vadd.f32 %v3279, %v3284
  %v3290 = vlaneseq
  %v3291 = vshrl.u32 %v3290, 7
  %v3292 = vsub.s32 0, %v3291
  %v3293 = vrot.slane %v250, %v3292
  %v3296 = vsel %vm333, %v1093, 0
  %v3299 = vsel %vm333, %v1094, 0
  %v3302 = vsel %vm333, %v1095, 0
  %3304 = vmatprep.subr.mxu0 0.0
  %3305 = vmatpush1.msra.mxu0 %v292
  %3306 = vmatprep.subr.mxu0 0.0
  %3307 = vmatpush1.msra.mxu0 %v293
  %3308 = vmatprep.subr.mxu0 0.0
  %3309 = vmatpush1.msra.mxu0 %v294
  %3310 = vmatprep.subr.mxu0 0.0
  %3311 = vmatpush1.msra.mxu0 %v295
  %3312 = vmatprep.subr.mxu0 0.0
  %3313 = vmatpush1.msra.mxu0 0.0
  %3314 = vmatprep.subr.mxu0 0.0
  %3315 = vmatpush1.msra.mxu0 0.0
  %3316 = vmatprep.subr.mxu0 0.0
  %3317 = vmatpush1.msra.mxu0 0.0
  %3318 = vmatprep.subr.mxu0 0.0
  %3319 = vmatpush1.msra.mxu0 0.0
  %3320 = vmatprep.subr.mxu0 0.0
  %3321 = vmatpush1.msra.mxu0 0.0
  %3322 = vmatprep.subr.mxu0 0.0
  %3323 = vmatpush1.msra.mxu0 0.0
  %3324 = vmatprep.subr.mxu0 0.0
  %3325 = vmatpush1.msra.mxu0 0.0
  %3326 = vmatprep.subr.mxu0 0.0
  %3327 = vmatpush1.msra.mxu0 0.0
  %3328 = vmatprep.subr.mxu0 0.0
  %3329 = vmatpush1.msra.mxu0 0.0
  %3330 = vmatprep.subr.mxu0 0.0
  %3331 = vmatpush1.msra.mxu0 0.0
  %3332 = vmatprep.subr.mxu0 0.0
  %3333 = vmatpush1.msra.mxu0 0.0
  %3334 = vmatprep.subr.mxu0 0.0
  %3335 = vmatpush1.msra.mxu0 0.0
  %3336 = vmatprep.subr.mxu0 0.0
  %3337 = vmatpush1.msra.mxu0 0.0
  %3338 = vmatprep.subr.mxu0 0.0
  %3339 = vmatpush1.msra.mxu0 0.0
  %3340 = vmatprep.subr.mxu0 0.0
  %3341 = vmatpush1.msra.mxu0 0.0
  %3342 = vmatprep.subr.mxu0 0.0
  %3343 = vmatpush1.msra.mxu0 0.0
  %3344 = vmatprep.subr.mxu0 0.0
  %3345 = vmatpush1.msra.mxu0 0.0
  %3346 = vmatprep.subr.mxu0 0.0
  %3347 = vmatpush1.msra.mxu0 0.0
  %3348 = vmatprep.subr.mxu0 0.0
  %3349 = vmatpush1.msra.mxu0 0.0
  %3350 = vmatprep.subr.mxu0 0.0
  %3351 = vmatpush1.msra.mxu0 0.0
  %3352 = vmatprep.subr.mxu0 0.0
  %3353 = vmatpush1.msra.mxu0 0.0
  %3354 = vmatprep.subr.mxu0 0.0
  %3355 = vmatpush1.msra.mxu0 0.0
  %3356 = vmatprep.subr.mxu0 0.0
  %3357 = vmatpush1.msra.mxu0 0.0
  %3358 = vmatprep.subr.mxu0 0.0
  %3359 = vmatpush1.msra.mxu0 0.0
  %3360 = vmatprep.subr.mxu0 0.0
  %3361 = vmatpush1.msra.mxu0 0.0
  %3362 = vmatprep.subr.mxu0 0.0
  %3363 = vmatpush1.msra.mxu0 0.0
  %3364 = vmatprep.subr.mxu0 0.0
  %3365 = vmatpush1.msra.mxu0 0.0
  %3366 = vmatprep.subr.mxu0 0.0
  %3367 = vmatpush1.msra.mxu0 0.0
  %3368 = vmatprep.mubr.f32.mxu0 0.0
  %3369 = vmatmul.mubr.f32.gmra.mrb[0].mxu0 %v3296
  %v3370 = vpop.f32.mrb[0].mxu0
  %v3371 = vadd.f32 %v3293, %v3370
  %v3372 = vpop.f32.mrb[0].mxu0
  %3373 = vmatprep.mubr.f32.mxu0 0.0
  %3374 = vmatmul.mubr.f32.gmra.mrb[0].mxu0 %v3299
  %v3375 = vpop.f32.mrb[0].mxu0
  %v3376 = vadd.f32 %v3293, %v3375
  %v3377 = vpop.f32.mrb[0].mxu0
  %3378 = vmatprep.mubr.f32.mxu0 0.0
  %3379 = vmatmul.mubr.f32.gmra.mrb[0].mxu0 %v3302
  %v3380 = vpop.f32.mrb[0].mxu0
  %v3381 = vadd.f32 %v3293, %v3380
  %v3382 = vpop.f32.mrb[0].mxu0
  %3383 = vdwg.mxu0
  %v3384 = vmul.f32 %v3371, 0.35355338
  %v3385 = vmul.f32 %v3376, 0.35355338
  %v3386 = vmul.f32 %v3381, 0.35355338
  %3391 = vrot.lane.b32.xlu0 %v292, 96
  %v3392 = vpop.permute.xlu0 %3391
  %3393 = vrot.lane.b32.xlu0 %v293, 96
  %v3394 = vpop.permute.xlu0 %3393
  %3395 = vrot.lane.b32.xlu0 %v294, 96
  %v3396 = vpop.permute.xlu0 %3395
  %3397 = vrot.lane.b32.xlu0 %v295, 96
  %v3398 = vpop.permute.xlu0 %3397
  %3403 = vrot.lane.b32.xlu0 %v3293, 96
  %v3404 = vpop.permute.xlu0 %3403
  %3406 = vmatprep.subr.mxu0 0.0
  %3407 = vmatpush1.msra.mxu0 %v3392
  %3408 = vmatprep.subr.mxu0 0.0
  %3409 = vmatpush1.msra.mxu0 %v3394
  %3410 = vmatprep.subr.mxu0 0.0
  %3411 = vmatpush1.msra.mxu0 %v3396
  %3412 = vmatprep.subr.mxu0 0.0
  %3413 = vmatpush1.msra.mxu0 %v3398
  %3414 = vmatprep.subr.mxu0 0.0
  %3415 = vmatpush1.msra.mxu0 0.0
  %3416 = vmatprep.subr.mxu0 0.0
  %3417 = vmatpush1.msra.mxu0 0.0
  %3418 = vmatprep.subr.mxu0 0.0
  %3419 = vmatpush1.msra.mxu0 0.0
  %3420 = vmatprep.subr.mxu0 0.0
  %3421 = vmatpush1.msra.mxu0 0.0
  %3422 = vmatprep.subr.mxu0 0.0
  %3423 = vmatpush1.msra.mxu0 0.0
  %3424 = vmatprep.subr.mxu0 0.0
  %3425 = vmatpush1.msra.mxu0 0.0
  %3426 = vmatprep.subr.mxu0 0.0
  %3427 = vmatpush1.msra.mxu0 0.0
  %3428 = vmatprep.subr.mxu0 0.0
  %3429 = vmatpush1.msra.mxu0 0.0
  %3430 = vmatprep.subr.mxu0 0.0
  %3431 = vmatpush1.msra.mxu0 0.0
  %3432 = vmatprep.subr.mxu0 0.0
  %3433 = vmatpush1.msra.mxu0 0.0
  %3434 = vmatprep.subr.mxu0 0.0
  %3435 = vmatpush1.msra.mxu0 0.0
  %3436 = vmatprep.subr.mxu0 0.0
  %3437 = vmatpush1.msra.mxu0 0.0
  %3438 = vmatprep.subr.mxu0 0.0
  %3439 = vmatpush1.msra.mxu0 0.0
  %3440 = vmatprep.subr.mxu0 0.0
  %3441 = vmatpush1.msra.mxu0 0.0
  %3442 = vmatprep.subr.mxu0 0.0
  %3443 = vmatpush1.msra.mxu0 0.0
  %3444 = vmatprep.subr.mxu0 0.0
  %3445 = vmatpush1.msra.mxu0 0.0
  %3446 = vmatprep.subr.mxu0 0.0
  %3447 = vmatpush1.msra.mxu0 0.0
  %3448 = vmatprep.subr.mxu0 0.0
  %3449 = vmatpush1.msra.mxu0 0.0
  %3450 = vmatprep.subr.mxu0 0.0
  %3451 = vmatpush1.msra.mxu0 0.0
  %3452 = vmatprep.subr.mxu0 0.0
  %3453 = vmatpush1.msra.mxu0 0.0
  %3454 = vmatprep.subr.mxu0 0.0
  %3455 = vmatpush1.msra.mxu0 0.0
  %3456 = vmatprep.subr.mxu0 0.0
  %3457 = vmatpush1.msra.mxu0 0.0
  %3458 = vmatprep.subr.mxu0 0.0
  %3459 = vmatpush1.msra.mxu0 0.0
  %3460 = vmatprep.subr.mxu0 0.0
  %3461 = vmatpush1.msra.mxu0 0.0
  %3462 = vmatprep.subr.mxu0 0.0
  %3463 = vmatpush1.msra.mxu0 0.0
  %3464 = vmatprep.subr.mxu0 0.0
  %3465 = vmatpush1.msra.mxu0 0.0
  %3466 = vmatprep.subr.mxu0 0.0
  %3467 = vmatpush1.msra.mxu0 0.0
  %3468 = vmatprep.subr.mxu0 0.0
  %3469 = vmatpush1.msra.mxu0 0.0
  %3470 = vmatprep.mubr.f32.mxu0 0.0
  %3471 = vmatmul.mubr.f32.gmra.mrb[0].mxu0 %v1103
  %v3472 = vpop.f32.mrb[0].mxu0
  %v3473 = vadd.f32 %v3404, %v3472
  %v3474 = vpop.f32.mrb[0].mxu0
  %3475 = vmatprep.mubr.f32.mxu0 0.0
  %3476 = vmatmul.mubr.f32.gmra.mrb[0].mxu0 %v1106
  %v3477 = vpop.f32.mrb[0].mxu0
  %v3478 = vadd.f32 %v3404, %v3477
  %v3479 = vpop.f32.mrb[0].mxu0
  %3480 = vmatprep.mubr.f32.mxu0 0.0
  %3481 = vmatmul.mubr.f32.gmra.mrb[0].mxu0 %v1109
  %v3482 = vpop.f32.mrb[0].mxu0
  %v3483 = vadd.f32 %v3404, %v3482
  %v3484 = vpop.f32.mrb[0].mxu0
  %3485 = vdwg.mxu0
  %3489 = vrot.lane.b32.xlu0 %v3371, 96
  %v3490 = vpop.permute.xlu0 %3489
  %3491 = vrot.lane.b32.xlu0 %v3376, 96
  %v3492 = vpop.permute.xlu0 %3491
  %3493 = vrot.lane.b32.xlu0 %v3381, 96
  %v3494 = vpop.permute.xlu0 %3493
  %vm3495 = vcmask 64512
  %v3497 = vsel %vm3495, %v3384, 0
  %v3500 = vsel %vm3495, %v3385, 0
  %v3503 = vsel %vm3495, %v3386, 0
  %v3505 = vsel %vm3495, %v3490, 0
  %v3507 = vsel %vm3495, %v3492, 0
  %v3509 = vsel %vm3495, %v3494, 0
  %3511 = vmatprep.subr.mxu0 0.0
  %3512 = vmatpush1.xpose.msra.mxu0 %v3505
  %3513 = vmatprep.subr.mxu0 0.0
  %3514 = vmatpush1.xpose.msra.mxu0 %v3507
  %3515 = vmatprep.subr.mxu0 0.0
  %3516 = vmatpush1.xpose.msra.mxu0 %v3509
  %3517 = vmatprep.subr.mxu0 0.0
  %3518 = vmatpush1.xpose.msra.mxu0 0.0
  %3519 = vmatprep.subr.mxu0 0.0
  %3520 = vmatpush1.xpose.msra.mxu0 0.0
  %3521 = vmatprep.subr.mxu0 0.0
  %3522 = vmatpush1.xpose.msra.mxu0 0.0
  %3523 = vmatprep.subr.mxu0 0.0
  %3524 = vmatpush1.xpose.msra.mxu0 0.0
  %3525 = vmatprep.subr.mxu0 0.0
  %3526 = vmatpush1.xpose.msra.mxu0 0.0
  %3527 = vmatprep.subr.mxu0 0.0
  %3528 = vmatpush1.xpose.msra.mxu0 0.0
  %3529 = vmatprep.subr.mxu0 0.0
  %3530 = vmatpush1.xpose.msra.mxu0 0.0
  %3531 = vmatprep.subr.mxu0 0.0
  %3532 = vmatpush1.xpose.msra.mxu0 0.0
  %3533 = vmatprep.subr.mxu0 0.0
  %3534 = vmatpush1.xpose.msra.mxu0 0.0
  %3535 = vmatprep.subr.mxu0 0.0
  %3536 = vmatpush1.xpose.msra.mxu0 0.0
  %3537 = vmatprep.subr.mxu0 0.0
  %3538 = vmatpush1.xpose.msra.mxu0 0.0
  %3539 = vmatprep.subr.mxu0 0.0
  %3540 = vmatpush1.xpose.msra.mxu0 0.0
  %3541 = vmatprep.subr.mxu0 0.0
  %3542 = vmatpush1.xpose.msra.mxu0 0.0
  %3543 = vmatprep.subr.mxu0 0.0
  %3544 = vmatpush1.xpose.msra.mxu0 0.0
  %3545 = vmatprep.subr.mxu0 0.0
  %3546 = vmatpush1.xpose.msra.mxu0 0.0
  %3547 = vmatprep.subr.mxu0 0.0
  %3548 = vmatpush1.xpose.msra.mxu0 0.0
  %3549 = vmatprep.subr.mxu0 0.0
  %3550 = vmatpush1.xpose.msra.mxu0 0.0
  %3551 = vmatprep.subr.mxu0 0.0
  %3552 = vmatpush1.xpose.msra.mxu0 0.0
  %3553 = vmatprep.subr.mxu0 0.0
  %3554 = vmatpush1.xpose.msra.mxu0 0.0
  %3555 = vmatprep.subr.mxu0 0.0
  %3556 = vmatpush1.xpose.msra.mxu0 0.0
  %3557 = vmatprep.subr.mxu0 0.0
  %3558 = vmatpush1.xpose.msra.mxu0 0.0
  %3559 = vmatprep.subr.mxu0 0.0
  %3560 = vmatpush1.xpose.msra.mxu0 0.0
  %3561 = vmatprep.subr.mxu0 0.0
  %3562 = vmatpush1.xpose.msra.mxu0 0.0
  %3563 = vmatprep.subr.mxu0 0.0
  %3564 = vmatpush1.xpose.msra.mxu0 0.0
  %3565 = vmatprep.subr.mxu0 0.0
  %3566 = vmatpush1.xpose.msra.mxu0 0.0
  %3567 = vmatprep.subr.mxu0 0.0
  %3568 = vmatpush1.xpose.msra.mxu0 0.0
  %3569 = vmatprep.subr.mxu0 0.0
  %3570 = vmatpush1.xpose.msra.mxu0 0.0
  %3571 = vmatprep.subr.mxu0 0.0
  %3572 = vmatpush1.xpose.msra.mxu0 0.0
  %3573 = vmatprep.subr.mxu0 0.0
  %3574 = vmatpush1.xpose.msra.mxu0 0.0
  %3575 = vmatprep.mubr.f32.mxu0 0.0
  %3576 = vmatmul.mubr.f32.gmra.mrb[0].mxu0 %v3497
  %v3577 = vpop.f32.mrb[0].mxu0
  %v3578 = vadd.f32 %v177, %v3577
  %v3579 = vpop.f32.mrb[0].mxu0
  %3580 = vmatprep.mubr.f32.mxu0 0.0
  %3581 = vmatmul.mubr.f32.gmra.mrb[0].mxu0 %v3500
  %v3582 = vpop.f32.mrb[0].mxu0
  %v3583 = vadd.f32 %v178, %v3582
  %v3584 = vpop.f32.mrb[0].mxu0
  %3585 = vmatprep.mubr.f32.mxu0 0.0
  %3586 = vmatmul.mubr.f32.gmra.mrb[0].mxu0 %v3503
  %v3587 = vpop.f32.mrb[0].mxu0
  %v3588 = vadd.f32 %v179, %v3587
  %v3589 = vpop.f32.mrb[0].mxu0
  %3590 = vdwg.mxu0
  %v3592 = vsel %vm3495, %v3473, 0
  %v3595 = vsel %vm3495, %v3478, 0
  %v3598 = vsel %vm3495, %v3483, 0
  %3600 = vmatprep.subr.mxu0 0.0
  %3601 = vmatpush1.xpose.msra.mxu0 %v3592
  %3602 = vmatprep.subr.mxu0 0.0
  %3603 = vmatpush1.xpose.msra.mxu0 %v3595
  %3604 = vmatprep.subr.mxu0 0.0
  %3605 = vmatpush1.xpose.msra.mxu0 %v3598
  %3606 = vmatprep.subr.mxu0 0.0
  %3607 = vmatpush1.xpose.msra.mxu0 0.0
  %3608 = vmatprep.subr.mxu0 0.0
  %3609 = vmatpush1.xpose.msra.mxu0 0.0
  %3610 = vmatprep.subr.mxu0 0.0
  %3611 = vmatpush1.xpose.msra.mxu0 0.0
  %3612 = vmatprep.subr.mxu0 0.0
  %3613 = vmatpush1.xpose.msra.mxu0 0.0
  %3614 = vmatprep.subr.mxu0 0.0
  %3615 = vmatpush1.xpose.msra.mxu0 0.0
  %3616 = vmatprep.subr.mxu0 0.0
  %3617 = vmatpush1.xpose.msra.mxu0 0.0
  %3618 = vmatprep.subr.mxu0 0.0
  %3619 = vmatpush1.xpose.msra.mxu0 0.0
  %3620 = vmatprep.subr.mxu0 0.0
  %3621 = vmatpush1.xpose.msra.mxu0 0.0
  %3622 = vmatprep.subr.mxu0 0.0
  %3623 = vmatpush1.xpose.msra.mxu0 0.0
  %3624 = vmatprep.subr.mxu0 0.0
  %3625 = vmatpush1.xpose.msra.mxu0 0.0
  %3626 = vmatprep.subr.mxu0 0.0
  %3627 = vmatpush1.xpose.msra.mxu0 0.0
  %3628 = vmatprep.subr.mxu0 0.0
  %3629 = vmatpush1.xpose.msra.mxu0 0.0
  %3630 = vmatprep.subr.mxu0 0.0
  %3631 = vmatpush1.xpose.msra.mxu0 0.0
  %3632 = vmatprep.subr.mxu0 0.0
  %3633 = vmatpush1.xpose.msra.mxu0 0.0
  %3634 = vmatprep.subr.mxu0 0.0
  %3635 = vmatpush1.xpose.msra.mxu0 0.0
  %3636 = vmatprep.subr.mxu0 0.0
  %3637 = vmatpush1.xpose.msra.mxu0 0.0
  %3638 = vmatprep.subr.mxu0 0.0
  %3639 = vmatpush1.xpose.msra.mxu0 0.0
  %3640 = vmatprep.subr.mxu0 0.0
  %3641 = vmatpush1.xpose.msra.mxu0 0.0
  %3642 = vmatprep.subr.mxu0 0.0
  %3643 = vmatpush1.xpose.msra.mxu0 0.0
  %3644 = vmatprep.subr.mxu0 0.0
  %3645 = vmatpush1.xpose.msra.mxu0 0.0
  %3646 = vmatprep.subr.mxu0 0.0
  %3647 = vmatpush1.xpose.msra.mxu0 0.0
  %3648 = vmatprep.subr.mxu0 0.0
  %3649 = vmatpush1.xpose.msra.mxu0 0.0
  %3650 = vmatprep.subr.mxu0 0.0
  %3651 = vmatpush1.xpose.msra.mxu0 0.0
  %3652 = vmatprep.subr.mxu0 0.0
  %3653 = vmatpush1.xpose.msra.mxu0 0.0
  %3654 = vmatprep.subr.mxu0 0.0
  %3655 = vmatpush1.xpose.msra.mxu0 0.0
  %3656 = vmatprep.subr.mxu0 0.0
  %3657 = vmatpush1.xpose.msra.mxu0 0.0
  %3658 = vmatprep.subr.mxu0 0.0
  %3659 = vmatpush1.xpose.msra.mxu0 0.0
  %3660 = vmatprep.subr.mxu0 0.0
  %3661 = vmatpush1.xpose.msra.mxu0 0.0
  %3662 = vmatprep.subr.mxu0 0.0
  %3663 = vmatpush1.xpose.msra.mxu0 0.0
  %3664 = vmatprep.mubr.f32.mxu0 0.0
  %3665 = vmatmul.mubr.f32.gmra.mrb[0].mxu0 %v3497
  %v3666 = vpop.f32.mrb[0].mxu0
  %v3667 = vadd.f32 %v177, %v3666
  %v3668 = vpop.f32.mrb[0].mxu0
  %3669 = vmatprep.mubr.f32.mxu0 0.0
  %3670 = vmatmul.mubr.f32.gmra.mrb[0].mxu0 %v3500
  %v3671 = vpop.f32.mrb[0].mxu0
  %v3672 = vadd.f32 %v178, %v3671
  %v3673 = vpop.f32.mrb[0].mxu0
  %3674 = vmatprep.mubr.f32.mxu0 0.0
  %3675 = vmatmul.mubr.f32.gmra.mrb[0].mxu0 %v3503
  %v3676 = vpop.f32.mrb[0].mxu0
  %v3677 = vadd.f32 %v179, %v3676
  %v3678 = vpop.f32.mrb[0].mxu0
  %3679 = vdwg.mxu0
  %v3680 = vsel %vm1298, %v3578, -inf
  %3681 = vmax.xlane.f32.xlu0 %v3680
  %v3682 = vpop.xlane.xlu0 %3681
  %v3683 = vsel %vm1298, %v3583, -inf
  %3684 = vmax.xlane.f32.xlu0 %v3683
  %v3685 = vpop.xlane.xlu0 %3684
  %v3686 = vsel %vm1305, %v3588, -inf
  %3687 = vmax.xlane.f32.xlu0 %v3686
  %v3688 = vpop.xlane.xlu0 %3687
  %v3689 = vsel %vm1298, %v3667, -inf
  %3690 = vmax.xlane.f32.xlu0 %v3689
  %v3691 = vpop.xlane.xlu0 %3690
  %v3692 = vsel %vm1298, %v3672, -inf
  %3693 = vmax.xlane.f32.xlu0 %v3692
  %v3694 = vpop.xlane.xlu0 %3693
  %v3695 = vsel %vm1305, %v3677, -inf
  %3696 = vmax.xlane.f32.xlu0 %v3695
  %v3697 = vpop.xlane.xlu0 %3696
  %v3698 = vmax.f32 %v3682, %v3691
  %v3699 = vmax.f32 %v3685, %v3694
  %v3700 = vmax.f32 %v3688, %v3697
  %v3701 = vsub.f32 %v3578, %v3698
  %v3702 = vsub.f32 %v3583, %v3699
  %v3703 = vsub.f32 %v3588, %v3700
  %v3704 = vmul.f32 %v3701, 1.442695
  %v3705 = vpow.pop %v3704
  %v3706 = vmul.f32 %v3702, 1.442695
  %v3707 = vpow.pop %v3706
  %v3708 = vmul.f32 %v3703, 1.442695
  %v3709 = vpow.pop %v3708
  %v3710 = vsub.f32 %v3667, %v3698
  %v3711 = vsub.f32 %v3672, %v3699
  %v3712 = vsub.f32 %v3677, %v3700
  %v3713 = vmul.f32 %v3710, 1.442695
  %v3714 = vpow.pop %v3713
  %v3715 = vmul.f32 %v3711, 1.442695
  %v3716 = vpow.pop %v3715
  %v3717 = vmul.f32 %v3712, 1.442695
  %v3718 = vpow.pop %v3717
  %v3719 = vsel %vm1298, %v3705, 0.0
  %3720 = vadd.xlane.f32.xlu0 %v3719
  %v3721 = vpop.xlane.xlu0 %3720
  %v3722 = vsel %vm1298, %v3707, 0.0
  %3723 = vadd.xlane.f32.xlu0 %v3722
  %v3724 = vpop.xlane.xlu0 %3723
  %v3725 = vsel %vm1305, %v3709, 0.0
  %3726 = vadd.xlane.f32.xlu0 %v3725
  %v3727 = vpop.xlane.xlu0 %3726
  %v3728 = vsel %vm1298, %v3714, 0.0
  %3729 = vadd.xlane.f32.xlu0 %v3728
  %v3730 = vpop.xlane.xlu0 %3729
  %v3731 = vsel %vm1298, %v3716, 0.0
  %3732 = vadd.xlane.f32.xlu0 %v3731
  %v3733 = vpop.xlane.xlu0 %3732
  %v3734 = vsel %vm1305, %v3718, 0.0
  %3735 = vadd.xlane.f32.xlu0 %v3734
  %v3736 = vpop.xlane.xlu0 %3735
  %v3737 = vadd.f32 %v3721, %v3730
  %v3738 = vadd.f32 %v3724, %v3733
  %v3739 = vadd.f32 %v3727, %v3736
  %v3740 = vrcp.pop %v3737
  %v3741 = vrcp.pop %v3738
  %v3742 = vrcp.pop %v3739
  %3743 = vrot.lane.b32.xlu0 %v3473, 96
  %v3744 = vpop.permute.xlu0 %3743
  %3745 = vrot.lane.b32.xlu0 %v3478, 96
  %v3746 = vpop.permute.xlu0 %3745
  %3747 = vrot.lane.b32.xlu0 %v3483, 96
  %v3748 = vpop.permute.xlu0 %3747
  %v3752 = vsel %vm1298, %v3714, 0
  %v3755 = vsel %vm1298, %v3716, 0
  %v3758 = vsel %vm1298, %v3718, 0
  %v3760 = vsel %vm765, %v3748, 0
  %3762 = vmatprep.subr.mxu0 0.0
  %3763 = vmatpush1.msra.mxu0 %v3744
  %3764 = vmatprep.subr.mxu0 0.0
  %3765 = vmatpush1.msra.mxu0 %v3746
  %3766 = vmatprep.subr.mxu0 0.0
  %3767 = vmatpush1.msra.mxu0 %v3760
  %3768 = vmatprep.subr.mxu0 0.0
  %3769 = vmatpush1.msra.mxu0 0.0
  %3770 = vmatprep.subr.mxu0 0.0
  %3771 = vmatpush1.msra.mxu0 0.0
  %3772 = vmatprep.subr.mxu0 0.0
  %3773 = vmatpush1.msra.mxu0 0.0
  %3774 = vmatprep.subr.mxu0 0.0
  %3775 = vmatpush1.msra.mxu0 0.0
  %3776 = vmatprep.subr.mxu0 0.0
  %3777 = vmatpush1.msra.mxu0 0.0
  %3778 = vmatprep.subr.mxu0 0.0
  %3779 = vmatpush1.msra.mxu0 0.0
  %3780 = vmatprep.subr.mxu0 0.0
  %3781 = vmatpush1.msra.mxu0 0.0
  %3782 = vmatprep.subr.mxu0 0.0
  %3783 = vmatpush1.msra.mxu0 0.0
  %3784 = vmatprep.subr.mxu0 0.0
  %3785 = vmatpush1.msra.mxu0 0.0
  %3786 = vmatprep.subr.mxu0 0.0
  %3787 = vmatpush1.msra.mxu0 0.0
  %3788 = vmatprep.subr.mxu0 0.0
  %3789 = vmatpush1.msra.mxu0 0.0
  %3790 = vmatprep.subr.mxu0 0.0
  %3791 = vmatpush1.msra.mxu0 0.0
  %3792 = vmatprep.subr.mxu0 0.0
  %3793 = vmatpush1.msra.mxu0 0.0
  %3794 = vmatprep.subr.mxu0 0.0
  %3795 = vmatpush1.msra.mxu0 0.0
  %3796 = vmatprep.subr.mxu0 0.0
  %3797 = vmatpush1.msra.mxu0 0.0
  %3798 = vmatprep.subr.mxu0 0.0
  %3799 = vmatpush1.msra.mxu0 0.0
  %3800 = vmatprep.subr.mxu0 0.0
  %3801 = vmatpush1.msra.mxu0 0.0
  %3802 = vmatprep.subr.mxu0 0.0
  %3803 = vmatpush1.msra.mxu0 0.0
  %3804 = vmatprep.subr.mxu0 0.0
  %3805 = vmatpush1.msra.mxu0 0.0
  %3806 = vmatprep.subr.mxu0 0.0
  %3807 = vmatpush1.msra.mxu0 0.0
  %3808 = vmatprep.subr.mxu0 0.0
  %3809 = vmatpush1.msra.mxu0 0.0
  %3810 = vmatprep.subr.mxu0 0.0
  %3811 = vmatpush1.msra.mxu0 0.0
  %3812 = vmatprep.subr.mxu0 0.0
  %3813 = vmatpush1.msra.mxu0 0.0
  %3814 = vmatprep.subr.mxu0 0.0
  %3815 = vmatpush1.msra.mxu0 0.0
  %3816 = vmatprep.subr.mxu0 0.0
  %3817 = vmatpush1.msra.mxu0 0.0
  %3818 = vmatprep.subr.mxu0 0.0
  %3819 = vmatpush1.msra.mxu0 0.0
  %3820 = vmatprep.subr.mxu0 0.0
  %3821 = vmatpush1.msra.mxu0 0.0
  %3822 = vmatprep.subr.mxu0 0.0
  %3823 = vmatpush1.msra.mxu0 0.0
  %3824 = vmatprep.subr.mxu0 0.0
  %3825 = vmatpush1.msra.mxu0 0.0
  %3826 = vmatprep.mubr.f32.mxu0 0.0
  %3827 = vmatmul.mubr.f32.gmra.mrb[0].mxu0 %v3752
  %v3828 = vpop.f32.mrb[0].mxu0
  %v3829 = vadd.f32 0.0, %v3828
  %v3830 = vpop.f32.mrb[0].mxu0
  %3831 = vmatprep.mubr.f32.mxu0 0.0
  %3832 = vmatmul.mubr.f32.gmra.mrb[0].mxu0 %v3755
  %v3833 = vpop.f32.mrb[0].mxu0
  %v3834 = vadd.f32 0.0, %v3833
  %v3835 = vpop.f32.mrb[0].mxu0
  %3836 = vmatprep.mubr.f32.mxu0 0.0
  %3837 = vmatmul.mubr.f32.gmra.mrb[0].mxu0 %v3758
  %v3838 = vpop.f32.mrb[0].mxu0
  %v3839 = vadd.f32 0.0, %v3838
  %v3840 = vpop.f32.mrb[0].mxu0
  %3841 = vdwg.mxu0
  %3842 = vrot.lane.b32.xlu0 %v3371, 64
  %v3843 = vpop.permute.xlu0 %3842
  %3844 = vrot.lane.b32.xlu0 %v3376, 64
  %v3845 = vpop.permute.xlu0 %3844
  %3846 = vrot.lane.b32.xlu0 %v3381, 64
  %v3847 = vpop.permute.xlu0 %3846
  %v3851 = vsel %vm1298, %v3705, 0
  %v3854 = vsel %vm1298, %v3707, 0
  %v3857 = vsel %vm1298, %v3709, 0
  %v3859 = vsel %vm765, %v3847, 0
  %3861 = vmatprep.subr.mxu0 0.0
  %3862 = vmatpush1.msra.mxu0 %v3843
  %3863 = vmatprep.subr.mxu0 0.0
  %3864 = vmatpush1.msra.mxu0 %v3845
  %3865 = vmatprep.subr.mxu0 0.0
  %3866 = vmatpush1.msra.mxu0 %v3859
  %3867 = vmatprep.subr.mxu0 0.0
  %3868 = vmatpush1.msra.mxu0 0.0
  %3869 = vmatprep.subr.mxu0 0.0
  %3870 = vmatpush1.msra.mxu0 0.0
  %3871 = vmatprep.subr.mxu0 0.0
  %3872 = vmatpush1.msra.mxu0 0.0
  %3873 = vmatprep.subr.mxu0 0.0
  %3874 = vmatpush1.msra.mxu0 0.0
  %3875 = vmatprep.subr.mxu0 0.0
  %3876 = vmatpush1.msra.mxu0 0.0
  %3877 = vmatprep.subr.mxu0 0.0
  %3878 = vmatpush1.msra.mxu0 0.0
  %3879 = vmatprep.subr.mxu0 0.0
  %3880 = vmatpush1.msra.mxu0 0.0
  %3881 = vmatprep.subr.mxu0 0.0
  %3882 = vmatpush1.msra.mxu0 0.0
  %3883 = vmatprep.subr.mxu0 0.0
  %3884 = vmatpush1.msra.mxu0 0.0
  %3885 = vmatprep.subr.mxu0 0.0
  %3886 = vmatpush1.msra.mxu0 0.0
  %3887 = vmatprep.subr.mxu0 0.0
  %3888 = vmatpush1.msra.mxu0 0.0
  %3889 = vmatprep.subr.mxu0 0.0
  %3890 = vmatpush1.msra.mxu0 0.0
  %3891 = vmatprep.subr.mxu0 0.0
  %3892 = vmatpush1.msra.mxu0 0.0
  %3893 = vmatprep.subr.mxu0 0.0
  %3894 = vmatpush1.msra.mxu0 0.0
  %3895 = vmatprep.subr.mxu0 0.0
  %3896 = vmatpush1.msra.mxu0 0.0
  %3897 = vmatprep.subr.mxu0 0.0
  %3898 = vmatpush1.msra.mxu0 0.0
  %3899 = vmatprep.subr.mxu0 0.0
  %3900 = vmatpush1.msra.mxu0 0.0
  %3901 = vmatprep.subr.mxu0 0.0
  %3902 = vmatpush1.msra.mxu0 0.0
  %3903 = vmatprep.subr.mxu0 0.0
  %3904 = vmatpush1.msra.mxu0 0.0
  %3905 = vmatprep.subr.mxu0 0.0
  %3906 = vmatpush1.msra.mxu0 0.0
  %3907 = vmatprep.subr.mxu0 0.0
  %3908 = vmatpush1.msra.mxu0 0.0
  %3909 = vmatprep.subr.mxu0 0.0
  %3910 = vmatpush1.msra.mxu0 0.0
  %3911 = vmatprep.subr.mxu0 0.0
  %3912 = vmatpush1.msra.mxu0 0.0
  %3913 = vmatprep.subr.mxu0 0.0
  %3914 = vmatpush1.msra.mxu0 0.0
  %3915 = vmatprep.subr.mxu0 0.0
  %3916 = vmatpush1.msra.mxu0 0.0
  %3917 = vmatprep.subr.mxu0 0.0
  %3918 = vmatpush1.msra.mxu0 0.0
  %3919 = vmatprep.subr.mxu0 0.0
  %3920 = vmatpush1.msra.mxu0 0.0
  %3921 = vmatprep.subr.mxu0 0.0
  %3922 = vmatpush1.msra.mxu0 0.0
  %3923 = vmatprep.subr.mxu0 0.0
  %3924 = vmatpush1.msra.mxu0 0.0
  %3925 = vmatprep.mubr.f32.mxu0 0.0
  %3926 = vmatmul.mubr.f32.gmra.mrb[0].mxu0 %v3851
  %v3927 = vpop.f32.mrb[0].mxu0
  %v3928 = vadd.f32 %v3829, %v3927
  %v3929 = vpop.f32.mrb[0].mxu0
  %3930 = vmatprep.mubr.f32.mxu0 0.0
  %3931 = vmatmul.mubr.f32.gmra.mrb[0].mxu0 %v3854
  %v3932 = vpop.f32.mrb[0].mxu0
  %v3933 = vadd.f32 %v3834, %v3932
  %v3934 = vpop.f32.mrb[0].mxu0
  %3935 = vmatprep.mubr.f32.mxu0 0.0
  %3936 = vmatmul.mubr.f32.gmra.mrb[0].mxu0 %v3857
  %v3937 = vpop.f32.mrb[0].mxu0
  %v3938 = vadd.f32 %v3839, %v3937
  %v3939 = vpop.f32.mrb[0].mxu0
  %3940 = vdwg.mxu0
  %v3941 = vmul.f32 %v3928, %v3740
  %v3942 = vmul.f32 %v3933, %v3741
  %v3943 = vmul.f32 %v3938, %v3742
  %3944 = vrot.lane.b32.xlu0 %v3384, 120
  %v3945 = vpop.permute.xlu0 %3944
  %3946 = vrot.lane.b32.xlu0 %v3385, 120
  %v3947 = vpop.permute.xlu0 %3946
  %3948 = vrot.lane.b32.xlu0 %v3386, 120
  %v3949 = vpop.permute.xlu0 %3948
  %3950 = vrot.lane.b32.xlu0 %v3371, 88
  %v3951 = vpop.permute.xlu0 %3950
  %3952 = vrot.lane.b32.xlu0 %v3376, 88
  %v3953 = vpop.permute.xlu0 %3952
  %3954 = vrot.lane.b32.xlu0 %v3381, 88
  %v3955 = vpop.permute.xlu0 %3954
  %v3956 = vsel %vm3495, %v3945, 0
  %v3958 = vsel %vm3495, %v3947, 0
  %v3960 = vsel %vm3495, %v3949, 0
  %v3962 = vsel %vm3495, %v3951, 0
  %v3964 = vsel %vm3495, %v3953, 0
  %v3966 = vsel %vm3495, %v3955, 0
  %3968 = vmatprep.subr.mxu0 0.0
  %3969 = vmatpush1.xpose.msra.mxu0 %v3962
  %3970 = vmatprep.subr.mxu0 0.0
  %3971 = vmatpush1.xpose.msra.mxu0 %v3964
  %3972 = vmatprep.subr.mxu0 0.0
  %3973 = vmatpush1.xpose.msra.mxu0 %v3966
  %3974 = vmatprep.subr.mxu0 0.0
  %3975 = vmatpush1.xpose.msra.mxu0 0.0
  %3976 = vmatprep.subr.mxu0 0.0
  %3977 = vmatpush1.xpose.msra.mxu0 0.0
  %3978 = vmatprep.subr.mxu0 0.0
  %3979 = vmatpush1.xpose.msra.mxu0 0.0
  %3980 = vmatprep.subr.mxu0 0.0
  %3981 = vmatpush1.xpose.msra.mxu0 0.0
  %3982 = vmatprep.subr.mxu0 0.0
  %3983 = vmatpush1.xpose.msra.mxu0 0.0
  %3984 = vmatprep.subr.mxu0 0.0
  %3985 = vmatpush1.xpose.msra.mxu0 0.0
  %3986 = vmatprep.subr.mxu0 0.0
  %3987 = vmatpush1.xpose.msra.mxu0 0.0
  %3988 = vmatprep.subr.mxu0 0.0
  %3989 = vmatpush1.xpose.msra.mxu0 0.0
  %3990 = vmatprep.subr.mxu0 0.0
  %3991 = vmatpush1.xpose.msra.mxu0 0.0
  %3992 = vmatprep.subr.mxu0 0.0
  %3993 = vmatpush1.xpose.msra.mxu0 0.0
  %3994 = vmatprep.subr.mxu0 0.0
  %3995 = vmatpush1.xpose.msra.mxu0 0.0
  %3996 = vmatprep.subr.mxu0 0.0
  %3997 = vmatpush1.xpose.msra.mxu0 0.0
  %3998 = vmatprep.subr.mxu0 0.0
  %3999 = vmatpush1.xpose.msra.mxu0 0.0
  %4000 = vmatprep.subr.mxu0 0.0
  %4001 = vmatpush1.xpose.msra.mxu0 0.0
  %4002 = vmatprep.subr.mxu0 0.0
  %4003 = vmatpush1.xpose.msra.mxu0 0.0
  %4004 = vmatprep.subr.mxu0 0.0
  %4005 = vmatpush1.xpose.msra.mxu0 0.0
  %4006 = vmatprep.subr.mxu0 0.0
  %4007 = vmatpush1.xpose.msra.mxu0 0.0
  %4008 = vmatprep.subr.mxu0 0.0
  %4009 = vmatpush1.xpose.msra.mxu0 0.0
  %4010 = vmatprep.subr.mxu0 0.0
  %4011 = vmatpush1.xpose.msra.mxu0 0.0
  %4012 = vmatprep.subr.mxu0 0.0
  %4013 = vmatpush1.xpose.msra.mxu0 0.0
  %4014 = vmatprep.subr.mxu0 0.0
  %4015 = vmatpush1.xpose.msra.mxu0 0.0
  %4016 = vmatprep.subr.mxu0 0.0
  %4017 = vmatpush1.xpose.msra.mxu0 0.0
  %4018 = vmatprep.subr.mxu0 0.0
  %4019 = vmatpush1.xpose.msra.mxu0 0.0
  %4020 = vmatprep.subr.mxu0 0.0
  %4021 = vmatpush1.xpose.msra.mxu0 0.0
  %4022 = vmatprep.subr.mxu0 0.0
  %4023 = vmatpush1.xpose.msra.mxu0 0.0
  %4024 = vmatprep.subr.mxu0 0.0
  %4025 = vmatpush1.xpose.msra.mxu0 0.0
  %4026 = vmatprep.subr.mxu0 0.0
  %4027 = vmatpush1.xpose.msra.mxu0 0.0
  %4028 = vmatprep.subr.mxu0 0.0
  %4029 = vmatpush1.xpose.msra.mxu0 0.0
  %4030 = vmatprep.subr.mxu0 0.0
  %4031 = vmatpush1.xpose.msra.mxu0 0.0
  %4032 = vmatprep.mubr.f32.mxu0 0.0
  %4033 = vmatmul.mubr.f32.gmra.mrb[0].mxu0 %v3956
  %v4034 = vpop.f32.mrb[0].mxu0
  %v4035 = vadd.f32 %v177, %v4034
  %v4036 = vpop.f32.mrb[0].mxu0
  %4037 = vmatprep.mubr.f32.mxu0 0.0
  %4038 = vmatmul.mubr.f32.gmra.mrb[0].mxu0 %v3958
  %v4039 = vpop.f32.mrb[0].mxu0
  %v4040 = vadd.f32 %v178, %v4039
  %v4041 = vpop.f32.mrb[0].mxu0
  %4042 = vmatprep.mubr.f32.mxu0 0.0
  %4043 = vmatmul.mubr.f32.gmra.mrb[0].mxu0 %v3960
  %v4044 = vpop.f32.mrb[0].mxu0
  %v4045 = vadd.f32 %v179, %v4044
  %v4046 = vpop.f32.mrb[0].mxu0
  %4047 = vdwg.mxu0
  %4048 = vrot.lane.b32.xlu0 %v3473, 120
  %v4049 = vpop.permute.xlu0 %4048
  %4050 = vrot.lane.b32.xlu0 %v3478, 120
  %v4051 = vpop.permute.xlu0 %4050
  %4052 = vrot.lane.b32.xlu0 %v3483, 120
  %v4053 = vpop.permute.xlu0 %4052
  %v4054 = vsel %vm3495, %v4049, 0
  %v4056 = vsel %vm3495, %v4051, 0
  %v4058 = vsel %vm3495, %v4053, 0
  %4060 = vmatprep.subr.mxu0 0.0
  %4061 = vmatpush1.xpose.msra.mxu0 %v4054
  %4062 = vmatprep.subr.mxu0 0.0
  %4063 = vmatpush1.xpose.msra.mxu0 %v4056
  %4064 = vmatprep.subr.mxu0 0.0
  %4065 = vmatpush1.xpose.msra.mxu0 %v4058
  %4066 = vmatprep.subr.mxu0 0.0
  %4067 = vmatpush1.xpose.msra.mxu0 0.0
  %4068 = vmatprep.subr.mxu0 0.0
  %4069 = vmatpush1.xpose.msra.mxu0 0.0
  %4070 = vmatprep.subr.mxu0 0.0
  %4071 = vmatpush1.xpose.msra.mxu0 0.0
  %4072 = vmatprep.subr.mxu0 0.0
  %4073 = vmatpush1.xpose.msra.mxu0 0.0
  %4074 = vmatprep.subr.mxu0 0.0
  %4075 = vmatpush1.xpose.msra.mxu0 0.0
  %4076 = vmatprep.subr.mxu0 0.0
  %4077 = vmatpush1.xpose.msra.mxu0 0.0
  %4078 = vmatprep.subr.mxu0 0.0
  %4079 = vmatpush1.xpose.msra.mxu0 0.0
  %4080 = vmatprep.subr.mxu0 0.0
  %4081 = vmatpush1.xpose.msra.mxu0 0.0
  %4082 = vmatprep.subr.mxu0 0.0
  %4083 = vmatpush1.xpose.msra.mxu0 0.0
  %4084 = vmatprep.subr.mxu0 0.0
  %4085 = vmatpush1.xpose.msra.mxu0 0.0
  %4086 = vmatprep.subr.mxu0 0.0
  %4087 = vmatpush1.xpose.msra.mxu0 0.0
  %4088 = vmatprep.subr.mxu0 0.0
  %4089 = vmatpush1.xpose.msra.mxu0 0.0
  %4090 = vmatprep.subr.mxu0 0.0
  %4091 = vmatpush1.xpose.msra.mxu0 0.0
  %4092 = vmatprep.subr.mxu0 0.0
  %4093 = vmatpush1.xpose.msra.mxu0 0.0
  %4094 = vmatprep.subr.mxu0 0.0
  %4095 = vmatpush1.xpose.msra.mxu0 0.0
  %4096 = vmatprep.subr.mxu0 0.0
  %4097 = vmatpush1.xpose.msra.mxu0 0.0
  %4098 = vmatprep.subr.mxu0 0.0
  %4099 = vmatpush1.xpose.msra.mxu0 0.0
  %4100 = vmatprep.subr.mxu0 0.0
  %4101 = vmatpush1.xpose.msra.mxu0 0.0
  %4102 = vmatprep.subr.mxu0 0.0
  %4103 = vmatpush1.xpose.msra.mxu0 0.0
  %4104 = vmatprep.subr.mxu0 0.0
  %4105 = vmatpush1.xpose.msra.mxu0 0.0
  %4106 = vmatprep.subr.mxu0 0.0
  %4107 = vmatpush1.xpose.msra.mxu0 0.0
  %4108 = vmatprep.subr.mxu0 0.0
  %4109 = vmatpush1.xpose.msra.mxu0 0.0
  %4110 = vmatprep.subr.mxu0 0.0
  %4111 = vmatpush1.xpose.msra.mxu0 0.0
  %4112 = vmatprep.subr.mxu0 0.0
  %4113 = vmatpush1.xpose.msra.mxu0 0.0
  %4114 = vmatprep.subr.mxu0 0.0
  %4115 = vmatpush1.xpose.msra.mxu0 0.0
  %4116 = vmatprep.subr.mxu0 0.0
  %4117 = vmatpush1.xpose.msra.mxu0 0.0
  %4118 = vmatprep.subr.mxu0 0.0
  %4119 = vmatpush1.xpose.msra.mxu0 0.0
  %4120 = vmatprep.subr.mxu0 0.0
  %4121 = vmatpush1.xpose.msra.mxu0 0.0
  %4122 = vmatprep.subr.mxu0 0.0
  %4123 = vmatpush1.xpose.msra.mxu0 0.0
  %4124 = vmatprep.mubr.f32.mxu0 0.0
  %4125 = vmatmul.mubr.f32.gmra.mrb[0].mxu0 %v3956
  %v4126 = vpop.f32.mrb[0].mxu0
  %v4127 = vadd.f32 %v177, %v4126
  %v4128 = vpop.f32.mrb[0].mxu0
  %4129 = vmatprep.mubr.f32.mxu0 0.0
  %4130 = vmatmul.mubr.f32.gmra.mrb[0].mxu0 %v3958
  %v4131 = vpop.f32.mrb[0].mxu0
  %v4132 = vadd.f32 %v178, %v4131
  %v4133 = vpop.f32.mrb[0].mxu0
  %4134 = vmatprep.mubr.f32.mxu0 0.0
  %4135 = vmatmul.mubr.f32.gmra.mrb[0].mxu0 %v3960
  %v4136 = vpop.f32.mrb[0].mxu0
  %v4137 = vadd.f32 %v179, %v4136
  %v4138 = vpop.f32.mrb[0].mxu0
  %4139 = vdwg.mxu0
  %v4140 = vsel %vm1298, %v4035, -inf
  %4141 = vmax.xlane.f32.xlu0 %v4140
  %v4142 = vpop.xlane.xlu0 %4141
  %v4143 = vsel %vm1298, %v4040, -inf
  %4144 = vmax.xlane.f32.xlu0 %v4143
  %v4145 = vpop.xlane.xlu0 %4144
  %v4146 = vsel %vm1305, %v4045, -inf
  %4147 = vmax.xlane.f32.xlu0 %v4146
  %v4148 = vpop.xlane.xlu0 %4147
  %v4149 = vsel %vm1298, %v4127, -inf
  %4150 = vmax.xlane.f32.xlu0 %v4149
  %v4151 = vpop.xlane.xlu0 %4150
  %v4152 = vsel %vm1298, %v4132, -inf
  %4153 = vmax.xlane.f32.xlu0 %v4152
  %v4154 = vpop.xlane.xlu0 %4153
  %v4155 = vsel %vm1305, %v4137, -inf
  %4156 = vmax.xlane.f32.xlu0 %v4155
  %v4157 = vpop.xlane.xlu0 %4156
  %v4158 = vmax.f32 %v4142, %v4151
  %v4159 = vmax.f32 %v4145, %v4154
  %v4160 = vmax.f32 %v4148, %v4157
  %v4161 = vsub.f32 %v4035, %v4158
  %v4162 = vsub.f32 %v4040, %v4159
  %v4163 = vsub.f32 %v4045, %v4160
  %v4164 = vmul.f32 %v4161, 1.442695
  %v4165 = vpow.pop %v4164
  %v4166 = vmul.f32 %v4162, 1.442695
  %v4167 = vpow.pop %v4166
  %v4168 = vmul.f32 %v4163, 1.442695
  %v4169 = vpow.pop %v4168
  %v4170 = vsub.f32 %v4127, %v4158
  %v4171 = vsub.f32 %v4132, %v4159
  %v4172 = vsub.f32 %v4137, %v4160
  %v4173 = vmul.f32 %v4170, 1.442695
  %v4174 = vpow.pop %v4173
  %v4175 = vmul.f32 %v4171, 1.442695
  %v4176 = vpow.pop %v4175
  %v4177 = vmul.f32 %v4172, 1.442695
  %v4178 = vpow.pop %v4177
  %v4179 = vsel %vm1298, %v4165, 0.0
  %4180 = vadd.xlane.f32.xlu0 %v4179
  %v4181 = vpop.xlane.xlu0 %4180
  %v4182 = vsel %vm1298, %v4167, 0.0
  %4183 = vadd.xlane.f32.xlu0 %v4182
  %v4184 = vpop.xlane.xlu0 %4183
  %v4185 = vsel %vm1305, %v4169, 0.0
  %4186 = vadd.xlane.f32.xlu0 %v4185
  %v4187 = vpop.xlane.xlu0 %4186
  %v4188 = vsel %vm1298, %v4174, 0.0
  %4189 = vadd.xlane.f32.xlu0 %v4188
  %v4190 = vpop.xlane.xlu0 %4189
  %v4191 = vsel %vm1298, %v4176, 0.0
  %4192 = vadd.xlane.f32.xlu0 %v4191
  %v4193 = vpop.xlane.xlu0 %4192
  %v4194 = vsel %vm1305, %v4178, 0.0
  %4195 = vadd.xlane.f32.xlu0 %v4194
  %v4196 = vpop.xlane.xlu0 %4195
  %v4197 = vadd.f32 %v4181, %v4190
  %v4198 = vadd.f32 %v4184, %v4193
  %v4199 = vadd.f32 %v4187, %v4196
  %v4200 = vrcp.pop %v4197
  %v4201 = vrcp.pop %v4198
  %v4202 = vrcp.pop %v4199
  %4203 = vrot.lane.b32.xlu0 %v3473, 88
  %v4204 = vpop.permute.xlu0 %4203
  %4205 = vrot.lane.b32.xlu0 %v3478, 88
  %v4206 = vpop.permute.xlu0 %4205
  %4207 = vrot.lane.b32.xlu0 %v3483, 88
  %v4208 = vpop.permute.xlu0 %4207
  %v4212 = vsel %vm1298, %v4174, 0
  %v4215 = vsel %vm1298, %v4176, 0
  %v4218 = vsel %vm1298, %v4178, 0
  %v4220 = vsel %vm765, %v4208, 0
  %4222 = vmatprep.subr.mxu0 0.0
  %4223 = vmatpush1.msra.mxu0 %v4204
  %4224 = vmatprep.subr.mxu0 0.0
  %4225 = vmatpush1.msra.mxu0 %v4206
  %4226 = vmatprep.subr.mxu0 0.0
  %4227 = vmatpush1.msra.mxu0 %v4220
  %4228 = vmatprep.subr.mxu0 0.0
  %4229 = vmatpush1.msra.mxu0 0.0
  %4230 = vmatprep.subr.mxu0 0.0
  %4231 = vmatpush1.msra.mxu0 0.0
  %4232 = vmatprep.subr.mxu0 0.0
  %4233 = vmatpush1.msra.mxu0 0.0
  %4234 = vmatprep.subr.mxu0 0.0
  %4235 = vmatpush1.msra.mxu0 0.0
  %4236 = vmatprep.subr.mxu0 0.0
  %4237 = vmatpush1.msra.mxu0 0.0
  %4238 = vmatprep.subr.mxu0 0.0
  %4239 = vmatpush1.msra.mxu0 0.0
  %4240 = vmatprep.subr.mxu0 0.0
  %4241 = vmatpush1.msra.mxu0 0.0
  %4242 = vmatprep.subr.mxu0 0.0
  %4243 = vmatpush1.msra.mxu0 0.0
  %4244 = vmatprep.subr.mxu0 0.0
  %4245 = vmatpush1.msra.mxu0 0.0
  %4246 = vmatprep.subr.mxu0 0.0
  %4247 = vmatpush1.msra.mxu0 0.0
  %4248 = vmatprep.subr.mxu0 0.0
  %4249 = vmatpush1.msra.mxu0 0.0
  %4250 = vmatprep.subr.mxu0 0.0
  %4251 = vmatpush1.msra.mxu0 0.0
  %4252 = vmatprep.subr.mxu0 0.0
  %4253 = vmatpush1.msra.mxu0 0.0
  %4254 = vmatprep.subr.mxu0 0.0
  %4255 = vmatpush1.msra.mxu0 0.0
  %4256 = vmatprep.subr.mxu0 0.0
  %4257 = vmatpush1.msra.mxu0 0.0
  %4258 = vmatprep.subr.mxu0 0.0
  %4259 = vmatpush1.msra.mxu0 0.0
  %4260 = vmatprep.subr.mxu0 0.0
  %4261 = vmatpush1.msra.mxu0 0.0
  %4262 = vmatprep.subr.mxu0 0.0
  %4263 = vmatpush1.msra.mxu0 0.0
  %4264 = vmatprep.subr.mxu0 0.0
  %4265 = vmatpush1.msra.mxu0 0.0
  %4266 = vmatprep.subr.mxu0 0.0
  %4267 = vmatpush1.msra.mxu0 0.0
  %4268 = vmatprep.subr.mxu0 0.0
  %4269 = vmatpush1.msra.mxu0 0.0
  %4270 = vmatprep.subr.mxu0 0.0
  %4271 = vmatpush1.msra.mxu0 0.0
  %4272 = vmatprep.subr.mxu0 0.0
  %4273 = vmatpush1.msra.mxu0 0.0
  %4274 = vmatprep.subr.mxu0 0.0
  %4275 = vmatpush1.msra.mxu0 0.0
  %4276 = vmatprep.subr.mxu0 0.0
  %4277 = vmatpush1.msra.mxu0 0.0
  %4278 = vmatprep.subr.mxu0 0.0
  %4279 = vmatpush1.msra.mxu0 0.0
  %4280 = vmatprep.subr.mxu0 0.0
  %4281 = vmatpush1.msra.mxu0 0.0
  %4282 = vmatprep.subr.mxu0 0.0
  %4283 = vmatpush1.msra.mxu0 0.0
  %4284 = vmatprep.subr.mxu0 0.0
  %4285 = vmatpush1.msra.mxu0 0.0
  %4286 = vmatprep.mubr.f32.mxu0 0.0
  %4287 = vmatmul.mubr.f32.gmra.mrb[0].mxu0 %v4212
  %v4288 = vpop.f32.mrb[0].mxu0
  %v4289 = vadd.f32 0.0, %v4288
  %v4290 = vpop.f32.mrb[0].mxu0
  %4291 = vmatprep.mubr.f32.mxu0 0.0
  %4292 = vmatmul.mubr.f32.gmra.mrb[0].mxu0 %v4215
  %v4293 = vpop.f32.mrb[0].mxu0
  %v4294 = vadd.f32 0.0, %v4293
  %v4295 = vpop.f32.mrb[0].mxu0
  %4296 = vmatprep.mubr.f32.mxu0 0.0
  %4297 = vmatmul.mubr.f32.gmra.mrb[0].mxu0 %v4218
  %v4298 = vpop.f32.mrb[0].mxu0
  %v4299 = vadd.f32 0.0, %v4298
  %v4300 = vpop.f32.mrb[0].mxu0
  %4301 = vdwg.mxu0
  %4302 = vrot.lane.b32.xlu0 %v3371, 56
  %v4303 = vpop.permute.xlu0 %4302
  %4304 = vrot.lane.b32.xlu0 %v3376, 56
  %v4305 = vpop.permute.xlu0 %4304
  %4306 = vrot.lane.b32.xlu0 %v3381, 56
  %v4307 = vpop.permute.xlu0 %4306
  %v4311 = vsel %vm1298, %v4165, 0
  %v4314 = vsel %vm1298, %v4167, 0
  %v4317 = vsel %vm1298, %v4169, 0
  %v4319 = vsel %vm765, %v4307, 0
  %4321 = vmatprep.subr.mxu0 0.0
  %4322 = vmatpush1.msra.mxu0 %v4303
  %4323 = vmatprep.subr.mxu0 0.0
  %4324 = vmatpush1.msra.mxu0 %v4305
  %4325 = vmatprep.subr.mxu0 0.0
  %4326 = vmatpush1.msra.mxu0 %v4319
  %4327 = vmatprep.subr.mxu0 0.0
  %4328 = vmatpush1.msra.mxu0 0.0
  %4329 = vmatprep.subr.mxu0 0.0
  %4330 = vmatpush1.msra.mxu0 0.0
  %4331 = vmatprep.subr.mxu0 0.0
  %4332 = vmatpush1.msra.mxu0 0.0
  %4333 = vmatprep.subr.mxu0 0.0
  %4334 = vmatpush1.msra.mxu0 0.0
  %4335 = vmatprep.subr.mxu0 0.0
  %4336 = vmatpush1.msra.mxu0 0.0
  %4337 = vmatprep.subr.mxu0 0.0
  %4338 = vmatpush1.msra.mxu0 0.0
  %4339 = vmatprep.subr.mxu0 0.0
  %4340 = vmatpush1.msra.mxu0 0.0
  %4341 = vmatprep.subr.mxu0 0.0
  %4342 = vmatpush1.msra.mxu0 0.0
  %4343 = vmatprep.subr.mxu0 0.0
  %4344 = vmatpush1.msra.mxu0 0.0
  %4345 = vmatprep.subr.mxu0 0.0
  %4346 = vmatpush1.msra.mxu0 0.0
  %4347 = vmatprep.subr.mxu0 0.0
  %4348 = vmatpush1.msra.mxu0 0.0
  %4349 = vmatprep.subr.mxu0 0.0
  %4350 = vmatpush1.msra.mxu0 0.0
  %4351 = vmatprep.subr.mxu0 0.0
  %4352 = vmatpush1.msra.mxu0 0.0
  %4353 = vmatprep.subr.mxu0 0.0
  %4354 = vmatpush1.msra.mxu0 0.0
  %4355 = vmatprep.subr.mxu0 0.0
  %4356 = vmatpush1.msra.mxu0 0.0
  %4357 = vmatprep.subr.mxu0 0.0
  %4358 = vmatpush1.msra.mxu0 0.0
  %4359 = vmatprep.subr.mxu0 0.0
  %4360 = vmatpush1.msra.mxu0 0.0
  %4361 = vmatprep.subr.mxu0 0.0
  %4362 = vmatpush1.msra.mxu0 0.0
  %4363 = vmatprep.subr.mxu0 0.0
  %4364 = vmatpush1.msra.mxu0 0.0
  %4365 = vmatprep.subr.mxu0 0.0
  %4366 = vmatpush1.msra.mxu0 0.0
  %4367 = vmatprep.subr.mxu0 0.0
  %4368 = vmatpush1.msra.mxu0 0.0
  %4369 = vmatprep.subr.mxu0 0.0
  %4370 = vmatpush1.msra.mxu0 0.0
  %4371 = vmatprep.subr.mxu0 0.0
  %4372 = vmatpush1.msra.mxu0 0.0
  %4373 = vmatprep.subr.mxu0 0.0
  %4374 = vmatpush1.msra.mxu0 0.0
  %4375 = vmatprep.subr.mxu0 0.0
  %4376 = vmatpush1.msra.mxu0 0.0
  %4377 = vmatprep.subr.mxu0 0.0
  %4378 = vmatpush1.msra.mxu0 0.0
  %4379 = vmatprep.subr.mxu0 0.0
  %4380 = vmatpush1.msra.mxu0 0.0
  %4381 = vmatprep.subr.mxu0 0.0
  %4382 = vmatpush1.msra.mxu0 0.0
  %4383 = vmatprep.subr.mxu0 0.0
  %4384 = vmatpush1.msra.mxu0 0.0
  %4385 = vmatprep.mubr.f32.mxu0 0.0
  %4386 = vmatmul.mubr.f32.gmra.mrb[0].mxu0 %v4311
  %v4387 = vpop.f32.mrb[0].mxu0
  %v4388 = vadd.f32 %v4289, %v4387
  %v4389 = vpop.f32.mrb[0].mxu0
  %4390 = vmatprep.mubr.f32.mxu0 0.0
  %4391 = vmatmul.mubr.f32.gmra.mrb[0].mxu0 %v4314
  %v4392 = vpop.f32.mrb[0].mxu0
  %v4393 = vadd.f32 %v4294, %v4392
  %v4394 = vpop.f32.mrb[0].mxu0
  %4395 = vmatprep.mubr.f32.mxu0 0.0
  %4396 = vmatmul.mubr.f32.gmra.mrb[0].mxu0 %v4317
  %v4397 = vpop.f32.mrb[0].mxu0
  %v4398 = vadd.f32 %v4299, %v4397
  %v4399 = vpop.f32.mrb[0].mxu0
  %4400 = vdwg.mxu0
  %v4401 = vmul.f32 %v4388, %v4200
  %v4402 = vmul.f32 %v4393, %v4201
  %v4403 = vmul.f32 %v4398, %v4202
  %v4405 = vsel %vm3495, %v4401, 0
  %v4408 = vsel %vm3495, %v4402, 0
  %v4411 = vsel %vm3495, %v4403, 0
  %4413 = vmatprep.subr.mxu0 0.0
  %4414 = vmatpush1.msra.mxu0 %v285
  %4415 = vmatprep.subr.mxu0 0.0
  %4416 = vmatpush1.msra.mxu0 0.0
  %4417 = vmatprep.subr.mxu0 0.0
  %4418 = vmatpush1.msra.mxu0 0.0
  %4419 = vmatprep.subr.mxu0 0.0
  %4420 = vmatpush1.msra.mxu0 0.0
  %4421 = vmatprep.subr.mxu0 0.0
  %4422 = vmatpush1.msra.mxu0 0.0
  %4423 = vmatprep.subr.mxu0 0.0
  %4424 = vmatpush1.msra.mxu0 0.0
  %4425 = vmatprep.subr.mxu0 0.0
  %4426 = vmatpush1.msra.mxu0 0.0
  %4427 = vmatprep.subr.mxu0 0.0
  %4428 = vmatpush1.msra.mxu0 0.0
  %4429 = vmatprep.subr.mxu0 0.0
  %4430 = vmatpush1.msra.mxu0 0.0
  %4431 = vmatprep.subr.mxu0 0.0
  %4432 = vmatpush1.msra.mxu0 0.0
  %4433 = vmatprep.subr.mxu0 0.0
  %4434 = vmatpush1.msra.mxu0 0.0
  %4435 = vmatprep.subr.mxu0 0.0
  %4436 = vmatpush1.msra.mxu0 0.0
  %4437 = vmatprep.subr.mxu0 0.0
  %4438 = vmatpush1.msra.mxu0 0.0
  %4439 = vmatprep.subr.mxu0 0.0
  %4440 = vmatpush1.msra.mxu0 0.0
  %4441 = vmatprep.subr.mxu0 0.0
  %4442 = vmatpush1.msra.mxu0 0.0
  %4443 = vmatprep.subr.mxu0 0.0
  %4444 = vmatpush1.msra.mxu0 0.0
  %4445 = vmatprep.subr.mxu0 0.0
  %4446 = vmatpush1.msra.mxu0 0.0
  %4447 = vmatprep.subr.mxu0 0.0
  %4448 = vmatpush1.msra.mxu0 0.0
  %4449 = vmatprep.subr.mxu0 0.0
  %4450 = vmatpush1.msra.mxu0 0.0
  %4451 = vmatprep.subr.mxu0 0.0
  %4452 = vmatpush1.msra.mxu0 0.0
  %4453 = vmatprep.subr.mxu0 0.0
  %4454 = vmatpush1.msra.mxu0 0.0
  %4455 = vmatprep.subr.mxu0 0.0
  %4456 = vmatpush1.msra.mxu0 0.0
  %4457 = vmatprep.subr.mxu0 0.0
  %4458 = vmatpush1.msra.mxu0 0.0
  %4459 = vmatprep.subr.mxu0 0.0
  %4460 = vmatpush1.msra.mxu0 0.0
  %4461 = vmatprep.subr.mxu0 0.0
  %4462 = vmatpush1.msra.mxu0 0.0
  %4463 = vmatprep.subr.mxu0 0.0
  %4464 = vmatpush1.msra.mxu0 0.0
  %4465 = vmatprep.subr.mxu0 0.0
  %4466 = vmatpush1.msra.mxu0 0.0
  %4467 = vmatprep.subr.mxu0 0.0
  %4468 = vmatpush1.msra.mxu0 0.0
  %4469 = vmatprep.subr.mxu0 0.0
  %4470 = vmatpush1.msra.mxu0 0.0
  %4471 = vmatprep.subr.mxu0 0.0
  %4472 = vmatpush1.msra.mxu0 0.0
  %4473 = vmatprep.subr.mxu0 0.0
  %4474 = vmatpush1.msra.mxu0 0.0
  %4475 = vmatprep.subr.mxu0 0.0
  %4476 = vmatpush1.msra.mxu0 0.0
  %4477 = vmatprep.mubr.f32.mxu0 0.0
  %4478 = vmatmul.mubr.f32.gmra.mrb[0].mxu0 %v4405
  %v4479 = vpop.f32.mrb[0].mxu0
  %v4480 = vadd.f32 0.0, %v4479
  %v4481 = vpop.f32.mrb[0].mxu0
  %4482 = vmatprep.mubr.f32.mxu0 0.0
  %4483 = vmatmul.mubr.f32.gmra.mrb[0].mxu0 %v4408
  %v4484 = vpop.f32.mrb[0].mxu0
  %v4485 = vadd.f32 0.0, %v4484
  %v4486 = vpop.f32.mrb[0].mxu0
  %4487 = vmatprep.mubr.f32.mxu0 0.0
  %4488 = vmatmul.mubr.f32.gmra.mrb[0].mxu0 %v4411
  %v4489 = vpop.f32.mrb[0].mxu0
  %v4490 = vadd.f32 0.0, %v4489
  %v4491 = vpop.f32.mrb[0].mxu0
  %4492 = vdwg.mxu0
  %v4494 = vsel %vm3495, %v3941, 0
  %v4497 = vsel %vm3495, %v3942, 0
  %v4500 = vsel %vm3495, %v3943, 0
  %4502 = vmatprep.subr.mxu0 0.0
  %4503 = vmatpush1.msra.mxu0 %v284
  %4504 = vmatprep.subr.mxu0 0.0
  %4505 = vmatpush1.msra.mxu0 0.0
  %4506 = vmatprep.subr.mxu0 0.0
  %4507 = vmatpush1.msra.mxu0 0.0
  %4508 = vmatprep.subr.mxu0 0.0
  %4509 = vmatpush1.msra.mxu0 0.0
  %4510 = vmatprep.subr.mxu0 0.0
  %4511 = vmatpush1.msra.mxu0 0.0
  %4512 = vmatprep.subr.mxu0 0.0
  %4513 = vmatpush1.msra.mxu0 0.0
  %4514 = vmatprep.subr.mxu0 0.0
  %4515 = vmatpush1.msra.mxu0 0.0
  %4516 = vmatprep.subr.mxu0 0.0
  %4517 = vmatpush1.msra.mxu0 0.0
  %4518 = vmatprep.subr.mxu0 0.0
  %4519 = vmatpush1.msra.mxu0 0.0
  %4520 = vmatprep.subr.mxu0 0.0
  %4521 = vmatpush1.msra.mxu0 0.0
  %4522 = vmatprep.subr.mxu0 0.0
  %4523 = vmatpush1.msra.mxu0 0.0
  %4524 = vmatprep.subr.mxu0 0.0
  %4525 = vmatpush1.msra.mxu0 0.0
  %4526 = vmatprep.subr.mxu0 0.0
  %4527 = vmatpush1.msra.mxu0 0.0
  %4528 = vmatprep.subr.mxu0 0.0
  %4529 = vmatpush1.msra.mxu0 0.0
  %4530 = vmatprep.subr.mxu0 0.0
  %4531 = vmatpush1.msra.mxu0 0.0
  %4532 = vmatprep.subr.mxu0 0.0
  %4533 = vmatpush1.msra.mxu0 0.0
  %4534 = vmatprep.subr.mxu0 0.0
  %4535 = vmatpush1.msra.mxu0 0.0
  %4536 = vmatprep.subr.mxu0 0.0
  %4537 = vmatpush1.msra.mxu0 0.0
  %4538 = vmatprep.subr.mxu0 0.0
  %4539 = vmatpush1.msra.mxu0 0.0
  %4540 = vmatprep.subr.mxu0 0.0
  %4541 = vmatpush1.msra.mxu0 0.0
  %4542 = vmatprep.subr.mxu0 0.0
  %4543 = vmatpush1.msra.mxu0 0.0
  %4544 = vmatprep.subr.mxu0 0.0
  %4545 = vmatpush1.msra.mxu0 0.0
  %4546 = vmatprep.subr.mxu0 0.0
  %4547 = vmatpush1.msra.mxu0 0.0
  %4548 = vmatprep.subr.mxu0 0.0
  %4549 = vmatpush1.msra.mxu0 0.0
  %4550 = vmatprep.subr.mxu0 0.0
  %4551 = vmatpush1.msra.mxu0 0.0
  %4552 = vmatprep.subr.mxu0 0.0
  %4553 = vmatpush1.msra.mxu0 0.0
  %4554 = vmatprep.subr.mxu0 0.0
  %4555 = vmatpush1.msra.mxu0 0.0
  %4556 = vmatprep.subr.mxu0 0.0
  %4557 = vmatpush1.msra.mxu0 0.0
  %4558 = vmatprep.subr.mxu0 0.0
  %4559 = vmatpush1.msra.mxu0 0.0
  %4560 = vmatprep.subr.mxu0 0.0
  %4561 = vmatpush1.msra.mxu0 0.0
  %4562 = vmatprep.subr.mxu0 0.0
  %4563 = vmatpush1.msra.mxu0 0.0
  %4564 = vmatprep.subr.mxu0 0.0
  %4565 = vmatpush1.msra.mxu0 0.0
  %4566 = vmatprep.mubr.f32.mxu0 0.0
  %4567 = vmatmul.mubr.f32.gmra.mrb[0].mxu0 %v4494
  %v4568 = vpop.f32.mrb[0].mxu0
  %v4569 = vadd.f32 %v4480, %v4568
  %v4570 = vpop.f32.mrb[0].mxu0
  %4571 = vmatprep.mubr.f32.mxu0 0.0
  %4572 = vmatmul.mubr.f32.gmra.mrb[0].mxu0 %v4497
  %v4573 = vpop.f32.mrb[0].mxu0
  %v4574 = vadd.f32 %v4485, %v4573
  %v4575 = vpop.f32.mrb[0].mxu0
  %4576 = vmatprep.mubr.f32.mxu0 0.0
  %4577 = vmatmul.mubr.f32.gmra.mrb[0].mxu0 %v4500
  %v4578 = vpop.f32.mrb[0].mxu0
  %v4579 = vadd.f32 %v4490, %v4578
  %v4580 = vpop.f32.mrb[0].mxu0
  %4581 = vdwg.mxu0
  %4582 = vrot.lane.b32.xlu0 %v3384, 112
  %v4583 = vpop.permute.xlu0 %4582
  %4584 = vrot.lane.b32.xlu0 %v3385, 112
  %v4585 = vpop.permute.xlu0 %4584
  %4586 = vrot.lane.b32.xlu0 %v3386, 112
  %v4587 = vpop.permute.xlu0 %4586
  %4588 = vrot.lane.b32.xlu0 %v3371, 80
  %v4589 = vpop.permute.xlu0 %4588
  %4590 = vrot.lane.b32.xlu0 %v3376, 80
  %v4591 = vpop.permute.xlu0 %4590
  %4592 = vrot.lane.b32.xlu0 %v3381, 80
  %v4593 = vpop.permute.xlu0 %4592
  %v4594 = vsel %vm3495, %v4583, 0
  %v4596 = vsel %vm3495, %v4585, 0
  %v4598 = vsel %vm3495, %v4587, 0
  %v4600 = vsel %vm3495, %v4589, 0
  %v4602 = vsel %vm3495, %v4591, 0
  %v4604 = vsel %vm3495, %v4593, 0
  %4606 = vmatprep.subr.mxu0 0.0
  %4607 = vmatpush1.xpose.msra.mxu0 %v4600
  %4608 = vmatprep.subr.mxu0 0.0
  %4609 = vmatpush1.xpose.msra.mxu0 %v4602
  %4610 = vmatprep.subr.mxu0 0.0
  %4611 = vmatpush1.xpose.msra.mxu0 %v4604
  %4612 = vmatprep.subr.mxu0 0.0
  %4613 = vmatpush1.xpose.msra.mxu0 0.0
  %4614 = vmatprep.subr.mxu0 0.0
  %4615 = vmatpush1.xpose.msra.mxu0 0.0
  %4616 = vmatprep.subr.mxu0 0.0
  %4617 = vmatpush1.xpose.msra.mxu0 0.0
  %4618 = vmatprep.subr.mxu0 0.0
  %4619 = vmatpush1.xpose.msra.mxu0 0.0
  %4620 = vmatprep.subr.mxu0 0.0
  %4621 = vmatpush1.xpose.msra.mxu0 0.0
  %4622 = vmatprep.subr.mxu0 0.0
  %4623 = vmatpush1.xpose.msra.mxu0 0.0
  %4624 = vmatprep.subr.mxu0 0.0
  %4625 = vmatpush1.xpose.msra.mxu0 0.0
  %4626 = vmatprep.subr.mxu0 0.0
  %4627 = vmatpush1.xpose.msra.mxu0 0.0
  %4628 = vmatprep.subr.mxu0 0.0
  %4629 = vmatpush1.xpose.msra.mxu0 0.0
  %4630 = vmatprep.subr.mxu0 0.0
  %4631 = vmatpush1.xpose.msra.mxu0 0.0
  %4632 = vmatprep.subr.mxu0 0.0
  %4633 = vmatpush1.xpose.msra.mxu0 0.0
  %4634 = vmatprep.subr.mxu0 0.0
  %4635 = vmatpush1.xpose.msra.mxu0 0.0
  %4636 = vmatprep.subr.mxu0 0.0
  %4637 = vmatpush1.xpose.msra.mxu0 0.0
  %4638 = vmatprep.subr.mxu0 0.0
  %4639 = vmatpush1.xpose.msra.mxu0 0.0
  %4640 = vmatprep.subr.mxu0 0.0
  %4641 = vmatpush1.xpose.msra.mxu0 0.0
  %4642 = vmatprep.subr.mxu0 0.0
  %4643 = vmatpush1.xpose.msra.mxu0 0.0
  %4644 = vmatprep.subr.mxu0 0.0
  %4645 = vmatpush1.xpose.msra.mxu0 0.0
  %4646 = vmatprep.subr.mxu0 0.0
  %4647 = vmatpush1.xpose.msra.mxu0 0.0
  %4648 = vmatprep.subr.mxu0 0.0
  %4649 = vmatpush1.xpose.msra.mxu0 0.0
  %4650 = vmatprep.subr.mxu0 0.0
  %4651 = vmatpush1.xpose.msra.mxu0 0.0
  %4652 = vmatprep.subr.mxu0 0.0
  %4653 = vmatpush1.xpose.msra.mxu0 0.0
  %4654 = vmatprep.subr.mxu0 0.0
  %4655 = vmatpush1.xpose.msra.mxu0 0.0
  %4656 = vmatprep.subr.mxu0 0.0
  %4657 = vmatpush1.xpose.msra.mxu0 0.0
  %4658 = vmatprep.subr.mxu0 0.0
  %4659 = vmatpush1.xpose.msra.mxu0 0.0
  %4660 = vmatprep.subr.mxu0 0.0
  %4661 = vmatpush1.xpose.msra.mxu0 0.0
  %4662 = vmatprep.subr.mxu0 0.0
  %4663 = vmatpush1.xpose.msra.mxu0 0.0
  %4664 = vmatprep.subr.mxu0 0.0
  %4665 = vmatpush1.xpose.msra.mxu0 0.0
  %4666 = vmatprep.subr.mxu0 0.0
  %4667 = vmatpush1.xpose.msra.mxu0 0.0
  %4668 = vmatprep.subr.mxu0 0.0
  %4669 = vmatpush1.xpose.msra.mxu0 0.0
  %4670 = vmatprep.mubr.f32.mxu0 0.0
  %4671 = vmatmul.mubr.f32.gmra.mrb[0].mxu0 %v4594
  %v4672 = vpop.f32.mrb[0].mxu0
  %v4673 = vadd.f32 %v177, %v4672
  %v4674 = vpop.f32.mrb[0].mxu0
  %4675 = vmatprep.mubr.f32.mxu0 0.0
  %4676 = vmatmul.mubr.f32.gmra.mrb[0].mxu0 %v4596
  %v4677 = vpop.f32.mrb[0].mxu0
  %v4678 = vadd.f32 %v178, %v4677
  %v4679 = vpop.f32.mrb[0].mxu0
  %4680 = vmatprep.mubr.f32.mxu0 0.0
  %4681 = vmatmul.mubr.f32.gmra.mrb[0].mxu0 %v4598
  %v4682 = vpop.f32.mrb[0].mxu0
  %v4683 = vadd.f32 %v179, %v4682
  %v4684 = vpop.f32.mrb[0].mxu0
  %4685 = vdwg.mxu0
  %4686 = vrot.lane.b32.xlu0 %v3473, 112
  %v4687 = vpop.permute.xlu0 %4686
  %4688 = vrot.lane.b32.xlu0 %v3478, 112
  %v4689 = vpop.permute.xlu0 %4688
  %4690 = vrot.lane.b32.xlu0 %v3483, 112
  %v4691 = vpop.permute.xlu0 %4690
  %v4692 = vsel %vm3495, %v4687, 0
  %v4694 = vsel %vm3495, %v4689, 0
  %v4696 = vsel %vm3495, %v4691, 0
  %4698 = vmatprep.subr.mxu0 0.0
  %4699 = vmatpush1.xpose.msra.mxu0 %v4692
  %4700 = vmatprep.subr.mxu0 0.0
  %4701 = vmatpush1.xpose.msra.mxu0 %v4694
  %4702 = vmatprep.subr.mxu0 0.0
  %4703 = vmatpush1.xpose.msra.mxu0 %v4696
  %4704 = vmatprep.subr.mxu0 0.0
  %4705 = vmatpush1.xpose.msra.mxu0 0.0
  %4706 = vmatprep.subr.mxu0 0.0
  %4707 = vmatpush1.xpose.msra.mxu0 0.0
  %4708 = vmatprep.subr.mxu0 0.0
  %4709 = vmatpush1.xpose.msra.mxu0 0.0
  %4710 = vmatprep.subr.mxu0 0.0
  %4711 = vmatpush1.xpose.msra.mxu0 0.0
  %4712 = vmatprep.subr.mxu0 0.0
  %4713 = vmatpush1.xpose.msra.mxu0 0.0
  %4714 = vmatprep.subr.mxu0 0.0
  %4715 = vmatpush1.xpose.msra.mxu0 0.0
  %4716 = vmatprep.subr.mxu0 0.0
  %4717 = vmatpush1.xpose.msra.mxu0 0.0
  %4718 = vmatprep.subr.mxu0 0.0
  %4719 = vmatpush1.xpose.msra.mxu0 0.0
  %4720 = vmatprep.subr.mxu0 0.0
  %4721 = vmatpush1.xpose.msra.mxu0 0.0
  %4722 = vmatprep.subr.mxu0 0.0
  %4723 = vmatpush1.xpose.msra.mxu0 0.0
  %4724 = vmatprep.subr.mxu0 0.0
  %4725 = vmatpush1.xpose.msra.mxu0 0.0
  %4726 = vmatprep.subr.mxu0 0.0
  %4727 = vmatpush1.xpose.msra.mxu0 0.0
  %4728 = vmatprep.subr.mxu0 0.0
  %4729 = vmatpush1.xpose.msra.mxu0 0.0
  %4730 = vmatprep.subr.mxu0 0.0
  %4731 = vmatpush1.xpose.msra.mxu0 0.0
  %4732 = vmatprep.subr.mxu0 0.0
  %4733 = vmatpush1.xpose.msra.mxu0 0.0
  %4734 = vmatprep.subr.mxu0 0.0
  %4735 = vmatpush1.xpose.msra.mxu0 0.0
  %4736 = vmatprep.subr.mxu0 0.0
  %4737 = vmatpush1.xpose.msra.mxu0 0.0
  %4738 = vmatprep.subr.mxu0 0.0
  %4739 = vmatpush1.xpose.msra.mxu0 0.0
  %4740 = vmatprep.subr.mxu0 0.0
  %4741 = vmatpush1.xpose.msra.mxu0 0.0
  %4742 = vmatprep.subr.mxu0 0.0
  %4743 = vmatpush1.xpose.msra.mxu0 0.0
  %4744 = vmatprep.subr.mxu0 0.0
  %4745 = vmatpush1.xpose.msra.mxu0 0.0
  %4746 = vmatprep.subr.mxu0 0.0
  %4747 = vmatpush1.xpose.msra.mxu0 0.0
  %4748 = vmatprep.subr.mxu0 0.0
  %4749 = vmatpush1.xpose.msra.mxu0 0.0
  %4750 = vmatprep.subr.mxu0 0.0
  %4751 = vmatpush1.xpose.msra.mxu0 0.0
  %4752 = vmatprep.subr.mxu0 0.0
  %4753 = vmatpush1.xpose.msra.mxu0 0.0
  %4754 = vmatprep.subr.mxu0 0.0
  %4755 = vmatpush1.xpose.msra.mxu0 0.0
  %4756 = vmatprep.subr.mxu0 0.0
  %4757 = vmatpush1.xpose.msra.mxu0 0.0
  %4758 = vmatprep.subr.mxu0 0.0
  %4759 = vmatpush1.xpose.msra.mxu0 0.0
  %4760 = vmatprep.subr.mxu0 0.0
  %4761 = vmatpush1.xpose.msra.mxu0 0.0
  %4762 = vmatprep.mubr.f32.mxu0 0.0
  %4763 = vmatmul.mubr.f32.gmra.mrb[0].mxu0 %v4594
  %v4764 = vpop.f32.mrb[0].mxu0
  %v4765 = vadd.f32 %v177, %v4764
  %v4766 = vpop.f32.mrb[0].mxu0
  %4767 = vmatprep.mubr.f32.mxu0 0.0
  %4768 = vmatmul.mubr.f32.gmra.mrb[0].mxu0 %v4596
  %v4769 = vpop.f32.mrb[0].mxu0
  %v4770 = vadd.f32 %v178, %v4769
  %v4771 = vpop.f32.mrb[0].mxu0
  %4772 = vmatprep.mubr.f32.mxu0 0.0
  %4773 = vmatmul.mubr.f32.gmra.mrb[0].mxu0 %v4598
  %v4774 = vpop.f32.mrb[0].mxu0
  %v4775 = vadd.f32 %v179, %v4774
  %v4776 = vpop.f32.mrb[0].mxu0
  %4777 = vdwg.mxu0
  %v4778 = vsel %vm1298, %v4673, -inf
  %4779 = vmax.xlane.f32.xlu0 %v4778
  %v4780 = vpop.xlane.xlu0 %4779
  %v4781 = vsel %vm1298, %v4678, -inf
  %4782 = vmax.xlane.f32.xlu0 %v4781
  %v4783 = vpop.xlane.xlu0 %4782
  %v4784 = vsel %vm1305, %v4683, -inf
  %4785 = vmax.xlane.f32.xlu0 %v4784
  %v4786 = vpop.xlane.xlu0 %4785
  %v4787 = vsel %vm1298, %v4765, -inf
  %4788 = vmax.xlane.f32.xlu0 %v4787
  %v4789 = vpop.xlane.xlu0 %4788
  %v4790 = vsel %vm1298, %v4770, -inf
  %4791 = vmax.xlane.f32.xlu0 %v4790
  %v4792 = vpop.xlane.xlu0 %4791
  %v4793 = vsel %vm1305, %v4775, -inf
  %4794 = vmax.xlane.f32.xlu0 %v4793
  %v4795 = vpop.xlane.xlu0 %4794
  %v4796 = vmax.f32 %v4780, %v4789
  %v4797 = vmax.f32 %v4783, %v4792
  %v4798 = vmax.f32 %v4786, %v4795
  %v4799 = vsub.f32 %v4673, %v4796
  %v4800 = vsub.f32 %v4678, %v4797
  %v4801 = vsub.f32 %v4683, %v4798
  %v4802 = vmul.f32 %v4799, 1.442695
  %v4803 = vpow.pop %v4802
  %v4804 = vmul.f32 %v4800, 1.442695
  %v4805 = vpow.pop %v4804
  %v4806 = vmul.f32 %v4801, 1.442695
  %v4807 = vpow.pop %v4806
  %v4808 = vsub.f32 %v4765, %v4796
  %v4809 = vsub.f32 %v4770, %v4797
  %v4810 = vsub.f32 %v4775, %v4798
  %v4811 = vmul.f32 %v4808, 1.442695
  %v4812 = vpow.pop %v4811
  %v4813 = vmul.f32 %v4809, 1.442695
  %v4814 = vpow.pop %v4813
  %v4815 = vmul.f32 %v4810, 1.442695
  %v4816 = vpow.pop %v4815
  %v4817 = vsel %vm1298, %v4803, 0.0
  %4818 = vadd.xlane.f32.xlu0 %v4817
  %v4819 = vpop.xlane.xlu0 %4818
  %v4820 = vsel %vm1298, %v4805, 0.0
  %4821 = vadd.xlane.f32.xlu0 %v4820
  %v4822 = vpop.xlane.xlu0 %4821
  %v4823 = vsel %vm1305, %v4807, 0.0
  %4824 = vadd.xlane.f32.xlu0 %v4823
  %v4825 = vpop.xlane.xlu0 %4824
  %v4826 = vsel %vm1298, %v4812, 0.0
  %4827 = vadd.xlane.f32.xlu0 %v4826
  %v4828 = vpop.xlane.xlu0 %4827
  %v4829 = vsel %vm1298, %v4814, 0.0
  %4830 = vadd.xlane.f32.xlu0 %v4829
  %v4831 = vpop.xlane.xlu0 %4830
  %v4832 = vsel %vm1305, %v4816, 0.0
  %4833 = vadd.xlane.f32.xlu0 %v4832
  %v4834 = vpop.xlane.xlu0 %4833
  %v4835 = vadd.f32 %v4819, %v4828
  %v4836 = vadd.f32 %v4822, %v4831
  %v4837 = vadd.f32 %v4825, %v4834
  %v4838 = vrcp.pop %v4835
  %v4839 = vrcp.pop %v4836
  %v4840 = vrcp.pop %v4837
  %4841 = vrot.lane.b32.xlu0 %v3473, 80
  %v4842 = vpop.permute.xlu0 %4841
  %4843 = vrot.lane.b32.xlu0 %v3478, 80
  %v4844 = vpop.permute.xlu0 %4843
  %4845 = vrot.lane.b32.xlu0 %v3483, 80
  %v4846 = vpop.permute.xlu0 %4845
  %v4850 = vsel %vm1298, %v4812, 0
  %v4853 = vsel %vm1298, %v4814, 0
  %v4856 = vsel %vm1298, %v4816, 0
  %v4858 = vsel %vm765, %v4846, 0
  %4860 = vmatprep.subr.mxu0 0.0
  %4861 = vmatpush1.msra.mxu0 %v4842
  %4862 = vmatprep.subr.mxu0 0.0
  %4863 = vmatpush1.msra.mxu0 %v4844
  %4864 = vmatprep.subr.mxu0 0.0
  %4865 = vmatpush1.msra.mxu0 %v4858
  %4866 = vmatprep.subr.mxu0 0.0
  %4867 = vmatpush1.msra.mxu0 0.0
  %4868 = vmatprep.subr.mxu0 0.0
  %4869 = vmatpush1.msra.mxu0 0.0
  %4870 = vmatprep.subr.mxu0 0.0
  %4871 = vmatpush1.msra.mxu0 0.0
  %4872 = vmatprep.subr.mxu0 0.0
  %4873 = vmatpush1.msra.mxu0 0.0
  %4874 = vmatprep.subr.mxu0 0.0
  %4875 = vmatpush1.msra.mxu0 0.0
  %4876 = vmatprep.subr.mxu0 0.0
  %4877 = vmatpush1.msra.mxu0 0.0
  %4878 = vmatprep.subr.mxu0 0.0
  %4879 = vmatpush1.msra.mxu0 0.0
  %4880 = vmatprep.subr.mxu0 0.0
  %4881 = vmatpush1.msra.mxu0 0.0
  %4882 = vmatprep.subr.mxu0 0.0
  %4883 = vmatpush1.msra.mxu0 0.0
  %4884 = vmatprep.subr.mxu0 0.0
  %4885 = vmatpush1.msra.mxu0 0.0
  %4886 = vmatprep.subr.mxu0 0.0
  %4887 = vmatpush1.msra.mxu0 0.0
  %4888 = vmatprep.subr.mxu0 0.0
  %4889 = vmatpush1.msra.mxu0 0.0
  %4890 = vmatprep.subr.mxu0 0.0
  %4891 = vmatpush1.msra.mxu0 0.0
  %4892 = vmatprep.subr.mxu0 0.0
  %4893 = vmatpush1.msra.mxu0 0.0
  %4894 = vmatprep.subr.mxu0 0.0
  %4895 = vmatpush1.msra.mxu0 0.0
  %4896 = vmatprep.subr.mxu0 0.0
  %4897 = vmatpush1.msra.mxu0 0.0
  %4898 = vmatprep.subr.mxu0 0.0
  %4899 = vmatpush1.msra.mxu0 0.0
  %4900 = vmatprep.subr.mxu0 0.0
  %4901 = vmatpush1.msra.mxu0 0.0
  %4902 = vmatprep.subr.mxu0 0.0
  %4903 = vmatpush1.msra.mxu0 0.0
  %4904 = vmatprep.subr.mxu0 0.0
  %4905 = vmatpush1.msra.mxu0 0.0
  %4906 = vmatprep.subr.mxu0 0.0
  %4907 = vmatpush1.msra.mxu0 0.0
  %4908 = vmatprep.subr.mxu0 0.0
  %4909 = vmatpush1.msra.mxu0 0.0
  %4910 = vmatprep.subr.mxu0 0.0
  %4911 = vmatpush1.msra.mxu0 0.0
  %4912 = vmatprep.subr.mxu0 0.0
  %4913 = vmatpush1.msra.mxu0 0.0
  %4914 = vmatprep.subr.mxu0 0.0
  %4915 = vmatpush1.msra.mxu0 0.0
  %4916 = vmatprep.subr.mxu0 0.0
  %4917 = vmatpush1.msra.mxu0 0.0
  %4918 = vmatprep.subr.mxu0 0.0
  %4919 = vmatpush1.msra.mxu0 0.0
  %4920 = vmatprep.subr.mxu0 0.0
  %4921 = vmatpush1.msra.mxu0 0.0
  %4922 = vmatprep.subr.mxu0 0.0
  %4923 = vmatpush1.msra.mxu0 0.0
  %4924 = vmatprep.mubr.f32.mxu0 0.0
  %4925 = vmatmul.mubr.f32.gmra.mrb[0].mxu0 %v4850
  %v4926 = vpop.f32.mrb[0].mxu0
  %v4927 = vadd.f32 0.0, %v4926
  %v4928 = vpop.f32.mrb[0].mxu0
  %4929 = vmatprep.mubr.f32.mxu0 0.0
  %4930 = vmatmul.mubr.f32.gmra.mrb[0].mxu0 %v4853
  %v4931 = vpop.f32.mrb[0].mxu0
  %v4932 = vadd.f32 0.0, %v4931
  %v4933 = vpop.f32.mrb[0].mxu0
  %4934 = vmatprep.mubr.f32.mxu0 0.0
  %4935 = vmatmul.mubr.f32.gmra.mrb[0].mxu0 %v4856
  %v4936 = vpop.f32.mrb[0].mxu0
  %v4937 = vadd.f32 0.0, %v4936
  %v4938 = vpop.f32.mrb[0].mxu0
  %4939 = vdwg.mxu0
  %4940 = vrot.lane.b32.xlu0 %v3371, 48
  %v4941 = vpop.permute.xlu0 %4940
  %4942 = vrot.lane.b32.xlu0 %v3376, 48
  %v4943 = vpop.permute.xlu0 %4942
  %4944 = vrot.lane.b32.xlu0 %v3381, 48
  %v4945 = vpop.permute.xlu0 %4944
  %v4949 = vsel %vm1298, %v4803, 0
  %v4952 = vsel %vm1298, %v4805, 0
  %v4955 = vsel %vm1298, %v4807, 0
  %v4957 = vsel %vm765, %v4945, 0
  %4959 = vmatprep.subr.mxu0 0.0
  %4960 = vmatpush1.msra.mxu0 %v4941
  %4961 = vmatprep.subr.mxu0 0.0
  %4962 = vmatpush1.msra.mxu0 %v4943
  %4963 = vmatprep.subr.mxu0 0.0
  %4964 = vmatpush1.msra.mxu0 %v4957
  %4965 = vmatprep.subr.mxu0 0.0
  %4966 = vmatpush1.msra.mxu0 0.0
  %4967 = vmatprep.subr.mxu0 0.0
  %4968 = vmatpush1.msra.mxu0 0.0
  %4969 = vmatprep.subr.mxu0 0.0
  %4970 = vmatpush1.msra.mxu0 0.0
  %4971 = vmatprep.subr.mxu0 0.0
  %4972 = vmatpush1.msra.mxu0 0.0
  %4973 = vmatprep.subr.mxu0 0.0
  %4974 = vmatpush1.msra.mxu0 0.0
  %4975 = vmatprep.subr.mxu0 0.0
  %4976 = vmatpush1.msra.mxu0 0.0
  %4977 = vmatprep.subr.mxu0 0.0
  %4978 = vmatpush1.msra.mxu0 0.0
  %4979 = vmatprep.subr.mxu0 0.0
  %4980 = vmatpush1.msra.mxu0 0.0
  %4981 = vmatprep.subr.mxu0 0.0
  %4982 = vmatpush1.msra.mxu0 0.0
  %4983 = vmatprep.subr.mxu0 0.0
  %4984 = vmatpush1.msra.mxu0 0.0
  %4985 = vmatprep.subr.mxu0 0.0
  %4986 = vmatpush1.msra.mxu0 0.0
  %4987 = vmatprep.subr.mxu0 0.0
  %4988 = vmatpush1.msra.mxu0 0.0
  %4989 = vmatprep.subr.mxu0 0.0
  %4990 = vmatpush1.msra.mxu0 0.0
  %4991 = vmatprep.subr.mxu0 0.0
  %4992 = vmatpush1.msra.mxu0 0.0
  %4993 = vmatprep.subr.mxu0 0.0
  %4994 = vmatpush1.msra.mxu0 0.0
  %4995 = vmatprep.subr.mxu0 0.0
  %4996 = vmatpush1.msra.mxu0 0.0
  %4997 = vmatprep.subr.mxu0 0.0
  %4998 = vmatpush1.msra.mxu0 0.0
  %4999 = vmatprep.subr.mxu0 0.0
  %5000 = vmatpush1.msra.mxu0 0.0
  %5001 = vmatprep.subr.mxu0 0.0
  %5002 = vmatpush1.msra.mxu0 0.0
  %5003 = vmatprep.subr.mxu0 0.0
  %5004 = vmatpush1.msra.mxu0 0.0
  %5005 = vmatprep.subr.mxu0 0.0
  %5006 = vmatpush1.msra.mxu0 0.0
  %5007 = vmatprep.subr.mxu0 0.0
  %5008 = vmatpush1.msra.mxu0 0.0
  %5009 = vmatprep.subr.mxu0 0.0
  %5010 = vmatpush1.msra.mxu0 0.0
  %5011 = vmatprep.subr.mxu0 0.0
  %5012 = vmatpush1.msra.mxu0 0.0
  %5013 = vmatprep.subr.mxu0 0.0
  %5014 = vmatpush1.msra.mxu0 0.0
  %5015 = vmatprep.subr.mxu0 0.0
  %5016 = vmatpush1.msra.mxu0 0.0
  %5017 = vmatprep.subr.mxu0 0.0
  %5018 = vmatpush1.msra.mxu0 0.0
  %5019 = vmatprep.subr.mxu0 0.0
  %5020 = vmatpush1.msra.mxu0 0.0
  %5021 = vmatprep.subr.mxu0 0.0
  %5022 = vmatpush1.msra.mxu0 0.0
  %5023 = vmatprep.mubr.f32.mxu0 0.0
  %5024 = vmatmul.mubr.f32.gmra.mrb[0].mxu0 %v4949
  %v5025 = vpop.f32.mrb[0].mxu0
  %v5026 = vadd.f32 %v4927, %v5025
  %v5027 = vpop.f32.mrb[0].mxu0
  %5028 = vmatprep.mubr.f32.mxu0 0.0
  %5029 = vmatmul.mubr.f32.gmra.mrb[0].mxu0 %v4952
  %v5030 = vpop.f32.mrb[0].mxu0
  %v5031 = vadd.f32 %v4932, %v5030
  %v5032 = vpop.f32.mrb[0].mxu0
  %5033 = vmatprep.mubr.f32.mxu0 0.0
  %5034 = vmatmul.mubr.f32.gmra.mrb[0].mxu0 %v4955
  %v5035 = vpop.f32.mrb[0].mxu0
  %v5036 = vadd.f32 %v4937, %v5035
  %v5037 = vpop.f32.mrb[0].mxu0
  %5038 = vdwg.mxu0
  %v5039 = vmul.f32 %v5026, %v4838
  %v5040 = vmul.f32 %v5031, %v4839
  %v5041 = vmul.f32 %v5036, %v4840
  %v5043 = vsel %vm3495, %v5039, 0
  %v5046 = vsel %vm3495, %v5040, 0
  %v5049 = vsel %vm3495, %v5041, 0
  %5051 = vmatprep.subr.mxu0 0.0
  %5052 = vmatpush1.msra.mxu0 %v286
  %5053 = vmatprep.subr.mxu0 0.0
  %5054 = vmatpush1.msra.mxu0 0.0
  %5055 = vmatprep.subr.mxu0 0.0
  %5056 = vmatpush1.msra.mxu0 0.0
  %5057 = vmatprep.subr.mxu0 0.0
  %5058 = vmatpush1.msra.mxu0 0.0
  %5059 = vmatprep.subr.mxu0 0.0
  %5060 = vmatpush1.msra.mxu0 0.0
  %5061 = vmatprep.subr.mxu0 0.0
  %5062 = vmatpush1.msra.mxu0 0.0
  %5063 = vmatprep.subr.mxu0 0.0
  %5064 = vmatpush1.msra.mxu0 0.0
  %5065 = vmatprep.subr.mxu0 0.0
  %5066 = vmatpush1.msra.mxu0 0.0
  %5067 = vmatprep.subr.mxu0 0.0
  %5068 = vmatpush1.msra.mxu0 0.0
  %5069 = vmatprep.subr.mxu0 0.0
  %5070 = vmatpush1.msra.mxu0 0.0
  %5071 = vmatprep.subr.mxu0 0.0
  %5072 = vmatpush1.msra.mxu0 0.0
  %5073 = vmatprep.subr.mxu0 0.0
  %5074 = vmatpush1.msra.mxu0 0.0
  %5075 = vmatprep.subr.mxu0 0.0
  %5076 = vmatpush1.msra.mxu0 0.0
  %5077 = vmatprep.subr.mxu0 0.0
  %5078 = vmatpush1.msra.mxu0 0.0
  %5079 = vmatprep.subr.mxu0 0.0
  %5080 = vmatpush1.msra.mxu0 0.0
  %5081 = vmatprep.subr.mxu0 0.0
  %5082 = vmatpush1.msra.mxu0 0.0
  %5083 = vmatprep.subr.mxu0 0.0
  %5084 = vmatpush1.msra.mxu0 0.0
  %5085 = vmatprep.subr.mxu0 0.0
  %5086 = vmatpush1.msra.mxu0 0.0
  %5087 = vmatprep.subr.mxu0 0.0
  %5088 = vmatpush1.msra.mxu0 0.0
  %5089 = vmatprep.subr.mxu0 0.0
  %5090 = vmatpush1.msra.mxu0 0.0
  %5091 = vmatprep.subr.mxu0 0.0
  %5092 = vmatpush1.msra.mxu0 0.0
  %5093 = vmatprep.subr.mxu0 0.0
  %5094 = vmatpush1.msra.mxu0 0.0
  %5095 = vmatprep.subr.mxu0 0.0
  %5096 = vmatpush1.msra.mxu0 0.0
  %5097 = vmatprep.subr.mxu0 0.0
  %5098 = vmatpush1.msra.mxu0 0.0
  %5099 = vmatprep.subr.mxu0 0.0
  %5100 = vmatpush1.msra.mxu0 0.0
  %5101 = vmatprep.subr.mxu0 0.0
  %5102 = vmatpush1.msra.mxu0 0.0
  %5103 = vmatprep.subr.mxu0 0.0
  %5104 = vmatpush1.msra.mxu0 0.0
  %5105 = vmatprep.subr.mxu0 0.0
  %5106 = vmatpush1.msra.mxu0 0.0
  %5107 = vmatprep.subr.mxu0 0.0
  %5108 = vmatpush1.msra.mxu0 0.0
  %5109 = vmatprep.subr.mxu0 0.0
  %5110 = vmatpush1.msra.mxu0 0.0
  %5111 = vmatprep.subr.mxu0 0.0
  %5112 = vmatpush1.msra.mxu0 0.0
  %5113 = vmatprep.subr.mxu0 0.0
  %5114 = vmatpush1.msra.mxu0 0.0
  %5115 = vmatprep.mubr.f32.mxu0 0.0
  %5116 = vmatmul.mubr.f32.gmra.mrb[0].mxu0 %v5043
  %v5117 = vpop.f32.mrb[0].mxu0
  %v5118 = vadd.f32 0.0, %v5117
  %v5119 = vpop.f32.mrb[0].mxu0
  %5120 = vmatprep.mubr.f32.mxu0 0.0
  %5121 = vmatmul.mubr.f32.gmra.mrb[0].mxu0 %v5046
  %v5122 = vpop.f32.mrb[0].mxu0
  %v5123 = vadd.f32 0.0, %v5122
  %v5124 = vpop.f32.mrb[0].mxu0
  %5125 = vmatprep.mubr.f32.mxu0 0.0
  %5126 = vmatmul.mubr.f32.gmra.mrb[0].mxu0 %v5049
  %v5127 = vpop.f32.mrb[0].mxu0
  %v5128 = vadd.f32 0.0, %v5127
  %v5129 = vpop.f32.mrb[0].mxu0
  %5130 = vdwg.mxu0
  %v5131 = vadd.f32 %v4569, %v5118
  %v5132 = vadd.f32 %v4574, %v5123
  %v5133 = vadd.f32 %v4579, %v5128
  %5134 = vrot.lane.b32.xlu0 %v3384, 104
  %v5135 = vpop.permute.xlu0 %5134
  %5136 = vrot.lane.b32.xlu0 %v3385, 104
  %v5137 = vpop.permute.xlu0 %5136
  %5138 = vrot.lane.b32.xlu0 %v3386, 104
  %v5139 = vpop.permute.xlu0 %5138
  %5140 = vrot.lane.b32.xlu0 %v3371, 72
  %v5141 = vpop.permute.xlu0 %5140
  %5142 = vrot.lane.b32.xlu0 %v3376, 72
  %v5143 = vpop.permute.xlu0 %5142
  %5144 = vrot.lane.b32.xlu0 %v3381, 72
  %v5145 = vpop.permute.xlu0 %5144
  %v5146 = vsel %vm3495, %v5135, 0
  %v5148 = vsel %vm3495, %v5137, 0
  %v5150 = vsel %vm3495, %v5139, 0
  %v5152 = vsel %vm3495, %v5141, 0
  %v5154 = vsel %vm3495, %v5143, 0
  %v5156 = vsel %vm3495, %v5145, 0
  %5158 = vmatprep.subr.mxu0 0.0
  %5159 = vmatpush1.xpose.msra.mxu0 %v5152
  %5160 = vmatprep.subr.mxu0 0.0
  %5161 = vmatpush1.xpose.msra.mxu0 %v5154
  %5162 = vmatprep.subr.mxu0 0.0
  %5163 = vmatpush1.xpose.msra.mxu0 %v5156
  %5164 = vmatprep.subr.mxu0 0.0
  %5165 = vmatpush1.xpose.msra.mxu0 0.0
  %5166 = vmatprep.subr.mxu0 0.0
  %5167 = vmatpush1.xpose.msra.mxu0 0.0
  %5168 = vmatprep.subr.mxu0 0.0
  %5169 = vmatpush1.xpose.msra.mxu0 0.0
  %5170 = vmatprep.subr.mxu0 0.0
  %5171 = vmatpush1.xpose.msra.mxu0 0.0
  %5172 = vmatprep.subr.mxu0 0.0
  %5173 = vmatpush1.xpose.msra.mxu0 0.0
  %5174 = vmatprep.subr.mxu0 0.0
  %5175 = vmatpush1.xpose.msra.mxu0 0.0
  %5176 = vmatprep.subr.mxu0 0.0
  %5177 = vmatpush1.xpose.msra.mxu0 0.0
  %5178 = vmatprep.subr.mxu0 0.0
  %5179 = vmatpush1.xpose.msra.mxu0 0.0
  %5180 = vmatprep.subr.mxu0 0.0
  %5181 = vmatpush1.xpose.msra.mxu0 0.0
  %5182 = vmatprep.subr.mxu0 0.0
  %5183 = vmatpush1.xpose.msra.mxu0 0.0
  %5184 = vmatprep.subr.mxu0 0.0
  %5185 = vmatpush1.xpose.msra.mxu0 0.0
  %5186 = vmatprep.subr.mxu0 0.0
  %5187 = vmatpush1.xpose.msra.mxu0 0.0
  %5188 = vmatprep.subr.mxu0 0.0
  %5189 = vmatpush1.xpose.msra.mxu0 0.0
  %5190 = vmatprep.subr.mxu0 0.0
  %5191 = vmatpush1.xpose.msra.mxu0 0.0
  %5192 = vmatprep.subr.mxu0 0.0
  %5193 = vmatpush1.xpose.msra.mxu0 0.0
  %5194 = vmatprep.subr.mxu0 0.0
  %5195 = vmatpush1.xpose.msra.mxu0 0.0
  %5196 = vmatprep.subr.mxu0 0.0
  %5197 = vmatpush1.xpose.msra.mxu0 0.0
  %5198 = vmatprep.subr.mxu0 0.0
  %5199 = vmatpush1.xpose.msra.mxu0 0.0
  %5200 = vmatprep.subr.mxu0 0.0
  %5201 = vmatpush1.xpose.msra.mxu0 0.0
  %5202 = vmatprep.subr.mxu0 0.0
  %5203 = vmatpush1.xpose.msra.mxu0 0.0
  %5204 = vmatprep.subr.mxu0 0.0
  %5205 = vmatpush1.xpose.msra.mxu0 0.0
  %5206 = vmatprep.subr.mxu0 0.0
  %5207 = vmatpush1.xpose.msra.mxu0 0.0
  %5208 = vmatprep.subr.mxu0 0.0
  %5209 = vmatpush1.xpose.msra.mxu0 0.0
  %5210 = vmatprep.subr.mxu0 0.0
  %5211 = vmatpush1.xpose.msra.mxu0 0.0
  %5212 = vmatprep.subr.mxu0 0.0
  %5213 = vmatpush1.xpose.msra.mxu0 0.0
  %5214 = vmatprep.subr.mxu0 0.0
  %5215 = vmatpush1.xpose.msra.mxu0 0.0
  %5216 = vmatprep.subr.mxu0 0.0
  %5217 = vmatpush1.xpose.msra.mxu0 0.0
  %5218 = vmatprep.subr.mxu0 0.0
  %5219 = vmatpush1.xpose.msra.mxu0 0.0
  %5220 = vmatprep.subr.mxu0 0.0
  %5221 = vmatpush1.xpose.msra.mxu0 0.0
  %5222 = vmatprep.mubr.f32.mxu0 0.0
  %5223 = vmatmul.mubr.f32.gmra.mrb[0].mxu0 %v5146
  %v5224 = vpop.f32.mrb[0].mxu0
  %v5225 = vadd.f32 %v177, %v5224
  %v5226 = vpop.f32.mrb[0].mxu0
  %5227 = vmatprep.mubr.f32.mxu0 0.0
  %5228 = vmatmul.mubr.f32.gmra.mrb[0].mxu0 %v5148
  %v5229 = vpop.f32.mrb[0].mxu0
  %v5230 = vadd.f32 %v178, %v5229
  %v5231 = vpop.f32.mrb[0].mxu0
  %5232 = vmatprep.mubr.f32.mxu0 0.0
  %5233 = vmatmul.mubr.f32.gmra.mrb[0].mxu0 %v5150
  %v5234 = vpop.f32.mrb[0].mxu0
  %v5235 = vadd.f32 %v179, %v5234
  %v5236 = vpop.f32.mrb[0].mxu0
  %5237 = vdwg.mxu0
  %5238 = vrot.lane.b32.xlu0 %v3473, 104
  %v5239 = vpop.permute.xlu0 %5238
  %5240 = vrot.lane.b32.xlu0 %v3478, 104
  %v5241 = vpop.permute.xlu0 %5240
  %5242 = vrot.lane.b32.xlu0 %v3483, 104
  %v5243 = vpop.permute.xlu0 %5242
  %v5244 = vsel %vm3495, %v5239, 0
  %v5246 = vsel %vm3495, %v5241, 0
  %v5248 = vsel %vm3495, %v5243, 0
  %5250 = vmatprep.subr.mxu0 0.0
  %5251 = vmatpush1.xpose.msra.mxu0 %v5244
  %5252 = vmatprep.subr.mxu0 0.0
  %5253 = vmatpush1.xpose.msra.mxu0 %v5246
  %5254 = vmatprep.subr.mxu0 0.0
  %5255 = vmatpush1.xpose.msra.mxu0 %v5248
  %5256 = vmatprep.subr.mxu0 0.0
  %5257 = vmatpush1.xpose.msra.mxu0 0.0
  %5258 = vmatprep.subr.mxu0 0.0
  %5259 = vmatpush1.xpose.msra.mxu0 0.0
  %5260 = vmatprep.subr.mxu0 0.0
  %5261 = vmatpush1.xpose.msra.mxu0 0.0
  %5262 = vmatprep.subr.mxu0 0.0
  %5263 = vmatpush1.xpose.msra.mxu0 0.0
  %5264 = vmatprep.subr.mxu0 0.0
  %5265 = vmatpush1.xpose.msra.mxu0 0.0
  %5266 = vmatprep.subr.mxu0 0.0
  %5267 = vmatpush1.xpose.msra.mxu0 0.0
  %5268 = vmatprep.subr.mxu0 0.0
  %5269 = vmatpush1.xpose.msra.mxu0 0.0
  %5270 = vmatprep.subr.mxu0 0.0
  %5271 = vmatpush1.xpose.msra.mxu0 0.0
  %5272 = vmatprep.subr.mxu0 0.0
  %5273 = vmatpush1.xpose.msra.mxu0 0.0
  %5274 = vmatprep.subr.mxu0 0.0
  %5275 = vmatpush1.xpose.msra.mxu0 0.0
  %5276 = vmatprep.subr.mxu0 0.0
  %5277 = vmatpush1.xpose.msra.mxu0 0.0
  %5278 = vmatprep.subr.mxu0 0.0
  %5279 = vmatpush1.xpose.msra.mxu0 0.0
  %5280 = vmatprep.subr.mxu0 0.0
  %5281 = vmatpush1.xpose.msra.mxu0 0.0
  %5282 = vmatprep.subr.mxu0 0.0
  %5283 = vmatpush1.xpose.msra.mxu0 0.0
  %5284 = vmatprep.subr.mxu0 0.0
  %5285 = vmatpush1.xpose.msra.mxu0 0.0
  %5286 = vmatprep.subr.mxu0 0.0
  %5287 = vmatpush1.xpose.msra.mxu0 0.0
  %5288 = vmatprep.subr.mxu0 0.0
  %5289 = vmatpush1.xpose.msra.mxu0 0.0
  %5290 = vmatprep.subr.mxu0 0.0
  %5291 = vmatpush1.xpose.msra.mxu0 0.0
  %5292 = vmatprep.subr.mxu0 0.0
  %5293 = vmatpush1.xpose.msra.mxu0 0.0
  %5294 = vmatprep.subr.mxu0 0.0
  %5295 = vmatpush1.xpose.msra.mxu0 0.0
  %5296 = vmatprep.subr.mxu0 0.0
  %5297 = vmatpush1.xpose.msra.mxu0 0.0
  %5298 = vmatprep.subr.mxu0 0.0
  %5299 = vmatpush1.xpose.msra.mxu0 0.0
  %5300 = vmatprep.subr.mxu0 0.0
  %5301 = vmatpush1.xpose.msra.mxu0 0.0
  %5302 = vmatprep.subr.mxu0 0.0
  %5303 = vmatpush1.xpose.msra.mxu0 0.0
  %5304 = vmatprep.subr.mxu0 0.0
  %5305 = vmatpush1.xpose.msra.mxu0 0.0
  %5306 = vmatprep.subr.mxu0 0.0
  %5307 = vmatpush1.xpose.msra.mxu0 0.0
  %5308 = vmatprep.subr.mxu0 0.0
  %5309 = vmatpush1.xpose.msra.mxu0 0.0
  %5310 = vmatprep.subr.mxu0 0.0
  %5311 = vmatpush1.xpose.msra.mxu0 0.0
  %5312 = vmatprep.subr.mxu0 0.0
  %5313 = vmatpush1.xpose.msra.mxu0 0.0
  %5314 = vmatprep.mubr.f32.mxu0 0.0
  %5315 = vmatmul.mubr.f32.gmra.mrb[0].mxu0 %v5146
  %v5316 = vpop.f32.mrb[0].mxu0
  %v5317 = vadd.f32 %v177, %v5316
  %v5318 = vpop.f32.mrb[0].mxu0
  %5319 = vmatprep.mubr.f32.mxu0 0.0
  %5320 = vmatmul.mubr.f32.gmra.mrb[0].mxu0 %v5148
  %v5321 = vpop.f32.mrb[0].mxu0
  %v5322 = vadd.f32 %v178, %v5321
  %v5323 = vpop.f32.mrb[0].mxu0
  %5324 = vmatprep.mubr.f32.mxu0 0.0
  %5325 = vmatmul.mubr.f32.gmra.mrb[0].mxu0 %v5150
  %v5326 = vpop.f32.mrb[0].mxu0
  %v5327 = vadd.f32 %v179, %v5326
  %v5328 = vpop.f32.mrb[0].mxu0
  %5329 = vdwg.mxu0
  %v5330 = vsel %vm1298, %v5225, -inf
  %5331 = vmax.xlane.f32.xlu0 %v5330
  %v5332 = vpop.xlane.xlu0 %5331
  %v5333 = vsel %vm1298, %v5230, -inf
  %5334 = vmax.xlane.f32.xlu0 %v5333
  %v5335 = vpop.xlane.xlu0 %5334
  %v5336 = vsel %vm1305, %v5235, -inf
  %5337 = vmax.xlane.f32.xlu0 %v5336
  %v5338 = vpop.xlane.xlu0 %5337
  %v5339 = vsel %vm1298, %v5317, -inf
  %5340 = vmax.xlane.f32.xlu0 %v5339
  %v5341 = vpop.xlane.xlu0 %5340
  %v5342 = vsel %vm1298, %v5322, -inf
  %5343 = vmax.xlane.f32.xlu0 %v5342
  %v5344 = vpop.xlane.xlu0 %5343
  %v5345 = vsel %vm1305, %v5327, -inf
  %5346 = vmax.xlane.f32.xlu0 %v5345
  %v5347 = vpop.xlane.xlu0 %5346
  %v5348 = vmax.f32 %v5332, %v5341
  %v5349 = vmax.f32 %v5335, %v5344
  %v5350 = vmax.f32 %v5338, %v5347
  %v5351 = vsub.f32 %v5225, %v5348
  %v5352 = vsub.f32 %v5230, %v5349
  %v5353 = vsub.f32 %v5235, %v5350
  %v5354 = vmul.f32 %v5351, 1.442695
  %v5355 = vpow.pop %v5354
  %v5356 = vmul.f32 %v5352, 1.442695
  %v5357 = vpow.pop %v5356
  %v5358 = vmul.f32 %v5353, 1.442695
  %v5359 = vpow.pop %v5358
  %v5360 = vsub.f32 %v5317, %v5348
  %v5361 = vsub.f32 %v5322, %v5349
  %v5362 = vsub.f32 %v5327, %v5350
  %v5363 = vmul.f32 %v5360, 1.442695
  %v5364 = vpow.pop %v5363
  %v5365 = vmul.f32 %v5361, 1.442695
  %v5366 = vpow.pop %v5365
  %v5367 = vmul.f32 %v5362, 1.442695
  %v5368 = vpow.pop %v5367
  %v5369 = vsel %vm1298, %v5355, 0.0
  %5370 = vadd.xlane.f32.xlu0 %v5369
  %v5371 = vpop.xlane.xlu0 %5370
  %v5372 = vsel %vm1298, %v5357, 0.0
  %5373 = vadd.xlane.f32.xlu0 %v5372
  %v5374 = vpop.xlane.xlu0 %5373
  %v5375 = vsel %vm1305, %v5359, 0.0
  %5376 = vadd.xlane.f32.xlu0 %v5375
  %v5377 = vpop.xlane.xlu0 %5376
  %v5378 = vsel %vm1298, %v5364, 0.0
  %5379 = vadd.xlane.f32.xlu0 %v5378
  %v5380 = vpop.xlane.xlu0 %5379
  %v5381 = vsel %vm1298, %v5366, 0.0
  %5382 = vadd.xlane.f32.xlu0 %v5381
  %v5383 = vpop.xlane.xlu0 %5382
  %v5384 = vsel %vm1305, %v5368, 0.0
  %5385 = vadd.xlane.f32.xlu0 %v5384
  %v5386 = vpop.xlane.xlu0 %5385
  %v5387 = vadd.f32 %v5371, %v5380
  %v5388 = vadd.f32 %v5374, %v5383
  %v5389 = vadd.f32 %v5377, %v5386
  %v5390 = vrcp.pop %v5387
  %v5391 = vrcp.pop %v5388
  %v5392 = vrcp.pop %v5389
  %5393 = vrot.lane.b32.xlu0 %v3473, 72
  %v5394 = vpop.permute.xlu0 %5393
  %5395 = vrot.lane.b32.xlu0 %v3478, 72
  %v5396 = vpop.permute.xlu0 %5395
  %5397 = vrot.lane.b32.xlu0 %v3483, 72
  %v5398 = vpop.permute.xlu0 %5397
  %v5402 = vsel %vm1298, %v5364, 0
  %v5405 = vsel %vm1298, %v5366, 0
  %v5408 = vsel %vm1298, %v5368, 0
  %v5410 = vsel %vm765, %v5398, 0
  %5412 = vmatprep.subr.mxu0 0.0
  %5413 = vmatpush1.msra.mxu0 %v5394
  %5414 = vmatprep.subr.mxu0 0.0
  %5415 = vmatpush1.msra.mxu0 %v5396
  %5416 = vmatprep.subr.mxu0 0.0
  %5417 = vmatpush1.msra.mxu0 %v5410
  %5418 = vmatprep.subr.mxu0 0.0
  %5419 = vmatpush1.msra.mxu0 0.0
  %5420 = vmatprep.subr.mxu0 0.0
  %5421 = vmatpush1.msra.mxu0 0.0
  %5422 = vmatprep.subr.mxu0 0.0
  %5423 = vmatpush1.msra.mxu0 0.0
  %5424 = vmatprep.subr.mxu0 0.0
  %5425 = vmatpush1.msra.mxu0 0.0
  %5426 = vmatprep.subr.mxu0 0.0
  %5427 = vmatpush1.msra.mxu0 0.0
  %5428 = vmatprep.subr.mxu0 0.0
  %5429 = vmatpush1.msra.mxu0 0.0
  %5430 = vmatprep.subr.mxu0 0.0
  %5431 = vmatpush1.msra.mxu0 0.0
  %5432 = vmatprep.subr.mxu0 0.0
  %5433 = vmatpush1.msra.mxu0 0.0
  %5434 = vmatprep.subr.mxu0 0.0
  %5435 = vmatpush1.msra.mxu0 0.0
  %5436 = vmatprep.subr.mxu0 0.0
  %5437 = vmatpush1.msra.mxu0 0.0
  %5438 = vmatprep.subr.mxu0 0.0
  %5439 = vmatpush1.msra.mxu0 0.0
  %5440 = vmatprep.subr.mxu0 0.0
  %5441 = vmatpush1.msra.mxu0 0.0
  %5442 = vmatprep.subr.mxu0 0.0
  %5443 = vmatpush1.msra.mxu0 0.0
  %5444 = vmatprep.subr.mxu0 0.0
  %5445 = vmatpush1.msra.mxu0 0.0
  %5446 = vmatprep.subr.mxu0 0.0
  %5447 = vmatpush1.msra.mxu0 0.0
  %5448 = vmatprep.subr.mxu0 0.0
  %5449 = vmatpush1.msra.mxu0 0.0
  %5450 = vmatprep.subr.mxu0 0.0
  %5451 = vmatpush1.msra.mxu0 0.0
  %5452 = vmatprep.subr.mxu0 0.0
  %5453 = vmatpush1.msra.mxu0 0.0
  %5454 = vmatprep.subr.mxu0 0.0
  %5455 = vmatpush1.msra.mxu0 0.0
  %5456 = vmatprep.subr.mxu0 0.0
  %5457 = vmatpush1.msra.mxu0 0.0
  %5458 = vmatprep.subr.mxu0 0.0
  %5459 = vmatpush1.msra.mxu0 0.0
  %5460 = vmatprep.subr.mxu0 0.0
  %5461 = vmatpush1.msra.mxu0 0.0
  %5462 = vmatprep.subr.mxu0 0.0
  %5463 = vmatpush1.msra.mxu0 0.0
  %5464 = vmatprep.subr.mxu0 0.0
  %5465 = vmatpush1.msra.mxu0 0.0
  %5466 = vmatprep.subr.mxu0 0.0
  %5467 = vmatpush1.msra.mxu0 0.0
  %5468 = vmatprep.subr.mxu0 0.0
  %5469 = vmatpush1.msra.mxu0 0.0
  %5470 = vmatprep.subr.mxu0 0.0
  %5471 = vmatpush1.msra.mxu0 0.0
  %5472 = vmatprep.subr.mxu0 0.0
  %5473 = vmatpush1.msra.mxu0 0.0
  %5474 = vmatprep.subr.mxu0 0.0
  %5475 = vmatpush1.msra.mxu0 0.0
  %5476 = vmatprep.mubr.f32.mxu0 0.0
  %5477 = vmatmul.mubr.f32.gmra.mrb[0].mxu0 %v5402
  %v5478 = vpop.f32.mrb[0].mxu0
  %v5479 = vadd.f32 0.0, %v5478
  %v5480 = vpop.f32.mrb[0].mxu0
  %5481 = vmatprep.mubr.f32.mxu0 0.0
  %5482 = vmatmul.mubr.f32.gmra.mrb[0].mxu0 %v5405
  %v5483 = vpop.f32.mrb[0].mxu0
  %v5484 = vadd.f32 0.0, %v5483
  %v5485 = vpop.f32.mrb[0].mxu0
  %5486 = vmatprep.mubr.f32.mxu0 0.0
  %5487 = vmatmul.mubr.f32.gmra.mrb[0].mxu0 %v5408
  %v5488 = vpop.f32.mrb[0].mxu0
  %v5489 = vadd.f32 0.0, %v5488
  %v5490 = vpop.f32.mrb[0].mxu0
  %5491 = vdwg.mxu0
  %5492 = vrot.lane.b32.xlu0 %v3371, 40
  %v5493 = vpop.permute.xlu0 %5492
  %5494 = vrot.lane.b32.xlu0 %v3376, 40
  %v5495 = vpop.permute.xlu0 %5494
  %5496 = vrot.lane.b32.xlu0 %v3381, 40
  %v5497 = vpop.permute.xlu0 %5496
  %v5501 = vsel %vm1298, %v5355, 0
  %v5504 = vsel %vm1298, %v5357, 0
  %v5507 = vsel %vm1298, %v5359, 0
  %v5509 = vsel %vm765, %v5497, 0
  %5511 = vmatprep.subr.mxu0 0.0
  %5512 = vmatpush1.msra.mxu0 %v5493
  %5513 = vmatprep.subr.mxu0 0.0
  %5514 = vmatpush1.msra.mxu0 %v5495
  %5515 = vmatprep.subr.mxu0 0.0
  %5516 = vmatpush1.msra.mxu0 %v5509
  %5517 = vmatprep.subr.mxu0 0.0
  %5518 = vmatpush1.msra.mxu0 0.0
  %5519 = vmatprep.subr.mxu0 0.0
  %5520 = vmatpush1.msra.mxu0 0.0
  %5521 = vmatprep.subr.mxu0 0.0
  %5522 = vmatpush1.msra.mxu0 0.0
  %5523 = vmatprep.subr.mxu0 0.0
  %5524 = vmatpush1.msra.mxu0 0.0
  %5525 = vmatprep.subr.mxu0 0.0
  %5526 = vmatpush1.msra.mxu0 0.0
  %5527 = vmatprep.subr.mxu0 0.0
  %5528 = vmatpush1.msra.mxu0 0.0
  %5529 = vmatprep.subr.mxu0 0.0
  %5530 = vmatpush1.msra.mxu0 0.0
  %5531 = vmatprep.subr.mxu0 0.0
  %5532 = vmatpush1.msra.mxu0 0.0
  %5533 = vmatprep.subr.mxu0 0.0
  %5534 = vmatpush1.msra.mxu0 0.0
  %5535 = vmatprep.subr.mxu0 0.0
  %5536 = vmatpush1.msra.mxu0 0.0
  %5537 = vmatprep.subr.mxu0 0.0
  %5538 = vmatpush1.msra.mxu0 0.0
  %5539 = vmatprep.subr.mxu0 0.0
  %5540 = vmatpush1.msra.mxu0 0.0
  %5541 = vmatprep.subr.mxu0 0.0
  %5542 = vmatpush1.msra.mxu0 0.0
  %5543 = vmatprep.subr.mxu0 0.0
  %5544 = vmatpush1.msra.mxu0 0.0
  %5545 = vmatprep.subr.mxu0 0.0
  %5546 = vmatpush1.msra.mxu0 0.0
  %5547 = vmatprep.subr.mxu0 0.0
  %5548 = vmatpush1.msra.mxu0 0.0
  %5549 = vmatprep.subr.mxu0 0.0
  %5550 = vmatpush1.msra.mxu0 0.0
  %5551 = vmatprep.subr.mxu0 0.0
  %5552 = vmatpush1.msra.mxu0 0.0
  %5553 = vmatprep.subr.mxu0 0.0
  %5554 = vmatpush1.msra.mxu0 0.0
  %5555 = vmatprep.subr.mxu0 0.0
  %5556 = vmatpush1.msra.mxu0 0.0
  %5557 = vmatprep.subr.mxu0 0.0
  %5558 = vmatpush1.msra.mxu0 0.0
  %5559 = vmatprep.subr.mxu0 0.0
  %5560 = vmatpush1.msra.mxu0 0.0
  %5561 = vmatprep.subr.mxu0 0.0
  %5562 = vmatpush1.msra.mxu0 0.0
  %5563 = vmatprep.subr.mxu0 0.0
  %5564 = vmatpush1.msra.mxu0 0.0
  %5565 = vmatprep.subr.mxu0 0.0
  %5566 = vmatpush1.msra.mxu0 0.0
  %5567 = vmatprep.subr.mxu0 0.0
  %5568 = vmatpush1.msra.mxu0 0.0
  %5569 = vmatprep.subr.mxu0 0.0
  %5570 = vmatpush1.msra.mxu0 0.0
  %5571 = vmatprep.subr.mxu0 0.0
  %5572 = vmatpush1.msra.mxu0 0.0
  %5573 = vmatprep.subr.mxu0 0.0
  %5574 = vmatpush1.msra.mxu0 0.0
  %5575 = vmatprep.mubr.f32.mxu0 0.0
  %5576 = vmatmul.mubr.f32.gmra.mrb[0].mxu0 %v5501
  %v5577 = vpop.f32.mrb[0].mxu0
  %v5578 = vadd.f32 %v5479, %v5577
  %v5579 = vpop.f32.mrb[0].mxu0
  %5580 = vmatprep.mubr.f32.mxu0 0.0
  %5581 = vmatmul.mubr.f32.gmra.mrb[0].mxu0 %v5504
  %v5582 = vpop.f32.mrb[0].mxu0
  %v5583 = vadd.f32 %v5484, %v5582
  %v5584 = vpop.f32.mrb[0].mxu0
  %5585 = vmatprep.mubr.f32.mxu0 0.0
  %5586 = vmatmul.mubr.f32.gmra.mrb[0].mxu0 %v5507
  %v5587 = vpop.f32.mrb[0].mxu0
  %v5588 = vadd.f32 %v5489, %v5587
  %v5589 = vpop.f32.mrb[0].mxu0
  %5590 = vdwg.mxu0
  %v5591 = vmul.f32 %v5578, %v5390
  %v5592 = vmul.f32 %v5583, %v5391
  %v5593 = vmul.f32 %v5588, %v5392
  %v5595 = vsel %vm3495, %v5591, 0
  %v5598 = vsel %vm3495, %v5592, 0
  %v5601 = vsel %vm3495, %v5593, 0
  %5603 = vmatprep.subr.mxu0 0.0
  %5604 = vmatpush1.msra.mxu0 %v287
  %5605 = vmatprep.subr.mxu0 0.0
  %5606 = vmatpush1.msra.mxu0 0.0
  %5607 = vmatprep.subr.mxu0 0.0
  %5608 = vmatpush1.msra.mxu0 0.0
  %5609 = vmatprep.subr.mxu0 0.0
  %5610 = vmatpush1.msra.mxu0 0.0
  %5611 = vmatprep.subr.mxu0 0.0
  %5612 = vmatpush1.msra.mxu0 0.0
  %5613 = vmatprep.subr.mxu0 0.0
  %5614 = vmatpush1.msra.mxu0 0.0
  %5615 = vmatprep.subr.mxu0 0.0
  %5616 = vmatpush1.msra.mxu0 0.0
  %5617 = vmatprep.subr.mxu0 0.0
  %5618 = vmatpush1.msra.mxu0 0.0
  %5619 = vmatprep.subr.mxu0 0.0
  %5620 = vmatpush1.msra.mxu0 0.0
  %5621 = vmatprep.subr.mxu0 0.0
  %5622 = vmatpush1.msra.mxu0 0.0
  %5623 = vmatprep.subr.mxu0 0.0
  %5624 = vmatpush1.msra.mxu0 0.0
  %5625 = vmatprep.subr.mxu0 0.0
  %5626 = vmatpush1.msra.mxu0 0.0
  %5627 = vmatprep.subr.mxu0 0.0
  %5628 = vmatpush1.msra.mxu0 0.0
  %5629 = vmatprep.subr.mxu0 0.0
  %5630 = vmatpush1.msra.mxu0 0.0
  %5631 = vmatprep.subr.mxu0 0.0
  %5632 = vmatpush1.msra.mxu0 0.0
  %5633 = vmatprep.subr.mxu0 0.0
  %5634 = vmatpush1.msra.mxu0 0.0
  %5635 = vmatprep.subr.mxu0 0.0
  %5636 = vmatpush1.msra.mxu0 0.0
  %5637 = vmatprep.subr.mxu0 0.0
  %5638 = vmatpush1.msra.mxu0 0.0
  %5639 = vmatprep.subr.mxu0 0.0
  %5640 = vmatpush1.msra.mxu0 0.0
  %5641 = vmatprep.subr.mxu0 0.0
  %5642 = vmatpush1.msra.mxu0 0.0
  %5643 = vmatprep.subr.mxu0 0.0
  %5644 = vmatpush1.msra.mxu0 0.0
  %5645 = vmatprep.subr.mxu0 0.0
  %5646 = vmatpush1.msra.mxu0 0.0
  %5647 = vmatprep.subr.mxu0 0.0
  %5648 = vmatpush1.msra.mxu0 0.0
  %5649 = vmatprep.subr.mxu0 0.0
  %5650 = vmatpush1.msra.mxu0 0.0
  %5651 = vmatprep.subr.mxu0 0.0
  %5652 = vmatpush1.msra.mxu0 0.0
  %5653 = vmatprep.subr.mxu0 0.0
  %5654 = vmatpush1.msra.mxu0 0.0
  %5655 = vmatprep.subr.mxu0 0.0
  %5656 = vmatpush1.msra.mxu0 0.0
  %5657 = vmatprep.subr.mxu0 0.0
  %5658 = vmatpush1.msra.mxu0 0.0
  %5659 = vmatprep.subr.mxu0 0.0
  %5660 = vmatpush1.msra.mxu0 0.0
  %5661 = vmatprep.subr.mxu0 0.0
  %5662 = vmatpush1.msra.mxu0 0.0
  %5663 = vmatprep.subr.mxu0 0.0
  %5664 = vmatpush1.msra.mxu0 0.0
  %5665 = vmatprep.subr.mxu0 0.0
  %5666 = vmatpush1.msra.mxu0 0.0
  %5667 = vmatprep.mubr.f32.mxu0 0.0
  %5668 = vmatmul.mubr.f32.gmra.mrb[0].mxu0 %v5595
  %v5669 = vpop.f32.mrb[0].mxu0
  %v5670 = vadd.f32 0.0, %v5669
  %v5671 = vpop.f32.mrb[0].mxu0
  %5672 = vmatprep.mubr.f32.mxu0 0.0
  %5673 = vmatmul.mubr.f32.gmra.mrb[0].mxu0 %v5598
  %v5674 = vpop.f32.mrb[0].mxu0
  %v5675 = vadd.f32 0.0, %v5674
  %v5676 = vpop.f32.mrb[0].mxu0
  %5677 = vmatprep.mubr.f32.mxu0 0.0
  %5678 = vmatmul.mubr.f32.gmra.mrb[0].mxu0 %v5601
  %v5679 = vpop.f32.mrb[0].mxu0
  %v5680 = vadd.f32 0.0, %v5679
  %v5681 = vpop.f32.mrb[0].mxu0
  %5682 = vdwg.mxu0
  %v5683 = vadd.f32 %v5131, %v5670
  %v5684 = vadd.f32 %v5132, %v5675
  %v5685 = vadd.f32 %v5133, %v5680
  %v5687 = vlaneseq
  %v5688 = vshrl.u32 %v5687, 7
  %v5689 = vsub.s32 0, %v5688
  %v5690 = vrot.slane %v248, %v5689
  %v5692 = vadd.f32 %v5683, %v5690
  %v5693 = vadd.f32 %v5684, %v5690
  %v5694 = vadd.f32 %v5685, %v5690
  %v5695 = vadd.f32 %v1093, %v5692
  %v5696 = vadd.f32 %v1094, %v5693
  %v5697 = vadd.f32 %v1095, %v5694
  %v5698 = vsel %vm333, %v5695, 0.0
  %5699 = vadd.xlane.f32.xlu0 %v5698
  %v5700 = vpop.xlane.xlu0 %5699
  %v5701 = vsel %vm333, %v5696, 0.0
  %5702 = vadd.xlane.f32.xlu0 %v5701
  %v5703 = vpop.xlane.xlu0 %5702
  %v5704 = vsel %vm1864, %v5697, 0.0
  %5705 = vadd.xlane.f32.xlu0 %v5704
  %v5706 = vpop.xlane.xlu0 %5705
  %v5707 = vmul.f32 %v5700, %v1868
  %v5708 = vmul.f32 %v5703, %v1868
  %v5709 = vmul.f32 %v5706, %v1868
  %v5710 = vsub.f32 %v5695, %v5707
  %v5711 = vsub.f32 %v5696, %v5708
  %v5712 = vsub.f32 %v5697, %v5709
  %v5713 = vmul.f32 %v5710, %v5710
  %v5714 = vmul.f32 %v5711, %v5711
  %v5715 = vmul.f32 %v5712, %v5712
  %v5716 = vsel %vm333, %v5713, 0.0
  %5717 = vadd.xlane.f32.xlu0 %v5716
  %v5718 = vpop.xlane.xlu0 %5717
  %v5719 = vsel %vm333, %v5714, 0.0
  %5720 = vadd.xlane.f32.xlu0 %v5719
  %v5721 = vpop.xlane.xlu0 %5720
  %v5722 = vsel %vm1864, %v5715, 0.0
  %5723 = vadd.xlane.f32.xlu0 %v5722
  %v5724 = vpop.xlane.xlu0 %5723
  %v5725 = vmul.f32 %v5718, %v1868
  %v5726 = vmul.f32 %v5721, %v1868
  %v5727 = vmul.f32 %v5724, %v1868
  %v5728 = vadd.f32 %v5725, 1e-05
  %v5729 = vadd.f32 %v5726, 1e-05
  %v5730 = vadd.f32 %v5727, 1e-05
  %v5731 = vrsqrt.pop %v5728
  %v5732 = vrsqrt.pop %v5729
  %v5733 = vrsqrt.pop %v5730
  %v5734 = vmul.f32 %v5710, %v5731
  %v5735 = vmul.f32 %v5711, %v5732
  %v5736 = vmul.f32 %v5712, %v5733
  %v5738 = vlaneseq
  %v5739 = vshrl.u32 %v5738, 7
  %v5740 = vsub.s32 0, %v5739
  %v5741 = vrot.slane %v254, %v5740
  %v5743 = vmul.f32 %v5734, %v5741
  %v5744 = vmul.f32 %v5735, %v5741
  %v5745 = vmul.f32 %v5736, %v5741
  %v5747 = vlaneseq
  %v5748 = vshrl.u32 %v5747, 7
  %v5749 = vsub.s32 0, %v5748
  %v5750 = vrot.slane %v252, %v5749
  %v5752 = vadd.f32 %v5743, %v5750
  %v5753 = vadd.f32 %v5744, %v5750
  %v5754 = vadd.f32 %v5745, %v5750
  %v5756 = vlaneseq
  %v5757 = vshrl.u32 %v5756, 7
  %v5758 = vsub.s32 0, %v5757
  %v5759 = vrot.slane %v244, %v5758
  %v5762 = vsel %vm333, %v5752, 0
  %v5765 = vsel %vm333, %v5753, 0
  %v5768 = vsel %vm333, %v5754, 0
  %5770 = vmatprep.subr.mxu0 0.0
  %5771 = vmatpush1.msra.mxu0 %v260
  %5772 = vmatprep.subr.mxu0 0.0
  %5773 = vmatpush1.msra.mxu0 %v261
  %5774 = vmatprep.subr.mxu0 0.0
  %5775 = vmatpush1.msra.mxu0 %v262
  %5776 = vmatprep.subr.mxu0 0.0
  %5777 = vmatpush1.msra.mxu0 %v263
  %5778 = vmatprep.subr.mxu0 0.0
  %5779 = vmatpush1.msra.mxu0 0.0
  %5780 = vmatprep.subr.mxu0 0.0
  %5781 = vmatpush1.msra.mxu0 0.0
  %5782 = vmatprep.subr.mxu0 0.0
  %5783 = vmatpush1.msra.mxu0 0.0
  %5784 = vmatprep.subr.mxu0 0.0
  %5785 = vmatpush1.msra.mxu0 0.0
  %5786 = vmatprep.subr.mxu0 0.0
  %5787 = vmatpush1.msra.mxu0 0.0
  %5788 = vmatprep.subr.mxu0 0.0
  %5789 = vmatpush1.msra.mxu0 0.0
  %5790 = vmatprep.subr.mxu0 0.0
  %5791 = vmatpush1.msra.mxu0 0.0
  %5792 = vmatprep.subr.mxu0 0.0
  %5793 = vmatpush1.msra.mxu0 0.0
  %5794 = vmatprep.subr.mxu0 0.0
  %5795 = vmatpush1.msra.mxu0 0.0
  %5796 = vmatprep.subr.mxu0 0.0
  %5797 = vmatpush1.msra.mxu0 0.0
  %5798 = vmatprep.subr.mxu0 0.0
  %5799 = vmatpush1.msra.mxu0 0.0
  %5800 = vmatprep.subr.mxu0 0.0
  %5801 = vmatpush1.msra.mxu0 0.0
  %5802 = vmatprep.subr.mxu0 0.0
  %5803 = vmatpush1.msra.mxu0 0.0
  %5804 = vmatprep.subr.mxu0 0.0
  %5805 = vmatpush1.msra.mxu0 0.0
  %5806 = vmatprep.subr.mxu0 0.0
  %5807 = vmatpush1.msra.mxu0 0.0
  %5808 = vmatprep.subr.mxu0 0.0
  %5809 = vmatpush1.msra.mxu0 0.0
  %5810 = vmatprep.subr.mxu0 0.0
  %5811 = vmatpush1.msra.mxu0 0.0
  %5812 = vmatprep.subr.mxu0 0.0
  %5813 = vmatpush1.msra.mxu0 0.0
  %5814 = vmatprep.subr.mxu0 0.0
  %5815 = vmatpush1.msra.mxu0 0.0
  %5816 = vmatprep.subr.mxu0 0.0
  %5817 = vmatpush1.msra.mxu0 0.0
  %5818 = vmatprep.subr.mxu0 0.0
  %5819 = vmatpush1.msra.mxu0 0.0
  %5820 = vmatprep.subr.mxu0 0.0
  %5821 = vmatpush1.msra.mxu0 0.0
  %5822 = vmatprep.subr.mxu0 0.0
  %5823 = vmatpush1.msra.mxu0 0.0
  %5824 = vmatprep.subr.mxu0 0.0
  %5825 = vmatpush1.msra.mxu0 0.0
  %5826 = vmatprep.subr.mxu0 0.0
  %5827 = vmatpush1.msra.mxu0 0.0
  %5828 = vmatprep.subr.mxu0 0.0
  %5829 = vmatpush1.msra.mxu0 0.0
  %5830 = vmatprep.subr.mxu0 0.0
  %5831 = vmatpush1.msra.mxu0 0.0
  %5832 = vmatprep.subr.mxu0 0.0
  %5833 = vmatpush1.msra.mxu0 0.0
  %5834 = vmatprep.mubr.f32.mxu0 0.0
  %5835 = vmatmul.mubr.f32.gmra.mrb[0].mxu0 %v5762
  %v5836 = vpop.f32.mrb[0].mxu0
  %v5837 = vadd.f32 %v5759, %v5836
  %v5838 = vpop.f32.mrb[0].mxu0
  %5839 = vmatprep.mubr.f32.mxu0 0.0
  %5840 = vmatmul.mubr.f32.gmra.mrb[0].mxu0 %v5765
  %v5841 = vpop.f32.mrb[0].mxu0
  %v5842 = vadd.f32 %v5759, %v5841
  %v5843 = vpop.f32.mrb[0].mxu0
  %5844 = vmatprep.mubr.f32.mxu0 0.0
  %5845 = vmatmul.mubr.f32.gmra.mrb[0].mxu0 %v5768
  %v5846 = vpop.f32.mrb[0].mxu0
  %v5847 = vadd.f32 %v5759, %v5846
  %v5848 = vpop.f32.mrb[0].mxu0
  %5849 = vdwg.mxu0
  %v5850 = vmul.f32 %v5837, %v5837
  %v5851 = vmul.f32 %v5842, %v5842
  %v5852 = vmul.f32 %v5847, %v5847
  %v5853 = vmul.f32 %v5837, %v5850
  %v5854 = vmul.f32 %v5842, %v5851
  %v5855 = vmul.f32 %v5847, %v5852
  %v5856 = vmul.f32 %v5853, 0.044715
  %v5857 = vmul.f32 %v5854, 0.044715
  %v5858 = vmul.f32 %v5855, 0.044715
  %v5859 = vadd.f32 %v5837, %v5856
  %v5860 = vadd.f32 %v5842, %v5857
  %v5861 = vadd.f32 %v5847, %v5858
  %v5862 = vmul.f32 %v5859, 0.7978846
  %v5863 = vmul.f32 %v5860, 0.7978846
  %v5864 = vmul.f32 %v5861, 0.7978846
  %v5865 = vtanh.pop %v5862
  %v5866 = vtanh.pop %v5863
  %v5867 = vtanh.pop %v5864
  %v5868 = vadd.f32 %v5865, 1.0
  %v5869 = vadd.f32 %v5866, 1.0
  %v5870 = vadd.f32 %v5867, 1.0
  %v5871 = vmul.f32 %v5868, 0.5
  %v5872 = vmul.f32 %v5869, 0.5
  %v5873 = vmul.f32 %v5870, 0.5
  %v5874 = vmul.f32 %v5837, %v5871
  %v5875 = vmul.f32 %v5842, %v5872
  %v5876 = vmul.f32 %v5847, %v5873
  %v5878 = vlaneseq
  %v5879 = vshrl.u32 %v5878, 7
  %v5880 = vsub.s32 0, %v5879
  %v5881 = vrot.slane %v246, %v5880
  %v5884 = vsel %vm2045, %v5874, 0
  %v5887 = vsel %vm2045, %v5875, 0
  %v5890 = vsel %vm2045, %v5876, 0
  %5892 = vmatprep.subr.mxu0 0.0
  %5893 = vmatpush1.msra.mxu0 %v268
  %5894 = vmatprep.subr.mxu0 0.0
  %5895 = vmatpush1.msra.mxu0 %v269
  %5896 = vmatprep.subr.mxu0 0.0
  %5897 = vmatpush1.msra.mxu0 %v270
  %5898 = vmatprep.subr.mxu0 0.0
  %5899 = vmatpush1.msra.mxu0 %v271
  %5900 = vmatprep.subr.mxu0 0.0
  %5901 = vmatpush1.msra.mxu0 %v272
  %5902 = vmatprep.subr.mxu0 0.0
  %5903 = vmatpush1.msra.mxu0 %v273
  %5904 = vmatprep.subr.mxu0 0.0
  %5905 = vmatpush1.msra.mxu0 %v274
  %5906 = vmatprep.subr.mxu0 0.0
  %5907 = vmatpush1.msra.mxu0 %v275
  %5908 = vmatprep.subr.mxu0 0.0
  %5909 = vmatpush1.msra.mxu0 0.0
  %5910 = vmatprep.subr.mxu0 0.0
  %5911 = vmatpush1.msra.mxu0 0.0
  %5912 = vmatprep.subr.mxu0 0.0
  %5913 = vmatpush1.msra.mxu0 0.0
  %5914 = vmatprep.subr.mxu0 0.0
  %5915 = vmatpush1.msra.mxu0 0.0
  %5916 = vmatprep.subr.mxu0 0.0
  %5917 = vmatpush1.msra.mxu0 0.0
  %5918 = vmatprep.subr.mxu0 0.0
  %5919 = vmatpush1.msra.mxu0 0.0
  %5920 = vmatprep.subr.mxu0 0.0
  %5921 = vmatpush1.msra.mxu0 0.0
  %5922 = vmatprep.subr.mxu0 0.0
  %5923 = vmatpush1.msra.mxu0 0.0
  %5924 = vmatprep.subr.mxu0 0.0
  %5925 = vmatpush1.msra.mxu0 0.0
  %5926 = vmatprep.subr.mxu0 0.0
  %5927 = vmatpush1.msra.mxu0 0.0
  %5928 = vmatprep.subr.mxu0 0.0
  %5929 = vmatpush1.msra.mxu0 0.0
  %5930 = vmatprep.subr.mxu0 0.0
  %5931 = vmatpush1.msra.mxu0 0.0
  %5932 = vmatprep.subr.mxu0 0.0
  %5933 = vmatpush1.msra.mxu0 0.0
  %5934 = vmatprep.subr.mxu0 0.0
  %5935 = vmatpush1.msra.mxu0 0.0
  %5936 = vmatprep.subr.mxu0 0.0
  %5937 = vmatpush1.msra.mxu0 0.0
  %5938 = vmatprep.subr.mxu0 0.0
  %5939 = vmatpush1.msra.mxu0 0.0
  %5940 = vmatprep.subr.mxu0 0.0
  %5941 = vmatpush1.msra.mxu0 0.0
  %5942 = vmatprep.subr.mxu0 0.0
  %5943 = vmatpush1.msra.mxu0 0.0
  %5944 = vmatprep.subr.mxu0 0.0
  %5945 = vmatpush1.msra.mxu0 0.0
  %5946 = vmatprep.subr.mxu0 0.0
  %5947 = vmatpush1.msra.mxu0 0.0
  %5948 = vmatprep.subr.mxu0 0.0
  %5949 = vmatpush1.msra.mxu0 0.0
  %5950 = vmatprep.subr.mxu0 0.0
  %5951 = vmatpush1.msra.mxu0 0.0
  %5952 = vmatprep.subr.mxu0 0.0
  %5953 = vmatpush1.msra.mxu0 0.0
  %5954 = vmatprep.subr.mxu0 0.0
  %5955 = vmatpush1.msra.mxu0 0.0
  %5956 = vmatprep.mubr.f32.mxu0 0.0
  %5957 = vmatmul.mubr.f32.gmra.mrb[0].mxu0 %v5884
  %v5958 = vpop.f32.mrb[0].mxu0
  %v5959 = vadd.f32 %v5881, %v5958
  %v5960 = vpop.f32.mrb[0].mxu0
  %5961 = vmatprep.mubr.f32.mxu0 0.0
  %5962 = vmatmul.mubr.f32.gmra.mrb[0].mxu0 %v5887
  %v5963 = vpop.f32.mrb[0].mxu0
  %v5964 = vadd.f32 %v5881, %v5963
  %v5965 = vpop.f32.mrb[0].mxu0
  %5966 = vmatprep.mubr.f32.mxu0 0.0
  %5967 = vmatmul.mubr.f32.gmra.mrb[0].mxu0 %v5890
  %v5968 = vpop.f32.mrb[0].mxu0
  %v5969 = vadd.f32 %v5881, %v5968
  %v5970 = vpop.f32.mrb[0].mxu0
  %5971 = vdwg.mxu0
  %v5972 = vadd.f32 %v5752, %v5959
  %v5973 = vadd.f32 %v5753, %v5964
  %v5974 = vadd.f32 %v5754, %v5969
  %v5975 = vsel %vm333, %v5972, 0.0
  %5976 = vadd.xlane.f32.xlu0 %v5975
  %v5977 = vpop.xlane.xlu0 %5976
  %v5978 = vsel %vm333, %v5973, 0.0
  %5979 = vadd.xlane.f32.xlu0 %v5978
  %v5980 = vpop.xlane.xlu0 %5979
  %v5981 = vsel %vm1864, %v5974, 0.0
  %5982 = vadd.xlane.f32.xlu0 %v5981
  %v5983 = vpop.xlane.xlu0 %5982
  %v5984 = vmul.f32 %v5977, %v1868
  %v5985 = vmul.f32 %v5980, %v1868
  %v5986 = vmul.f32 %v5983, %v1868
  %v5987 = vsub.f32 %v5972, %v5984
  %v5988 = vsub.f32 %v5973, %v5985
  %v5989 = vsub.f32 %v5974, %v5986
  %v5990 = vmul.f32 %v5987, %v5987
  %v5991 = vmul.f32 %v5988, %v5988
  %v5992 = vmul.f32 %v5989, %v5989
  %v5993 = vsel %vm333, %v5990, 0.0
  %5994 = vadd.xlane.f32.xlu0 %v5993
  %v5995 = vpop.xlane.xlu0 %5994
  %v5996 = vsel %vm333, %v5991, 0.0
  %5997 = vadd.xlane.f32.xlu0 %v5996
  %v5998 = vpop.xlane.xlu0 %5997
  %v5999 = vsel %vm1864, %v5992, 0.0
  %6000 = vadd.xlane.f32.xlu0 %v5999
  %v6001 = vpop.xlane.xlu0 %6000
  %v6002 = vmul.f32 %v5995, %v1868
  %v6003 = vmul.f32 %v5998, %v1868
  %v6004 = vmul.f32 %v6001, %v1868
  %v6005 = vadd.f32 %v6002, 1e-05
  %v6006 = vadd.f32 %v6003, 1e-05
  %v6007 = vadd.f32 %v6004, 1e-05
  %v6008 = vrsqrt.pop %v6005
  %v6009 = vrsqrt.pop %v6006
  %v6010 = vrsqrt.pop %v6007
  %v6011 = vmul.f32 %v5987, %v6008
  %v6012 = vmul.f32 %v5988, %v6009
  %v6013 = vmul.f32 %v5989, %v6010
  %v6015 = vlaneseq
  %v6016 = vshrl.u32 %v6015, 7
  %v6017 = vsub.s32 0, %v6016
  %v6018 = vrot.slane %v258, %v6017
  %v6020 = vmul.f32 %v6011, %v6018
  %v6021 = vmul.f32 %v6012, %v6018
  %v6022 = vmul.f32 %v6013, %v6018
  %v6024 = vlaneseq
  %v6025 = vshrl.u32 %v6024, 7
  %v6026 = vsub.s32 0, %v6025
  %v6027 = vrot.slane %v256, %v6026
  %v6029 = vadd.f32 %v6020, %v6027
  %v6030 = vadd.f32 %v6021, %v6027
  %v6031 = vadd.f32 %v6022, %v6027
  %v6033 = vlaneseq
  %v6034 = vshrl.u32 %v6033, 7
  %v6035 = vsub.s32 0, %v6034
  %v6036 = vrot.slane %v251, %v6035
  %v6039 = vsel %vm333, %v6029, 0
  %v6042 = vsel %vm333, %v6030, 0
  %v6045 = vsel %vm333, %v6031, 0
  %6047 = vmatprep.subr.mxu0 0.0
  %6048 = vmatpush1.msra.mxu0 %v296
  %6049 = vmatprep.subr.mxu0 0.0
  %6050 = vmatpush1.msra.mxu0 %v297
  %6051 = vmatprep.subr.mxu0 0.0
  %6052 = vmatpush1.msra.mxu0 %v298
  %6053 = vmatprep.subr.mxu0 0.0
  %6054 = vmatpush1.msra.mxu0 %v299
  %6055 = vmatprep.subr.mxu0 0.0
  %6056 = vmatpush1.msra.mxu0 0.0
  %6057 = vmatprep.subr.mxu0 0.0
  %6058 = vmatpush1.msra.mxu0 0.0
  %6059 = vmatprep.subr.mxu0 0.0
  %6060 = vmatpush1.msra.mxu0 0.0
  %6061 = vmatprep.subr.mxu0 0.0
  %6062 = vmatpush1.msra.mxu0 0.0
  %6063 = vmatprep.subr.mxu0 0.0
  %6064 = vmatpush1.msra.mxu0 0.0
  %6065 = vmatprep.subr.mxu0 0.0
  %6066 = vmatpush1.msra.mxu0 0.0
  %6067 = vmatprep.subr.mxu0 0.0
  %6068 = vmatpush1.msra.mxu0 0.0
  %6069 = vmatprep.subr.mxu0 0.0
  %6070 = vmatpush1.msra.mxu0 0.0
  %6071 = vmatprep.subr.mxu0 0.0
  %6072 = vmatpush1.msra.mxu0 0.0
  %6073 = vmatprep.subr.mxu0 0.0
  %6074 = vmatpush1.msra.mxu0 0.0
  %6075 = vmatprep.subr.mxu0 0.0
  %6076 = vmatpush1.msra.mxu0 0.0
  %6077 = vmatprep.subr.mxu0 0.0
  %6078 = vmatpush1.msra.mxu0 0.0
  %6079 = vmatprep.subr.mxu0 0.0
  %6080 = vmatpush1.msra.mxu0 0.0
  %6081 = vmatprep.subr.mxu0 0.0
  %6082 = vmatpush1.msra.mxu0 0.0
  %6083 = vmatprep.subr.mxu0 0.0
  %6084 = vmatpush1.msra.mxu0 0.0
  %6085 = vmatprep.subr.mxu0 0.0
  %6086 = vmatpush1.msra.mxu0 0.0
  %6087 = vmatprep.subr.mxu0 0.0
  %6088 = vmatpush1.msra.mxu0 0.0
  %6089 = vmatprep.subr.mxu0 0.0
  %6090 = vmatpush1.msra.mxu0 0.0
  %6091 = vmatprep.subr.mxu0 0.0
  %6092 = vmatpush1.msra.mxu0 0.0
  %6093 = vmatprep.subr.mxu0 0.0
  %6094 = vmatpush1.msra.mxu0 0.0
  %6095 = vmatprep.subr.mxu0 0.0
  %6096 = vmatpush1.msra.mxu0 0.0
  %6097 = vmatprep.subr.mxu0 0.0
  %6098 = vmatpush1.msra.mxu0 0.0
  %6099 = vmatprep.subr.mxu0 0.0
  %6100 = vmatpush1.msra.mxu0 0.0
  %6101 = vmatprep.subr.mxu0 0.0
  %6102 = vmatpush1.msra.mxu0 0.0
  %6103 = vmatprep.subr.mxu0 0.0
  %6104 = vmatpush1.msra.mxu0 0.0
  %6105 = vmatprep.subr.mxu0 0.0
  %6106 = vmatpush1.msra.mxu0 0.0
  %6107 = vmatprep.subr.mxu0 0.0
  %6108 = vmatpush1.msra.mxu0 0.0
  %6109 = vmatprep.subr.mxu0 0.0
  %6110 = vmatpush1.msra.mxu0 0.0
  %6111 = vmatprep.mubr.f32.mxu0 0.0
  %6112 = vmatmul.mubr.f32.gmra.mrb[0].mxu0 %v6039
  %v6113 = vpop.f32.mrb[0].mxu0
  %v6114 = vadd.f32 %v6036, %v6113
  %v6115 = vpop.f32.mrb[0].mxu0
  %6116 = vmatprep.mubr.f32.mxu0 0.0
  %6117 = vmatmul.mubr.f32.gmra.mrb[0].mxu0 %v6042
  %v6118 = vpop.f32.mrb[0].mxu0
  %v6119 = vadd.f32 %v6036, %v6118
  %v6120 = vpop.f32.mrb[0].mxu0
  %6121 = vmatprep.mubr.f32.mxu0 0.0
  %6122 = vmatmul.mubr.f32.gmra.mrb[0].mxu0 %v6045
  %v6123 = vpop.f32.mrb[0].mxu0
  %v6124 = vadd.f32 %v6036, %v6123
  %v6125 = vpop.f32.mrb[0].mxu0
  %6126 = vdwg.mxu0
  %v6127 = vmul.f32 %v6114, 0.35355338
  %v6128 = vmul.f32 %v6119, 0.35355338
  %v6129 = vmul.f32 %v6124, 0.35355338
  %6134 = vrot.lane.b32.xlu0 %v296, 96
  %v6135 = vpop.permute.xlu0 %6134
  %6136 = vrot.lane.b32.xlu0 %v297, 96
  %v6137 = vpop.permute.xlu0 %6136
  %6138 = vrot.lane.b32.xlu0 %v298, 96
  %v6139 = vpop.permute.xlu0 %6138
  %6140 = vrot.lane.b32.xlu0 %v299, 96
  %v6141 = vpop.permute.xlu0 %6140
  %6146 = vrot.lane.b32.xlu0 %v6036, 96
  %v6147 = vpop.permute.xlu0 %6146
  %6149 = vmatprep.subr.mxu0 0.0
  %6150 = vmatpush1.msra.mxu0 %v6135
  %6151 = vmatprep.subr.mxu0 0.0
  %6152 = vmatpush1.msra.mxu0 %v6137
  %6153 = vmatprep.subr.mxu0 0.0
  %6154 = vmatpush1.msra.mxu0 %v6139
  %6155 = vmatprep.subr.mxu0 0.0
  %6156 = vmatpush1.msra.mxu0 %v6141
  %6157 = vmatprep.subr.mxu0 0.0
  %6158 = vmatpush1.msra.mxu0 0.0
  %6159 = vmatprep.subr.mxu0 0.0
  %6160 = vmatpush1.msra.mxu0 0.0
  %6161 = vmatprep.subr.mxu0 0.0
  %6162 = vmatpush1.msra.mxu0 0.0
  %6163 = vmatprep.subr.mxu0 0.0
  %6164 = vmatpush1.msra.mxu0 0.0
  %6165 = vmatprep.subr.mxu0 0.0
  %6166 = vmatpush1.msra.mxu0 0.0
  %6167 = vmatprep.subr.mxu0 0.0
  %6168 = vmatpush1.msra.mxu0 0.0
  %6169 = vmatprep.subr.mxu0 0.0
  %6170 = vmatpush1.msra.mxu0 0.0
  %6171 = vmatprep.subr.mxu0 0.0
  %6172 = vmatpush1.msra.mxu0 0.0
  %6173 = vmatprep.subr.mxu0 0.0
  %6174 = vmatpush1.msra.mxu0 0.0
  %6175 = vmatprep.subr.mxu0 0.0
  %6176 = vmatpush1.msra.mxu0 0.0
  %6177 = vmatprep.subr.mxu0 0.0
  %6178 = vmatpush1.msra.mxu0 0.0
  %6179 = vmatprep.subr.mxu0 0.0
  %6180 = vmatpush1.msra.mxu0 0.0
  %6181 = vmatprep.subr.mxu0 0.0
  %6182 = vmatpush1.msra.mxu0 0.0
  %6183 = vmatprep.subr.mxu0 0.0
  %6184 = vmatpush1.msra.mxu0 0.0
  %6185 = vmatprep.subr.mxu0 0.0
  %6186 = vmatpush1.msra.mxu0 0.0
  %6187 = vmatprep.subr.mxu0 0.0
  %6188 = vmatpush1.msra.mxu0 0.0
  %6189 = vmatprep.subr.mxu0 0.0
  %6190 = vmatpush1.msra.mxu0 0.0
  %6191 = vmatprep.subr.mxu0 0.0
  %6192 = vmatpush1.msra.mxu0 0.0
  %6193 = vmatprep.subr.mxu0 0.0
  %6194 = vmatpush1.msra.mxu0 0.0
  %6195 = vmatprep.subr.mxu0 0.0
  %6196 = vmatpush1.msra.mxu0 0.0
  %6197 = vmatprep.subr.mxu0 0.0
  %6198 = vmatpush1.msra.mxu0 0.0
  %6199 = vmatprep.subr.mxu0 0.0
  %6200 = vmatpush1.msra.mxu0 0.0
  %6201 = vmatprep.subr.mxu0 0.0
  %6202 = vmatpush1.msra.mxu0 0.0
  %6203 = vmatprep.subr.mxu0 0.0
  %6204 = vmatpush1.msra.mxu0 0.0
  %6205 = vmatprep.subr.mxu0 0.0
  %6206 = vmatpush1.msra.mxu0 0.0
  %6207 = vmatprep.subr.mxu0 0.0
  %6208 = vmatpush1.msra.mxu0 0.0
  %6209 = vmatprep.subr.mxu0 0.0
  %6210 = vmatpush1.msra.mxu0 0.0
  %6211 = vmatprep.subr.mxu0 0.0
  %6212 = vmatpush1.msra.mxu0 0.0
  %6213 = vmatprep.mubr.f32.mxu0 0.0
  %6214 = vmatmul.mubr.f32.gmra.mrb[0].mxu0 %v2202
  %v6215 = vpop.f32.mrb[0].mxu0
  %v6216 = vadd.f32 %v6147, %v6215
  %v6217 = vpop.f32.mrb[0].mxu0
  %6218 = vmatprep.mubr.f32.mxu0 0.0
  %6219 = vmatmul.mubr.f32.gmra.mrb[0].mxu0 %v2205
  %v6220 = vpop.f32.mrb[0].mxu0
  %v6221 = vadd.f32 %v6147, %v6220
  %v6222 = vpop.f32.mrb[0].mxu0
  %6223 = vmatprep.mubr.f32.mxu0 0.0
  %6224 = vmatmul.mubr.f32.gmra.mrb[0].mxu0 %v2208
  %v6225 = vpop.f32.mrb[0].mxu0
  %v6226 = vadd.f32 %v6147, %v6225
  %v6227 = vpop.f32.mrb[0].mxu0
  %6228 = vdwg.mxu0
  %6232 = vrot.lane.b32.xlu0 %v6114, 96
  %v6233 = vpop.permute.xlu0 %6232
  %6234 = vrot.lane.b32.xlu0 %v6119, 96
  %v6235 = vpop.permute.xlu0 %6234
  %6236 = vrot.lane.b32.xlu0 %v6124, 96
  %v6237 = vpop.permute.xlu0 %6236
  %v6239 = vsel %vm3495, %v6127, 0
  %v6242 = vsel %vm3495, %v6128, 0
  %v6245 = vsel %vm3495, %v6129, 0
  %v6247 = vsel %vm3495, %v6233, 0
  %v6249 = vsel %vm3495, %v6235, 0
  %v6251 = vsel %vm3495, %v6237, 0
  %6253 = vmatprep.subr.mxu0 0.0
  %6254 = vmatpush1.xpose.msra.mxu0 %v6247
  %6255 = vmatprep.subr.mxu0 0.0
  %6256 = vmatpush1.xpose.msra.mxu0 %v6249
  %6257 = vmatprep.subr.mxu0 0.0
  %6258 = vmatpush1.xpose.msra.mxu0 %v6251
  %6259 = vmatprep.subr.mxu0 0.0
  %6260 = vmatpush1.xpose.msra.mxu0 0.0
  %6261 = vmatprep.subr.mxu0 0.0
  %6262 = vmatpush1.xpose.msra.mxu0 0.0
  %6263 = vmatprep.subr.mxu0 0.0
  %6264 = vmatpush1.xpose.msra.mxu0 0.0
  %6265 = vmatprep.subr.mxu0 0.0
  %6266 = vmatpush1.xpose.msra.mxu0 0.0
  %6267 = vmatprep.subr.mxu0 0.0
  %6268 = vmatpush1.xpose.msra.mxu0 0.0
  %6269 = vmatprep.subr.mxu0 0.0
  %6270 = vmatpush1.xpose.msra.mxu0 0.0
  %6271 = vmatprep.subr.mxu0 0.0
  %6272 = vmatpush1.xpose.msra.mxu0 0.0
  %6273 = vmatprep.subr.mxu0 0.0
  %6274 = vmatpush1.xpose.msra.mxu0 0.0
  %6275 = vmatprep.subr.mxu0 0.0
  %6276 = vmatpush1.xpose.msra.mxu0 0.0
  %6277 = vmatprep.subr.mxu0 0.0
  %6278 = vmatpush1.xpose.msra.mxu0 0.0
  %6279 = vmatprep.subr.mxu0 0.0
  %6280 = vmatpush1.xpose.msra.mxu0 0.0
  %6281 = vmatprep.subr.mxu0 0.0
  %6282 = vmatpush1.xpose.msra.mxu0 0.0
  %6283 = vmatprep.subr.mxu0 0.0
  %6284 = vmatpush1.xpose.msra.mxu0 0.0
  %6285 = vmatprep.subr.mxu0 0.0
  %6286 = vmatpush1.xpose.msra.mxu0 0.0
  %6287 = vmatprep.subr.mxu0 0.0
  %6288 = vmatpush1.xpose.msra.mxu0 0.0
  %6289 = vmatprep.subr.mxu0 0.0
  %6290 = vmatpush1.xpose.msra.mxu0 0.0
  %6291 = vmatprep.subr.mxu0 0.0
  %6292 = vmatpush1.xpose.msra.mxu0 0.0
  %6293 = vmatprep.subr.mxu0 0.0
  %6294 = vmatpush1.xpose.msra.mxu0 0.0
  %6295 = vmatprep.subr.mxu0 0.0
  %6296 = vmatpush1.xpose.msra.mxu0 0.0
  %6297 = vmatprep.subr.mxu0 0.0
  %6298 = vmatpush1.xpose.msra.mxu0 0.0
  %6299 = vmatprep.subr.mxu0 0.0
  %6300 = vmatpush1.xpose.msra.mxu0 0.0
  %6301 = vmatprep.subr.mxu0 0.0
  %6302 = vmatpush1.xpose.msra.mxu0 0.0
  %6303 = vmatprep.subr.mxu0 0.0
  %6304 = vmatpush1.xpose.msra.mxu0 0.0
  %6305 = vmatprep.subr.mxu0 0.0
  %6306 = vmatpush1.xpose.msra.mxu0 0.0
  %6307 = vmatprep.subr.mxu0 0.0
  %6308 = vmatpush1.xpose.msra.mxu0 0.0
  %6309 = vmatprep.subr.mxu0 0.0
  %6310 = vmatpush1.xpose.msra.mxu0 0.0
  %6311 = vmatprep.subr.mxu0 0.0
  %6312 = vmatpush1.xpose.msra.mxu0 0.0
  %6313 = vmatprep.subr.mxu0 0.0
  %6314 = vmatpush1.xpose.msra.mxu0 0.0
  %6315 = vmatprep.subr.mxu0 0.0
  %6316 = vmatpush1.xpose.msra.mxu0 0.0
  %6317 = vmatprep.mubr.f32.mxu0 0.0
  %6318 = vmatmul.mubr.f32.gmra.mrb[0].mxu0 %v6239
  %v6319 = vpop.f32.mrb[0].mxu0
  %v6320 = vadd.f32 %v177, %v6319
  %v6321 = vpop.f32.mrb[0].mxu0
  %6322 = vmatprep.mubr.f32.mxu0 0.0
  %6323 = vmatmul.mubr.f32.gmra.mrb[0].mxu0 %v6242
  %v6324 = vpop.f32.mrb[0].mxu0
  %v6325 = vadd.f32 %v178, %v6324
  %v6326 = vpop.f32.mrb[0].mxu0
  %6327 = vmatprep.mubr.f32.mxu0 0.0
  %6328 = vmatmul.mubr.f32.gmra.mrb[0].mxu0 %v6245
  %v6329 = vpop.f32.mrb[0].mxu0
  %v6330 = vadd.f32 %v179, %v6329
  %v6331 = vpop.f32.mrb[0].mxu0
  %6332 = vdwg.mxu0
  %v6334 = vsel %vm3495, %v6216, 0
  %v6337 = vsel %vm3495, %v6221, 0
  %v6340 = vsel %vm3495, %v6226, 0
  %6342 = vmatprep.subr.mxu0 0.0
  %6343 = vmatpush1.xpose.msra.mxu0 %v6334
  %6344 = vmatprep.subr.mxu0 0.0
  %6345 = vmatpush1.xpose.msra.mxu0 %v6337
  %6346 = vmatprep.subr.mxu0 0.0
  %6347 = vmatpush1.xpose.msra.mxu0 %v6340
  %6348 = vmatprep.subr.mxu0 0.0
  %6349 = vmatpush1.xpose.msra.mxu0 0.0
  %6350 = vmatprep.subr.mxu0 0.0
  %6351 = vmatpush1.xpose.msra.mxu0 0.0
  %6352 = vmatprep.subr.mxu0 0.0
  %6353 = vmatpush1.xpose.msra.mxu0 0.0
  %6354 = vmatprep.subr.mxu0 0.0
  %6355 = vmatpush1.xpose.msra.mxu0 0.0
  %6356 = vmatprep.subr.mxu0 0.0
  %6357 = vmatpush1.xpose.msra.mxu0 0.0
  %6358 = vmatprep.subr.mxu0 0.0
  %6359 = vmatpush1.xpose.msra.mxu0 0.0
  %6360 = vmatprep.subr.mxu0 0.0
  %6361 = vmatpush1.xpose.msra.mxu0 0.0
  %6362 = vmatprep.subr.mxu0 0.0
  %6363 = vmatpush1.xpose.msra.mxu0 0.0
  %6364 = vmatprep.subr.mxu0 0.0
  %6365 = vmatpush1.xpose.msra.mxu0 0.0
  %6366 = vmatprep.subr.mxu0 0.0
  %6367 = vmatpush1.xpose.msra.mxu0 0.0
  %6368 = vmatprep.subr.mxu0 0.0
  %6369 = vmatpush1.xpose.msra.mxu0 0.0
  %6370 = vmatprep.subr.mxu0 0.0
  %6371 = vmatpush1.xpose.msra.mxu0 0.0
  %6372 = vmatprep.subr.mxu0 0.0
  %6373 = vmatpush1.xpose.msra.mxu0 0.0
  %6374 = vmatprep.subr.mxu0 0.0
  %6375 = vmatpush1.xpose.msra.mxu0 0.0
  %6376 = vmatprep.subr.mxu0 0.0
  %6377 = vmatpush1.xpose.msra.mxu0 0.0
  %6378 = vmatprep.subr.mxu0 0.0
  %6379 = vmatpush1.xpose.msra.mxu0 0.0
  %6380 = vmatprep.subr.mxu0 0.0
  %6381 = vmatpush1.xpose.msra.mxu0 0.0
  %6382 = vmatprep.subr.mxu0 0.0
  %6383 = vmatpush1.xpose.msra.mxu0 0.0
  %6384 = vmatprep.subr.mxu0 0.0
  %6385 = vmatpush1.xpose.msra.mxu0 0.0
  %6386 = vmatprep.subr.mxu0 0.0
  %6387 = vmatpush1.xpose.msra.mxu0 0.0
  %6388 = vmatprep.subr.mxu0 0.0
  %6389 = vmatpush1.xpose.msra.mxu0 0.0
  %6390 = vmatprep.subr.mxu0 0.0
  %6391 = vmatpush1.xpose.msra.mxu0 0.0
  %6392 = vmatprep.subr.mxu0 0.0
  %6393 = vmatpush1.xpose.msra.mxu0 0.0
  %6394 = vmatprep.subr.mxu0 0.0
  %6395 = vmatpush1.xpose.msra.mxu0 0.0
  %6396 = vmatprep.subr.mxu0 0.0
  %6397 = vmatpush1.xpose.msra.mxu0 0.0
  %6398 = vmatprep.subr.mxu0 0.0
  %6399 = vmatpush1.xpose.msra.mxu0 0.0
  %6400 = vmatprep.subr.mxu0 0.0
  %6401 = vmatpush1.xpose.msra.mxu0 0.0
  %6402 = vmatprep.subr.mxu0 0.0
  %6403 = vmatpush1.xpose.msra.mxu0 0.0
  %6404 = vmatprep.subr.mxu0 0.0
  %6405 = vmatpush1.xpose.msra.mxu0 0.0
  %6406 = vmatprep.mubr.f32.mxu0 0.0
  %6407 = vmatmul.mubr.f32.gmra.mrb[0].mxu0 %v6239
  %v6408 = vpop.f32.mrb[0].mxu0
  %v6409 = vadd.f32 %v177, %v6408
  %v6410 = vpop.f32.mrb[0].mxu0
  %6411 = vmatprep.mubr.f32.mxu0 0.0
  %6412 = vmatmul.mubr.f32.gmra.mrb[0].mxu0 %v6242
  %v6413 = vpop.f32.mrb[0].mxu0
  %v6414 = vadd.f32 %v178, %v6413
  %v6415 = vpop.f32.mrb[0].mxu0
  %6416 = vmatprep.mubr.f32.mxu0 0.0
  %6417 = vmatmul.mubr.f32.gmra.mrb[0].mxu0 %v6245
  %v6418 = vpop.f32.mrb[0].mxu0
  %v6419 = vadd.f32 %v179, %v6418
  %v6420 = vpop.f32.mrb[0].mxu0
  %6421 = vdwg.mxu0
  %v6422 = vsel %vm1298, %v6320, -inf
  %6423 = vmax.xlane.f32.xlu0 %v6422
  %v6424 = vpop.xlane.xlu0 %6423
  %v6425 = vsel %vm1298, %v6325, -inf
  %6426 = vmax.xlane.f32.xlu0 %v6425
  %v6427 = vpop.xlane.xlu0 %6426
  %v6428 = vsel %vm1305, %v6330, -inf
  %6429 = vmax.xlane.f32.xlu0 %v6428
  %v6430 = vpop.xlane.xlu0 %6429
  %v6431 = vsel %vm1298, %v6409, -inf
  %6432 = vmax.xlane.f32.xlu0 %v6431
  %v6433 = vpop.xlane.xlu0 %6432
  %v6434 = vsel %vm1298, %v6414, -inf
  %6435 = vmax.xlane.f32.xlu0 %v6434
  %v6436 = vpop.xlane.xlu0 %6435
  %v6437 = vsel %vm1305, %v6419, -inf
  %6438 = vmax.xlane.f32.xlu0 %v6437
  %v6439 = vpop.xlane.xlu0 %6438
  %v6440 = vmax.f32 %v6424, %v6433
  %v6441 = vmax.f32 %v6427, %v6436
  %v6442 = vmax.f32 %v6430, %v6439
  %v6443 = vsub.f32 %v6320, %v6440
  %v6444 = vsub.f32 %v6325, %v6441
  %v6445 = vsub.f32 %v6330, %v6442
  %v6446 = vmul.f32 %v6443, 1.442695
  %v6447 = vpow.pop %v6446
  %v6448 = vmul.f32 %v6444, 1.442695
  %v6449 = vpow.pop %v6448
  %v6450 = vmul.f32 %v6445, 1.442695
  %v6451 = vpow.pop %v6450
  %v6452 = vsub.f32 %v6409, %v6440
  %v6453 = vsub.f32 %v6414, %v6441
  %v6454 = vsub.f32 %v6419, %v6442
  %v6455 = vmul.f32 %v6452, 1.442695
  %v6456 = vpow.pop %v6455
  %v6457 = vmul.f32 %v6453, 1.442695
  %v6458 = vpow.pop %v6457
  %v6459 = vmul.f32 %v6454, 1.442695
  %v6460 = vpow.pop %v6459
  %v6461 = vsel %vm1298, %v6447, 0.0
  %6462 = vadd.xlane.f32.xlu0 %v6461
  %v6463 = vpop.xlane.xlu0 %6462
  %v6464 = vsel %vm1298, %v6449, 0.0
  %6465 = vadd.xlane.f32.xlu0 %v6464
  %v6466 = vpop.xlane.xlu0 %6465
  %v6467 = vsel %vm1305, %v6451, 0.0
  %6468 = vadd.xlane.f32.xlu0 %v6467
  %v6469 = vpop.xlane.xlu0 %6468
  %v6470 = vsel %vm1298, %v6456, 0.0
  %6471 = vadd.xlane.f32.xlu0 %v6470
  %v6472 = vpop.xlane.xlu0 %6471
  %v6473 = vsel %vm1298, %v6458, 0.0
  %6474 = vadd.xlane.f32.xlu0 %v6473
  %v6475 = vpop.xlane.xlu0 %6474
  %v6476 = vsel %vm1305, %v6460, 0.0
  %6477 = vadd.xlane.f32.xlu0 %v6476
  %v6478 = vpop.xlane.xlu0 %6477
  %v6479 = vadd.f32 %v6463, %v6472
  %v6480 = vadd.f32 %v6466, %v6475
  %v6481 = vadd.f32 %v6469, %v6478
  %v6482 = vrcp.pop %v6479
  %v6483 = vrcp.pop %v6480
  %v6484 = vrcp.pop %v6481
  %6485 = vrot.lane.b32.xlu0 %v6216, 96
  %v6486 = vpop.permute.xlu0 %6485
  %6487 = vrot.lane.b32.xlu0 %v6221, 96
  %v6488 = vpop.permute.xlu0 %6487
  %6489 = vrot.lane.b32.xlu0 %v6226, 96
  %v6490 = vpop.permute.xlu0 %6489
  %v6494 = vsel %vm1298, %v6456, 0
  %v6497 = vsel %vm1298, %v6458, 0
  %v6500 = vsel %vm1298, %v6460, 0
  %v6502 = vsel %vm765, %v6490, 0
  %6504 = vmatprep.subr.mxu0 0.0
  %6505 = vmatpush1.msra.mxu0 %v6486
  %6506 = vmatprep.subr.mxu0 0.0
  %6507 = vmatpush1.msra.mxu0 %v6488
  %6508 = vmatprep.subr.mxu0 0.0
  %6509 = vmatpush1.msra.mxu0 %v6502
  %6510 = vmatprep.subr.mxu0 0.0
  %6511 = vmatpush1.msra.mxu0 0.0
  %6512 = vmatprep.subr.mxu0 0.0
  %6513 = vmatpush1.msra.mxu0 0.0
  %6514 = vmatprep.subr.mxu0 0.0
  %6515 = vmatpush1.msra.mxu0 0.0
  %6516 = vmatprep.subr.mxu0 0.0
  %6517 = vmatpush1.msra.mxu0 0.0
  %6518 = vmatprep.subr.mxu0 0.0
  %6519 = vmatpush1.msra.mxu0 0.0
  %6520 = vmatprep.subr.mxu0 0.0
  %6521 = vmatpush1.msra.mxu0 0.0
  %6522 = vmatprep.subr.mxu0 0.0
  %6523 = vmatpush1.msra.mxu0 0.0
  %6524 = vmatprep.subr.mxu0 0.0
  %6525 = vmatpush1.msra.mxu0 0.0
  %6526 = vmatprep.subr.mxu0 0.0
  %6527 = vmatpush1.msra.mxu0 0.0
  %6528 = vmatprep.subr.mxu0 0.0
  %6529 = vmatpush1.msra.mxu0 0.0
  %6530 = vmatprep.subr.mxu0 0.0
  %6531 = vmatpush1.msra.mxu0 0.0
  %6532 = vmatprep.subr.mxu0 0.0
  %6533 = vmatpush1.msra.mxu0 0.0
  %6534 = vmatprep.subr.mxu0 0.0
  %6535 = vmatpush1.msra.mxu0 0.0
  %6536 = vmatprep.subr.mxu0 0.0
  %6537 = vmatpush1.msra.mxu0 0.0
  %6538 = vmatprep.subr.mxu0 0.0
  %6539 = vmatpush1.msra.mxu0 0.0
  %6540 = vmatprep.subr.mxu0 0.0
  %6541 = vmatpush1.msra.mxu0 0.0
  %6542 = vmatprep.subr.mxu0 0.0
  %6543 = vmatpush1.msra.mxu0 0.0
  %6544 = vmatprep.subr.mxu0 0.0
  %6545 = vmatpush1.msra.mxu0 0.0
  %6546 = vmatprep.subr.mxu0 0.0
  %6547 = vmatpush1.msra.mxu0 0.0
  %6548 = vmatprep.subr.mxu0 0.0
  %6549 = vmatpush1.msra.mxu0 0.0
  %6550 = vmatprep.subr.mxu0 0.0
  %6551 = vmatpush1.msra.mxu0 0.0
  %6552 = vmatprep.subr.mxu0 0.0
  %6553 = vmatpush1.msra.mxu0 0.0
  %6554 = vmatprep.subr.mxu0 0.0
  %6555 = vmatpush1.msra.mxu0 0.0
  %6556 = vmatprep.subr.mxu0 0.0
  %6557 = vmatpush1.msra.mxu0 0.0
  %6558 = vmatprep.subr.mxu0 0.0
  %6559 = vmatpush1.msra.mxu0 0.0
  %6560 = vmatprep.subr.mxu0 0.0
  %6561 = vmatpush1.msra.mxu0 0.0
  %6562 = vmatprep.subr.mxu0 0.0
  %6563 = vmatpush1.msra.mxu0 0.0
  %6564 = vmatprep.subr.mxu0 0.0
  %6565 = vmatpush1.msra.mxu0 0.0
  %6566 = vmatprep.subr.mxu0 0.0
  %6567 = vmatpush1.msra.mxu0 0.0
  %6568 = vmatprep.mubr.f32.mxu0 0.0
  %6569 = vmatmul.mubr.f32.gmra.mrb[0].mxu0 %v6494
  %v6570 = vpop.f32.mrb[0].mxu0
  %v6571 = vadd.f32 0.0, %v6570
  %v6572 = vpop.f32.mrb[0].mxu0
  %6573 = vmatprep.mubr.f32.mxu0 0.0
  %6574 = vmatmul.mubr.f32.gmra.mrb[0].mxu0 %v6497
  %v6575 = vpop.f32.mrb[0].mxu0
  %v6576 = vadd.f32 0.0, %v6575
  %v6577 = vpop.f32.mrb[0].mxu0
  %6578 = vmatprep.mubr.f32.mxu0 0.0
  %6579 = vmatmul.mubr.f32.gmra.mrb[0].mxu0 %v6500
  %v6580 = vpop.f32.mrb[0].mxu0
  %v6581 = vadd.f32 0.0, %v6580
  %v6582 = vpop.f32.mrb[0].mxu0
  %6583 = vdwg.mxu0
  %6584 = vrot.lane.b32.xlu0 %v6114, 64
  %v6585 = vpop.permute.xlu0 %6584
  %6586 = vrot.lane.b32.xlu0 %v6119, 64
  %v6587 = vpop.permute.xlu0 %6586
  %6588 = vrot.lane.b32.xlu0 %v6124, 64
  %v6589 = vpop.permute.xlu0 %6588
  %v6593 = vsel %vm1298, %v6447, 0
  %v6596 = vsel %vm1298, %v6449, 0
  %v6599 = vsel %vm1298, %v6451, 0
  %v6601 = vsel %vm765, %v6589, 0
  %6603 = vmatprep.subr.mxu0 0.0
  %6604 = vmatpush1.msra.mxu0 %v6585
  %6605 = vmatprep.subr.mxu0 0.0
  %6606 = vmatpush1.msra.mxu0 %v6587
  %6607 = vmatprep.subr.mxu0 0.0
  %6608 = vmatpush1.msra.mxu0 %v6601
  %6609 = vmatprep.subr.mxu0 0.0
  %6610 = vmatpush1.msra.mxu0 0.0
  %6611 = vmatprep.subr.mxu0 0.0
  %6612 = vmatpush1.msra.mxu0 0.0
  %6613 = vmatprep.subr.mxu0 0.0
  %6614 = vmatpush1.msra.mxu0 0.0
  %6615 = vmatprep.subr.mxu0 0.0
  %6616 = vmatpush1.msra.mxu0 0.0
  %6617 = vmatprep.subr.mxu0 0.0
  %6618 = vmatpush1.msra.mxu0 0.0
  %6619 = vmatprep.subr.mxu0 0.0
  %6620 = vmatpush1.msra.mxu0 0.0
  %6621 = vmatprep.subr.mxu0 0.0
  %6622 = vmatpush1.msra.mxu0 0.0
  %6623 = vmatprep.subr.mxu0 0.0
  %6624 = vmatpush1.msra.mxu0 0.0
  %6625 = vmatprep.subr.mxu0 0.0
  %6626 = vmatpush1.msra.mxu0 0.0
  %6627 = vmatprep.subr.mxu0 0.0
  %6628 = vmatpush1.msra.mxu0 0.0
  %6629 = vmatprep.subr.mxu0 0.0
  %6630 = vmatpush1.msra.mxu0 0.0
  %6631 = vmatprep.subr.mxu0 0.0
  %6632 = vmatpush1.msra.mxu0 0.0
  %6633 = vmatprep.subr.mxu0 0.0
  %6634 = vmatpush1.msra.mxu0 0.0
  %6635 = vmatprep.subr.mxu0 0.0
  %6636 = vmatpush1.msra.mxu0 0.0
  %6637 = vmatprep.subr.mxu0 0.0
  %6638 = vmatpush1.msra.mxu0 0.0
  %6639 = vmatprep.subr.mxu0 0.0
  %6640 = vmatpush1.msra.mxu0 0.0
  %6641 = vmatprep.subr.mxu0 0.0
  %6642 = vmatpush1.msra.mxu0 0.0
  %6643 = vmatprep.subr.mxu0 0.0
  %6644 = vmatpush1.msra.mxu0 0.0
  %6645 = vmatprep.subr.mxu0 0.0
  %6646 = vmatpush1.msra.mxu0 0.0
  %6647 = vmatprep.subr.mxu0 0.0
  %6648 = vmatpush1.msra.mxu0 0.0
  %6649 = vmatprep.subr.mxu0 0.0
  %6650 = vmatpush1.msra.mxu0 0.0
  %6651 = vmatprep.subr.mxu0 0.0
  %6652 = vmatpush1.msra.mxu0 0.0
  %6653 = vmatprep.subr.mxu0 0.0
  %6654 = vmatpush1.msra.mxu0 0.0
  %6655 = vmatprep.subr.mxu0 0.0
  %6656 = vmatpush1.msra.mxu0 0.0
  %6657 = vmatprep.subr.mxu0 0.0
  %6658 = vmatpush1.msra.mxu0 0.0
  %6659 = vmatprep.subr.mxu0 0.0
  %6660 = vmatpush1.msra.mxu0 0.0
  %6661 = vmatprep.subr.mxu0 0.0
  %6662 = vmatpush1.msra.mxu0 0.0
  %6663 = vmatprep.subr.mxu0 0.0
  %6664 = vmatpush1.msra.mxu0 0.0
  %6665 = vmatprep.subr.mxu0 0.0
  %6666 = vmatpush1.msra.mxu0 0.0
  %6667 = vmatprep.mubr.f32.mxu0 0.0
  %6668 = vmatmul.mubr.f32.gmra.mrb[0].mxu0 %v6593
  %v6669 = vpop.f32.mrb[0].mxu0
  %v6670 = vadd.f32 %v6571, %v6669
  %v6671 = vpop.f32.mrb[0].mxu0
  %6672 = vmatprep.mubr.f32.mxu0 0.0
  %6673 = vmatmul.mubr.f32.gmra.mrb[0].mxu0 %v6596
  %v6674 = vpop.f32.mrb[0].mxu0
  %v6675 = vadd.f32 %v6576, %v6674
  %v6676 = vpop.f32.mrb[0].mxu0
  %6677 = vmatprep.mubr.f32.mxu0 0.0
  %6678 = vmatmul.mubr.f32.gmra.mrb[0].mxu0 %v6599
  %v6679 = vpop.f32.mrb[0].mxu0
  %v6680 = vadd.f32 %v6581, %v6679
  %v6681 = vpop.f32.mrb[0].mxu0
  %6682 = vdwg.mxu0
  %v6683 = vmul.f32 %v6670, %v6482
  %v6684 = vmul.f32 %v6675, %v6483
  %v6685 = vmul.f32 %v6680, %v6484
  %6686 = vrot.lane.b32.xlu0 %v6127, 120
  %v6687 = vpop.permute.xlu0 %6686
  %6688 = vrot.lane.b32.xlu0 %v6128, 120
  %v6689 = vpop.permute.xlu0 %6688
  %6690 = vrot.lane.b32.xlu0 %v6129, 120
  %v6691 = vpop.permute.xlu0 %6690
  %6692 = vrot.lane.b32.xlu0 %v6114, 88
  %v6693 = vpop.permute.xlu0 %6692
  %6694 = vrot.lane.b32.xlu0 %v6119, 88
  %v6695 = vpop.permute.xlu0 %6694
  %6696 = vrot.lane.b32.xlu0 %v6124, 88
  %v6697 = vpop.permute.xlu0 %6696
  %v6698 = vsel %vm3495, %v6687, 0
  %v6700 = vsel %vm3495, %v6689, 0
  %v6702 = vsel %vm3495, %v6691, 0
  %v6704 = vsel %vm3495, %v6693, 0
  %v6706 = vsel %vm3495, %v6695, 0
  %v6708 = vsel %vm3495, %v6697, 0
  %6710 = vmatprep.subr.mxu0 0.0
  %6711 = vmatpush1.xpose.msra.mxu0 %v6704
  %6712 = vmatprep.subr.mxu0 0.0
  %6713 = vmatpush1.xpose.msra.mxu0 %v6706
  %6714 = vmatprep.subr.mxu0 0.0
  %6715 = vmatpush1.xpose.msra.mxu0 %v6708
  %6716 = vmatprep.subr.mxu0 0.0
  %6717 = vmatpush1.xpose.msra.mxu0 0.0
  %6718 = vmatprep.subr.mxu0 0.0
  %6719 = vmatpush1.xpose.msra.mxu0 0.0
  %6720 = vmatprep.subr.mxu0 0.0
  %6721 = vmatpush1.xpose.msra.mxu0 0.0
  %6722 = vmatprep.subr.mxu0 0.0
  %6723 = vmatpush1.xpose.msra.mxu0 0.0
  %6724 = vmatprep.subr.mxu0 0.0
  %6725 = vmatpush1.xpose.msra.mxu0 0.0
  %6726 = vmatprep.subr.mxu0 0.0
  %6727 = vmatpush1.xpose.msra.mxu0 0.0
  %6728 = vmatprep.subr.mxu0 0.0
  %6729 = vmatpush1.xpose.msra.mxu0 0.0
  %6730 = vmatprep.subr.mxu0 0.0
  %6731 = vmatpush1.xpose.msra.mxu0 0.0
  %6732 = vmatprep.subr.mxu0 0.0
  %6733 = vmatpush1.xpose.msra.mxu0 0.0
  %6734 = vmatprep.subr.mxu0 0.0
  %6735 = vmatpush1.xpose.msra.mxu0 0.0
  %6736 = vmatprep.subr.mxu0 0.0
  %6737 = vmatpush1.xpose.msra.mxu0 0.0
  %6738 = vmatprep.subr.mxu0 0.0
  %6739 = vmatpush1.xpose.msra.mxu0 0.0
  %6740 = vmatprep.subr.mxu0 0.0
  %6741 = vmatpush1.xpose.msra.mxu0 0.0
  %6742 = vmatprep.subr.mxu0 0.0
  %6743 = vmatpush1.xpose.msra.mxu0 0.0
  %6744 = vmatprep.subr.mxu0 0.0
  %6745 = vmatpush1.xpose.msra.mxu0 0.0
  %6746 = vmatprep.subr.mxu0 0.0
  %6747 = vmatpush1.xpose.msra.mxu0 0.0
  %6748 = vmatprep.subr.mxu0 0.0
  %6749 = vmatpush1.xpose.msra.mxu0 0.0
  %6750 = vmatprep.subr.mxu0 0.0
  %6751 = vmatpush1.xpose.msra.mxu0 0.0
  %6752 = vmatprep.subr.mxu0 0.0
  %6753 = vmatpush1.xpose.msra.mxu0 0.0
  %6754 = vmatprep.subr.mxu0 0.0
  %6755 = vmatpush1.xpose.msra.mxu0 0.0
  %6756 = vmatprep.subr.mxu0 0.0
  %6757 = vmatpush1.xpose.msra.mxu0 0.0
  %6758 = vmatprep.subr.mxu0 0.0
  %6759 = vmatpush1.xpose.msra.mxu0 0.0
  %6760 = vmatprep.subr.mxu0 0.0
  %6761 = vmatpush1.xpose.msra.mxu0 0.0
  %6762 = vmatprep.subr.mxu0 0.0
  %6763 = vmatpush1.xpose.msra.mxu0 0.0
  %6764 = vmatprep.subr.mxu0 0.0
  %6765 = vmatpush1.xpose.msra.mxu0 0.0
  %6766 = vmatprep.subr.mxu0 0.0
  %6767 = vmatpush1.xpose.msra.mxu0 0.0
  %6768 = vmatprep.subr.mxu0 0.0
  %6769 = vmatpush1.xpose.msra.mxu0 0.0
  %6770 = vmatprep.subr.mxu0 0.0
  %6771 = vmatpush1.xpose.msra.mxu0 0.0
  %6772 = vmatprep.subr.mxu0 0.0
  %6773 = vmatpush1.xpose.msra.mxu0 0.0
  %6774 = vmatprep.mubr.f32.mxu0 0.0
  %6775 = vmatmul.mubr.f32.gmra.mrb[0].mxu0 %v6698
  %v6776 = vpop.f32.mrb[0].mxu0
  %v6777 = vadd.f32 %v177, %v6776
  %v6778 = vpop.f32.mrb[0].mxu0
  %6779 = vmatprep.mubr.f32.mxu0 0.0
  %6780 = vmatmul.mubr.f32.gmra.mrb[0].mxu0 %v6700
  %v6781 = vpop.f32.mrb[0].mxu0
  %v6782 = vadd.f32 %v178, %v6781
  %v6783 = vpop.f32.mrb[0].mxu0
  %6784 = vmatprep.mubr.f32.mxu0 0.0
  %6785 = vmatmul.mubr.f32.gmra.mrb[0].mxu0 %v6702
  %v6786 = vpop.f32.mrb[0].mxu0
  %v6787 = vadd.f32 %v179, %v6786
  %v6788 = vpop.f32.mrb[0].mxu0
  %6789 = vdwg.mxu0
  %6790 = vrot.lane.b32.xlu0 %v6216, 120
  %v6791 = vpop.permute.xlu0 %6790
  %6792 = vrot.lane.b32.xlu0 %v6221, 120
  %v6793 = vpop.permute.xlu0 %6792
  %6794 = vrot.lane.b32.xlu0 %v6226, 120
  %v6795 = vpop.permute.xlu0 %6794
  %v6796 = vsel %vm3495, %v6791, 0
  %v6798 = vsel %vm3495, %v6793, 0
  %v6800 = vsel %vm3495, %v6795, 0
  %6802 = vmatprep.subr.mxu0 0.0
  %6803 = vmatpush1.xpose.msra.mxu0 %v6796
  %6804 = vmatprep.subr.mxu0 0.0
  %6805 = vmatpush1.xpose.msra.mxu0 %v6798
  %6806 = vmatprep.subr.mxu0 0.0
  %6807 = vmatpush1.xpose.msra.mxu0 %v6800
  %6808 = vmatprep.subr.mxu0 0.0
  %6809 = vmatpush1.xpose.msra.mxu0 0.0
  %6810 = vmatprep.subr.mxu0 0.0
  %6811 = vmatpush1.xpose.msra.mxu0 0.0
  %6812 = vmatprep.subr.mxu0 0.0
  %6813 = vmatpush1.xpose.msra.mxu0 0.0
  %6814 = vmatprep.subr.mxu0 0.0
  %6815 = vmatpush1.xpose.msra.mxu0 0.0
  %6816 = vmatprep.subr.mxu0 0.0
  %6817 = vmatpush1.xpose.msra.mxu0 0.0
  %6818 = vmatprep.subr.mxu0 0.0
  %6819 = vmatpush1.xpose.msra.mxu0 0.0
  %6820 = vmatprep.subr.mxu0 0.0
  %6821 = vmatpush1.xpose.msra.mxu0 0.0
  %6822 = vmatprep.subr.mxu0 0.0
  %6823 = vmatpush1.xpose.msra.mxu0 0.0
  %6824 = vmatprep.subr.mxu0 0.0
  %6825 = vmatpush1.xpose.msra.mxu0 0.0
  %6826 = vmatprep.subr.mxu0 0.0
  %6827 = vmatpush1.xpose.msra.mxu0 0.0
  %6828 = vmatprep.subr.mxu0 0.0
  %6829 = vmatpush1.xpose.msra.mxu0 0.0
  %6830 = vmatprep.subr.mxu0 0.0
  %6831 = vmatpush1.xpose.msra.mxu0 0.0
  %6832 = vmatprep.subr.mxu0 0.0
  %6833 = vmatpush1.xpose.msra.mxu0 0.0
  %6834 = vmatprep.subr.mxu0 0.0
  %6835 = vmatpush1.xpose.msra.mxu0 0.0
  %6836 = vmatprep.subr.mxu0 0.0
  %6837 = vmatpush1.xpose.msra.mxu0 0.0
  %6838 = vmatprep.subr.mxu0 0.0
  %6839 = vmatpush1.xpose.msra.mxu0 0.0
  %6840 = vmatprep.subr.mxu0 0.0
  %6841 = vmatpush1.xpose.msra.mxu0 0.0
  %6842 = vmatprep.subr.mxu0 0.0
  %6843 = vmatpush1.xpose.msra.mxu0 0.0
  %6844 = vmatprep.subr.mxu0 0.0
  %6845 = vmatpush1.xpose.msra.mxu0 0.0
  %6846 = vmatprep.subr.mxu0 0.0
  %6847 = vmatpush1.xpose.msra.mxu0 0.0
  %6848 = vmatprep.subr.mxu0 0.0
  %6849 = vmatpush1.xpose.msra.mxu0 0.0
  %6850 = vmatprep.subr.mxu0 0.0
  %6851 = vmatpush1.xpose.msra.mxu0 0.0
  %6852 = vmatprep.subr.mxu0 0.0
  %6853 = vmatpush1.xpose.msra.mxu0 0.0
  %6854 = vmatprep.subr.mxu0 0.0
  %6855 = vmatpush1.xpose.msra.mxu0 0.0
  %6856 = vmatprep.subr.mxu0 0.0
  %6857 = vmatpush1.xpose.msra.mxu0 0.0
  %6858 = vmatprep.subr.mxu0 0.0
  %6859 = vmatpush1.xpose.msra.mxu0 0.0
  %6860 = vmatprep.subr.mxu0 0.0
  %6861 = vmatpush1.xpose.msra.mxu0 0.0
  %6862 = vmatprep.subr.mxu0 0.0
  %6863 = vmatpush1.xpose.msra.mxu0 0.0
  %6864 = vmatprep.subr.mxu0 0.0
  %6865 = vmatpush1.xpose.msra.mxu0 0.0
  %6866 = vmatprep.mubr.f32.mxu0 0.0
  %6867 = vmatmul.mubr.f32.gmra.mrb[0].mxu0 %v6698
  %v6868 = vpop.f32.mrb[0].mxu0
  %v6869 = vadd.f32 %v177, %v6868
  %v6870 = vpop.f32.mrb[0].mxu0
  %6871 = vmatprep.mubr.f32.mxu0 0.0
  %6872 = vmatmul.mubr.f32.gmra.mrb[0].mxu0 %v6700
  %v6873 = vpop.f32.mrb[0].mxu0
  %v6874 = vadd.f32 %v178, %v6873
  %v6875 = vpop.f32.mrb[0].mxu0
  %6876 = vmatprep.mubr.f32.mxu0 0.0
  %6877 = vmatmul.mubr.f32.gmra.mrb[0].mxu0 %v6702
  %v6878 = vpop.f32.mrb[0].mxu0
  %v6879 = vadd.f32 %v179, %v6878
  %v6880 = vpop.f32.mrb[0].mxu0
  %6881 = vdwg.mxu0
  %v6882 = vsel %vm1298, %v6777, -inf
  %6883 = vmax.xlane.f32.xlu0 %v6882
  %v6884 = vpop.xlane.xlu0 %6883
  %v6885 = vsel %vm1298, %v6782, -inf
  %6886 = vmax.xlane.f32.xlu0 %v6885
  %v6887 = vpop.xlane.xlu0 %6886
  %v6888 = vsel %vm1305, %v6787, -inf
  %6889 = vmax.xlane.f32.xlu0 %v6888
  %v6890 = vpop.xlane.xlu0 %6889
  %v6891 = vsel %vm1298, %v6869, -inf
  %6892 = vmax.xlane.f32.xlu0 %v6891
  %v6893 = vpop.xlane.xlu0 %6892
  %v6894 = vsel %vm1298, %v6874, -inf
  %6895 = vmax.xlane.f32.xlu0 %v6894
  %v6896 = vpop.xlane.xlu0 %6895
  %v6897 = vsel %vm1305, %v6879, -inf
  %6898 = vmax.xlane.f32.xlu0 %v6897
  %v6899 = vpop.xlane.xlu0 %6898
  %v6900 = vmax.f32 %v6884, %v6893
  %v6901 = vmax.f32 %v6887, %v6896
  %v6902 = vmax.f32 %v6890, %v6899
  %v6903 = vsub.f32 %v6777, %v6900
  %v6904 = vsub.f32 %v6782, %v6901
  %v6905 = vsub.f32 %v6787, %v6902
  %v6906 = vmul.f32 %v6903, 1.442695
  %v6907 = vpow.pop %v6906
  %v6908 = vmul.f32 %v6904, 1.442695
  %v6909 = vpow.pop %v6908
  %v6910 = vmul.f32 %v6905, 1.442695
  %v6911 = vpow.pop %v6910
  %v6912 = vsub.f32 %v6869, %v6900
  %v6913 = vsub.f32 %v6874, %v6901
  %v6914 = vsub.f32 %v6879, %v6902
  %v6915 = vmul.f32 %v6912, 1.442695
  %v6916 = vpow.pop %v6915
  %v6917 = vmul.f32 %v6913, 1.442695
  %v6918 = vpow.pop %v6917
  %v6919 = vmul.f32 %v6914, 1.442695
  %v6920 = vpow.pop %v6919
  %v6921 = vsel %vm1298, %v6907, 0.0
  %6922 = vadd.xlane.f32.xlu0 %v6921
  %v6923 = vpop.xlane.xlu0 %6922
  %v6924 = vsel %vm1298, %v6909, 0.0
  %6925 = vadd.xlane.f32.xlu0 %v6924
  %v6926 = vpop.xlane.xlu0 %6925
  %v6927 = vsel %vm1305, %v6911, 0.0
  %6928 = vadd.xlane.f32.xlu0 %v6927
  %v6929 = vpop.xlane.xlu0 %6928
  %v6930 = vsel %vm1298, %v6916, 0.0
  %6931 = vadd.xlane.f32.xlu0 %v6930
  %v6932 = vpop.xlane.xlu0 %6931
  %v6933 = vsel %vm1298, %v6918, 0.0
  %6934 = vadd.xlane.f32.xlu0 %v6933
  %v6935 = vpop.xlane.xlu0 %6934
  %v6936 = vsel %vm1305, %v6920, 0.0
  %6937 = vadd.xlane.f32.xlu0 %v6936
  %v6938 = vpop.xlane.xlu0 %6937
  %v6939 = vadd.f32 %v6923, %v6932
  %v6940 = vadd.f32 %v6926, %v6935
  %v6941 = vadd.f32 %v6929, %v6938
  %v6942 = vrcp.pop %v6939
  %v6943 = vrcp.pop %v6940
  %v6944 = vrcp.pop %v6941
  %6945 = vrot.lane.b32.xlu0 %v6216, 88
  %v6946 = vpop.permute.xlu0 %6945
  %6947 = vrot.lane.b32.xlu0 %v6221, 88
  %v6948 = vpop.permute.xlu0 %6947
  %6949 = vrot.lane.b32.xlu0 %v6226, 88
  %v6950 = vpop.permute.xlu0 %6949
  %v6954 = vsel %vm1298, %v6916, 0
  %v6957 = vsel %vm1298, %v6918, 0
  %v6960 = vsel %vm1298, %v6920, 0
  %v6962 = vsel %vm765, %v6950, 0
  %6964 = vmatprep.subr.mxu0 0.0
  %6965 = vmatpush1.msra.mxu0 %v6946
  %6966 = vmatprep.subr.mxu0 0.0
  %6967 = vmatpush1.msra.mxu0 %v6948
  %6968 = vmatprep.subr.mxu0 0.0
  %6969 = vmatpush1.msra.mxu0 %v6962
  %6970 = vmatprep.subr.mxu0 0.0
  %6971 = vmatpush1.msra.mxu0 0.0
  %6972 = vmatprep.subr.mxu0 0.0
  %6973 = vmatpush1.msra.mxu0 0.0
  %6974 = vmatprep.subr.mxu0 0.0
  %6975 = vmatpush1.msra.mxu0 0.0
  %6976 = vmatprep.subr.mxu0 0.0
  %6977 = vmatpush1.msra.mxu0 0.0
  %6978 = vmatprep.subr.mxu0 0.0
  %6979 = vmatpush1.msra.mxu0 0.0
  %6980 = vmatprep.subr.mxu0 0.0
  %6981 = vmatpush1.msra.mxu0 0.0
  %6982 = vmatprep.subr.mxu0 0.0
  %6983 = vmatpush1.msra.mxu0 0.0
  %6984 = vmatprep.subr.mxu0 0.0
  %6985 = vmatpush1.msra.mxu0 0.0
  %6986 = vmatprep.subr.mxu0 0.0
  %6987 = vmatpush1.msra.mxu0 0.0
  %6988 = vmatprep.subr.mxu0 0.0
  %6989 = vmatpush1.msra.mxu0 0.0
  %6990 = vmatprep.subr.mxu0 0.0
  %6991 = vmatpush1.msra.mxu0 0.0
  %6992 = vmatprep.subr.mxu0 0.0
  %6993 = vmatpush1.msra.mxu0 0.0
  %6994 = vmatprep.subr.mxu0 0.0
  %6995 = vmatpush1.msra.mxu0 0.0
  %6996 = vmatprep.subr.mxu0 0.0
  %6997 = vmatpush1.msra.mxu0 0.0
  %6998 = vmatprep.subr.mxu0 0.0
  %6999 = vmatpush1.msra.mxu0 0.0
  %7000 = vmatprep.subr.mxu0 0.0
  %7001 = vmatpush1.msra.mxu0 0.0
  %7002 = vmatprep.subr.mxu0 0.0
  %7003 = vmatpush1.msra.mxu0 0.0
  %7004 = vmatprep.subr.mxu0 0.0
  %7005 = vmatpush1.msra.mxu0 0.0
  %7006 = vmatprep.subr.mxu0 0.0
  %7007 = vmatpush1.msra.mxu0 0.0
  %7008 = vmatprep.subr.mxu0 0.0
  %7009 = vmatpush1.msra.mxu0 0.0
  %7010 = vmatprep.subr.mxu0 0.0
  %7011 = vmatpush1.msra.mxu0 0.0
  %7012 = vmatprep.subr.mxu0 0.0
  %7013 = vmatpush1.msra.mxu0 0.0
  %7014 = vmatprep.subr.mxu0 0.0
  %7015 = vmatpush1.msra.mxu0 0.0
  %7016 = vmatprep.subr.mxu0 0.0
  %7017 = vmatpush1.msra.mxu0 0.0
  %7018 = vmatprep.subr.mxu0 0.0
  %7019 = vmatpush1.msra.mxu0 0.0
  %7020 = vmatprep.subr.mxu0 0.0
  %7021 = vmatpush1.msra.mxu0 0.0
  %7022 = vmatprep.subr.mxu0 0.0
  %7023 = vmatpush1.msra.mxu0 0.0
  %7024 = vmatprep.subr.mxu0 0.0
  %7025 = vmatpush1.msra.mxu0 0.0
  %7026 = vmatprep.subr.mxu0 0.0
  %7027 = vmatpush1.msra.mxu0 0.0
  %7028 = vmatprep.mubr.f32.mxu0 0.0
  %7029 = vmatmul.mubr.f32.gmra.mrb[0].mxu0 %v6954
  %v7030 = vpop.f32.mrb[0].mxu0
  %v7031 = vadd.f32 0.0, %v7030
  %v7032 = vpop.f32.mrb[0].mxu0
  %7033 = vmatprep.mubr.f32.mxu0 0.0
  %7034 = vmatmul.mubr.f32.gmra.mrb[0].mxu0 %v6957
  %v7035 = vpop.f32.mrb[0].mxu0
  %v7036 = vadd.f32 0.0, %v7035
  %v7037 = vpop.f32.mrb[0].mxu0
  %7038 = vmatprep.mubr.f32.mxu0 0.0
  %7039 = vmatmul.mubr.f32.gmra.mrb[0].mxu0 %v6960
  %v7040 = vpop.f32.mrb[0].mxu0
  %v7041 = vadd.f32 0.0, %v7040
  %v7042 = vpop.f32.mrb[0].mxu0
  %7043 = vdwg.mxu0
  %7044 = vrot.lane.b32.xlu0 %v6114, 56
  %v7045 = vpop.permute.xlu0 %7044
  %7046 = vrot.lane.b32.xlu0 %v6119, 56
  %v7047 = vpop.permute.xlu0 %7046
  %7048 = vrot.lane.b32.xlu0 %v6124, 56
  %v7049 = vpop.permute.xlu0 %7048
  %v7053 = vsel %vm1298, %v6907, 0
  %v7056 = vsel %vm1298, %v6909, 0
  %v7059 = vsel %vm1298, %v6911, 0
  %v7061 = vsel %vm765, %v7049, 0
  %7063 = vmatprep.subr.mxu0 0.0
  %7064 = vmatpush1.msra.mxu0 %v7045
  %7065 = vmatprep.subr.mxu0 0.0
  %7066 = vmatpush1.msra.mxu0 %v7047
  %7067 = vmatprep.subr.mxu0 0.0
  %7068 = vmatpush1.msra.mxu0 %v7061
  %7069 = vmatprep.subr.mxu0 0.0
  %7070 = vmatpush1.msra.mxu0 0.0
  %7071 = vmatprep.subr.mxu0 0.0
  %7072 = vmatpush1.msra.mxu0 0.0
  %7073 = vmatprep.subr.mxu0 0.0
  %7074 = vmatpush1.msra.mxu0 0.0
  %7075 = vmatprep.subr.mxu0 0.0
  %7076 = vmatpush1.msra.mxu0 0.0
  %7077 = vmatprep.subr.mxu0 0.0
  %7078 = vmatpush1.msra.mxu0 0.0
  %7079 = vmatprep.subr.mxu0 0.0
  %7080 = vmatpush1.msra.mxu0 0.0
  %7081 = vmatprep.subr.mxu0 0.0
  %7082 = vmatpush1.msra.mxu0 0.0
  %7083 = vmatprep.subr.mxu0 0.0
  %7084 = vmatpush1.msra.mxu0 0.0
  %7085 = vmatprep.subr.mxu0 0.0
  %7086 = vmatpush1.msra.mxu0 0.0
  %7087 = vmatprep.subr.mxu0 0.0
  %7088 = vmatpush1.msra.mxu0 0.0
  %7089 = vmatprep.subr.mxu0 0.0
  %7090 = vmatpush1.msra.mxu0 0.0
  %7091 = vmatprep.subr.mxu0 0.0
  %7092 = vmatpush1.msra.mxu0 0.0
  %7093 = vmatprep.subr.mxu0 0.0
  %7094 = vmatpush1.msra.mxu0 0.0
  %7095 = vmatprep.subr.mxu0 0.0
  %7096 = vmatpush1.msra.mxu0 0.0
  %7097 = vmatprep.subr.mxu0 0.0
  %7098 = vmatpush1.msra.mxu0 0.0
  %7099 = vmatprep.subr.mxu0 0.0
  %7100 = vmatpush1.msra.mxu0 0.0
  %7101 = vmatprep.subr.mxu0 0.0
  %7102 = vmatpush1.msra.mxu0 0.0
  %7103 = vmatprep.subr.mxu0 0.0
  %7104 = vmatpush1.msra.mxu0 0.0
  %7105 = vmatprep.subr.mxu0 0.0
  %7106 = vmatpush1.msra.mxu0 0.0
  %7107 = vmatprep.subr.mxu0 0.0
  %7108 = vmatpush1.msra.mxu0 0.0
  %7109 = vmatprep.subr.mxu0 0.0
  %7110 = vmatpush1.msra.mxu0 0.0
  %7111 = vmatprep.subr.mxu0 0.0
  %7112 = vmatpush1.msra.mxu0 0.0
  %7113 = vmatprep.subr.mxu0 0.0
  %7114 = vmatpush1.msra.mxu0 0.0
  %7115 = vmatprep.subr.mxu0 0.0
  %7116 = vmatpush1.msra.mxu0 0.0
  %7117 = vmatprep.subr.mxu0 0.0
  %7118 = vmatpush1.msra.mxu0 0.0
  %7119 = vmatprep.subr.mxu0 0.0
  %7120 = vmatpush1.msra.mxu0 0.0
  %7121 = vmatprep.subr.mxu0 0.0
  %7122 = vmatpush1.msra.mxu0 0.0
  %7123 = vmatprep.subr.mxu0 0.0
  %7124 = vmatpush1.msra.mxu0 0.0
  %7125 = vmatprep.subr.mxu0 0.0
  %7126 = vmatpush1.msra.mxu0 0.0
  %7127 = vmatprep.mubr.f32.mxu0 0.0
  %7128 = vmatmul.mubr.f32.gmra.mrb[0].mxu0 %v7053
  %v7129 = vpop.f32.mrb[0].mxu0
  %v7130 = vadd.f32 %v7031, %v7129
  %v7131 = vpop.f32.mrb[0].mxu0
  %7132 = vmatprep.mubr.f32.mxu0 0.0
  %7133 = vmatmul.mubr.f32.gmra.mrb[0].mxu0 %v7056
  %v7134 = vpop.f32.mrb[0].mxu0
  %v7135 = vadd.f32 %v7036, %v7134
  %v7136 = vpop.f32.mrb[0].mxu0
  %7137 = vmatprep.mubr.f32.mxu0 0.0
  %7138 = vmatmul.mubr.f32.gmra.mrb[0].mxu0 %v7059
  %v7139 = vpop.f32.mrb[0].mxu0
  %v7140 = vadd.f32 %v7041, %v7139
  %v7141 = vpop.f32.mrb[0].mxu0
  %7142 = vdwg.mxu0
  %v7143 = vmul.f32 %v7130, %v6942
  %v7144 = vmul.f32 %v7135, %v6943
  %v7145 = vmul.f32 %v7140, %v6944
  %v7147 = vsel %vm3495, %v7143, 0
  %v7150 = vsel %vm3495, %v7144, 0
  %v7153 = vsel %vm3495, %v7145, 0
  %7155 = vmatprep.subr.mxu0 0.0
  %7156 = vmatpush1.msra.mxu0 %v289
  %7157 = vmatprep.subr.mxu0 0.0
  %7158 = vmatpush1.msra.mxu0 0.0
  %7159 = vmatprep.subr.mxu0 0.0
  %7160 = vmatpush1.msra.mxu0 0.0
  %7161 = vmatprep.subr.mxu0 0.0
  %7162 = vmatpush1.msra.mxu0 0.0
  %7163 = vmatprep.subr.mxu0 0.0
  %7164 = vmatpush1.msra.mxu0 0.0
  %7165 = vmatprep.subr.mxu0 0.0
  %7166 = vmatpush1.msra.mxu0 0.0
  %7167 = vmatprep.subr.mxu0 0.0
  %7168 = vmatpush1.msra.mxu0 0.0
  %7169 = vmatprep.subr.mxu0 0.0
  %7170 = vmatpush1.msra.mxu0 0.0
  %7171 = vmatprep.subr.mxu0 0.0
  %7172 = vmatpush1.msra.mxu0 0.0
  %7173 = vmatprep.subr.mxu0 0.0
  %7174 = vmatpush1.msra.mxu0 0.0
  %7175 = vmatprep.subr.mxu0 0.0
  %7176 = vmatpush1.msra.mxu0 0.0
  %7177 = vmatprep.subr.mxu0 0.0
  %7178 = vmatpush1.msra.mxu0 0.0
  %7179 = vmatprep.subr.mxu0 0.0
  %7180 = vmatpush1.msra.mxu0 0.0
  %7181 = vmatprep.subr.mxu0 0.0
  %7182 = vmatpush1.msra.mxu0 0.0
  %7183 = vmatprep.subr.mxu0 0.0
  %7184 = vmatpush1.msra.mxu0 0.0
  %7185 = vmatprep.subr.mxu0 0.0
  %7186 = vmatpush1.msra.mxu0 0.0
  %7187 = vmatprep.subr.mxu0 0.0
  %7188 = vmatpush1.msra.mxu0 0.0
  %7189 = vmatprep.subr.mxu0 0.0
  %7190 = vmatpush1.msra.mxu0 0.0
  %7191 = vmatprep.subr.mxu0 0.0
  %7192 = vmatpush1.msra.mxu0 0.0
  %7193 = vmatprep.subr.mxu0 0.0
  %7194 = vmatpush1.msra.mxu0 0.0
  %7195 = vmatprep.subr.mxu0 0.0
  %7196 = vmatpush1.msra.mxu0 0.0
  %7197 = vmatprep.subr.mxu0 0.0
  %7198 = vmatpush1.msra.mxu0 0.0
  %7199 = vmatprep.subr.mxu0 0.0
  %7200 = vmatpush1.msra.mxu0 0.0
  %7201 = vmatprep.subr.mxu0 0.0
  %7202 = vmatpush1.msra.mxu0 0.0
  %7203 = vmatprep.subr.mxu0 0.0
  %7204 = vmatpush1.msra.mxu0 0.0
  %7205 = vmatprep.subr.mxu0 0.0
  %7206 = vmatpush1.msra.mxu0 0.0
  %7207 = vmatprep.subr.mxu0 0.0
  %7208 = vmatpush1.msra.mxu0 0.0
  %7209 = vmatprep.subr.mxu0 0.0
  %7210 = vmatpush1.msra.mxu0 0.0
  %7211 = vmatprep.subr.mxu0 0.0
  %7212 = vmatpush1.msra.mxu0 0.0
  %7213 = vmatprep.subr.mxu0 0.0
  %7214 = vmatpush1.msra.mxu0 0.0
  %7215 = vmatprep.subr.mxu0 0.0
  %7216 = vmatpush1.msra.mxu0 0.0
  %7217 = vmatprep.subr.mxu0 0.0
  %7218 = vmatpush1.msra.mxu0 0.0
  %7219 = vmatprep.mubr.f32.mxu0 0.0
  %7220 = vmatmul.mubr.f32.gmra.mrb[0].mxu0 %v7147
  %v7221 = vpop.f32.mrb[0].mxu0
  %v7222 = vadd.f32 0.0, %v7221
  %v7223 = vpop.f32.mrb[0].mxu0
  %7224 = vmatprep.mubr.f32.mxu0 0.0
  %7225 = vmatmul.mubr.f32.gmra.mrb[0].mxu0 %v7150
  %v7226 = vpop.f32.mrb[0].mxu0
  %v7227 = vadd.f32 0.0, %v7226
  %v7228 = vpop.f32.mrb[0].mxu0
  %7229 = vmatprep.mubr.f32.mxu0 0.0
  %7230 = vmatmul.mubr.f32.gmra.mrb[0].mxu0 %v7153
  %v7231 = vpop.f32.mrb[0].mxu0
  %v7232 = vadd.f32 0.0, %v7231
  %v7233 = vpop.f32.mrb[0].mxu0
  %7234 = vdwg.mxu0
  %v7236 = vsel %vm3495, %v6683, 0
  %v7239 = vsel %vm3495, %v6684, 0
  %v7242 = vsel %vm3495, %v6685, 0
  %7244 = vmatprep.subr.mxu0 0.0
  %7245 = vmatpush1.msra.mxu0 %v288
  %7246 = vmatprep.subr.mxu0 0.0
  %7247 = vmatpush1.msra.mxu0 0.0
  %7248 = vmatprep.subr.mxu0 0.0
  %7249 = vmatpush1.msra.mxu0 0.0
  %7250 = vmatprep.subr.mxu0 0.0
  %7251 = vmatpush1.msra.mxu0 0.0
  %7252 = vmatprep.subr.mxu0 0.0
  %7253 = vmatpush1.msra.mxu0 0.0
  %7254 = vmatprep.subr.mxu0 0.0
  %7255 = vmatpush1.msra.mxu0 0.0
  %7256 = vmatprep.subr.mxu0 0.0
  %7257 = vmatpush1.msra.mxu0 0.0
  %7258 = vmatprep.subr.mxu0 0.0
  %7259 = vmatpush1.msra.mxu0 0.0
  %7260 = vmatprep.subr.mxu0 0.0
  %7261 = vmatpush1.msra.mxu0 0.0
  %7262 = vmatprep.subr.mxu0 0.0
  %7263 = vmatpush1.msra.mxu0 0.0
  %7264 = vmatprep.subr.mxu0 0.0
  %7265 = vmatpush1.msra.mxu0 0.0
  %7266 = vmatprep.subr.mxu0 0.0
  %7267 = vmatpush1.msra.mxu0 0.0
  %7268 = vmatprep.subr.mxu0 0.0
  %7269 = vmatpush1.msra.mxu0 0.0
  %7270 = vmatprep.subr.mxu0 0.0
  %7271 = vmatpush1.msra.mxu0 0.0
  %7272 = vmatprep.subr.mxu0 0.0
  %7273 = vmatpush1.msra.mxu0 0.0
  %7274 = vmatprep.subr.mxu0 0.0
  %7275 = vmatpush1.msra.mxu0 0.0
  %7276 = vmatprep.subr.mxu0 0.0
  %7277 = vmatpush1.msra.mxu0 0.0
  %7278 = vmatprep.subr.mxu0 0.0
  %7279 = vmatpush1.msra.mxu0 0.0
  %7280 = vmatprep.subr.mxu0 0.0
  %7281 = vmatpush1.msra.mxu0 0.0
  %7282 = vmatprep.subr.mxu0 0.0
  %7283 = vmatpush1.msra.mxu0 0.0
  %7284 = vmatprep.subr.mxu0 0.0
  %7285 = vmatpush1.msra.mxu0 0.0
  %7286 = vmatprep.subr.mxu0 0.0
  %7287 = vmatpush1.msra.mxu0 0.0
  %7288 = vmatprep.subr.mxu0 0.0
  %7289 = vmatpush1.msra.mxu0 0.0
  %7290 = vmatprep.subr.mxu0 0.0
  %7291 = vmatpush1.msra.mxu0 0.0
  %7292 = vmatprep.subr.mxu0 0.0
  %7293 = vmatpush1.msra.mxu0 0.0
  %7294 = vmatprep.subr.mxu0 0.0
  %7295 = vmatpush1.msra.mxu0 0.0
  %7296 = vmatprep.subr.mxu0 0.0
  %7297 = vmatpush1.msra.mxu0 0.0
  %7298 = vmatprep.subr.mxu0 0.0
  %7299 = vmatpush1.msra.mxu0 0.0
  %7300 = vmatprep.subr.mxu0 0.0
  %7301 = vmatpush1.msra.mxu0 0.0
  %7302 = vmatprep.subr.mxu0 0.0
  %7303 = vmatpush1.msra.mxu0 0.0
  %7304 = vmatprep.subr.mxu0 0.0
  %7305 = vmatpush1.msra.mxu0 0.0
  %7306 = vmatprep.subr.mxu0 0.0
  %7307 = vmatpush1.msra.mxu0 0.0
  %7308 = vmatprep.mubr.f32.mxu0 0.0
  %7309 = vmatmul.mubr.f32.gmra.mrb[0].mxu0 %v7236
  %v7310 = vpop.f32.mrb[0].mxu0
  %v7311 = vadd.f32 %v7222, %v7310
  %v7312 = vpop.f32.mrb[0].mxu0
  %7313 = vmatprep.mubr.f32.mxu0 0.0
  %7314 = vmatmul.mubr.f32.gmra.mrb[0].mxu0 %v7239
  %v7315 = vpop.f32.mrb[0].mxu0
  %v7316 = vadd.f32 %v7227, %v7315
  %v7317 = vpop.f32.mrb[0].mxu0
  %7318 = vmatprep.mubr.f32.mxu0 0.0
  %7319 = vmatmul.mubr.f32.gmra.mrb[0].mxu0 %v7242
  %v7320 = vpop.f32.mrb[0].mxu0
  %v7321 = vadd.f32 %v7232, %v7320
  %v7322 = vpop.f32.mrb[0].mxu0
  %7323 = vdwg.mxu0
  %7324 = vrot.lane.b32.xlu0 %v6127, 112
  %v7325 = vpop.permute.xlu0 %7324
  %7326 = vrot.lane.b32.xlu0 %v6128, 112
  %v7327 = vpop.permute.xlu0 %7326
  %7328 = vrot.lane.b32.xlu0 %v6129, 112
  %v7329 = vpop.permute.xlu0 %7328
  %7330 = vrot.lane.b32.xlu0 %v6114, 80
  %v7331 = vpop.permute.xlu0 %7330
  %7332 = vrot.lane.b32.xlu0 %v6119, 80
  %v7333 = vpop.permute.xlu0 %7332
  %7334 = vrot.lane.b32.xlu0 %v6124, 80
  %v7335 = vpop.permute.xlu0 %7334
  %v7336 = vsel %vm3495, %v7325, 0
  %v7338 = vsel %vm3495, %v7327, 0
  %v7340 = vsel %vm3495, %v7329, 0
  %v7342 = vsel %vm3495, %v7331, 0
  %v7344 = vsel %vm3495, %v7333, 0
  %v7346 = vsel %vm3495, %v7335, 0
  %7348 = vmatprep.subr.mxu0 0.0
  %7349 = vmatpush1.xpose.msra.mxu0 %v7342
  %7350 = vmatprep.subr.mxu0 0.0
  %7351 = vmatpush1.xpose.msra.mxu0 %v7344
  %7352 = vmatprep.subr.mxu0 0.0
  %7353 = vmatpush1.xpose.msra.mxu0 %v7346
  %7354 = vmatprep.subr.mxu0 0.0
  %7355 = vmatpush1.xpose.msra.mxu0 0.0
  %7356 = vmatprep.subr.mxu0 0.0
  %7357 = vmatpush1.xpose.msra.mxu0 0.0
  %7358 = vmatprep.subr.mxu0 0.0
  %7359 = vmatpush1.xpose.msra.mxu0 0.0
  %7360 = vmatprep.subr.mxu0 0.0
  %7361 = vmatpush1.xpose.msra.mxu0 0.0
  %7362 = vmatprep.subr.mxu0 0.0
  %7363 = vmatpush1.xpose.msra.mxu0 0.0
  %7364 = vmatprep.subr.mxu0 0.0
  %7365 = vmatpush1.xpose.msra.mxu0 0.0
  %7366 = vmatprep.subr.mxu0 0.0
  %7367 = vmatpush1.xpose.msra.mxu0 0.0
  %7368 = vmatprep.subr.mxu0 0.0
  %7369 = vmatpush1.xpose.msra.mxu0 0.0
  %7370 = vmatprep.subr.mxu0 0.0
  %7371 = vmatpush1.xpose.msra.mxu0 0.0
  %7372 = vmatprep.subr.mxu0 0.0
  %7373 = vmatpush1.xpose.msra.mxu0 0.0
  %7374 = vmatprep.subr.mxu0 0.0
  %7375 = vmatpush1.xpose.msra.mxu0 0.0
  %7376 = vmatprep.subr.mxu0 0.0
  %7377 = vmatpush1.xpose.msra.mxu0 0.0
  %7378 = vmatprep.subr.mxu0 0.0
  %7379 = vmatpush1.xpose.msra.mxu0 0.0
  %7380 = vmatprep.subr.mxu0 0.0
  %7381 = vmatpush1.xpose.msra.mxu0 0.0
  %7382 = vmatprep.subr.mxu0 0.0
  %7383 = vmatpush1.xpose.msra.mxu0 0.0
  %7384 = vmatprep.subr.mxu0 0.0
  %7385 = vmatpush1.xpose.msra.mxu0 0.0
  %7386 = vmatprep.subr.mxu0 0.0
  %7387 = vmatpush1.xpose.msra.mxu0 0.0
  %7388 = vmatprep.subr.mxu0 0.0
  %7389 = vmatpush1.xpose.msra.mxu0 0.0
  %7390 = vmatprep.subr.mxu0 0.0
  %7391 = vmatpush1.xpose.msra.mxu0 0.0
  %7392 = vmatprep.subr.mxu0 0.0
  %7393 = vmatpush1.xpose.msra.mxu0 0.0
  %7394 = vmatprep.subr.mxu0 0.0
  %7395 = vmatpush1.xpose.msra.mxu0 0.0
  %7396 = vmatprep.subr.mxu0 0.0
  %7397 = vmatpush1.xpose.msra.mxu0 0.0
  %7398 = vmatprep.subr.mxu0 0.0
  %7399 = vmatpush1.xpose.msra.mxu0 0.0
  %7400 = vmatprep.subr.mxu0 0.0
  %7401 = vmatpush1.xpose.msra.mxu0 0.0
  %7402 = vmatprep.subr.mxu0 0.0
  %7403 = vmatpush1.xpose.msra.mxu0 0.0
  %7404 = vmatprep.subr.mxu0 0.0
  %7405 = vmatpush1.xpose.msra.mxu0 0.0
  %7406 = vmatprep.subr.mxu0 0.0
  %7407 = vmatpush1.xpose.msra.mxu0 0.0
  %7408 = vmatprep.subr.mxu0 0.0
  %7409 = vmatpush1.xpose.msra.mxu0 0.0
  %7410 = vmatprep.subr.mxu0 0.0
  %7411 = vmatpush1.xpose.msra.mxu0 0.0
  %7412 = vmatprep.mubr.f32.mxu0 0.0
  %7413 = vmatmul.mubr.f32.gmra.mrb[0].mxu0 %v7336
  %v7414 = vpop.f32.mrb[0].mxu0
  %v7415 = vadd.f32 %v177, %v7414
  %v7416 = vpop.f32.mrb[0].mxu0
  %7417 = vmatprep.mubr.f32.mxu0 0.0
  %7418 = vmatmul.mubr.f32.gmra.mrb[0].mxu0 %v7338
  %v7419 = vpop.f32.mrb[0].mxu0
  %v7420 = vadd.f32 %v178, %v7419
  %v7421 = vpop.f32.mrb[0].mxu0
  %7422 = vmatprep.mubr.f32.mxu0 0.0
  %7423 = vmatmul.mubr.f32.gmra.mrb[0].mxu0 %v7340
  %v7424 = vpop.f32.mrb[0].mxu0
  %v7425 = vadd.f32 %v179, %v7424
  %v7426 = vpop.f32.mrb[0].mxu0
  %7427 = vdwg.mxu0
  %7428 = vrot.lane.b32.xlu0 %v6216, 112
  %v7429 = vpop.permute.xlu0 %7428
  %7430 = vrot.lane.b32.xlu0 %v6221, 112
  %v7431 = vpop.permute.xlu0 %7430
  %7432 = vrot.lane.b32.xlu0 %v6226, 112
  %v7433 = vpop.permute.xlu0 %7432
  %v7434 = vsel %vm3495, %v7429, 0
  %v7436 = vsel %vm3495, %v7431, 0
  %v7438 = vsel %vm3495, %v7433, 0
  %7440 = vmatprep.subr.mxu0 0.0
  %7441 = vmatpush1.xpose.msra.mxu0 %v7434
  %7442 = vmatprep.subr.mxu0 0.0
  %7443 = vmatpush1.xpose.msra.mxu0 %v7436
  %7444 = vmatprep.subr.mxu0 0.0
  %7445 = vmatpush1.xpose.msra.mxu0 %v7438
  %7446 = vmatprep.subr.mxu0 0.0
  %7447 = vmatpush1.xpose.msra.mxu0 0.0
  %7448 = vmatprep.subr.mxu0 0.0
  %7449 = vmatpush1.xpose.msra.mxu0 0.0
  %7450 = vmatprep.subr.mxu0 0.0
  %7451 = vmatpush1.xpose.msra.mxu0 0.0
  %7452 = vmatprep.subr.mxu0 0.0
  %7453 = vmatpush1.xpose.msra.mxu0 0.0
  %7454 = vmatprep.subr.mxu0 0.0
  %7455 = vmatpush1.xpose.msra.mxu0 0.0
  %7456 = vmatprep.subr.mxu0 0.0
  %7457 = vmatpush1.xpose.msra.mxu0 0.0
  %7458 = vmatprep.subr.mxu0 0.0
  %7459 = vmatpush1.xpose.msra.mxu0 0.0
  %7460 = vmatprep.subr.mxu0 0.0
  %7461 = vmatpush1.xpose.msra.mxu0 0.0
  %7462 = vmatprep.subr.mxu0 0.0
  %7463 = vmatpush1.xpose.msra.mxu0 0.0
  %7464 = vmatprep.subr.mxu0 0.0
  %7465 = vmatpush1.xpose.msra.mxu0 0.0
  %7466 = vmatprep.subr.mxu0 0.0
  %7467 = vmatpush1.xpose.msra.mxu0 0.0
  %7468 = vmatprep.subr.mxu0 0.0
  %7469 = vmatpush1.xpose.msra.mxu0 0.0
  %7470 = vmatprep.subr.mxu0 0.0
  %7471 = vmatpush1.xpose.msra.mxu0 0.0
  %7472 = vmatprep.subr.mxu0 0.0
  %7473 = vmatpush1.xpose.msra.mxu0 0.0
  %7474 = vmatprep.subr.mxu0 0.0
  %7475 = vmatpush1.xpose.msra.mxu0 0.0
  %7476 = vmatprep.subr.mxu0 0.0
  %7477 = vmatpush1.xpose.msra.mxu0 0.0
  %7478 = vmatprep.subr.mxu0 0.0
  %7479 = vmatpush1.xpose.msra.mxu0 0.0
  %7480 = vmatprep.subr.mxu0 0.0
  %7481 = vmatpush1.xpose.msra.mxu0 0.0
  %7482 = vmatprep.subr.mxu0 0.0
  %7483 = vmatpush1.xpose.msra.mxu0 0.0
  %7484 = vmatprep.subr.mxu0 0.0
  %7485 = vmatpush1.xpose.msra.mxu0 0.0
  %7486 = vmatprep.subr.mxu0 0.0
  %7487 = vmatpush1.xpose.msra.mxu0 0.0
  %7488 = vmatprep.subr.mxu0 0.0
  %7489 = vmatpush1.xpose.msra.mxu0 0.0
  %7490 = vmatprep.subr.mxu0 0.0
  %7491 = vmatpush1.xpose.msra.mxu0 0.0
  %7492 = vmatprep.subr.mxu0 0.0
  %7493 = vmatpush1.xpose.msra.mxu0 0.0
  %7494 = vmatprep.subr.mxu0 0.0
  %7495 = vmatpush1.xpose.msra.mxu0 0.0
  %7496 = vmatprep.subr.mxu0 0.0
  %7497 = vmatpush1.xpose.msra.mxu0 0.0
  %7498 = vmatprep.subr.mxu0 0.0
  %7499 = vmatpush1.xpose.msra.mxu0 0.0
  %7500 = vmatprep.subr.mxu0 0.0
  %7501 = vmatpush1.xpose.msra.mxu0 0.0
  %7502 = vmatprep.subr.mxu0 0.0
  %7503 = vmatpush1.xpose.msra.mxu0 0.0
  %7504 = vmatprep.mubr.f32.mxu0 0.0
  %7505 = vmatmul.mubr.f32.gmra.mrb[0].mxu0 %v7336
  %v7506 = vpop.f32.mrb[0].mxu0
  %v7507 = vadd.f32 %v177, %v7506
  %v7508 = vpop.f32.mrb[0].mxu0
  %7509 = vmatprep.mubr.f32.mxu0 0.0
  %7510 = vmatmul.mubr.f32.gmra.mrb[0].mxu0 %v7338
  %v7511 = vpop.f32.mrb[0].mxu0
  %v7512 = vadd.f32 %v178, %v7511
  %v7513 = vpop.f32.mrb[0].mxu0
  %7514 = vmatprep.mubr.f32.mxu0 0.0
  %7515 = vmatmul.mubr.f32.gmra.mrb[0].mxu0 %v7340
  %v7516 = vpop.f32.mrb[0].mxu0
  %v7517 = vadd.f32 %v179, %v7516
  %v7518 = vpop.f32.mrb[0].mxu0
  %7519 = vdwg.mxu0
  %v7520 = vsel %vm1298, %v7415, -inf
  %7521 = vmax.xlane.f32.xlu0 %v7520
  %v7522 = vpop.xlane.xlu0 %7521
  %v7523 = vsel %vm1298, %v7420, -inf
  %7524 = vmax.xlane.f32.xlu0 %v7523
  %v7525 = vpop.xlane.xlu0 %7524
  %v7526 = vsel %vm1305, %v7425, -inf
  %7527 = vmax.xlane.f32.xlu0 %v7526
  %v7528 = vpop.xlane.xlu0 %7527
  %v7529 = vsel %vm1298, %v7507, -inf
  %7530 = vmax.xlane.f32.xlu0 %v7529
  %v7531 = vpop.xlane.xlu0 %7530
  %v7532 = vsel %vm1298, %v7512, -inf
  %7533 = vmax.xlane.f32.xlu0 %v7532
  %v7534 = vpop.xlane.xlu0 %7533
  %v7535 = vsel %vm1305, %v7517, -inf
  %7536 = vmax.xlane.f32.xlu0 %v7535
  %v7537 = vpop.xlane.xlu0 %7536
  %v7538 = vmax.f32 %v7522, %v7531
  %v7539 = vmax.f32 %v7525, %v7534
  %v7540 = vmax.f32 %v7528, %v7537
  %v7541 = vsub.f32 %v7415, %v7538
  %v7542 = vsub.f32 %v7420, %v7539
  %v7543 = vsub.f32 %v7425, %v7540
  %v7544 = vmul.f32 %v7541, 1.442695
  %v7545 = vpow.pop %v7544
  %v7546 = vmul.f32 %v7542, 1.442695
  %v7547 = vpow.pop %v7546
  %v7548 = vmul.f32 %v7543, 1.442695
  %v7549 = vpow.pop %v7548
  %v7550 = vsub.f32 %v7507, %v7538
  %v7551 = vsub.f32 %v7512, %v7539
  %v7552 = vsub.f32 %v7517, %v7540
  %v7553 = vmul.f32 %v7550, 1.442695
  %v7554 = vpow.pop %v7553
  %v7555 = vmul.f32 %v7551, 1.442695
  %v7556 = vpow.pop %v7555
  %v7557 = vmul.f32 %v7552, 1.442695
  %v7558 = vpow.pop %v7557
  %v7559 = vsel %vm1298, %v7545, 0.0
  %7560 = vadd.xlane.f32.xlu0 %v7559
  %v7561 = vpop.xlane.xlu0 %7560
  %v7562 = vsel %vm1298, %v7547, 0.0
  %7563 = vadd.xlane.f32.xlu0 %v7562
  %v7564 = vpop.xlane.xlu0 %7563
  %v7565 = vsel %vm1305, %v7549, 0.0
  %7566 = vadd.xlane.f32.xlu0 %v7565
  %v7567 = vpop.xlane.xlu0 %7566
  %v7568 = vsel %vm1298, %v7554, 0.0
  %7569 = vadd.xlane.f32.xlu0 %v7568
  %v7570 = vpop.xlane.xlu0 %7569
  %v7571 = vsel %vm1298, %v7556, 0.0
  %7572 = vadd.xlane.f32.xlu0 %v7571
  %v7573 = vpop.xlane.xlu0 %7572
  %v7574 = vsel %vm1305, %v7558, 0.0
  %7575 = vadd.xlane.f32.xlu0 %v7574
  %v7576 = vpop.xlane.xlu0 %7575
  %v7577 = vadd.f32 %v7561, %v7570
  %v7578 = vadd.f32 %v7564, %v7573
  %v7579 = vadd.f32 %v7567, %v7576
  %v7580 = vrcp.pop %v7577
  %v7581 = vrcp.pop %v7578
  %v7582 = vrcp.pop %v7579
  %7583 = vrot.lane.b32.xlu0 %v6216, 80
  %v7584 = vpop.permute.xlu0 %7583
  %7585 = vrot.lane.b32.xlu0 %v6221, 80
  %v7586 = vpop.permute.xlu0 %7585
  %7587 = vrot.lane.b32.xlu0 %v6226, 80
  %v7588 = vpop.permute.xlu0 %7587
  %v7592 = vsel %vm1298, %v7554, 0
  %v7595 = vsel %vm1298, %v7556, 0
  %v7598 = vsel %vm1298, %v7558, 0
  %v7600 = vsel %vm765, %v7588, 0
  %7602 = vmatprep.subr.mxu0 0.0
  %7603 = vmatpush1.msra.mxu0 %v7584
  %7604 = vmatprep.subr.mxu0 0.0
  %7605 = vmatpush1.msra.mxu0 %v7586
  %7606 = vmatprep.subr.mxu0 0.0
  %7607 = vmatpush1.msra.mxu0 %v7600
  %7608 = vmatprep.subr.mxu0 0.0
  %7609 = vmatpush1.msra.mxu0 0.0
  %7610 = vmatprep.subr.mxu0 0.0
  %7611 = vmatpush1.msra.mxu0 0.0
  %7612 = vmatprep.subr.mxu0 0.0
  %7613 = vmatpush1.msra.mxu0 0.0
  %7614 = vmatprep.subr.mxu0 0.0
  %7615 = vmatpush1.msra.mxu0 0.0
  %7616 = vmatprep.subr.mxu0 0.0
  %7617 = vmatpush1.msra.mxu0 0.0
  %7618 = vmatprep.subr.mxu0 0.0
  %7619 = vmatpush1.msra.mxu0 0.0
  %7620 = vmatprep.subr.mxu0 0.0
  %7621 = vmatpush1.msra.mxu0 0.0
  %7622 = vmatprep.subr.mxu0 0.0
  %7623 = vmatpush1.msra.mxu0 0.0
  %7624 = vmatprep.subr.mxu0 0.0
  %7625 = vmatpush1.msra.mxu0 0.0
  %7626 = vmatprep.subr.mxu0 0.0
  %7627 = vmatpush1.msra.mxu0 0.0
  %7628 = vmatprep.subr.mxu0 0.0
  %7629 = vmatpush1.msra.mxu0 0.0
  %7630 = vmatprep.subr.mxu0 0.0
  %7631 = vmatpush1.msra.mxu0 0.0
  %7632 = vmatprep.subr.mxu0 0.0
  %7633 = vmatpush1.msra.mxu0 0.0
  %7634 = vmatprep.subr.mxu0 0.0
  %7635 = vmatpush1.msra.mxu0 0.0
  %7636 = vmatprep.subr.mxu0 0.0
  %7637 = vmatpush1.msra.mxu0 0.0
  %7638 = vmatprep.subr.mxu0 0.0
  %7639 = vmatpush1.msra.mxu0 0.0
  %7640 = vmatprep.subr.mxu0 0.0
  %7641 = vmatpush1.msra.mxu0 0.0
  %7642 = vmatprep.subr.mxu0 0.0
  %7643 = vmatpush1.msra.mxu0 0.0
  %7644 = vmatprep.subr.mxu0 0.0
  %7645 = vmatpush1.msra.mxu0 0.0
  %7646 = vmatprep.subr.mxu0 0.0
  %7647 = vmatpush1.msra.mxu0 0.0
  %7648 = vmatprep.subr.mxu0 0.0
  %7649 = vmatpush1.msra.mxu0 0.0
  %7650 = vmatprep.subr.mxu0 0.0
  %7651 = vmatpush1.msra.mxu0 0.0
  %7652 = vmatprep.subr.mxu0 0.0
  %7653 = vmatpush1.msra.mxu0 0.0
  %7654 = vmatprep.subr.mxu0 0.0
  %7655 = vmatpush1.msra.mxu0 0.0
  %7656 = vmatprep.subr.mxu0 0.0
  %7657 = vmatpush1.msra.mxu0 0.0
  %7658 = vmatprep.subr.mxu0 0.0
  %7659 = vmatpush1.msra.mxu0 0.0
  %7660 = vmatprep.subr.mxu0 0.0
  %7661 = vmatpush1.msra.mxu0 0.0
  %7662 = vmatprep.subr.mxu0 0.0
  %7663 = vmatpush1.msra.mxu0 0.0
  %7664 = vmatprep.subr.mxu0 0.0
  %7665 = vmatpush1.msra.mxu0 0.0
  %7666 = vmatprep.mubr.f32.mxu0 0.0
  %7667 = vmatmul.mubr.f32.gmra.mrb[0].mxu0 %v7592
  %v7668 = vpop.f32.mrb[0].mxu0
  %v7669 = vadd.f32 0.0, %v7668
  %v7670 = vpop.f32.mrb[0].mxu0
  %7671 = vmatprep.mubr.f32.mxu0 0.0
  %7672 = vmatmul.mubr.f32.gmra.mrb[0].mxu0 %v7595
  %v7673 = vpop.f32.mrb[0].mxu0
  %v7674 = vadd.f32 0.0, %v7673
  %v7675 = vpop.f32.mrb[0].mxu0
  %7676 = vmatprep.mubr.f32.mxu0 0.0
  %7677 = vmatmul.mubr.f32.gmra.mrb[0].mxu0 %v7598
  %v7678 = vpop.f32.mrb[0].mxu0
  %v7679 = vadd.f32 0.0, %v7678
  %v7680 = vpop.f32.mrb[0].mxu0
  %7681 = vdwg.mxu0
  %7682 = vrot.lane.b32.xlu0 %v6114, 48
  %v7683 = vpop.permute.xlu0 %7682
  %7684 = vrot.lane.b32.xlu0 %v6119, 48
  %v7685 = vpop.permute.xlu0 %7684
  %7686 = vrot.lane.b32.xlu0 %v6124, 48
  %v7687 = vpop.permute.xlu0 %7686
  %v7691 = vsel %vm1298, %v7545, 0
  %v7694 = vsel %vm1298, %v7547, 0
  %v7697 = vsel %vm1298, %v7549, 0
  %v7699 = vsel %vm765, %v7687, 0
  %7701 = vmatprep.subr.mxu0 0.0
  %7702 = vmatpush1.msra.mxu0 %v7683
  %7703 = vmatprep.subr.mxu0 0.0
  %7704 = vmatpush1.msra.mxu0 %v7685
  %7705 = vmatprep.subr.mxu0 0.0
  %7706 = vmatpush1.msra.mxu0 %v7699
  %7707 = vmatprep.subr.mxu0 0.0
  %7708 = vmatpush1.msra.mxu0 0.0
  %7709 = vmatprep.subr.mxu0 0.0
  %7710 = vmatpush1.msra.mxu0 0.0
  %7711 = vmatprep.subr.mxu0 0.0
  %7712 = vmatpush1.msra.mxu0 0.0
  %7713 = vmatprep.subr.mxu0 0.0
  %7714 = vmatpush1.msra.mxu0 0.0
  %7715 = vmatprep.subr.mxu0 0.0
  %7716 = vmatpush1.msra.mxu0 0.0
  %7717 = vmatprep.subr.mxu0 0.0
  %7718 = vmatpush1.msra.mxu0 0.0
  %7719 = vmatprep.subr.mxu0 0.0
  %7720 = vmatpush1.msra.mxu0 0.0
  %7721 = vmatprep.subr.mxu0 0.0
  %7722 = vmatpush1.msra.mxu0 0.0
  %7723 = vmatprep.subr.mxu0 0.0
  %7724 = vmatpush1.msra.mxu0 0.0
  %7725 = vmatprep.subr.mxu0 0.0
  %7726 = vmatpush1.msra.mxu0 0.0
  %7727 = vmatprep.subr.mxu0 0.0
  %7728 = vmatpush1.msra.mxu0 0.0
  %7729 = vmatprep.subr.mxu0 0.0
  %7730 = vmatpush1.msra.mxu0 0.0
  %7731 = vmatprep.subr.mxu0 0.0
  %7732 = vmatpush1.msra.mxu0 0.0
  %7733 = vmatprep.subr.mxu0 0.0
  %7734 = vmatpush1.msra.mxu0 0.0
  %7735 = vmatprep.subr.mxu0 0.0
  %7736 = vmatpush1.msra.mxu0 0.0
  %7737 = vmatprep.subr.mxu0 0.0
  %7738 = vmatpush1.msra.mxu0 0.0
  %7739 = vmatprep.subr.mxu0 0.0
  %7740 = vmatpush1.msra.mxu0 0.0
  %7741 = vmatprep.subr.mxu0 0.0
  %7742 = vmatpush1.msra.mxu0 0.0
  %7743 = vmatprep.subr.mxu0 0.0
  %7744 = vmatpush1.msra.mxu0 0.0
  %7745 = vmatprep.subr.mxu0 0.0
  %7746 = vmatpush1.msra.mxu0 0.0
  %7747 = vmatprep.subr.mxu0 0.0
  %7748 = vmatpush1.msra.mxu0 0.0
  %7749 = vmatprep.subr.mxu0 0.0
  %7750 = vmatpush1.msra.mxu0 0.0
  %7751 = vmatprep.subr.mxu0 0.0
  %7752 = vmatpush1.msra.mxu0 0.0
  %7753 = vmatprep.subr.mxu0 0.0
  %7754 = vmatpush1.msra.mxu0 0.0
  %7755 = vmatprep.subr.mxu0 0.0
  %7756 = vmatpush1.msra.mxu0 0.0
  %7757 = vmatprep.subr.mxu0 0.0
  %7758 = vmatpush1.msra.mxu0 0.0
  %7759 = vmatprep.subr.mxu0 0.0
  %7760 = vmatpush1.msra.mxu0 0.0
  %7761 = vmatprep.subr.mxu0 0.0
  %7762 = vmatpush1.msra.mxu0 0.0
  %7763 = vmatprep.subr.mxu0 0.0
  %7764 = vmatpush1.msra.mxu0 0.0
  %7765 = vmatprep.mubr.f32.mxu0 0.0
  %7766 = vmatmul.mubr.f32.gmra.mrb[0].mxu0 %v7691
  %v7767 = vpop.f32.mrb[0].mxu0
  %v7768 = vadd.f32 %v7669, %v7767
  %v7769 = vpop.f32.mrb[0].mxu0
  %7770 = vmatprep.mubr.f32.mxu0 0.0
  %7771 = vmatmul.mubr.f32.gmra.mrb[0].mxu0 %v7694
  %v7772 = vpop.f32.mrb[0].mxu0
  %v7773 = vadd.f32 %v7674, %v7772
  %v7774 = vpop.f32.mrb[0].mxu0
  %7775 = vmatprep.mubr.f32.mxu0 0.0
  %7776 = vmatmul.mubr.f32.gmra.mrb[0].mxu0 %v7697
  %v7777 = vpop.f32.mrb[0].mxu0
  %v7778 = vadd.f32 %v7679, %v7777
  %v7779 = vpop.f32.mrb[0].mxu0
  %7780 = vdwg.mxu0
  %v7781 = vmul.f32 %v7768, %v7580
  %v7782 = vmul.f32 %v7773, %v7581
  %v7783 = vmul.f32 %v7778, %v7582
  %v7785 = vsel %vm3495, %v7781, 0
  %v7788 = vsel %vm3495, %v7782, 0
  %v7791 = vsel %vm3495, %v7783, 0
  %7793 = vmatprep.subr.mxu0 0.0
  %7794 = vmatpush1.msra.mxu0 %v290
  %7795 = vmatprep.subr.mxu0 0.0
  %7796 = vmatpush1.msra.mxu0 0.0
  %7797 = vmatprep.subr.mxu0 0.0
  %7798 = vmatpush1.msra.mxu0 0.0
  %7799 = vmatprep.subr.mxu0 0.0
  %7800 = vmatpush1.msra.mxu0 0.0
  %7801 = vmatprep.subr.mxu0 0.0
  %7802 = vmatpush1.msra.mxu0 0.0
  %7803 = vmatprep.subr.mxu0 0.0
  %7804 = vmatpush1.msra.mxu0 0.0
  %7805 = vmatprep.subr.mxu0 0.0
  %7806 = vmatpush1.msra.mxu0 0.0
  %7807 = vmatprep.subr.mxu0 0.0
  %7808 = vmatpush1.msra.mxu0 0.0
  %7809 = vmatprep.subr.mxu0 0.0
  %7810 = vmatpush1.msra.mxu0 0.0
  %7811 = vmatprep.subr.mxu0 0.0
  %7812 = vmatpush1.msra.mxu0 0.0
  %7813 = vmatprep.subr.mxu0 0.0
  %7814 = vmatpush1.msra.mxu0 0.0
  %7815 = vmatprep.subr.mxu0 0.0
  %7816 = vmatpush1.msra.mxu0 0.0
  %7817 = vmatprep.subr.mxu0 0.0
  %7818 = vmatpush1.msra.mxu0 0.0
  %7819 = vmatprep.subr.mxu0 0.0
  %7820 = vmatpush1.msra.mxu0 0.0
  %7821 = vmatprep.subr.mxu0 0.0
  %7822 = vmatpush1.msra.mxu0 0.0
  %7823 = vmatprep.subr.mxu0 0.0
  %7824 = vmatpush1.msra.mxu0 0.0
  %7825 = vmatprep.subr.mxu0 0.0
  %7826 = vmatpush1.msra.mxu0 0.0
  %7827 = vmatprep.subr.mxu0 0.0
  %7828 = vmatpush1.msra.mxu0 0.0
  %7829 = vmatprep.subr.mxu0 0.0
  %7830 = vmatpush1.msra.mxu0 0.0
  %7831 = vmatprep.subr.mxu0 0.0
  %7832 = vmatpush1.msra.mxu0 0.0
  %7833 = vmatprep.subr.mxu0 0.0
  %7834 = vmatpush1.msra.mxu0 0.0
  %7835 = vmatprep.subr.mxu0 0.0
  %7836 = vmatpush1.msra.mxu0 0.0
  %7837 = vmatprep.subr.mxu0 0.0
  %7838 = vmatpush1.msra.mxu0 0.0
  %7839 = vmatprep.subr.mxu0 0.0
  %7840 = vmatpush1.msra.mxu0 0.0
  %7841 = vmatprep.subr.mxu0 0.0
  %7842 = vmatpush1.msra.mxu0 0.0
  %7843 = vmatprep.subr.mxu0 0.0
  %7844 = vmatpush1.msra.mxu0 0.0
  %7845 = vmatprep.subr.mxu0 0.0
  %7846 = vmatpush1.msra.mxu0 0.0
  %7847 = vmatprep.subr.mxu0 0.0
  %7848 = vmatpush1.msra.mxu0 0.0
  %7849 = vmatprep.subr.mxu0 0.0
  %7850 = vmatpush1.msra.mxu0 0.0
  %7851 = vmatprep.subr.mxu0 0.0
  %7852 = vmatpush1.msra.mxu0 0.0
  %7853 = vmatprep.subr.mxu0 0.0
  %7854 = vmatpush1.msra.mxu0 0.0
  %7855 = vmatprep.subr.mxu0 0.0
  %7856 = vmatpush1.msra.mxu0 0.0
  %7857 = vmatprep.mubr.f32.mxu0 0.0
  %7858 = vmatmul.mubr.f32.gmra.mrb[0].mxu0 %v7785
  %v7859 = vpop.f32.mrb[0].mxu0
  %v7860 = vadd.f32 0.0, %v7859
  %v7861 = vpop.f32.mrb[0].mxu0
  %7862 = vmatprep.mubr.f32.mxu0 0.0
  %7863 = vmatmul.mubr.f32.gmra.mrb[0].mxu0 %v7788
  %v7864 = vpop.f32.mrb[0].mxu0
  %v7865 = vadd.f32 0.0, %v7864
  %v7866 = vpop.f32.mrb[0].mxu0
  %7867 = vmatprep.mubr.f32.mxu0 0.0
  %7868 = vmatmul.mubr.f32.gmra.mrb[0].mxu0 %v7791
  %v7869 = vpop.f32.mrb[0].mxu0
  %v7870 = vadd.f32 0.0, %v7869
  %v7871 = vpop.f32.mrb[0].mxu0
  %7872 = vdwg.mxu0
  %v7873 = vadd.f32 %v7311, %v7860
  %v7874 = vadd.f32 %v7316, %v7865
  %v7875 = vadd.f32 %v7321, %v7870
  %7876 = vrot.lane.b32.xlu0 %v6127, 104
  %v7877 = vpop.permute.xlu0 %7876
  %7878 = vrot.lane.b32.xlu0 %v6128, 104
  %v7879 = vpop.permute.xlu0 %7878
  %7880 = vrot.lane.b32.xlu0 %v6129, 104
  %v7881 = vpop.permute.xlu0 %7880
  %7882 = vrot.lane.b32.xlu0 %v6114, 72
  %v7883 = vpop.permute.xlu0 %7882
  %7884 = vrot.lane.b32.xlu0 %v6119, 72
  %v7885 = vpop.permute.xlu0 %7884
  %7886 = vrot.lane.b32.xlu0 %v6124, 72
  %v7887 = vpop.permute.xlu0 %7886
  %v7888 = vsel %vm3495, %v7877, 0
  %v7890 = vsel %vm3495, %v7879, 0
  %v7892 = vsel %vm3495, %v7881, 0
  %v7894 = vsel %vm3495, %v7883, 0
  %v7896 = vsel %vm3495, %v7885, 0
  %v7898 = vsel %vm3495, %v7887, 0
  %7900 = vmatprep.subr.mxu0 0.0
  %7901 = vmatpush1.xpose.msra.mxu0 %v7894
  %7902 = vmatprep.subr.mxu0 0.0
  %7903 = vmatpush1.xpose.msra.mxu0 %v7896
  %7904 = vmatprep.subr.mxu0 0.0
  %7905 = vmatpush1.xpose.msra.mxu0 %v7898
  %7906 = vmatprep.subr.mxu0 0.0
  %7907 = vmatpush1.xpose.msra.mxu0 0.0
  %7908 = vmatprep.subr.mxu0 0.0
  %7909 = vmatpush1.xpose.msra.mxu0 0.0
  %7910 = vmatprep.subr.mxu0 0.0
  %7911 = vmatpush1.xpose.msra.mxu0 0.0
  %7912 = vmatprep.subr.mxu0 0.0
  %7913 = vmatpush1.xpose.msra.mxu0 0.0
  %7914 = vmatprep.subr.mxu0 0.0
  %7915 = vmatpush1.xpose.msra.mxu0 0.0
  %7916 = vmatprep.subr.mxu0 0.0
  %7917 = vmatpush1.xpose.msra.mxu0 0.0
  %7918 = vmatprep.subr.mxu0 0.0
  %7919 = vmatpush1.xpose.msra.mxu0 0.0
  %7920 = vmatprep.subr.mxu0 0.0
  %7921 = vmatpush1.xpose.msra.mxu0 0.0
  %7922 = vmatprep.subr.mxu0 0.0
  %7923 = vmatpush1.xpose.msra.mxu0 0.0
  %7924 = vmatprep.subr.mxu0 0.0
  %7925 = vmatpush1.xpose.msra.mxu0 0.0
  %7926 = vmatprep.subr.mxu0 0.0
  %7927 = vmatpush1.xpose.msra.mxu0 0.0
  %7928 = vmatprep.subr.mxu0 0.0
  %7929 = vmatpush1.xpose.msra.mxu0 0.0
  %7930 = vmatprep.subr.mxu0 0.0
  %7931 = vmatpush1.xpose.msra.mxu0 0.0
  %7932 = vmatprep.subr.mxu0 0.0
  %7933 = vmatpush1.xpose.msra.mxu0 0.0
  %7934 = vmatprep.subr.mxu0 0.0
  %7935 = vmatpush1.xpose.msra.mxu0 0.0
  %7936 = vmatprep.subr.mxu0 0.0
  %7937 = vmatpush1.xpose.msra.mxu0 0.0
  %7938 = vmatprep.subr.mxu0 0.0
  %7939 = vmatpush1.xpose.msra.mxu0 0.0
  %7940 = vmatprep.subr.mxu0 0.0
  %7941 = vmatpush1.xpose.msra.mxu0 0.0
  %7942 = vmatprep.subr.mxu0 0.0
  %7943 = vmatpush1.xpose.msra.mxu0 0.0
  %7944 = vmatprep.subr.mxu0 0.0
  %7945 = vmatpush1.xpose.msra.mxu0 0.0
  %7946 = vmatprep.subr.mxu0 0.0
  %7947 = vmatpush1.xpose.msra.mxu0 0.0
  %7948 = vmatprep.subr.mxu0 0.0
  %7949 = vmatpush1.xpose.msra.mxu0 0.0
  %7950 = vmatprep.subr.mxu0 0.0
  %7951 = vmatpush1.xpose.msra.mxu0 0.0
  %7952 = vmatprep.subr.mxu0 0.0
  %7953 = vmatpush1.xpose.msra.mxu0 0.0
  %7954 = vmatprep.subr.mxu0 0.0
  %7955 = vmatpush1.xpose.msra.mxu0 0.0
  %7956 = vmatprep.subr.mxu0 0.0
  %7957 = vmatpush1.xpose.msra.mxu0 0.0
  %7958 = vmatprep.subr.mxu0 0.0
  %7959 = vmatpush1.xpose.msra.mxu0 0.0
  %7960 = vmatprep.subr.mxu0 0.0
  %7961 = vmatpush1.xpose.msra.mxu0 0.0
  %7962 = vmatprep.subr.mxu0 0.0
  %7963 = vmatpush1.xpose.msra.mxu0 0.0
  %7964 = vmatprep.mubr.f32.mxu0 0.0
  %7965 = vmatmul.mubr.f32.gmra.mrb[0].mxu0 %v7888
  %v7966 = vpop.f32.mrb[0].mxu0
  %v7967 = vadd.f32 %v177, %v7966
  %v7968 = vpop.f32.mrb[0].mxu0
  %7969 = vmatprep.mubr.f32.mxu0 0.0
  %7970 = vmatmul.mubr.f32.gmra.mrb[0].mxu0 %v7890
  %v7971 = vpop.f32.mrb[0].mxu0
  %v7972 = vadd.f32 %v178, %v7971
  %v7973 = vpop.f32.mrb[0].mxu0
  %7974 = vmatprep.mubr.f32.mxu0 0.0
  %7975 = vmatmul.mubr.f32.gmra.mrb[0].mxu0 %v7892
  %v7976 = vpop.f32.mrb[0].mxu0
  %v7977 = vadd.f32 %v179, %v7976
  %v7978 = vpop.f32.mrb[0].mxu0
  %7979 = vdwg.mxu0
  %7980 = vrot.lane.b32.xlu0 %v6216, 104
  %v7981 = vpop.permute.xlu0 %7980
  %7982 = vrot.lane.b32.xlu0 %v6221, 104
  %v7983 = vpop.permute.xlu0 %7982
  %7984 = vrot.lane.b32.xlu0 %v6226, 104
  %v7985 = vpop.permute.xlu0 %7984
  %v7986 = vsel %vm3495, %v7981, 0
  %v7988 = vsel %vm3495, %v7983, 0
  %v7990 = vsel %vm3495, %v7985, 0
  %7992 = vmatprep.subr.mxu0 0.0
  %7993 = vmatpush1.xpose.msra.mxu0 %v7986
  %7994 = vmatprep.subr.mxu0 0.0
  %7995 = vmatpush1.xpose.msra.mxu0 %v7988
  %7996 = vmatprep.subr.mxu0 0.0
  %7997 = vmatpush1.xpose.msra.mxu0 %v7990
  %7998 = vmatprep.subr.mxu0 0.0
  %7999 = vmatpush1.xpose.msra.mxu0 0.0
  %8000 = vmatprep.subr.mxu0 0.0
  %8001 = vmatpush1.xpose.msra.mxu0 0.0
  %8002 = vmatprep.subr.mxu0 0.0
  %8003 = vmatpush1.xpose.msra.mxu0 0.0
  %8004 = vmatprep.subr.mxu0 0.0
  %8005 = vmatpush1.xpose.msra.mxu0 0.0
  %8006 = vmatprep.subr.mxu0 0.0
  %8007 = vmatpush1.xpose.msra.mxu0 0.0
  %8008 = vmatprep.subr.mxu0 0.0
  %8009 = vmatpush1.xpose.msra.mxu0 0.0
  %8010 = vmatprep.subr.mxu0 0.0
  %8011 = vmatpush1.xpose.msra.mxu0 0.0
  %8012 = vmatprep.subr.mxu0 0.0
  %8013 = vmatpush1.xpose.msra.mxu0 0.0
  %8014 = vmatprep.subr.mxu0 0.0
  %8015 = vmatpush1.xpose.msra.mxu0 0.0
  %8016 = vmatprep.subr.mxu0 0.0
  %8017 = vmatpush1.xpose.msra.mxu0 0.0
  %8018 = vmatprep.subr.mxu0 0.0
  %8019 = vmatpush1.xpose.msra.mxu0 0.0
  %8020 = vmatprep.subr.mxu0 0.0
  %8021 = vmatpush1.xpose.msra.mxu0 0.0
  %8022 = vmatprep.subr.mxu0 0.0
  %8023 = vmatpush1.xpose.msra.mxu0 0.0
  %8024 = vmatprep.subr.mxu0 0.0
  %8025 = vmatpush1.xpose.msra.mxu0 0.0
  %8026 = vmatprep.subr.mxu0 0.0
  %8027 = vmatpush1.xpose.msra.mxu0 0.0
  %8028 = vmatprep.subr.mxu0 0.0
  %8029 = vmatpush1.xpose.msra.mxu0 0.0
  %8030 = vmatprep.subr.mxu0 0.0
  %8031 = vmatpush1.xpose.msra.mxu0 0.0
  %8032 = vmatprep.subr.mxu0 0.0
  %8033 = vmatpush1.xpose.msra.mxu0 0.0
  %8034 = vmatprep.subr.mxu0 0.0
  %8035 = vmatpush1.xpose.msra.mxu0 0.0
  %8036 = vmatprep.subr.mxu0 0.0
  %8037 = vmatpush1.xpose.msra.mxu0 0.0
  %8038 = vmatprep.subr.mxu0 0.0
  %8039 = vmatpush1.xpose.msra.mxu0 0.0
  %8040 = vmatprep.subr.mxu0 0.0
  %8041 = vmatpush1.xpose.msra.mxu0 0.0
  %8042 = vmatprep.subr.mxu0 0.0
  %8043 = vmatpush1.xpose.msra.mxu0 0.0
  %8044 = vmatprep.subr.mxu0 0.0
  %8045 = vmatpush1.xpose.msra.mxu0 0.0
  %8046 = vmatprep.subr.mxu0 0.0
  %8047 = vmatpush1.xpose.msra.mxu0 0.0
  %8048 = vmatprep.subr.mxu0 0.0
  %8049 = vmatpush1.xpose.msra.mxu0 0.0
  %8050 = vmatprep.subr.mxu0 0.0
  %8051 = vmatpush1.xpose.msra.mxu0 0.0
  %8052 = vmatprep.subr.mxu0 0.0
  %8053 = vmatpush1.xpose.msra.mxu0 0.0
  %8054 = vmatprep.subr.mxu0 0.0
  %8055 = vmatpush1.xpose.msra.mxu0 0.0
  %8056 = vmatprep.mubr.f32.mxu0 0.0
  %8057 = vmatmul.mubr.f32.gmra.mrb[0].mxu0 %v7888
  %v8058 = vpop.f32.mrb[0].mxu0
  %v8059 = vadd.f32 %v177, %v8058
  %v8060 = vpop.f32.mrb[0].mxu0
  %8061 = vmatprep.mubr.f32.mxu0 0.0
  %8062 = vmatmul.mubr.f32.gmra.mrb[0].mxu0 %v7890
  %v8063 = vpop.f32.mrb[0].mxu0
  %v8064 = vadd.f32 %v178, %v8063
  %v8065 = vpop.f32.mrb[0].mxu0
  %8066 = vmatprep.mubr.f32.mxu0 0.0
  %8067 = vmatmul.mubr.f32.gmra.mrb[0].mxu0 %v7892
  %v8068 = vpop.f32.mrb[0].mxu0
  %v8069 = vadd.f32 %v179, %v8068
  %v8070 = vpop.f32.mrb[0].mxu0
  %8071 = vdwg.mxu0
  %v8072 = vsel %vm1298, %v7967, -inf
  %8073 = vmax.xlane.f32.xlu0 %v8072
  %v8074 = vpop.xlane.xlu0 %8073
  %v8075 = vsel %vm1298, %v7972, -inf
  %8076 = vmax.xlane.f32.xlu0 %v8075
  %v8077 = vpop.xlane.xlu0 %8076
  %v8078 = vsel %vm1305, %v7977, -inf
  %8079 = vmax.xlane.f32.xlu0 %v8078
  %v8080 = vpop.xlane.xlu0 %8079
  %v8081 = vsel %vm1298, %v8059, -inf
  %8082 = vmax.xlane.f32.xlu0 %v8081
  %v8083 = vpop.xlane.xlu0 %8082
  %v8084 = vsel %vm1298, %v8064, -inf
  %8085 = vmax.xlane.f32.xlu0 %v8084
  %v8086 = vpop.xlane.xlu0 %8085
  %v8087 = vsel %vm1305, %v8069, -inf
  %8088 = vmax.xlane.f32.xlu0 %v8087
  %v8089 = vpop.xlane.xlu0 %8088
  %v8090 = vmax.f32 %v8074, %v8083
  %v8091 = vmax.f32 %v8077, %v8086
  %v8092 = vmax.f32 %v8080, %v8089
  %v8093 = vsub.f32 %v7967, %v8090
  %v8094 = vsub.f32 %v7972, %v8091
  %v8095 = vsub.f32 %v7977, %v8092
  %v8096 = vmul.f32 %v8093, 1.442695
  %v8097 = vpow.pop %v8096
  %v8098 = vmul.f32 %v8094, 1.442695
  %v8099 = vpow.pop %v8098
  %v8100 = vmul.f32 %v8095, 1.442695
  %v8101 = vpow.pop %v8100
  %v8102 = vsub.f32 %v8059, %v8090
  %v8103 = vsub.f32 %v8064, %v8091
  %v8104 = vsub.f32 %v8069, %v8092
  %v8105 = vmul.f32 %v8102, 1.442695
  %v8106 = vpow.pop %v8105
  %v8107 = vmul.f32 %v8103, 1.442695
  %v8108 = vpow.pop %v8107
  %v8109 = vmul.f32 %v8104, 1.442695
  %v8110 = vpow.pop %v8109
  %v8111 = vsel %vm1298, %v8097, 0.0
  %8112 = vadd.xlane.f32.xlu0 %v8111
  %v8113 = vpop.xlane.xlu0 %8112
  %v8114 = vsel %vm1298, %v8099, 0.0
  %8115 = vadd.xlane.f32.xlu0 %v8114
  %v8116 = vpop.xlane.xlu0 %8115
  %v8117 = vsel %vm1305, %v8101, 0.0
  %8118 = vadd.xlane.f32.xlu0 %v8117
  %v8119 = vpop.xlane.xlu0 %8118
  %v8120 = vsel %vm1298, %v8106, 0.0
  %8121 = vadd.xlane.f32.xlu0 %v8120
  %v8122 = vpop.xlane.xlu0 %8121
  %v8123 = vsel %vm1298, %v8108, 0.0
  %8124 = vadd.xlane.f32.xlu0 %v8123
  %v8125 = vpop.xlane.xlu0 %8124
  %v8126 = vsel %vm1305, %v8110, 0.0
  %8127 = vadd.xlane.f32.xlu0 %v8126
  %v8128 = vpop.xlane.xlu0 %8127
  %v8129 = vadd.f32 %v8113, %v8122
  %v8130 = vadd.f32 %v8116, %v8125
  %v8131 = vadd.f32 %v8119, %v8128
  %v8132 = vrcp.pop %v8129
  %v8133 = vrcp.pop %v8130
  %v8134 = vrcp.pop %v8131
  %8135 = vrot.lane.b32.xlu0 %v6216, 72
  %v8136 = vpop.permute.xlu0 %8135
  %8137 = vrot.lane.b32.xlu0 %v6221, 72
  %v8138 = vpop.permute.xlu0 %8137
  %8139 = vrot.lane.b32.xlu0 %v6226, 72
  %v8140 = vpop.permute.xlu0 %8139
  %v8144 = vsel %vm1298, %v8106, 0
  %v8147 = vsel %vm1298, %v8108, 0
  %v8150 = vsel %vm1298, %v8110, 0
  %v8152 = vsel %vm765, %v8140, 0
  %8154 = vmatprep.subr.mxu0 0.0
  %8155 = vmatpush1.msra.mxu0 %v8136
  %8156 = vmatprep.subr.mxu0 0.0
  %8157 = vmatpush1.msra.mxu0 %v8138
  %8158 = vmatprep.subr.mxu0 0.0
  %8159 = vmatpush1.msra.mxu0 %v8152
  %8160 = vmatprep.subr.mxu0 0.0
  %8161 = vmatpush1.msra.mxu0 0.0
  %8162 = vmatprep.subr.mxu0 0.0
  %8163 = vmatpush1.msra.mxu0 0.0
  %8164 = vmatprep.subr.mxu0 0.0
  %8165 = vmatpush1.msra.mxu0 0.0
  %8166 = vmatprep.subr.mxu0 0.0
  %8167 = vmatpush1.msra.mxu0 0.0
  %8168 = vmatprep.subr.mxu0 0.0
  %8169 = vmatpush1.msra.mxu0 0.0
  %8170 = vmatprep.subr.mxu0 0.0
  %8171 = vmatpush1.msra.mxu0 0.0
  %8172 = vmatprep.subr.mxu0 0.0
  %8173 = vmatpush1.msra.mxu0 0.0
  %8174 = vmatprep.subr.mxu0 0.0
  %8175 = vmatpush1.msra.mxu0 0.0
  %8176 = vmatprep.subr.mxu0 0.0
  %8177 = vmatpush1.msra.mxu0 0.0
  %8178 = vmatprep.subr.mxu0 0.0
  %8179 = vmatpush1.msra.mxu0 0.0
  %8180 = vmatprep.subr.mxu0 0.0
  %8181 = vmatpush1.msra.mxu0 0.0
  %8182 = vmatprep.subr.mxu0 0.0
  %8183 = vmatpush1.msra.mxu0 0.0
  %8184 = vmatprep.subr.mxu0 0.0
  %8185 = vmatpush1.msra.mxu0 0.0
  %8186 = vmatprep.subr.mxu0 0.0
  %8187 = vmatpush1.msra.mxu0 0.0
  %8188 = vmatprep.subr.mxu0 0.0
  %8189 = vmatpush1.msra.mxu0 0.0
  %8190 = vmatprep.subr.mxu0 0.0
  %8191 = vmatpush1.msra.mxu0 0.0
  %8192 = vmatprep.subr.mxu0 0.0
  %8193 = vmatpush1.msra.mxu0 0.0
  %8194 = vmatprep.subr.mxu0 0.0
  %8195 = vmatpush1.msra.mxu0 0.0
  %8196 = vmatprep.subr.mxu0 0.0
  %8197 = vmatpush1.msra.mxu0 0.0
  %8198 = vmatprep.subr.mxu0 0.0
  %8199 = vmatpush1.msra.mxu0 0.0
  %8200 = vmatprep.subr.mxu0 0.0
  %8201 = vmatpush1.msra.mxu0 0.0
  %8202 = vmatprep.subr.mxu0 0.0
  %8203 = vmatpush1.msra.mxu0 0.0
  %8204 = vmatprep.subr.mxu0 0.0
  %8205 = vmatpush1.msra.mxu0 0.0
  %8206 = vmatprep.subr.mxu0 0.0
  %8207 = vmatpush1.msra.mxu0 0.0
  %8208 = vmatprep.subr.mxu0 0.0
  %8209 = vmatpush1.msra.mxu0 0.0
  %8210 = vmatprep.subr.mxu0 0.0
  %8211 = vmatpush1.msra.mxu0 0.0
  %8212 = vmatprep.subr.mxu0 0.0
  %8213 = vmatpush1.msra.mxu0 0.0
  %8214 = vmatprep.subr.mxu0 0.0
  %8215 = vmatpush1.msra.mxu0 0.0
  %8216 = vmatprep.subr.mxu0 0.0
  %8217 = vmatpush1.msra.mxu0 0.0
  %8218 = vmatprep.mubr.f32.mxu0 0.0
  %8219 = vmatmul.mubr.f32.gmra.mrb[0].mxu0 %v8144
  %v8220 = vpop.f32.mrb[0].mxu0
  %v8221 = vadd.f32 0.0, %v8220
  %v8222 = vpop.f32.mrb[0].mxu0
  %8223 = vmatprep.mubr.f32.mxu0 0.0
  %8224 = vmatmul.mubr.f32.gmra.mrb[0].mxu0 %v8147
  %v8225 = vpop.f32.mrb[0].mxu0
  %v8226 = vadd.f32 0.0, %v8225
  %v8227 = vpop.f32.mrb[0].mxu0
  %8228 = vmatprep.mubr.f32.mxu0 0.0
  %8229 = vmatmul.mubr.f32.gmra.mrb[0].mxu0 %v8150
  %v8230 = vpop.f32.mrb[0].mxu0
  %v8231 = vadd.f32 0.0, %v8230
  %v8232 = vpop.f32.mrb[0].mxu0
  %8233 = vdwg.mxu0
  %8234 = vrot.lane.b32.xlu0 %v6114, 40
  %v8235 = vpop.permute.xlu0 %8234
  %8236 = vrot.lane.b32.xlu0 %v6119, 40
  %v8237 = vpop.permute.xlu0 %8236
  %8238 = vrot.lane.b32.xlu0 %v6124, 40
  %v8239 = vpop.permute.xlu0 %8238
  %v8243 = vsel %vm1298, %v8097, 0
  %v8246 = vsel %vm1298, %v8099, 0
  %v8249 = vsel %vm1298, %v8101, 0
  %v8251 = vsel %vm765, %v8239, 0
  %8253 = vmatprep.subr.mxu0 0.0
  %8254 = vmatpush1.msra.mxu0 %v8235
  %8255 = vmatprep.subr.mxu0 0.0
  %8256 = vmatpush1.msra.mxu0 %v8237
  %8257 = vmatprep.subr.mxu0 0.0
  %8258 = vmatpush1.msra.mxu0 %v8251
  %8259 = vmatprep.subr.mxu0 0.0
  %8260 = vmatpush1.msra.mxu0 0.0
  %8261 = vmatprep.subr.mxu0 0.0
  %8262 = vmatpush1.msra.mxu0 0.0
  %8263 = vmatprep.subr.mxu0 0.0
  %8264 = vmatpush1.msra.mxu0 0.0
  %8265 = vmatprep.subr.mxu0 0.0
  %8266 = vmatpush1.msra.mxu0 0.0
  %8267 = vmatprep.subr.mxu0 0.0
  %8268 = vmatpush1.msra.mxu0 0.0
  %8269 = vmatprep.subr.mxu0 0.0
  %8270 = vmatpush1.msra.mxu0 0.0
  %8271 = vmatprep.subr.mxu0 0.0
  %8272 = vmatpush1.msra.mxu0 0.0
  %8273 = vmatprep.subr.mxu0 0.0
  %8274 = vmatpush1.msra.mxu0 0.0
  %8275 = vmatprep.subr.mxu0 0.0
  %8276 = vmatpush1.msra.mxu0 0.0
  %8277 = vmatprep.subr.mxu0 0.0
  %8278 = vmatpush1.msra.mxu0 0.0
  %8279 = vmatprep.subr.mxu0 0.0
  %8280 = vmatpush1.msra.mxu0 0.0
  %8281 = vmatprep.subr.mxu0 0.0
  %8282 = vmatpush1.msra.mxu0 0.0
  %8283 = vmatprep.subr.mxu0 0.0
  %8284 = vmatpush1.msra.mxu0 0.0
  %8285 = vmatprep.subr.mxu0 0.0
  %8286 = vmatpush1.msra.mxu0 0.0
  %8287 = vmatprep.subr.mxu0 0.0
  %8288 = vmatpush1.msra.mxu0 0.0
  %8289 = vmatprep.subr.mxu0 0.0
  %8290 = vmatpush1.msra.mxu0 0.0
  %8291 = vmatprep.subr.mxu0 0.0
  %8292 = vmatpush1.msra.mxu0 0.0
  %8293 = vmatprep.subr.mxu0 0.0
  %8294 = vmatpush1.msra.mxu0 0.0
  %8295 = vmatprep.subr.mxu0 0.0
  %8296 = vmatpush1.msra.mxu0 0.0
  %8297 = vmatprep.subr.mxu0 0.0
  %8298 = vmatpush1.msra.mxu0 0.0
  %8299 = vmatprep.subr.mxu0 0.0
  %8300 = vmatpush1.msra.mxu0 0.0
  %8301 = vmatprep.subr.mxu0 0.0
  %8302 = vmatpush1.msra.mxu0 0.0
  %8303 = vmatprep.subr.mxu0 0.0
  %8304 = vmatpush1.msra.mxu0 0.0
  %8305 = vmatprep.subr.mxu0 0.0
  %8306 = vmatpush1.msra.mxu0 0.0
  %8307 = vmatprep.subr.mxu0 0.0
  %8308 = vmatpush1.msra.mxu0 0.0
  %8309 = vmatprep.subr.mxu0 0.0
  %8310 = vmatpush1.msra.mxu0 0.0
  %8311 = vmatprep.subr.mxu0 0.0
  %8312 = vmatpush1.msra.mxu0 0.0
  %8313 = vmatprep.subr.mxu0 0.0
  %8314 = vmatpush1.msra.mxu0 0.0
  %8315 = vmatprep.subr.mxu0 0.0
  %8316 = vmatpush1.msra.mxu0 0.0
  %8317 = vmatprep.mubr.f32.mxu0 0.0
  %8318 = vmatmul.mubr.f32.gmra.mrb[0].mxu0 %v8243
  %v8319 = vpop.f32.mrb[0].mxu0
  %v8320 = vadd.f32 %v8221, %v8319
  %v8321 = vpop.f32.mrb[0].mxu0
  %8322 = vmatprep.mubr.f32.mxu0 0.0
  %8323 = vmatmul.mubr.f32.gmra.mrb[0].mxu0 %v8246
  %v8324 = vpop.f32.mrb[0].mxu0
  %v8325 = vadd.f32 %v8226, %v8324
  %v8326 = vpop.f32.mrb[0].mxu0
  %8327 = vmatprep.mubr.f32.mxu0 0.0
  %8328 = vmatmul.mubr.f32.gmra.mrb[0].mxu0 %v8249
  %v8329 = vpop.f32.mrb[0].mxu0
  %v8330 = vadd.f32 %v8231, %v8329
  %v8331 = vpop.f32.mrb[0].mxu0
  %8332 = vdwg.mxu0
  %v8333 = vmul.f32 %v8320, %v8132
  %v8334 = vmul.f32 %v8325, %v8133
  %v8335 = vmul.f32 %v8330, %v8134
  %v8337 = vsel %vm3495, %v8333, 0
  %v8340 = vsel %vm3495, %v8334, 0
  %v8343 = vsel %vm3495, %v8335, 0
  %8345 = vmatprep.subr.mxu0 0.0
  %8346 = vmatpush1.msra.mxu0 %v291
  %8347 = vmatprep.subr.mxu0 0.0
  %8348 = vmatpush1.msra.mxu0 0.0
  %8349 = vmatprep.subr.mxu0 0.0
  %8350 = vmatpush1.msra.mxu0 0.0
  %8351 = vmatprep.subr.mxu0 0.0
  %8352 = vmatpush1.msra.mxu0 0.0
  %8353 = vmatprep.subr.mxu0 0.0
  %8354 = vmatpush1.msra.mxu0 0.0
  %8355 = vmatprep.subr.mxu0 0.0
  %8356 = vmatpush1.msra.mxu0 0.0
  %8357 = vmatprep.subr.mxu0 0.0
  %8358 = vmatpush1.msra.mxu0 0.0
  %8359 = vmatprep.subr.mxu0 0.0
  %8360 = vmatpush1.msra.mxu0 0.0
  %8361 = vmatprep.subr.mxu0 0.0
  %8362 = vmatpush1.msra.mxu0 0.0
  %8363 = vmatprep.subr.mxu0 0.0
  %8364 = vmatpush1.msra.mxu0 0.0
  %8365 = vmatprep.subr.mxu0 0.0
  %8366 = vmatpush1.msra.mxu0 0.0
  %8367 = vmatprep.subr.mxu0 0.0
  %8368 = vmatpush1.msra.mxu0 0.0
  %8369 = vmatprep.subr.mxu0 0.0
  %8370 = vmatpush1.msra.mxu0 0.0
  %8371 = vmatprep.subr.mxu0 0.0
  %8372 = vmatpush1.msra.mxu0 0.0
  %8373 = vmatprep.subr.mxu0 0.0
  %8374 = vmatpush1.msra.mxu0 0.0
  %8375 = vmatprep.subr.mxu0 0.0
  %8376 = vmatpush1.msra.mxu0 0.0
  %8377 = vmatprep.subr.mxu0 0.0
  %8378 = vmatpush1.msra.mxu0 0.0
  %8379 = vmatprep.subr.mxu0 0.0
  %8380 = vmatpush1.msra.mxu0 0.0
  %8381 = vmatprep.subr.mxu0 0.0
  %8382 = vmatpush1.msra.mxu0 0.0
  %8383 = vmatprep.subr.mxu0 0.0
  %8384 = vmatpush1.msra.mxu0 0.0
  %8385 = vmatprep.subr.mxu0 0.0
  %8386 = vmatpush1.msra.mxu0 0.0
  %8387 = vmatprep.subr.mxu0 0.0
  %8388 = vmatpush1.msra.mxu0 0.0
  %8389 = vmatprep.subr.mxu0 0.0
  %8390 = vmatpush1.msra.mxu0 0.0
  %8391 = vmatprep.subr.mxu0 0.0
  %8392 = vmatpush1.msra.mxu0 0.0
  %8393 = vmatprep.subr.mxu0 0.0
  %8394 = vmatpush1.msra.mxu0 0.0
  %8395 = vmatprep.subr.mxu0 0.0
  %8396 = vmatpush1.msra.mxu0 0.0
  %8397 = vmatprep.subr.mxu0 0.0
  %8398 = vmatpush1.msra.mxu0 0.0
  %8399 = vmatprep.subr.mxu0 0.0
  %8400 = vmatpush1.msra.mxu0 0.0
  %8401 = vmatprep.subr.mxu0 0.0
  %8402 = vmatpush1.msra.mxu0 0.0
  %8403 = vmatprep.subr.mxu0 0.0
  %8404 = vmatpush1.msra.mxu0 0.0
  %8405 = vmatprep.subr.mxu0 0.0
  %8406 = vmatpush1.msra.mxu0 0.0
  %8407 = vmatprep.subr.mxu0 0.0
  %8408 = vmatpush1.msra.mxu0 0.0
  %8409 = vmatprep.mubr.f32.mxu0 0.0
  %8410 = vmatmul.mubr.f32.gmra.mrb[0].mxu0 %v8337
  %v8411 = vpop.f32.mrb[0].mxu0
  %v8412 = vadd.f32 0.0, %v8411
  %v8413 = vpop.f32.mrb[0].mxu0
  %8414 = vmatprep.mubr.f32.mxu0 0.0
  %8415 = vmatmul.mubr.f32.gmra.mrb[0].mxu0 %v8340
  %v8416 = vpop.f32.mrb[0].mxu0
  %v8417 = vadd.f32 0.0, %v8416
  %v8418 = vpop.f32.mrb[0].mxu0
  %8419 = vmatprep.mubr.f32.mxu0 0.0
  %8420 = vmatmul.mubr.f32.gmra.mrb[0].mxu0 %v8343
  %v8421 = vpop.f32.mrb[0].mxu0
  %v8422 = vadd.f32 0.0, %v8421
  %v8423 = vpop.f32.mrb[0].mxu0
  %8424 = vdwg.mxu0
  %v8425 = vadd.f32 %v7873, %v8412
  %v8426 = vadd.f32 %v7874, %v8417
  %v8427 = vadd.f32 %v7875, %v8422
  %v8429 = vlaneseq
  %v8430 = vshrl.u32 %v8429, 7
  %v8431 = vsub.s32 0, %v8430
  %v8432 = vrot.slane %v249, %v8431
  %v8434 = vadd.f32 %v8425, %v8432
  %v8435 = vadd.f32 %v8426, %v8432
  %v8436 = vadd.f32 %v8427, %v8432
  %v8437 = vadd.f32 %v6029, %v8434
  %v8438 = vadd.f32 %v6030, %v8435
  %v8439 = vadd.f32 %v6031, %v8436
  %v8440 = vsel %vm333, %v8437, 0.0
  %8441 = vadd.xlane.f32.xlu0 %v8440
  %v8442 = vpop.xlane.xlu0 %8441
  %v8443 = vsel %vm333, %v8438, 0.0
  %8444 = vadd.xlane.f32.xlu0 %v8443
  %v8445 = vpop.xlane.xlu0 %8444
  %v8446 = vsel %vm1864, %v8439, 0.0
  %8447 = vadd.xlane.f32.xlu0 %v8446
  %v8448 = vpop.xlane.xlu0 %8447
  %v8449 = vmul.f32 %v8442, %v1868
  %v8450 = vmul.f32 %v8445, %v1868
  %v8451 = vmul.f32 %v8448, %v1868
  %v8452 = vsub.f32 %v8437, %v8449
  %v8453 = vsub.f32 %v8438, %v8450
  %v8454 = vsub.f32 %v8439, %v8451
  %v8455 = vmul.f32 %v8452, %v8452
  %v8456 = vmul.f32 %v8453, %v8453
  %v8457 = vmul.f32 %v8454, %v8454
  %v8458 = vsel %vm333, %v8455, 0.0
  %8459 = vadd.xlane.f32.xlu0 %v8458
  %v8460 = vpop.xlane.xlu0 %8459
  %v8461 = vsel %vm333, %v8456, 0.0
  %8462 = vadd.xlane.f32.xlu0 %v8461
  %v8463 = vpop.xlane.xlu0 %8462
  %v8464 = vsel %vm1864, %v8457, 0.0
  %8465 = vadd.xlane.f32.xlu0 %v8464
  %v8466 = vpop.xlane.xlu0 %8465
  %v8467 = vmul.f32 %v8460, %v1868
  %v8468 = vmul.f32 %v8463, %v1868
  %v8469 = vmul.f32 %v8466, %v1868
  %v8470 = vadd.f32 %v8467, 1e-05
  %v8471 = vadd.f32 %v8468, 1e-05
  %v8472 = vadd.f32 %v8469, 1e-05
  %v8473 = vrsqrt.pop %v8470
  %v8474 = vrsqrt.pop %v8471
  %v8475 = vrsqrt.pop %v8472
  %v8476 = vmul.f32 %v8452, %v8473
  %v8477 = vmul.f32 %v8453, %v8474
  %v8478 = vmul.f32 %v8454, %v8475
  %v8480 = vlaneseq
  %v8481 = vshrl.u32 %v8480, 7
  %v8482 = vsub.s32 0, %v8481
  %v8483 = vrot.slane %v255, %v8482
  %v8485 = vmul.f32 %v8476, %v8483
  %v8486 = vmul.f32 %v8477, %v8483
  %v8487 = vmul.f32 %v8478, %v8483
  %v8489 = vlaneseq
  %v8490 = vshrl.u32 %v8489, 7
  %v8491 = vsub.s32 0, %v8490
  %v8492 = vrot.slane %v253, %v8491
  %v8494 = vadd.f32 %v8485, %v8492
  %v8495 = vadd.f32 %v8486, %v8492
  %v8496 = vadd.f32 %v8487, %v8492
  %v8498 = vlaneseq
  %v8499 = vshrl.u32 %v8498, 7
  %v8500 = vsub.s32 0, %v8499
  %v8501 = vrot.slane %v245, %v8500
  %v8504 = vsel %vm333, %v8494, 0
  %v8507 = vsel %vm333, %v8495, 0
  %v8510 = vsel %vm333, %v8496, 0
  %8512 = vmatprep.subr.mxu0 0.0
  %8513 = vmatpush1.msra.mxu0 %v264
  %8514 = vmatprep.subr.mxu0 0.0
  %8515 = vmatpush1.msra.mxu0 %v265
  %8516 = vmatprep.subr.mxu0 0.0
  %8517 = vmatpush1.msra.mxu0 %v266
  %8518 = vmatprep.subr.mxu0 0.0
  %8519 = vmatpush1.msra.mxu0 %v267
  %8520 = vmatprep.subr.mxu0 0.0
  %8521 = vmatpush1.msra.mxu0 0.0
  %8522 = vmatprep.subr.mxu0 0.0
  %8523 = vmatpush1.msra.mxu0 0.0
  %8524 = vmatprep.subr.mxu0 0.0
  %8525 = vmatpush1.msra.mxu0 0.0
  %8526 = vmatprep.subr.mxu0 0.0
  %8527 = vmatpush1.msra.mxu0 0.0
  %8528 = vmatprep.subr.mxu0 0.0
  %8529 = vmatpush1.msra.mxu0 0.0
  %8530 = vmatprep.subr.mxu0 0.0
  %8531 = vmatpush1.msra.mxu0 0.0
  %8532 = vmatprep.subr.mxu0 0.0
  %8533 = vmatpush1.msra.mxu0 0.0
  %8534 = vmatprep.subr.mxu0 0.0
  %8535 = vmatpush1.msra.mxu0 0.0
  %8536 = vmatprep.subr.mxu0 0.0
  %8537 = vmatpush1.msra.mxu0 0.0
  %8538 = vmatprep.subr.mxu0 0.0
  %8539 = vmatpush1.msra.mxu0 0.0
  %8540 = vmatprep.subr.mxu0 0.0
  %8541 = vmatpush1.msra.mxu0 0.0
  %8542 = vmatprep.subr.mxu0 0.0
  %8543 = vmatpush1.msra.mxu0 0.0
  %8544 = vmatprep.subr.mxu0 0.0
  %8545 = vmatpush1.msra.mxu0 0.0
  %8546 = vmatprep.subr.mxu0 0.0
  %8547 = vmatpush1.msra.mxu0 0.0
  %8548 = vmatprep.subr.mxu0 0.0
  %8549 = vmatpush1.msra.mxu0 0.0
  %8550 = vmatprep.subr.mxu0 0.0
  %8551 = vmatpush1.msra.mxu0 0.0
  %8552 = vmatprep.subr.mxu0 0.0
  %8553 = vmatpush1.msra.mxu0 0.0
  %8554 = vmatprep.subr.mxu0 0.0
  %8555 = vmatpush1.msra.mxu0 0.0
  %8556 = vmatprep.subr.mxu0 0.0
  %8557 = vmatpush1.msra.mxu0 0.0
  %8558 = vmatprep.subr.mxu0 0.0
  %8559 = vmatpush1.msra.mxu0 0.0
  %8560 = vmatprep.subr.mxu0 0.0
  %8561 = vmatpush1.msra.mxu0 0.0
  %8562 = vmatprep.subr.mxu0 0.0
  %8563 = vmatpush1.msra.mxu0 0.0
  %8564 = vmatprep.subr.mxu0 0.0
  %8565 = vmatpush1.msra.mxu0 0.0
  %8566 = vmatprep.subr.mxu0 0.0
  %8567 = vmatpush1.msra.mxu0 0.0
  %8568 = vmatprep.subr.mxu0 0.0
  %8569 = vmatpush1.msra.mxu0 0.0
  %8570 = vmatprep.subr.mxu0 0.0
  %8571 = vmatpush1.msra.mxu0 0.0
  %8572 = vmatprep.subr.mxu0 0.0
  %8573 = vmatpush1.msra.mxu0 0.0
  %8574 = vmatprep.subr.mxu0 0.0
  %8575 = vmatpush1.msra.mxu0 0.0
  %8576 = vmatprep.mubr.f32.mxu0 0.0
  %8577 = vmatmul.mubr.f32.gmra.mrb[0].mxu0 %v8504
  %v8578 = vpop.f32.mrb[0].mxu0
  %v8579 = vadd.f32 %v8501, %v8578
  %v8580 = vpop.f32.mrb[0].mxu0
  %8581 = vmatprep.mubr.f32.mxu0 0.0
  %8582 = vmatmul.mubr.f32.gmra.mrb[0].mxu0 %v8507
  %v8583 = vpop.f32.mrb[0].mxu0
  %v8584 = vadd.f32 %v8501, %v8583
  %v8585 = vpop.f32.mrb[0].mxu0
  %8586 = vmatprep.mubr.f32.mxu0 0.0
  %8587 = vmatmul.mubr.f32.gmra.mrb[0].mxu0 %v8510
  %v8588 = vpop.f32.mrb[0].mxu0
  %v8589 = vadd.f32 %v8501, %v8588
  %v8590 = vpop.f32.mrb[0].mxu0
  %8591 = vdwg.mxu0
  %v8592 = vmul.f32 %v8579, %v8579
  %v8593 = vmul.f32 %v8584, %v8584
  %v8594 = vmul.f32 %v8589, %v8589
  %v8595 = vmul.f32 %v8579, %v8592
  %v8596 = vmul.f32 %v8584, %v8593
  %v8597 = vmul.f32 %v8589, %v8594
  %v8598 = vmul.f32 %v8595, 0.044715
  %v8599 = vmul.f32 %v8596, 0.044715
  %v8600 = vmul.f32 %v8597, 0.044715
  %v8601 = vadd.f32 %v8579, %v8598
  %v8602 = vadd.f32 %v8584, %v8599
  %v8603 = vadd.f32 %v8589, %v8600
  %v8604 = vmul.f32 %v8601, 0.7978846
  %v8605 = vmul.f32 %v8602, 0.7978846
  %v8606 = vmul.f32 %v8603, 0.7978846
  %v8607 = vtanh.pop %v8604
  %v8608 = vtanh.pop %v8605
  %v8609 = vtanh.pop %v8606
  %v8610 = vadd.f32 %v8607, 1.0
  %v8611 = vadd.f32 %v8608, 1.0
  %v8612 = vadd.f32 %v8609, 1.0
  %v8613 = vmul.f32 %v8610, 0.5
  %v8614 = vmul.f32 %v8611, 0.5
  %v8615 = vmul.f32 %v8612, 0.5
  %v8616 = vmul.f32 %v8579, %v8613
  %v8617 = vmul.f32 %v8584, %v8614
  %v8618 = vmul.f32 %v8589, %v8615
  %v8620 = vlaneseq
  %v8621 = vshrl.u32 %v8620, 7
  %v8622 = vsub.s32 0, %v8621
  %v8623 = vrot.slane %v247, %v8622
  %v8626 = vsel %vm2045, %v8616, 0
  %v8629 = vsel %vm2045, %v8617, 0
  %v8632 = vsel %vm2045, %v8618, 0
  %8634 = vmatprep.subr.mxu0 0.0
  %8635 = vmatpush1.msra.mxu0 %v276
  %8636 = vmatprep.subr.mxu0 0.0
  %8637 = vmatpush1.msra.mxu0 %v277
  %8638 = vmatprep.subr.mxu0 0.0
  %8639 = vmatpush1.msra.mxu0 %v278
  %8640 = vmatprep.subr.mxu0 0.0
  %8641 = vmatpush1.msra.mxu0 %v279
  %8642 = vmatprep.subr.mxu0 0.0
  %8643 = vmatpush1.msra.mxu0 %v280
  %8644 = vmatprep.subr.mxu0 0.0
  %8645 = vmatpush1.msra.mxu0 %v281
  %8646 = vmatprep.subr.mxu0 0.0
  %8647 = vmatpush1.msra.mxu0 %v282
  %8648 = vmatprep.subr.mxu0 0.0
  %8649 = vmatpush1.msra.mxu0 %v283
  %8650 = vmatprep.subr.mxu0 0.0
  %8651 = vmatpush1.msra.mxu0 0.0
  %8652 = vmatprep.subr.mxu0 0.0
  %8653 = vmatpush1.msra.mxu0 0.0
  %8654 = vmatprep.subr.mxu0 0.0
  %8655 = vmatpush1.msra.mxu0 0.0
  %8656 = vmatprep.subr.mxu0 0.0
  %8657 = vmatpush1.msra.mxu0 0.0
  %8658 = vmatprep.subr.mxu0 0.0
  %8659 = vmatpush1.msra.mxu0 0.0
  %8660 = vmatprep.subr.mxu0 0.0
  %8661 = vmatpush1.msra.mxu0 0.0
  %8662 = vmatprep.subr.mxu0 0.0
  %8663 = vmatpush1.msra.mxu0 0.0
  %8664 = vmatprep.subr.mxu0 0.0
  %8665 = vmatpush1.msra.mxu0 0.0
  %8666 = vmatprep.subr.mxu0 0.0
  %8667 = vmatpush1.msra.mxu0 0.0
  %8668 = vmatprep.subr.mxu0 0.0
  %8669 = vmatpush1.msra.mxu0 0.0
  %8670 = vmatprep.subr.mxu0 0.0
  %8671 = vmatpush1.msra.mxu0 0.0
  %8672 = vmatprep.subr.mxu0 0.0
  %8673 = vmatpush1.msra.mxu0 0.0
  %8674 = vmatprep.subr.mxu0 0.0
  %8675 = vmatpush1.msra.mxu0 0.0
  %8676 = vmatprep.subr.mxu0 0.0
  %8677 = vmatpush1.msra.mxu0 0.0
  %8678 = vmatprep.subr.mxu0 0.0
  %8679 = vmatpush1.msra.mxu0 0.0
  %8680 = vmatprep.subr.mxu0 0.0
  %8681 = vmatpush1.msra.mxu0 0.0
  %8682 = vmatprep.subr.mxu0 0.0
  %8683 = vmatpush1.msra.mxu0 0.0
  %8684 = vmatprep.subr.mxu0 0.0
  %8685 = vmatpush1.msra.mxu0 0.0
  %8686 = vmatprep.subr.mxu0 0.0
  %8687 = vmatpush1.msra.mxu0 0.0
  %8688 = vmatprep.subr.mxu0 0.0
  %8689 = vmatpush1.msra.mxu0 0.0
  %8690 = vmatprep.subr.mxu0 0.0
  %8691 = vmatpush1.msra.mxu0 0.0
  %8692 = vmatprep.subr.mxu0 0.0
  %8693 = vmatpush1.msra.mxu0 0.0
  %8694 = vmatprep.subr.mxu0 0.0
  %8695 = vmatpush1.msra.mxu0 0.0
  %8696 = vmatprep.subr.mxu0 0.0
  %8697 = vmatpush1.msra.mxu0 0.0
  %8698 = vmatprep.mubr.f32.mxu0 0.0
  %8699 = vmatmul.mubr.f32.gmra.mrb[0].mxu0 %v8626
  %v8700 = vpop.f32.mrb[0].mxu0
  %v8701 = vadd.f32 %v8623, %v8700
  %v8702 = vpop.f32.mrb[0].mxu0
  %8703 = vmatprep.mubr.f32.mxu0 0.0
  %8704 = vmatmul.mubr.f32.gmra.mrb[0].mxu0 %v8629
  %v8705 = vpop.f32.mrb[0].mxu0
  %v8706 = vadd.f32 %v8623, %v8705
  %v8707 = vpop.f32.mrb[0].mxu0
  %8708 = vmatprep.mubr.f32.mxu0 0.0
  %8709 = vmatmul.mubr.f32.gmra.mrb[0].mxu0 %v8632
  %v8710 = vpop.f32.mrb[0].mxu0
  %v8711 = vadd.f32 %v8623, %v8710
  %v8712 = vpop.f32.mrb[0].mxu0
  %8713 = vdwg.mxu0
  %v8714 = vadd.f32 %v8494, %v8701
  %v8715 = vadd.f32 %v8495, %v8706
  %v8716 = vadd.f32 %v8496, %v8711
  %v8717 = vsel %vm333, %v8714, 0.0
  %8718 = vadd.xlane.f32.xlu0 %v8717
  %v8719 = vpop.xlane.xlu0 %8718
  %v8720 = vsel %vm333, %v8715, 0.0
  %8721 = vadd.xlane.f32.xlu0 %v8720
  %v8722 = vpop.xlane.xlu0 %8721
  %v8723 = vsel %vm1864, %v8716, 0.0
  %8724 = vadd.xlane.f32.xlu0 %v8723
  %v8725 = vpop.xlane.xlu0 %8724
  %v8726 = vmul.f32 %v8719, %v1868
  %v8727 = vmul.f32 %v8722, %v1868
  %v8728 = vmul.f32 %v8725, %v1868
  %v8729 = vsub.f32 %v8714, %v8726
  %v8730 = vsub.f32 %v8715, %v8727
  %v8731 = vsub.f32 %v8716, %v8728
  %v8732 = vmul.f32 %v8729, %v8729
  %v8733 = vmul.f32 %v8730, %v8730
  %v8734 = vmul.f32 %v8731, %v8731
  %v8735 = vsel %vm333, %v8732, 0.0
  %8736 = vadd.xlane.f32.xlu0 %v8735
  %v8737 = vpop.xlane.xlu0 %8736
  %v8738 = vsel %vm333, %v8733, 0.0
  %8739 = vadd.xlane.f32.xlu0 %v8738
  %v8740 = vpop.xlane.xlu0 %8739
  %v8741 = vsel %vm1864, %v8734, 0.0
  %8742 = vadd.xlane.f32.xlu0 %v8741
  %v8743 = vpop.xlane.xlu0 %8742
  %v8744 = vmul.f32 %v8737, %v1868
  %v8745 = vmul.f32 %v8740, %v1868
  %v8746 = vmul.f32 %v8743, %v1868
  %v8747 = vadd.f32 %v8744, 1e-05
  %v8748 = vadd.f32 %v8745, 1e-05
  %v8749 = vadd.f32 %v8746, 1e-05
  %v8750 = vrsqrt.pop %v8747
  %v8751 = vrsqrt.pop %v8748
  %v8752 = vrsqrt.pop %v8749
  %v8753 = vmul.f32 %v8729, %v8750
  %v8754 = vmul.f32 %v8730, %v8751
  %v8755 = vmul.f32 %v8731, %v8752
  %v8757 = vlaneseq
  %v8758 = vshrl.u32 %v8757, 7
  %v8759 = vsub.s32 0, %v8758
  %v8760 = vrot.slane %v259, %v8759
  %v8762 = vmul.f32 %v8753, %v8760
  %v8763 = vmul.f32 %v8754, %v8760
  %v8764 = vmul.f32 %v8755, %v8760
  %v8766 = vlaneseq
  %v8767 = vshrl.u32 %v8766, 7
  %v8768 = vsub.s32 0, %v8767
  %v8769 = vrot.slane %v257, %v8768
  %v8771 = vadd.f32 %v8762, %v8769
  %v8772 = vadd.f32 %v8763, %v8769
  %v8773 = vadd.f32 %v8764, %v8769
  %v8775 = vlaneseq
  %v8776 = vshrl.u32 %v8775, 7
  %v8777 = vsub.s32 0, %v8776
  %v8778 = vrot.slane %v300, %v8777
  %v8781 = vsel %vm333, %v3286, 0
  %v8784 = vsel %vm333, %v3287, 0
  %v8787 = vsel %vm333, %v3288, 0
  %8789 = vmatprep.subr.mxu0 0.0
  %8790 = vmatpush1.msra.mxu0 %v301
  %8791 = vmatprep.subr.mxu0 0.0
  %8792 = vmatpush1.msra.mxu0 %v302
  %8793 = vmatprep.subr.mxu0 0.0
  %8794 = vmatpush1.msra.mxu0 %v303
  %8795 = vmatprep.subr.mxu0 0.0
  %8796 = vmatpush1.msra.mxu0 %v304
  %8797 = vmatprep.subr.mxu0 0.0
  %8798 = vmatpush1.msra.mxu0 0.0
  %8799 = vmatprep.subr.mxu0 0.0
  %8800 = vmatpush1.msra.mxu0 0.0
  %8801 = vmatprep.subr.mxu0 0.0
  %8802 = vmatpush1.msra.mxu0 0.0
  %8803 = vmatprep.subr.mxu0 0.0
  %8804 = vmatpush1.msra.mxu0 0.0
  %8805 = vmatprep.subr.mxu0 0.0
  %8806 = vmatpush1.msra.mxu0 0.0
  %8807 = vmatprep.subr.mxu0 0.0
  %8808 = vmatpush1.msra.mxu0 0.0
  %8809 = vmatprep.subr.mxu0 0.0
  %8810 = vmatpush1.msra.mxu0 0.0
  %8811 = vmatprep.subr.mxu0 0.0
  %8812 = vmatpush1.msra.mxu0 0.0
  %8813 = vmatprep.subr.mxu0 0.0
  %8814 = vmatpush1.msra.mxu0 0.0
  %8815 = vmatprep.subr.mxu0 0.0
  %8816 = vmatpush1.msra.mxu0 0.0
  %8817 = vmatprep.subr.mxu0 0.0
  %8818 = vmatpush1.msra.mxu0 0.0
  %8819 = vmatprep.subr.mxu0 0.0
  %8820 = vmatpush1.msra.mxu0 0.0
  %8821 = vmatprep.subr.mxu0 0.0
  %8822 = vmatpush1.msra.mxu0 0.0
  %8823 = vmatprep.subr.mxu0 0.0
  %8824 = vmatpush1.msra.mxu0 0.0
  %8825 = vmatprep.subr.mxu0 0.0
  %8826 = vmatpush1.msra.mxu0 0.0
  %8827 = vmatprep.subr.mxu0 0.0
  %8828 = vmatpush1.msra.mxu0 0.0
  %8829 = vmatprep.subr.mxu0 0.0
  %8830 = vmatpush1.msra.mxu0 0.0
  %8831 = vmatprep.subr.mxu0 0.0
  %8832 = vmatpush1.msra.mxu0 0.0
  %8833 = vmatprep.subr.mxu0 0.0
  %8834 = vmatpush1.msra.mxu0 0.0
  %8835 = vmatprep.subr.mxu0 0.0
  %8836 = vmatpush1.msra.mxu0 0.0
  %8837 = vmatprep.subr.mxu0 0.0
  %8838 = vmatpush1.msra.mxu0 0.0
  %8839 = vmatprep.subr.mxu0 0.0
  %8840 = vmatpush1.msra.mxu0 0.0
  %8841 = vmatprep.subr.mxu0 0.0
  %8842 = vmatpush1.msra.mxu0 0.0
  %8843 = vmatprep.subr.mxu0 0.0
  %8844 = vmatpush1.msra.mxu0 0.0
  %8845 = vmatprep.subr.mxu0 0.0
  %8846 = vmatpush1.msra.mxu0 0.0
  %8847 = vmatprep.subr.mxu0 0.0
  %8848 = vmatpush1.msra.mxu0 0.0
  %8849 = vmatprep.subr.mxu0 0.0
  %8850 = vmatpush1.msra.mxu0 0.0
  %8851 = vmatprep.subr.mxu0 0.0
  %8852 = vmatpush1.msra.mxu0 0.0
  %8853 = vmatprep.mubr.f32.mxu0 0.0
  %8854 = vmatmul.mubr.f32.gmra.mrb[0].mxu0 %v8781
  %v8855 = vpop.f32.mrb[0].mxu0
  %v8856 = vadd.f32 %v8778, %v8855
  %v8857 = vpop.f32.mrb[0].mxu0
  %8858 = vmatprep.mubr.f32.mxu0 0.0
  %8859 = vmatmul.mubr.f32.gmra.mrb[0].mxu0 %v8784
  %v8860 = vpop.f32.mrb[0].mxu0
  %v8861 = vadd.f32 %v8778, %v8860
  %v8862 = vpop.f32.mrb[0].mxu0
  %8863 = vmatprep.mubr.f32.mxu0 0.0
  %8864 = vmatmul.mubr.f32.gmra.mrb[0].mxu0 %v8787
  %v8865 = vpop.f32.mrb[0].mxu0
  %v8866 = vadd.f32 %v8778, %v8865
  %v8867 = vpop.f32.mrb[0].mxu0
  %8868 = vdwg.mxu0
  %8869 = vst.msk [vmem:[%s85] sm:$0xff] %vm580, %v8856
  %8870 = vst.msk [vmem:[%s85 + $0x8] sm:$0xff] %vm580, %v8861
  %vm8871 = vcmask 41984
  %8872 = vst.msk [vmem:[%s85 + $0x10] sm:$0x3] %vm8871, %v8866
  %v8874 = vsel %vm333, %v8771, 0
  %v8877 = vsel %vm333, %v8772, 0
  %v8880 = vsel %vm333, %v8773, 0
  %8882 = vmatprep.subr.mxu0 0.0
  %8883 = vmatpush1.msra.mxu0 %v301
  %8884 = vmatprep.subr.mxu0 0.0
  %8885 = vmatpush1.msra.mxu0 %v302
  %8886 = vmatprep.subr.mxu0 0.0
  %8887 = vmatpush1.msra.mxu0 %v303
  %8888 = vmatprep.subr.mxu0 0.0
  %8889 = vmatpush1.msra.mxu0 %v304
  %8890 = vmatprep.subr.mxu0 0.0
  %8891 = vmatpush1.msra.mxu0 0.0
  %8892 = vmatprep.subr.mxu0 0.0
  %8893 = vmatpush1.msra.mxu0 0.0
  %8894 = vmatprep.subr.mxu0 0.0
  %8895 = vmatpush1.msra.mxu0 0.0
  %8896 = vmatprep.subr.mxu0 0.0
  %8897 = vmatpush1.msra.mxu0 0.0
  %8898 = vmatprep.subr.mxu0 0.0
  %8899 = vmatpush1.msra.mxu0 0.0
  %8900 = vmatprep.subr.mxu0 0.0
  %8901 = vmatpush1.msra.mxu0 0.0
  %8902 = vmatprep.subr.mxu0 0.0
  %8903 = vmatpush1.msra.mxu0 0.0
  %8904 = vmatprep.subr.mxu0 0.0
  %8905 = vmatpush1.msra.mxu0 0.0
  %8906 = vmatprep.subr.mxu0 0.0
  %8907 = vmatpush1.msra.mxu0 0.0
  %8908 = vmatprep.subr.mxu0 0.0
  %8909 = vmatpush1.msra.mxu0 0.0
  %8910 = vmatprep.subr.mxu0 0.0
  %8911 = vmatpush1.msra.mxu0 0.0
  %8912 = vmatprep.subr.mxu0 0.0
  %8913 = vmatpush1.msra.mxu0 0.0
  %8914 = vmatprep.subr.mxu0 0.0
  %8915 = vmatpush1.msra.mxu0 0.0
  %8916 = vmatprep.subr.mxu0 0.0
  %8917 = vmatpush1.msra.mxu0 0.0
  %8918 = vmatprep.subr.mxu0 0.0
  %8919 = vmatpush1.msra.mxu0 0.0
  %8920 = vmatprep.subr.mxu0 0.0
  %8921 = vmatpush1.msra.mxu0 0.0
  %8922 = vmatprep.subr.mxu0 0.0
  %8923 = vmatpush1.msra.mxu0 0.0
  %8924 = vmatprep.subr.mxu0 0.0
  %8925 = vmatpush1.msra.mxu0 0.0
  %8926 = vmatprep.subr.mxu0 0.0
  %8927 = vmatpush1.msra.mxu0 0.0
  %8928 = vmatprep.subr.mxu0 0.0
  %8929 = vmatpush1.msra.mxu0 0.0
  %8930 = vmatprep.subr.mxu0 0.0
  %8931 = vmatpush1.msra.mxu0 0.0
  %8932 = vmatprep.subr.mxu0 0.0
  %8933 = vmatpush1.msra.mxu0 0.0
  %8934 = vmatprep.subr.mxu0 0.0
  %8935 = vmatpush1.msra.mxu0 0.0
  %8936 = vmatprep.subr.mxu0 0.0
  %8937 = vmatpush1.msra.mxu0 0.0
  %8938 = vmatprep.subr.mxu0 0.0
  %8939 = vmatpush1.msra.mxu0 0.0
  %8940 = vmatprep.subr.mxu0 0.0
  %8941 = vmatpush1.msra.mxu0 0.0
  %8942 = vmatprep.subr.mxu0 0.0
  %8943 = vmatpush1.msra.mxu0 0.0
  %8944 = vmatprep.subr.mxu0 0.0
  %8945 = vmatpush1.msra.mxu0 0.0
  %8946 = vmatprep.mubr.f32.mxu0 0.0
  %8947 = vmatmul.mubr.f32.gmra.mrb[0].mxu0 %v8874
  %v8948 = vpop.f32.mrb[0].mxu0
  %v8949 = vadd.f32 %v8778, %v8948
  %v8950 = vpop.f32.mrb[0].mxu0
  %8951 = vmatprep.mubr.f32.mxu0 0.0
  %8952 = vmatmul.mubr.f32.gmra.mrb[0].mxu0 %v8877
  %v8953 = vpop.f32.mrb[0].mxu0
  %v8954 = vadd.f32 %v8778, %v8953
  %v8955 = vpop.f32.mrb[0].mxu0
  %8956 = vmatprep.mubr.f32.mxu0 0.0
  %8957 = vmatmul.mubr.f32.gmra.mrb[0].mxu0 %v8880
  %v8958 = vpop.f32.mrb[0].mxu0
  %v8959 = vadd.f32 %v8778, %v8958
  %v8960 = vpop.f32.mrb[0].mxu0
  %8961 = vdwg.mxu0
  %8962 = vst.msk [vmem:[%s87] sm:$0xff] %vm580, %v8949
  %8963 = vst.msk [vmem:[%s87 + $0x8] sm:$0xff] %vm580, %v8954
  %8964 = vst.msk [vmem:[%s87 + $0x10] sm:$0x3] %vm8871, %v8959
  // Predicated region
  $region170: #{mdm_any_forward.1} parent=0 // pred_check
    _
  $region171: #{mdm_any_forward.1} parent=0 // pred_check_branch
    %8966 = sbr.rel (0) target = $region173
  $region172: #{mdm_any_forward.1} parent=0 // pred_region
    _
  $region173: #{mdm_any_forward.1} parent=0 // pred_fallthru
    _
  // Predicated region
  $region174: #{mdm_any_forward.1} parent=0 // pred_check
    _
  $region175: #{mdm_any_forward.1} parent=0 // pred_check_branch
    %8968 = sbr.rel (0) target = $region177
  $region176: #{mdm_any_forward.1} parent=0 // pred_region
    _
  $region177: #{mdm_any_forward.1} parent=0 // pred_fallthru
    _
  // Predicated region
  $region178: #{mdm_any_forward.1} parent=0 // pred_check
    _
  $region179: #{mdm_any_forward.1} parent=0 // pred_check_branch
    %8970 = sbr.rel (0) target = $region181
  $region180: #{mdm_any_forward.1} parent=0 // pred_region
    _
  $region181: #{mdm_any_forward.1} parent=0 // pred_fallthru
    _
  // Predicated region
  $region182: #{mdm_any_forward.1} parent=0 // pred_check
    _
  $region183: #{mdm_any_forward.1} parent=0 // pred_check_branch
    %8972 = sbr.rel (0) target = $region185
  $region184: #{mdm_any_forward.1} parent=0 // pred_region
    _
  $region185: #{mdm_any_forward.1} parent=0 // pred_fallthru
    _

</llo_original>
